<compile_context>
chip_gen: v5e
topology: v5e:2x2
jax: 0.10.0
libtpu: 0.0.40
codegen_flags: <defaults>
</compile_context>

<pallas_src>
import functools

import jax
import jax.numpy as jnp
from jax.experimental import pallas as pl
from jax.experimental.pallas import tpu as pltpu


def _round_up(v, m):
    return (v + m - 1) // m * m


# Below this many GEMM rows a pallas_call is pure launch overhead -> plain XLA.
_PALLAS_MIN_ROWS = 64
# Largest K handled as a single MXU pass (covers all ResNet-18 layers: max 4608).
_MAX_SINGLE_K = 4608


# ----------------------------- Pallas kernels -------------------------------

def _mm_kernel(x_ref, w_ref, scale_ref, shift_ref, *rest,
               relu, has_res, multi_k):
    """Matmul with fused BN-affine [+ residual add] [+ ReLU] epilogue.

    multi_k=False: 2-D grid (M, N), single K step, no accumulator scratch.
    multi_k=True : 3-D grid (M, N, K) with an f32 VMEM accumulator.
    """
    if has_res:
        res_ref, rest = rest[0], rest[1:]
    else:
        res_ref = None
    if multi_k:
        o_ref, acc_ref = rest
    else:
        (o_ref,) = rest
        acc_ref = None

    def epilogue(acc):
        acc = acc * scale_ref[...] + shift_ref[...]
        if has_res:
            acc = acc + res_ref[...].astype(jnp.float32)
        if relu:
            acc = jnp.maximum(acc, 0.0)
        o_ref[...] = acc.astype(o_ref.dtype)

    if not multi_k:
        epilogue(jnp.dot(x_ref[...], w_ref[...],
                         preferred_element_type=jnp.float32))
        return

    k = pl.program_id(2)

    @pl.when(k == 0)
    def _():
        acc_ref[...] = jnp.zeros_like(acc_ref)

    acc_ref[...] += jnp.dot(x_ref[...], w_ref[...],
                            preferred_element_type=jnp.float32)

    @pl.when(k == pl.num_programs(2) - 1)
    def _():
        epilogue(acc_ref[...])


def _maxpool_kernel(p00_ref, p01_ref, p10_ref, p11_ref, o_ref, *, oh, ow):
    """3x3 / stride-2 max pool from the four stride-2 phases of the padded input."""
    phases = ((p00_ref[0], p01_ref[0]), (p10_ref[0], p11_ref[0]))
    out = None
    for dh in range(3):
        for dw in range(3):
            ph = phases[dh % 2][dw % 2]
            slab = ph[dh // 2:dh // 2 + oh, dw // 2:dw // 2 + ow, :]
            out = slab if out is None else jnp.maximum(out, slab)
    o_ref[0] = out.astype(o_ref.dtype)


# ------------------------- fused matmul wrapper ------------------------------

def fused_matmul(x, w, scale, shift, residual=None, relu=True,
                 out_dtype=jnp.bfloat16):
    """(M,K) @ (K,N) with per-column affine (+residual)(+ReLU) epilogue."""
    M, K = x.shape
    K2, N = w.shape
    assert K == K2
    has_res = residual is not None

    # Lane-dense output: pad cout to a multiple of 128 so stores are unmasked.
    Np = max(_round_up(N, 128), 128)
    tn = min(Np, 256)                        # 256 matches the v6e/v7x MXU width
    # bf16 tiles pack 16 rows per sublane pair.
    tm = min(_round_up(M, 16), 256)
    # Ensure >= 2 parallel programs when the layer allows it (v7x: 2 TensorCores).
    if (Np // tn) * (_round_up(M, tm) // tm) == 1 and tm >= 32:
        tm = _round_up(tm // 2, 16)
    Mp = _round_up(M, tm)

    # K: pad to 128 and run a single MXU pass whenever it fits (all ResNet-18
    # layers do), else fall back to a short K loop with an f32 accumulator.
    Kp = _round_up(K, 128)
    if Kp <= _MAX_SINGLE_K:
        tk = Kp
    else:
        tk = 2048
        Kp = _round_up(K, tk)
    multi_k = (Kp // tk) > 1

    xb = jnp.pad(x.astype(jnp.bfloat16), ((0, Mp - M), (0, Kp - K)))
    wb = jnp.pad(w.astype(jnp.bfloat16), ((0, Kp - K), (0, Np - N)))
    sc = jnp.pad(scale.astype(jnp.float32), (0, Np - N)).reshape(1, Np)
    sh = jnp.pad(shift.astype(jnp.float32), (0, Np - N)).reshape(1, Np)
    args = [xb, wb, sc, sh]

    if multi_k:
        grid = (Mp // tm, Np // tn, Kp // tk)
        x_spec = pl.BlockSpec((tm, tk), lambda i, j, k: (i, k))
        w_spec = pl.BlockSpec((tk, tn), lambda i, j, k: (k, j))
        v_spec = pl.BlockSpec((1, tn), lambda i, j, k: (0, j))
        mn_spec = pl.BlockSpec((tm, tn), lambda i, j, k: (i, j))
        scratch = [pltpu.VMEM((tm, tn), jnp.float32)]
        dims = ("parallel", "parallel", "arbitrary")
    else:
        grid = (Mp // tm, Np // tn)
        x_spec = pl.BlockSpec((tm, tk), lambda i, j: (i, 0))
        w_spec = pl.BlockSpec((tk, tn), lambda i, j: (0, j))
        v_spec = pl.BlockSpec((1, tn), lambda i, j: (0, j))
        mn_spec = pl.BlockSpec((tm, tn), lambda i, j: (i, j))
        scratch = []
        dims = ("parallel", "parallel")

    in_specs = [x_spec, w_spec, v_spec, v_spec]
    if has_res:
        rb = jnp.pad(residual.astype(jnp.bfloat16), ((0, Mp - M), (0, Np - N)))
        in_specs.append(mn_spec)
        args.append(rb)

    bytes_accessed = 2 * (Mp * Kp + Kp * Np
                          + (2 if has_res else 1) * Mp * Np) + 8 * Np
    cost = pl.CostEstimate(flops=2 * Mp * Kp * Np, transcendentals=0,
                           bytes_accessed=bytes_accessed)

    kernel = functools.partial(_mm_kernel, relu=relu, has_res=has_res,
                               multi_k=multi_k)
    out = pl.pallas_call(
        kernel,
        out_shape=jax.ShapeDtypeStruct((Mp, Np), out_dtype),
        grid=grid,
        in_specs=in_specs,
        out_specs=mn_spec,
        scratch_shapes=scratch,
        compiler_params=pltpu.CompilerParams(dimension_semantics=dims),
        cost_estimate=cost,
    )(*args)
    if (Mp, Np) != (M, N):
        out = out[:M, :N]
    return out


# ------------------------------ conv wrappers ---------------------------------

def _im2col(x, kh, kw, stride, pad):
    # x: (N, H, W, C) bf16 -> (N*OH*OW, KH*KW*C)   (patch extraction is glue)
    # TODO(synk): fold the KH*KW taps into the matmul kernel via element-offset
    # index_maps to avoid this HBM patch materialization for 3x3 convs.
    n, h, w, c = x.shape
    xp = jnp.pad(x, ((0, 0), (pad, pad), (pad, pad), (0, 0)))
    oh = (h + 2 * pad - kh) // stride + 1
    ow = (w + 2 * pad - kw) // stride + 1
    cols = []
    for i in range(kh):
        for j in range(kw):
            cols.append(xp[:, i:i + stride * (oh - 1) + 1:stride,
                           j:j + stride * (ow - 1) + 1:stride, :])
    patches = jnp.stack(cols, axis=3)              # (n, oh, ow, kh*kw, c)
    return patches.reshape(n * oh * ow, kh * kw * c), (n, oh, ow)


def conv_bn(x, w, scale, shift, stride, pad, relu, residual=None):
    """conv2d (no bias) + BN (eval, folded affine) [+ residual] [+ ReLU]."""
    kh, kw, cin, cout = w.shape
    n, h, wd, _ = x.shape
    oh = (h + 2 * pad - kh) // stride + 1
    ow = (wd + 2 * pad - kw) // stride + 1
    m = n * oh * ow

    if m < _PALLAS_MIN_ROWS:
        # Tiny GEMM (late stages at small inputs): a pallas_call here is pure
        # launch overhead with <4% MXU occupancy -> plain XLA, like the 512x2 FC.
        y = jax.lax.conv_general_dilated(
            x.astype(jnp.float32), w.astype(jnp.float32),
            window_strides=(stride, stride),
            padding=((pad, pad), (pad, pad)),
            dimension_numbers=("NHWC", "HWIO", "NHWC"))
        y = y * scale + shift
        if residual is not None:
            y = y + residual.astype(jnp.float32)
        if relu:
            y = jnp.maximum(y, 0.0)
        return y.astype(jnp.bfloat16)

    if kh == 1 and kw == 1:
        assert pad == 0
        patches = x[:, ::stride, ::stride, :].reshape(m, cin)
    else:
        patches, _ = _im2col(x, kh, kw, stride, pad)
    res2 = None if residual is None else residual.reshape(m, cout)
    out = fused_matmul(patches, w.reshape(kh * kw * cin, cout),
                       scale, shift, residual=res2, relu=relu)
    return out.reshape(n, oh, ow, cout)


def maxpool_3x3_s2_p1(x):
    n, h, w, c = x.shape
    # Inputs are post-ReLU (>= 0), so 0-padding is exact for the max.
    xp = jnp.pad(x, ((0, 0), (1, 1), (1, 1), (0, 0)))
    oh = (h + 2 - 3) // 2 + 1
    ow = (w + 2 - 3) // 2 + 1
    # 4 stride-2 phases of the padded input (~1x HBM traffic, no 9x stack).
    phases = [xp[:, i::2, j::2, :] for i in (0, 1) for j in (0, 1)]
    kernel = functools.partial(_maxpool_kernel, oh=oh, ow=ow)
    return pl.pallas_call(
        kernel,
        out_shape=jax.ShapeDtypeStruct((n, oh, ow, c), x.dtype),
        grid=(n,),
        in_specs=[pl.BlockSpec((1,) + p.shape[1:], lambda b: (b, 0, 0, 0))
                  for p in phases],
        out_specs=pl.BlockSpec((1, oh, ow, c), lambda b: (b, 0, 0, 0)),
        compiler_params=pltpu.CompilerParams(dimension_semantics=("parallel",)),
    )(*phases)


# --------------------------- parameters (synthetic) ---------------------------

def init_params():
    root = jax.random.PRNGKey(42)
    counter = [0]

    def nk():
        counter[0] += 1
        return jax.random.fold_in(root, counter[0])

    def conv_w(kh, kw, cin, cout):
        fan_in = kh * kw * cin
        return (jax.random.normal(nk(), (kh, kw, cin, cout), jnp.float32)
                * (2.0 / fan_in) ** 0.5)

    def bn(c):
        eps = 1e-5
        gamma = 1.0 + 0.1 * jax.random.normal(nk(), (c,), jnp.float32)
        beta = 0.1 * jax.random.normal(nk(), (c,), jnp.float32)
        mean = 0.1 * jax.random.normal(nk(), (c,), jnp.float32)
        var = 1.0 + 0.1 * jnp.abs(jax.random.normal(nk(), (c,), jnp.float32))
        scale = gamma / jnp.sqrt(var + eps)
        shift = beta - mean * scale
        return scale, shift

    params = {"conv1": (conv_w(7, 7, 3, 64),) + bn(64)}
    stage_cfg = [(64, 64, 1), (64, 128, 2), (128, 256, 2), (256, 512, 2)]
    stages = []
    for cin, cout, stride in stage_cfg:
        blocks = []
        for b in range(2):
            in_c = cin if b == 0 else cout
            s = stride if b == 0 else 1
            blk = {
                "stride": s,
                "conv1": (conv_w(3, 3, in_c, cout),) + bn(cout),
                "conv2": (conv_w(3, 3, cout, cout),) + bn(cout),
            }
            if s != 1 or in_c != cout:
                blk["down"] = (conv_w(1, 1, in_c, cout),) + bn(cout)
            blocks.append(blk)
        stages.append(blocks)
    params["stages"] = stages
    params["fc_w"] = jax.random.normal(nk(), (512, 2), jnp.float32) * (1.0 / 512 ** 0.5)
    params["fc_b"] = 0.01 * jax.random.normal(nk(), (2,), jnp.float32)
    return params


# ------------------------------ forward pass ----------------------------------

def forward(params, x_nchw):
    # NCHW -> NHWC, bf16 activations (matmul accumulation stays f32).
    x = jnp.transpose(x_nchw, (0, 2, 3, 1)).astype(jnp.bfloat16)

    # stem: conv7x7/2 + BN + ReLU, maxpool3x3/2
    w, sc, sh = params["conv1"]
    x = conv_bn(x, w, sc, sh, stride=2, pad=3, relu=True)
    x = maxpool_3x3_s2_p1(x)

    # 4 stages x 2 BasicBlocks; residual add + final ReLU fused into conv2.
    for blocks in params["stages"]:
        for blk in blocks:
            s = blk["stride"]
            identity = x
            if "down" in blk:
                wd, sd, bd = blk["down"]
                identity = conv_bn(x, wd, sd, bd, stride=s, pad=0, relu=False)
            w1, s1, b1 = blk["conv1"]
            out = conv_bn(x, w1, s1, b1, stride=s, pad=1, relu=True)
            w2, s2, b2 = blk["conv2"]
            x = conv_bn(out, w2, s2, b2, stride=1, pad=1, relu=True,
                        residual=identity)

    # adaptive avg pool to 1x1 + fc(512 -> 2): tiny, plain XLA (a pallas_call
    # here is pure launch overhead).
    pooled = jnp.mean(x.astype(jnp.float32), axis=(1, 2))          # (N, 512) f32
    logits = pooled @ params["fc_w"] + params["fc_b"]
    # TODO(synk): nn.Dropout(0.5) is identity in eval mode (used here);
    # train-mode random masking with 1/(1-p) scaling is not implemented.
    return logits


if __name__ == "__main__":
    params = init_params()
    key = jax.random.PRNGKey(0)
    x = jax.random.normal(key, (2, 3, 64, 64), dtype=jnp.float32)   # NCHW like PyTorch

    fwd = jax.jit(functools.partial(forward, params))
    out = fwd(x)
    jax.block_until_ready(out)

    assert out.shape == (2, 2), out.shape
    assert out.dtype == jnp.float32
    print("KERNEL_OK")
</pallas_src>

<mosaic_0001>
module attributes {stable_mosaic.version = 11 : i64} {
  func.func @_mm_kernel(%arg0: i32, %arg1: i32, %arg2: memref<256x256xbf16, #tpu.memory_space<vmem>>, %arg3: memref<256x128xbf16, #tpu.memory_space<vmem>>, %arg4: memref<1x128xf32, #tpu.memory_space<vmem>>, %arg5: memref<1x128xf32, #tpu.memory_space<vmem>>, %arg6: memref<256x128xbf16, #tpu.memory_space<vmem>>) attributes {dimension_semantics = [#tpu.dimension_semantics<parallel>, #tpu.dimension_semantics<parallel>], iteration_bounds = array<i64: 8, 1>, scalar_prefetch = 0 : i64, scratch_operands = 0 : i64, tpu.core_type = #tpu.core_type<tc>, window_params = [{transform_indices = @transform_0, window_bounds = array<i64: 256, 256>}, {transform_indices = @transform_1, window_bounds = array<i64: 256, 128>}, {transform_indices = @transform_2, window_bounds = array<i64: 1, 128>}, {transform_indices = @transform_3, window_bounds = array<i64: 1, 128>}, {transform_indices = @transform_4, window_bounds = array<i64: 256, 128>}]} {
    %c0 = arith.constant 0 : index
    %c0_0 = arith.constant 0 : index
    %0 = vector.load %arg2[%c0, %c0_0] : memref<256x256xbf16, #tpu.memory_space<vmem>>, vector<256x256xbf16>
    %c0_1 = arith.constant 0 : index
    %c0_2 = arith.constant 0 : index
    %1 = vector.load %arg3[%c0_1, %c0_2] : memref<256x128xbf16, #tpu.memory_space<vmem>>, vector<256x128xbf16>
    %cst = arith.constant dense<0.000000e+00> : vector<256x128xf32>
    %2 = tpu.matmul %0, %1, %cst {dimension_numbers = #tpu.dot_dimension_numbers<[1], [0], [0], [1], [0, 0, 1, 1], [], []>} : vector<256x256xbf16>, vector<256x128xbf16>, vector<256x128xf32> -> vector<256x128xf32>
    %c0_3 = arith.constant 0 : index
    %c0_4 = arith.constant 0 : index
    %3 = vector.load %arg4[%c0_3, %c0_4] : memref<1x128xf32, #tpu.memory_space<vmem>>, vector<1x128xf32>
    %4 = vector.broadcast %3 : vector<1x128xf32> to vector<256x128xf32>
    %5 = arith.mulf %2, %4 : vector<256x128xf32>
    %c0_5 = arith.constant 0 : index
    %c0_6 = arith.constant 0 : index
    %6 = vector.load %arg5[%c0_5, %c0_6] : memref<1x128xf32, #tpu.memory_space<vmem>>, vector<1x128xf32>
    %7 = vector.broadcast %6 : vector<1x128xf32> to vector<256x128xf32>
    %8 = arith.addf %5, %7 : vector<256x128xf32>
    %cst_7 = arith.constant 0.000000e+00 : f32
    %9 = vector.broadcast %cst_7 : f32 to vector<256x128xf32>
    %10 = arith.maximumf %8, %9 : vector<256x128xf32>
    %11 = arith.truncf %10 : vector<256x128xf32> to vector<256x128xbf16>
    %c0_8 = arith.constant 0 : index
    %c0_9 = arith.constant 0 : index
    %12 = vector.load %arg6[%c0_8, %c0_9] : memref<256x128xbf16, #tpu.memory_space<vmem>>, vector<256x128xbf16>
    tpu.vector_store %arg6[%c0_8, %c0_9], %11 {strides = array<i32>} : memref<256x128xbf16, #tpu.memory_space<vmem>>, vector<256x128xbf16>,
    return
  }
  func.func @transform_0(%arg0: i32, %arg1: i32) -> (i32, i32) {
    %c0_i32 = arith.constant 0 : i32
    %c0_i32_0 = arith.constant 0 : i32
    return %arg0, %c0_i32 : i32, i32
  }
  func.func @transform_1(%arg0: i32, %arg1: i32) -> (i32, i32) {
    %c0_i32 = arith.constant 0 : i32
    %c0_i32_0 = arith.constant 0 : i32
    return %c0_i32, %arg1 : i32, i32
  }
  func.func @transform_2(%arg0: i32, %arg1: i32) -> (i32, i32) {
    %c0_i32 = arith.constant 0 : i32
    %c0_i32_0 = arith.constant 0 : i32
    return %c0_i32, %arg1 : i32, i32
  }
  func.func @transform_3(%arg0: i32, %arg1: i32) -> (i32, i32) {
    %c0_i32 = arith.constant 0 : i32
    %c0_i32_0 = arith.constant 0 : i32
    return %c0_i32, %arg1 : i32, i32
  }
  func.func @transform_4(%arg0: i32, %arg1: i32) -> (i32, i32) {
    %c0_i32 = arith.constant 0 : i32
    return %arg0, %arg1 : i32, i32
  }
}

module attributes {stable_mosaic.version = 11 : i64} {
  func.func @_maxpool_kernel(%arg0: i32, %arg1: memref<1x17x17x64xbf16, #tpu.memory_space<vmem>>, %arg2: memref<1x17x17x64xbf16, #tpu.memory_space<vmem>>, %arg3: memref<1x17x17x64xbf16, #tpu.memory_space<vmem>>, %arg4: memref<1x17x17x64xbf16, #tpu.memory_space<vmem>>, %arg5: memref<1x16x16x64xbf16, #tpu.memory_space<vmem>>) attributes {dimension_semantics = [#tpu.dimension_semantics<parallel>], iteration_bounds = array<i64: 2>, scalar_prefetch = 0 : i64, scratch_operands = 0 : i64, tpu.core_type = #tpu.core_type<tc>, window_params = [{transform_indices = @transform_0, window_bounds = array<i64: 1, 17, 17, 64>}, {transform_indices = @transform_1, window_bounds = array<i64: 1, 17, 17, 64>}, {transform_indices = @transform_2, window_bounds = array<i64: 1, 17, 17, 64>}, {transform_indices = @transform_3, window_bounds = array<i64: 1, 17, 17, 64>}, {transform_indices = @transform_4, window_bounds = array<i64: 1, 16, 16, 64>}]} {
    %c0 = arith.constant 0 : index
    %c0_0 = arith.constant 0 : index
    %c0_1 = arith.constant 0 : index
    %c0_2 = arith.constant 0 : index
    %0 = vector.load %arg1[%c0, %c0_0, %c0_1, %c0_2] : memref<1x17x17x64xbf16, #tpu.memory_space<vmem>>, vector<1x17x17x64xbf16>
    %1 = vector.shape_cast %0 : vector<1x17x17x64xbf16> to vector<17x17x64xbf16>
    %c0_3 = arith.constant 0 : index
    %c0_4 = arith.constant 0 : index
    %c0_5 = arith.constant 0 : index
    %c0_6 = arith.constant 0 : index
    %2 = vector.load %arg2[%c0_3, %c0_4, %c0_5, %c0_6] : memref<1x17x17x64xbf16, #tpu.memory_space<vmem>>, vector<1x17x17x64xbf16>
    %3 = vector.shape_cast %2 : vector<1x17x17x64xbf16> to vector<17x17x64xbf16>
    %c0_7 = arith.constant 0 : index
    %c0_8 = arith.constant 0 : index
    %c0_9 = arith.constant 0 : index
    %c0_10 = arith.constant 0 : index
    %4 = vector.load %arg3[%c0_7, %c0_8, %c0_9, %c0_10] : memref<1x17x17x64xbf16, #tpu.memory_space<vmem>>, vector<1x17x17x64xbf16>
    %5 = vector.shape_cast %4 : vector<1x17x17x64xbf16> to vector<17x17x64xbf16>
    %c0_11 = arith.constant 0 : index
    %c0_12 = arith.constant 0 : index
    %c0_13 = arith.constant 0 : index
    %c0_14 = arith.constant 0 : index
    %6 = vector.load %arg4[%c0_11, %c0_12, %c0_13, %c0_14] : memref<1x17x17x64xbf16, #tpu.memory_space<vmem>>, vector<1x17x17x64xbf16>
    %7 = vector.shape_cast %6 : vector<1x17x17x64xbf16> to vector<17x17x64xbf16>
    %8 = vector.extract_strided_slice %1 {offsets = [0, 0, 0], sizes = [16, 16, 64], strides = [1, 1, 1]} : vector<17x17x64xbf16> to vector<16x16x64xbf16>
    %9 = vector.extract_strided_slice %3 {offsets = [0, 0, 0], sizes = [16, 16, 64], strides = [1, 1, 1]} : vector<17x17x64xbf16> to vector<16x16x64xbf16>
    %10 = arith.maximumf %8, %9 : vector<16x16x64xbf16>
    %11 = vector.extract_strided_slice %1 {offsets = [0, 1, 0], sizes = [16, 16, 64], strides = [1, 1, 1]} : vector<17x17x64xbf16> to vector<16x16x64xbf16>
    %12 = arith.maximumf %10, %11 : vector<16x16x64xbf16>
    %13 = vector.extract_strided_slice %5 {offsets = [0, 0, 0], sizes = [16, 16, 64], strides = [1, 1, 1]} : vector<17x17x64xbf16> to vector<16x16x64xbf16>
    %14 = arith.maximumf %12, %13 : vector<16x16x64xbf16>
    %15 = vector.extract_strided_slice %7 {offsets = [0, 0, 0], sizes = [16, 16, 64], strides = [1, 1, 1]} : vector<17x17x64xbf16> to vector<16x16x64xbf16>
    %16 = arith.maximumf %14, %15 : vector<16x16x64xbf16>
    %17 = vector.extract_strided_slice %5 {offsets = [0, 1, 0], sizes = [16, 16, 64], strides = [1, 1, 1]} : vector<17x17x64xbf16> to vector<16x16x64xbf16>
    %18 = arith.maximumf %16, %17 : vector<16x16x64xbf16>
    %19 = vector.extract_strided_slice %1 {offsets = [1, 0, 0], sizes = [16, 16, 64], strides = [1, 1, 1]} : vector<17x17x64xbf16> to vector<16x16x64xbf16>
    %20 = arith.maximumf %18, %19 : vector<16x16x64xbf16>
    %21 = vector.extract_strided_slice %3 {offsets = [1, 0, 0], sizes = [16, 16, 64], strides = [1, 1, 1]} : vector<17x17x64xbf16> to vector<16x16x64xbf16>
    %22 = arith.maximumf %20, %21 : vector<16x16x64xbf16>
    %23 = vector.extract_strided_slice %1 {offsets = [1, 1, 0], sizes = [16, 16, 64], strides = [1, 1, 1]} : vector<17x17x64xbf16> to vector<16x16x64xbf16>
    %24 = arith.maximumf %22, %23 : vector<16x16x64xbf16>
    %c0_15 = arith.constant 0 : index
    %c0_16 = arith.constant 0 : index
    %c0_17 = arith.constant 0 : index
    %c0_18 = arith.constant 0 : index
    %25 = vector.load %arg5[%c0_15, %c0_16, %c0_17, %c0_18] : memref<1x16x16x64xbf16, #tpu.memory_space<vmem>>, vector<1x16x16x64xbf16>
    %26 = vector.shape_cast %25 : vector<1x16x16x64xbf16> to vector<16x16x64xbf16>
    %27 = vector.shape_cast %24 : vector<16x16x64xbf16> to vector<1x16x16x64xbf16>
    tpu.vector_store %arg5[%c0_15, %c0_16, %c0_17, %c0_18], %27 {strides = array<i32>} : memref<1x16x16x64xbf16, #tpu.memory_space<vmem>>, vector<1x16x16x64xbf16>,
    return
  }
  func.func @transform_0(%arg0: i32) -> (i32, i32, i32, i32) {
    %c0_i32 = arith.constant 0 : i32
    %c0_i32_0 = arith.constant 0 : i32
    %c0_i32_1 = arith.constant 0 : i32
    %c0_i32_2 = arith.constant 0 : i32
    return %arg0, %c0_i32, %c0_i32_0, %c0_i32_1 : i32, i32, i32, i32
  }
  func.func @transform_1(%arg0: i32) -> (i32, i32, i32, i32) {
    %c0_i32 = arith.constant 0 : i32
    %c0_i32_0 = arith.constant 0 : i32
    %c0_i32_1 = arith.constant 0 : i32
    %c0_i32_2 = arith.constant 0 : i32
    return %arg0, %c0_i32, %c0_i32_0, %c0_i32_1 : i32, i32, i32, i32
  }
  func.func @transform_2(%arg0: i32) -> (i32, i32, i32, i32) {
    %c0_i32 = arith.constant 0 : i32
    %c0_i32_0 = arith.constant 0 : i32
    %c0_i32_1 = arith.constant 0 : i32
    %c0_i32_2 = arith.constant 0 : i32
    return %arg0, %c0_i32, %c0_i32_0, %c0_i32_1 : i32, i32, i32, i32
  }
  func.func @transform_3(%arg0: i32) -> (i32, i32, i32, i32) {
    %c0_i32 = arith.constant 0 : i32
    %c0_i32_0 = arith.constant 0 : i32
    %c0_i32_1 = arith.constant 0 : i32
    %c0_i32_2 = arith.constant 0 : i32
    return %arg0, %c0_i32, %c0_i32_0, %c0_i32_1 : i32, i32, i32, i32
  }
  func.func @transform_4(%arg0: i32) -> (i32, i32, i32, i32) {
    %c0_i32 = arith.constant 0 : i32
    %c0_i32_0 = arith.constant 0 : i32
    %c0_i32_1 = arith.constant 0 : i32
    %c0_i32_2 = arith.constant 0 : i32
    return %arg0, %c0_i32, %c0_i32_0, %c0_i32_1 : i32, i32, i32, i32
  }
}

module attributes {stable_mosaic.version = 11 : i64} {
  func.func @_mm_kernel(%arg0: i32, %arg1: i32, %arg2: memref<256x640xbf16, #tpu.memory_space<vmem>>, %arg3: memref<640x128xbf16, #tpu.memory_space<vmem>>, %arg4: memref<1x128xf32, #tpu.memory_space<vmem>>, %arg5: memref<1x128xf32, #tpu.memory_space<vmem>>, %arg6: memref<256x128xbf16, #tpu.memory_space<vmem>>) attributes {dimension_semantics = [#tpu.dimension_semantics<parallel>, #tpu.dimension_semantics<parallel>], iteration_bounds = array<i64: 2, 1>, scalar_prefetch = 0 : i64, scratch_operands = 0 : i64, tpu.core_type = #tpu.core_type<tc>, window_params = [{transform_indices = @transform_0, window_bounds = array<i64: 256, 640>}, {transform_indices = @transform_1, window_bounds = array<i64: 640, 128>}, {transform_indices = @transform_2, window_bounds = array<i64: 1, 128>}, {transform_indices = @transform_3, window_bounds = array<i64: 1, 128>}, {transform_indices = @transform_4, window_bounds = array<i64: 256, 128>}]} {
    %c0 = arith.constant 0 : index
    %c0_0 = arith.constant 0 : index
    %0 = vector.load %arg2[%c0, %c0_0] : memref<256x640xbf16, #tpu.memory_space<vmem>>, vector<256x640xbf16>
    %c0_1 = arith.constant 0 : index
    %c0_2 = arith.constant 0 : index
    %1 = vector.load %arg3[%c0_1, %c0_2] : memref<640x128xbf16, #tpu.memory_space<vmem>>, vector<640x128xbf16>
    %cst = arith.constant dense<0.000000e+00> : vector<256x128xf32>
    %2 = tpu.matmul %0, %1, %cst {dimension_numbers = #tpu.dot_dimension_numbers<[1], [0], [0], [1], [0, 0, 1, 1], [], []>} : vector<256x640xbf16>, vector<640x128xbf16>, vector<256x128xf32> -> vector<256x128xf32>
    %c0_3 = arith.constant 0 : index
    %c0_4 = arith.constant 0 : index
    %3 = vector.load %arg4[%c0_3, %c0_4] : memref<1x128xf32, #tpu.memory_space<vmem>>, vector<1x128xf32>
    %4 = vector.broadcast %3 : vector<1x128xf32> to vector<256x128xf32>
    %5 = arith.mulf %2, %4 : vector<256x128xf32>
    %c0_5 = arith.constant 0 : index
    %c0_6 = arith.constant 0 : index
    %6 = vector.load %arg5[%c0_5, %c0_6] : memref<1x128xf32, #tpu.memory_space<vmem>>, vector<1x128xf32>
    %7 = vector.broadcast %6 : vector<1x128xf32> to vector<256x128xf32>
    %8 = arith.addf %5, %7 : vector<256x128xf32>
    %cst_7 = arith.constant 0.000000e+00 : f32
    %9 = vector.broadcast %cst_7 : f32 to vector<256x128xf32>
    %10 = arith.maximumf %8, %9 : vector<256x128xf32>
    %11 = arith.truncf %10 : vector<256x128xf32> to vector<256x128xbf16>
    %c0_8 = arith.constant 0 : index
    %c0_9 = arith.constant 0 : index
    %12 = vector.load %arg6[%c0_8, %c0_9] : memref<256x128xbf16, #tpu.memory_space<vmem>>, vector<256x128xbf16>
    tpu.vector_store %arg6[%c0_8, %c0_9], %11 {strides = array<i32>} : memref<256x128xbf16, #tpu.memory_space<vmem>>, vector<256x128xbf16>,
    return
  }
  func.func @transform_0(%arg0: i32, %arg1: i32) -> (i32, i32) {
    %c0_i32 = arith.constant 0 : i32
    %c0_i32_0 = arith.constant 0 : i32
    return %arg0, %c0_i32 : i32, i32
  }
  func.func @transform_1(%arg0: i32, %arg1: i32) -> (i32, i32) {
    %c0_i32 = arith.constant 0 : i32
    %c0_i32_0 = arith.constant 0 : i32
    return %c0_i32, %arg1 : i32, i32
  }
  func.func @transform_2(%arg0: i32, %arg1: i32) -> (i32, i32) {
    %c0_i32 = arith.constant 0 : i32
    %c0_i32_0 = arith.constant 0 : i32
    return %c0_i32, %arg1 : i32, i32
  }
  func.func @transform_3(%arg0: i32, %arg1: i32) -> (i32, i32) {
    %c0_i32 = arith.constant 0 : i32
    %c0_i32_0 = arith.constant 0 : i32
    return %c0_i32, %arg1 : i32, i32
  }
  func.func @transform_4(%arg0: i32, %arg1: i32) -> (i32, i32) {
    %c0_i32 = arith.constant 0 : i32
    return %arg0, %arg1 : i32, i32
  }
}

module attributes {stable_mosaic.version = 11 : i64} {
  func.func @_mm_kernel(%arg0: i32, %arg1: i32, %arg2: memref<256x640xbf16, #tpu.memory_space<vmem>>, %arg3: memref<640x128xbf16, #tpu.memory_space<vmem>>, %arg4: memref<1x128xf32, #tpu.memory_space<vmem>>, %arg5: memref<1x128xf32, #tpu.memory_space<vmem>>, %arg6: memref<256x128xbf16, #tpu.memory_space<vmem>>, %arg7: memref<256x128xbf16, #tpu.memory_space<vmem>>) attributes {dimension_semantics = [#tpu.dimension_semantics<parallel>, #tpu.dimension_semantics<parallel>], iteration_bounds = array<i64: 2, 1>, scalar_prefetch = 0 : i64, scratch_operands = 0 : i64, tpu.core_type = #tpu.core_type<tc>, window_params = [{transform_indices = @transform_0, window_bounds = array<i64: 256, 640>}, {transform_indices = @transform_1, window_bounds = array<i64: 640, 128>}, {transform_indices = @transform_2, window_bounds = array<i64: 1, 128>}, {transform_indices = @transform_3, window_bounds = array<i64: 1, 128>}, {transform_indices = @transform_4, window_bounds = array<i64: 256, 128>}, {transform_indices = @transform_5, window_bounds = array<i64: 256, 128>}]} {
    %c0 = arith.constant 0 : index
    %c0_0 = arith.constant 0 : index
    %0 = vector.load %arg2[%c0, %c0_0] : memref<256x640xbf16, #tpu.memory_space<vmem>>, vector<256x640xbf16>
    %c0_1 = arith.constant 0 : index
    %c0_2 = arith.constant 0 : index
    %1 = vector.load %arg3[%c0_1, %c0_2] : memref<640x128xbf16, #tpu.memory_space<vmem>>, vector<640x128xbf16>
    %cst = arith.constant dense<0.000000e+00> : vector<256x128xf32>
    %2 = tpu.matmul %0, %1, %cst {dimension_numbers = #tpu.dot_dimension_numbers<[1], [0], [0], [1], [0, 0, 1, 1], [], []>} : vector<256x640xbf16>, vector<640x128xbf16>, vector<256x128xf32> -> vector<256x128xf32>
    %c0_3 = arith.constant 0 : index
    %c0_4 = arith.constant 0 : index
    %3 = vector.load %arg4[%c0_3, %c0_4] : memref<1x128xf32, #tpu.memory_space<vmem>>, vector<1x128xf32>
    %4 = vector.broadcast %3 : vector<1x128xf32> to vector<256x128xf32>
    %5 = arith.mulf %2, %4 : vector<256x128xf32>
    %c0_5 = arith.constant 0 : index
    %c0_6 = arith.constant 0 : index
    %6 = vector.load %arg5[%c0_5, %c0_6] : memref<1x128xf32, #tpu.memory_space<vmem>>, vector<1x128xf32>
    %7 = vector.broadcast %6 : vector<1x128xf32> to vector<256x128xf32>
    %8 = arith.addf %5, %7 : vector<256x128xf32>
    %c0_7 = arith.constant 0 : index
    %c0_8 = arith.constant 0 : index
    %9 = vector.load %arg6[%c0_7, %c0_8] : memref<256x128xbf16, #tpu.memory_space<vmem>>, vector<256x128xbf16>
    %10 = arith.extf %9 : vector<256x128xbf16> to vector<256x128xf32>
    %11 = arith.addf %8, %10 : vector<256x128xf32>
    %cst_9 = arith.constant 0.000000e+00 : f32
    %12 = vector.broadcast %cst_9 : f32 to vector<256x128xf32>
    %13 = arith.maximumf %11, %12 : vector<256x128xf32>
    %14 = arith.truncf %13 : vector<256x128xf32> to vector<256x128xbf16>
    %c0_10 = arith.constant 0 : index
    %c0_11 = arith.constant 0 : index
    %15 = vector.load %arg7[%c0_10, %c0_11] : memref<256x128xbf16, #tpu.memory_space<vmem>>, vector<256x128xbf16>
    tpu.vector_store %arg7[%c0_10, %c0_11], %14 {strides = array<i32>} : memref<256x128xbf16, #tpu.memory_space<vmem>>, vector<256x128xbf16>,
    return
  }
  func.func @transform_0(%arg0: i32, %arg1: i32) -> (i32, i32) {
    %c0_i32 = arith.constant 0 : i32
    %c0_i32_0 = arith.constant 0 : i32
    return %arg0, %c0_i32 : i32, i32
  }
  func.func @transform_1(%arg0: i32, %arg1: i32) -> (i32, i32) {
    %c0_i32 = arith.constant 0 : i32
    %c0_i32_0 = arith.constant 0 : i32
    return %c0_i32, %arg1 : i32, i32
  }
  func.func @transform_2(%arg0: i32, %arg1: i32) -> (i32, i32) {
    %c0_i32 = arith.constant 0 : i32
    %c0_i32_0 = arith.constant 0 : i32
    return %c0_i32, %arg1 : i32, i32
  }
  func.func @transform_3(%arg0: i32, %arg1: i32) -> (i32, i32) {
    %c0_i32 = arith.constant 0 : i32
    %c0_i32_0 = arith.constant 0 : i32
    return %c0_i32, %arg1 : i32, i32
  }
  func.func @transform_4(%arg0: i32, %arg1: i32) -> (i32, i32) {
    %c0_i32 = arith.constant 0 : i32
    return %arg0, %arg1 : i32, i32
  }
  func.func @transform_5(%arg0: i32, %arg1: i32) -> (i32, i32) {
    %c0_i32 = arith.constant 0 : i32
    return %arg0, %arg1 : i32, i32
  }
}

module attributes {stable_mosaic.version = 11 : i64} {
  func.func @_mm_kernel(%arg0: i32, %arg1: i32, %arg2: memref<64x640xbf16, #tpu.memory_space<vmem>>, %arg3: memref<640x128xbf16, #tpu.memory_space<vmem>>, %arg4: memref<1x128xf32, #tpu.memory_space<vmem>>, %arg5: memref<1x128xf32, #tpu.memory_space<vmem>>, %arg6: memref<64x128xbf16, #tpu.memory_space<vmem>>) attributes {dimension_semantics = [#tpu.dimension_semantics<parallel>, #tpu.dimension_semantics<parallel>], iteration_bounds = array<i64: 2, 1>, scalar_prefetch = 0 : i64, scratch_operands = 0 : i64, tpu.core_type = #tpu.core_type<tc>, window_params = [{transform_indices = @transform_0, window_bounds = array<i64: 64, 640>}, {transform_indices = @transform_1, window_bounds = array<i64: 640, 128>}, {transform_indices = @transform_2, window_bounds = array<i64: 1, 128>}, {transform_indices = @transform_3, window_bounds = array<i64: 1, 128>}, {transform_indices = @transform_4, window_bounds = array<i64: 64, 128>}]} {
    %c0 = arith.constant 0 : index
    %c0_0 = arith.constant 0 : index
    %0 = vector.load %arg2[%c0, %c0_0] : memref<64x640xbf16, #tpu.memory_space<vmem>>, vector<64x640xbf16>
    %c0_1 = arith.constant 0 : index
    %c0_2 = arith.constant 0 : index
    %1 = vector.load %arg3[%c0_1, %c0_2] : memref<640x128xbf16, #tpu.memory_space<vmem>>, vector<640x128xbf16>
    %cst = arith.constant dense<0.000000e+00> : vector<64x128xf32>
    %2 = tpu.matmul %0, %1, %cst {dimension_numbers = #tpu.dot_dimension_numbers<[1], [0], [0], [1], [0, 0, 1, 1], [], []>} : vector<64x640xbf16>, vector<640x128xbf16>, vector<64x128xf32> -> vector<64x128xf32>
    %c0_3 = arith.constant 0 : index
    %c0_4 = arith.constant 0 : index
    %3 = vector.load %arg4[%c0_3, %c0_4] : memref<1x128xf32, #tpu.memory_space<vmem>>, vector<1x128xf32>
    %4 = vector.broadcast %3 : vector<1x128xf32> to vector<64x128xf32>
    %5 = arith.mulf %2, %4 : vector<64x128xf32>
    %c0_5 = arith.constant 0 : index
    %c0_6 = arith.constant 0 : index
    %6 = vector.load %arg5[%c0_5, %c0_6] : memref<1x128xf32, #tpu.memory_space<vmem>>, vector<1x128xf32>
    %7 = vector.broadcast %6 : vector<1x128xf32> to vector<64x128xf32>
    %8 = arith.addf %5, %7 : vector<64x128xf32>
    %cst_7 = arith.constant 0.000000e+00 : f32
    %9 = vector.broadcast %cst_7 : f32 to vector<64x128xf32>
    %10 = arith.maximumf %8, %9 : vector<64x128xf32>
    %11 = arith.truncf %10 : vector<64x128xf32> to vector<64x128xbf16>
    %c0_8 = arith.constant 0 : index
    %c0_9 = arith.constant 0 : index
    %12 = vector.load %arg6[%c0_8, %c0_9] : memref<64x128xbf16, #tpu.memory_space<vmem>>, vector<64x128xbf16>
    tpu.vector_store %arg6[%c0_8, %c0_9], %11 {strides = array<i32>} : memref<64x128xbf16, #tpu.memory_space<vmem>>, vector<64x128xbf16>,
    return
  }
  func.func @transform_0(%arg0: i32, %arg1: i32) -> (i32, i32) {
    %c0_i32 = arith.constant 0 : i32
    %c0_i32_0 = arith.constant 0 : i32
    return %arg0, %c0_i32 : i32, i32
  }
  func.func @transform_1(%arg0: i32, %arg1: i32) -> (i32, i32) {
    %c0_i32 = arith.constant 0 : i32
    %c0_i32_0 = arith.constant 0 : i32
    return %c0_i32, %arg1 : i32, i32
  }
  func.func @transform_2(%arg0: i32, %arg1: i32) -> (i32, i32) {
    %c0_i32 = arith.constant 0 : i32
    %c0_i32_0 = arith.constant 0 : i32
    return %c0_i32, %arg1 : i32, i32
  }
  func.func @transform_3(%arg0: i32, %arg1: i32) -> (i32, i32) {
    %c0_i32 = arith.constant 0 : i32
    %c0_i32_0 = arith.constant 0 : i32
    return %c0_i32, %arg1 : i32, i32
  }
  func.func @transform_4(%arg0: i32, %arg1: i32) -> (i32, i32) {
    %c0_i32 = arith.constant 0 : i32
    return %arg0, %arg1 : i32, i32
  }
}

module attributes {stable_mosaic.version = 11 : i64} {
  func.func @_mm_kernel(%arg0: i32, %arg1: i32, %arg2: memref<64x128xbf16, #tpu.memory_space<vmem>>, %arg3: memref<128x128xbf16, #tpu.memory_space<vmem>>, %arg4: memref<1x128xf32, #tpu.memory_space<vmem>>, %arg5: memref<1x128xf32, #tpu.memory_space<vmem>>, %arg6: memref<64x128xbf16, #tpu.memory_space<vmem>>) attributes {dimension_semantics = [#tpu.dimension_semantics<parallel>, #tpu.dimension_semantics<parallel>], iteration_bounds = array<i64: 2, 1>, scalar_prefetch = 0 : i64, scratch_operands = 0 : i64, tpu.core_type = #tpu.core_type<tc>, window_params = [{transform_indices = @transform_0, window_bounds = array<i64: 64, 128>}, {transform_indices = @transform_1, window_bounds = array<i64: 128, 128>}, {transform_indices = @transform_2, window_bounds = array<i64: 1, 128>}, {transform_indices = @transform_3, window_bounds = array<i64: 1, 128>}, {transform_indices = @transform_4, window_bounds = array<i64: 64, 128>}]} {
    %c0 = arith.constant 0 : index
    %c0_0 = arith.constant 0 : index
    %0 = vector.load %arg2[%c0, %c0_0] : memref<64x128xbf16, #tpu.memory_space<vmem>>, vector<64x128xbf16>
    %c0_1 = arith.constant 0 : index
    %c0_2 = arith.constant 0 : index
    %1 = vector.load %arg3[%c0_1, %c0_2] : memref<128x128xbf16, #tpu.memory_space<vmem>>, vector<128x128xbf16>
    %cst = arith.constant dense<0.000000e+00> : vector<64x128xf32>
    %2 = tpu.matmul %0, %1, %cst {dimension_numbers = #tpu.dot_dimension_numbers<[1], [0], [0], [1], [0, 0, 1, 1], [], []>} : vector<64x128xbf16>, vector<128x128xbf16>, vector<64x128xf32> -> vector<64x128xf32>
    %c0_3 = arith.constant 0 : index
    %c0_4 = arith.constant 0 : index
    %3 = vector.load %arg4[%c0_3, %c0_4] : memref<1x128xf32, #tpu.memory_space<vmem>>, vector<1x128xf32>
    %4 = vector.broadcast %3 : vector<1x128xf32> to vector<64x128xf32>
    %5 = arith.mulf %2, %4 : vector<64x128xf32>
    %c0_5 = arith.constant 0 : index
    %c0_6 = arith.constant 0 : index
    %6 = vector.load %arg5[%c0_5, %c0_6] : memref<1x128xf32, #tpu.memory_space<vmem>>, vector<1x128xf32>
    %7 = vector.broadcast %6 : vector<1x128xf32> to vector<64x128xf32>
    %8 = arith.addf %5, %7 : vector<64x128xf32>
    %9 = arith.truncf %8 : vector<64x128xf32> to vector<64x128xbf16>
    %c0_7 = arith.constant 0 : index
    %c0_8 = arith.constant 0 : index
    %10 = vector.load %arg6[%c0_7, %c0_8] : memref<64x128xbf16, #tpu.memory_space<vmem>>, vector<64x128xbf16>
    tpu.vector_store %arg6[%c0_7, %c0_8], %9 {strides = array<i32>} : memref<64x128xbf16, #tpu.memory_space<vmem>>, vector<64x128xbf16>,
    return
  }
  func.func @transform_0(%arg0: i32, %arg1: i32) -> (i32, i32) {
    %c0_i32 = arith.constant 0 : i32
    %c0_i32_0 = arith.constant 0 : i32
    return %arg0, %c0_i32 : i32, i32
  }
  func.func @transform_1(%arg0: i32, %arg1: i32) -> (i32, i32) {
    %c0_i32 = arith.constant 0 : i32
    %c0_i32_0 = arith.constant 0 : i32
    return %c0_i32, %arg1 : i32, i32
  }
  func.func @transform_2(%arg0: i32, %arg1: i32) -> (i32, i32) {
    %c0_i32 = arith.constant 0 : i32
    %c0_i32_0 = arith.constant 0 : i32
    return %c0_i32, %arg1 : i32, i32
  }
  func.func @transform_3(%arg0: i32, %arg1: i32) -> (i32, i32) {
    %c0_i32 = arith.constant 0 : i32
    %c0_i32_0 = arith.constant 0 : i32
    return %c0_i32, %arg1 : i32, i32
  }
  func.func @transform_4(%arg0: i32, %arg1: i32) -> (i32, i32) {
    %c0_i32 = arith.constant 0 : i32
    return %arg0, %arg1 : i32, i32
  }
}

module attributes {stable_mosaic.version = 11 : i64} {
  func.func @_mm_kernel(%arg0: i32, %arg1: i32, %arg2: memref<64x1152xbf16, #tpu.memory_space<vmem>>, %arg3: memref<1152x128xbf16, #tpu.memory_space<vmem>>, %arg4: memref<1x128xf32, #tpu.memory_space<vmem>>, %arg5: memref<1x128xf32, #tpu.memory_space<vmem>>, %arg6: memref<64x128xbf16, #tpu.memory_space<vmem>>, %arg7: memref<64x128xbf16, #tpu.memory_space<vmem>>) attributes {dimension_semantics = [#tpu.dimension_semantics<parallel>, #tpu.dimension_semantics<parallel>], iteration_bounds = array<i64: 2, 1>, scalar_prefetch = 0 : i64, scratch_operands = 0 : i64, tpu.core_type = #tpu.core_type<tc>, window_params = [{transform_indices = @transform_0, window_bounds = array<i64: 64, 1152>}, {transform_indices = @transform_1, window_bounds = array<i64: 1152, 128>}, {transform_indices = @transform_2, window_bounds = array<i64: 1, 128>}, {transform_indices = @transform_3, window_bounds = array<i64: 1, 128>}, {transform_indices = @transform_4, window_bounds = array<i64: 64, 128>}, {transform_indices = @transform_5, window_bounds = array<i64: 64, 128>}]} {
    %c0 = arith.constant 0 : index
    %c0_0 = arith.constant 0 : index
    %0 = vector.load %arg2[%c0, %c0_0] : memref<64x1152xbf16, #tpu.memory_space<vmem>>, vector<64x1152xbf16>
    %c0_1 = arith.constant 0 : index
    %c0_2 = arith.constant 0 : index
    %1 = vector.load %arg3[%c0_1, %c0_2] : memref<1152x128xbf16, #tpu.memory_space<vmem>>, vector<1152x128xbf16>
    %cst = arith.constant dense<0.000000e+00> : vector<64x128xf32>
    %2 = tpu.matmul %0, %1, %cst {dimension_numbers = #tpu.dot_dimension_numbers<[1], [0], [0], [1], [0, 0, 1, 1], [], []>} : vector<64x1152xbf16>, vector<1152x128xbf16>, vector<64x128xf32> -> vector<64x128xf32>
    %c0_3 = arith.constant 0 : index
    %c0_4 = arith.constant 0 : index
    %3 = vector.load %arg4[%c0_3, %c0_4] : memref<1x128xf32, #tpu.memory_space<vmem>>, vector<1x128xf32>
    %4 = vector.broadcast %3 : vector<1x128xf32> to vector<64x128xf32>
    %5 = arith.mulf %2, %4 : vector<64x128xf32>
    %c0_5 = arith.constant 0 : index
    %c0_6 = arith.constant 0 : index
    %6 = vector.load %arg5[%c0_5, %c0_6] : memref<1x128xf32, #tpu.memory_space<vmem>>, vector<1x128xf32>
    %7 = vector.broadcast %6 : vector<1x128xf32> to vector<64x128xf32>
    %8 = arith.addf %5, %7 : vector<64x128xf32>
    %c0_7 = arith.constant 0 : index
    %c0_8 = arith.constant 0 : index
    %9 = vector.load %arg6[%c0_7, %c0_8] : memref<64x128xbf16, #tpu.memory_space<vmem>>, vector<64x128xbf16>
    %10 = arith.extf %9 : vector<64x128xbf16> to vector<64x128xf32>
    %11 = arith.addf %8, %10 : vector<64x128xf32>
    %cst_9 = arith.constant 0.000000e+00 : f32
    %12 = vector.broadcast %cst_9 : f32 to vector<64x128xf32>
    %13 = arith.maximumf %11, %12 : vector<64x128xf32>
    %14 = arith.truncf %13 : vector<64x128xf32> to vector<64x128xbf16>
    %c0_10 = arith.constant 0 : index
    %c0_11 = arith.constant 0 : index
    %15 = vector.load %arg7[%c0_10, %c0_11] : memref<64x128xbf16, #tpu.memory_space<vmem>>, vector<64x128xbf16>
    tpu.vector_store %arg7[%c0_10, %c0_11], %14 {strides = array<i32>} : memref<64x128xbf16, #tpu.memory_space<vmem>>, vector<64x128xbf16>,
    return
  }
  func.func @transform_0(%arg0: i32, %arg1: i32) -> (i32, i32) {
    %c0_i32 = arith.constant 0 : i32
    %c0_i32_0 = arith.constant 0 : i32
    return %arg0, %c0_i32 : i32, i32
  }
  func.func @transform_1(%arg0: i32, %arg1: i32) -> (i32, i32) {
    %c0_i32 = arith.constant 0 : i32
    %c0_i32_0 = arith.constant 0 : i32
    return %c0_i32, %arg1 : i32, i32
  }
  func.func @transform_2(%arg0: i32, %arg1: i32) -> (i32, i32) {
    %c0_i32 = arith.constant 0 : i32
    %c0_i32_0 = arith.constant 0 : i32
    return %c0_i32, %arg1 : i32, i32
  }
  func.func @transform_3(%arg0: i32, %arg1: i32) -> (i32, i32) {
    %c0_i32 = arith.constant 0 : i32
    %c0_i32_0 = arith.constant 0 : i32
    return %c0_i32, %arg1 : i32, i32
  }
  func.func @transform_4(%arg0: i32, %arg1: i32) -> (i32, i32) {
    %c0_i32 = arith.constant 0 : i32
    return %arg0, %arg1 : i32, i32
  }
  func.func @transform_5(%arg0: i32, %arg1: i32) -> (i32, i32) {
    %c0_i32 = arith.constant 0 : i32
    return %arg0, %arg1 : i32, i32
  }
}

module attributes {stable_mosaic.version = 11 : i64} {
  func.func @_mm_kernel(%arg0: i32, %arg1: i32, %arg2: memref<64x1152xbf16, #tpu.memory_space<vmem>>, %arg3: memref<1152x128xbf16, #tpu.memory_space<vmem>>, %arg4: memref<1x128xf32, #tpu.memory_space<vmem>>, %arg5: memref<1x128xf32, #tpu.memory_space<vmem>>, %arg6: memref<64x128xbf16, #tpu.memory_space<vmem>>) attributes {dimension_semantics = [#tpu.dimension_semantics<parallel>, #tpu.dimension_semantics<parallel>], iteration_bounds = array<i64: 2, 1>, scalar_prefetch = 0 : i64, scratch_operands = 0 : i64, tpu.core_type = #tpu.core_type<tc>, window_params = [{transform_indices = @transform_0, window_bounds = array<i64: 64, 1152>}, {transform_indices = @transform_1, window_bounds = array<i64: 1152, 128>}, {transform_indices = @transform_2, window_bounds = array<i64: 1, 128>}, {transform_indices = @transform_3, window_bounds = array<i64: 1, 128>}, {transform_indices = @transform_4, window_bounds = array<i64: 64, 128>}]} {
    %c0 = arith.constant 0 : index
    %c0_0 = arith.constant 0 : index
    %0 = vector.load %arg2[%c0, %c0_0] : memref<64x1152xbf16, #tpu.memory_space<vmem>>, vector<64x1152xbf16>
    %c0_1 = arith.constant 0 : index
    %c0_2 = arith.constant 0 : index
    %1 = vector.load %arg3[%c0_1, %c0_2] : memref<1152x128xbf16, #tpu.memory_space<vmem>>, vector<1152x128xbf16>
    %cst = arith.constant dense<0.000000e+00> : vector<64x128xf32>
    %2 = tpu.matmul %0, %1, %cst {dimension_numbers = #tpu.dot_dimension_numbers<[1], [0], [0], [1], [0, 0, 1, 1], [], []>} : vector<64x1152xbf16>, vector<1152x128xbf16>, vector<64x128xf32> -> vector<64x128xf32>
    %c0_3 = arith.constant 0 : index
    %c0_4 = arith.constant 0 : index
    %3 = vector.load %arg4[%c0_3, %c0_4] : memref<1x128xf32, #tpu.memory_space<vmem>>, vector<1x128xf32>
    %4 = vector.broadcast %3 : vector<1x128xf32> to vector<64x128xf32>
    %5 = arith.mulf %2, %4 : vector<64x128xf32>
    %c0_5 = arith.constant 0 : index
    %c0_6 = arith.constant 0 : index
    %6 = vector.load %arg5[%c0_5, %c0_6] : memref<1x128xf32, #tpu.memory_space<vmem>>, vector<1x128xf32>
    %7 = vector.broadcast %6 : vector<1x128xf32> to vector<64x128xf32>
    %8 = arith.addf %5, %7 : vector<64x128xf32>
    %cst_7 = arith.constant 0.000000e+00 : f32
    %9 = vector.broadcast %cst_7 : f32 to vector<64x128xf32>
    %10 = arith.maximumf %8, %9 : vector<64x128xf32>
    %11 = arith.truncf %10 : vector<64x128xf32> to vector<64x128xbf16>
    %c0_8 = arith.constant 0 : index
    %c0_9 = arith.constant 0 : index
    %12 = vector.load %arg6[%c0_8, %c0_9] : memref<64x128xbf16, #tpu.memory_space<vmem>>, vector<64x128xbf16>
    tpu.vector_store %arg6[%c0_8, %c0_9], %11 {strides = array<i32>} : memref<64x128xbf16, #tpu.memory_space<vmem>>, vector<64x128xbf16>,
    return
  }
  func.func @transform_0(%arg0: i32, %arg1: i32) -> (i32, i32) {
    %c0_i32 = arith.constant 0 : i32
    %c0_i32_0 = arith.constant 0 : i32
    return %arg0, %c0_i32 : i32, i32
  }
  func.func @transform_1(%arg0: i32, %arg1: i32) -> (i32, i32) {
    %c0_i32 = arith.constant 0 : i32
    %c0_i32_0 = arith.constant 0 : i32
    return %c0_i32, %arg1 : i32, i32
  }
  func.func @transform_2(%arg0: i32, %arg1: i32) -> (i32, i32) {
    %c0_i32 = arith.constant 0 : i32
    %c0_i32_0 = arith.constant 0 : i32
    return %c0_i32, %arg1 : i32, i32
  }
  func.func @transform_3(%arg0: i32, %arg1: i32) -> (i32, i32) {
    %c0_i32 = arith.constant 0 : i32
    %c0_i32_0 = arith.constant 0 : i32
    return %c0_i32, %arg1 : i32, i32
  }
  func.func @transform_4(%arg0: i32, %arg1: i32) -> (i32, i32) {
    %c0_i32 = arith.constant 0 : i32
    return %arg0, %arg1 : i32, i32
  }
}

</mosaic_0001>

<llo_original>
// kernel: forward.11
$region0: #{forward.11}
  #allocation0 [shape = 'u32[]', space=smem, size = 0x4, offset = 0x4, fixed_abs, tag = 'smem constant byte address 0x4 - core index']
  #allocation1 [shape = 'u32[72,128]{1,0:T(1,128)}', space=vmem, size = 0x9000, scoped, tag = 'internal scratch']
  %s0 = inlined_call_operand.vmem [shape: bf16[2048,256], index: 0, kind: input, shape index: {}]
  %s1 = inlined_call_operand.vmem [shape: bf16[256,128], index: 1, kind: input, shape index: {}]
  %s2 = inlined_call_operand.vmem [shape: f32[1,128], index: 2, kind: input, shape index: {}]
  %s3 = inlined_call_operand.vmem [shape: f32[1,128], index: 3, kind: input, shape index: {}]
  %s4 = inlined_call_operand.vmem [shape: bf16[2048,128], index: 4, kind: output, shape index: {}]
  %s5 = sld [smem:[#allocation0]]
  $region49: #{forward.11} parent=0
    _
  %s7 = ssub.s32 1, %s5
  %s8 = scalar_select 0, %s7, %s5
  loop: start=0, step=1, limit=10
  $region2: #{forward.11} parent=0 // loop_pre_header
    _
  $region3: #{forward.11} parent=0 // loop_header
    %s10 = sphi 0, %s14
    %p11 = scmp.ge.s32.totalorder %s10, 10
    %s17 = sphi 0, %s29
    %s18 = sphi 0, %s25
    %s19 = sphi 0, %s17
    %s20 = sphi 0, %s18
    %s21 = sphi 0, %s19
    %s22 = sphi 0, %s20
    %s32 = sphi 0, %s34
    %s35 = sphi 0, %s32
    %s36 = sphi 0, %s35
    %s52 = sphi 0, %s36
    %s58 = sphi 0, %s60
    %s61 = sphi 0, %s58
    %s62 = sphi 0, %s61
    %s78 = sphi 0, %s62
    %s84 = sphi 0, %s86
    %s87 = sphi 0, %s84
    %s88 = sphi 0, %s87
    %s104 = sphi 0, %s88
    %s110 = sphi 0, %s112
    %s113 = sphi 0, %s110
    %s114 = sphi 0, %s113
    %s130 = sphi 0, %s114
    %s138 = sphi 0, %s140
    %s141 = sphi 0, %s138
    %s142 = sphi 0, %s141
    %s158 = sphi 0, %s142
  $region4: #{forward.11} parent=0 // loop_header_branch
    %13 = sbr.rel (%p11) target = $region8
  $region5: #{forward.11} parent=0 // loop_body
    %s15 = ssub.s32 %s10, 1
    %s16 = ssub.s32 %s10, 2
    %s23 = sadd.s32 1, %s18
    %p24 = scmp.ge.s32.totalorder %s23, 1
    %s25 = scalar_select %p24, 0, %s23
    %s26 = sadd.s32 1, %s17
    %s27 = scalar_select %p24, %s26, %s17
    %p28 = scmp.ge.s32.totalorder %s27, 8
    %s29 = scalar_select %p28, 0, %s27
    %s30 = ssub.s32 %s17, %s29
    %p31 = scmp.eq.s32.totalorder %s30, 0
    %s33 = sadd.s32 %s32, 1
    %s34 = scalar_select %p31, %s32, %s33
    %p37 = pneg %p31
    %p38 = scmp.eq.s32.totalorder %s10, 7
    %p39 = por %p37, %p38
    %p40 = scmp.ne.s32.totalorder %s32, %s35
    %p41 = scmp.eq.s32.totalorder %s10, 0
    %p42 = por %p40, %p41
    %p43 = scmp.ne.s32.totalorder %s32, %s35
    %p44 = scmp.eq.s32.totalorder %s15, 7
    %p45 = por %p43, %p44
    %p46 = scmp.ne.s32.totalorder %s35, %s36
    %p47 = scmp.eq.s32.totalorder %s15, 0
    %p48 = por %p46, %p47
    %p49 = scmp.ne.s32.totalorder %s35, %s36
    %p50 = scmp.eq.s32.totalorder %s16, 7
    %p51 = por %p49, %p50
    %p53 = scmp.ne.s32.totalorder %s36, %s52
    %p54 = scmp.eq.s32.totalorder %s16, 0
    %p55 = por %p53, %p54
    %s56 = ssub.s32 %s18, %s25
    %p57 = scmp.eq.s32.totalorder %s56, 0
    %s59 = sadd.s32 %s58, 1
    %s60 = scalar_select %p57, %s58, %s59
    %p63 = pneg %p57
    %p64 = scmp.eq.s32.totalorder %s10, 7
    %p65 = por %p63, %p64
    %p66 = scmp.ne.s32.totalorder %s58, %s61
    %p67 = scmp.eq.s32.totalorder %s10, 0
    %p68 = por %p66, %p67
    %p69 = scmp.ne.s32.totalorder %s58, %s61
    %p70 = scmp.eq.s32.totalorder %s15, 7
    %p71 = por %p69, %p70
    %p72 = scmp.ne.s32.totalorder %s61, %s62
    %p73 = scmp.eq.s32.totalorder %s15, 0
    %p74 = por %p72, %p73
    %p75 = scmp.ne.s32.totalorder %s61, %s62
    %p76 = scmp.eq.s32.totalorder %s16, 7
    %p77 = por %p75, %p76
    %p79 = scmp.ne.s32.totalorder %s62, %s78
    %p80 = scmp.eq.s32.totalorder %s16, 0
    %p81 = por %p79, %p80
    %s82 = ssub.s32 %s18, %s25
    %p83 = scmp.eq.s32.totalorder %s82, 0
    %s85 = sadd.s32 %s84, 1
    %s86 = scalar_select %p83, %s84, %s85
    %p89 = pneg %p83
    %p90 = scmp.eq.s32.totalorder %s10, 7
    %p91 = por %p89, %p90
    %p92 = scmp.ne.s32.totalorder %s84, %s87
    %p93 = scmp.eq.s32.totalorder %s10, 0
    %p94 = por %p92, %p93
    %p95 = scmp.ne.s32.totalorder %s84, %s87
    %p96 = scmp.eq.s32.totalorder %s15, 7
    %p97 = por %p95, %p96
    %p98 = scmp.ne.s32.totalorder %s87, %s88
    %p99 = scmp.eq.s32.totalorder %s15, 0
    %p100 = por %p98, %p99
    %p101 = scmp.ne.s32.totalorder %s87, %s88
    %p102 = scmp.eq.s32.totalorder %s16, 7
    %p103 = por %p101, %p102
    %p105 = scmp.ne.s32.totalorder %s88, %s104
    %p106 = scmp.eq.s32.totalorder %s16, 0
    %p107 = por %p105, %p106
    %s108 = ssub.s32 %s18, %s25
    %p109 = scmp.eq.s32.totalorder %s108, 0
    %s111 = sadd.s32 %s110, 1
    %s112 = scalar_select %p109, %s110, %s111
    %p115 = pneg %p109
    %p116 = scmp.eq.s32.totalorder %s10, 7
    %p117 = por %p115, %p116
    %p118 = scmp.ne.s32.totalorder %s110, %s113
    %p119 = scmp.eq.s32.totalorder %s10, 0
    %p120 = por %p118, %p119
    %p121 = scmp.ne.s32.totalorder %s110, %s113
    %p122 = scmp.eq.s32.totalorder %s15, 7
    %p123 = por %p121, %p122
    %p124 = scmp.ne.s32.totalorder %s113, %s114
    %p125 = scmp.eq.s32.totalorder %s15, 0
    %p126 = por %p124, %p125
    %p127 = scmp.ne.s32.totalorder %s113, %s114
    %p128 = scmp.eq.s32.totalorder %s16, 7
    %p129 = por %p127, %p128
    %p131 = scmp.ne.s32.totalorder %s114, %s130
    %p132 = scmp.eq.s32.totalorder %s16, 0
    %p133 = por %p131, %p132
    %s134 = ssub.s32 %s17, %s29
    %s135 = ssub.s32 %s18, %s25
    %s136 = sor.u32 %s134, %s135
    %p137 = scmp.eq.s32.totalorder %s136, 0
    %s139 = sadd.s32 %s138, 1
    %s140 = scalar_select %p137, %s138, %s139
    %p143 = pneg %p137
    %p144 = scmp.eq.s32.totalorder %s10, 7
    %p145 = por %p143, %p144
    %p146 = scmp.ne.s32.totalorder %s138, %s141
    %p147 = scmp.eq.s32.totalorder %s10, 0
    %p148 = por %p146, %p147
    %p149 = scmp.ne.s32.totalorder %s138, %s141
    %p150 = scmp.eq.s32.totalorder %s15, 7
    %p151 = por %p149, %p150
    %p152 = scmp.ne.s32.totalorder %s141, %s142
    %p153 = scmp.eq.s32.totalorder %s15, 0
    %p154 = por %p152, %p153
    %p155 = scmp.ne.s32.totalorder %s141, %s142
    %p156 = scmp.eq.s32.totalorder %s16, 7
    %p157 = por %p155, %p156
    %p159 = scmp.ne.s32.totalorder %s142, %s158
    %p160 = scmp.eq.s32.totalorder %s16, 0
    %p161 = por %p159, %p160
    %p162 = scmp.le.s32.totalorder 1, %s10
    %p163 = scmp.lt.s32.totalorder %s10, 9
    %p164 = pnand %p162, %p163
    %p165 = pneg %p164
    // Predicated region
    $region9: #{forward.11} parent=5 // pred_check
      _
    $region10: #{forward.11} parent=5 // pred_check_branch
      %167 = sbr.rel (%p164) target = $region12
    $region11: #{forward.11} parent=5 // pred_region
      %s168 = ssub.s32 %s10, 1
      // Predicated region
      $region13: #{forward.11} parent=11 // pred_check
        %p169 = pneg %p74
      $region14: #{forward.11} parent=11 // pred_check_branch
        %171 = sbr.rel (%p169) target = $region16
      $region15: #{forward.11} parent=11 // pred_region
        %p172 = scmp.lt.s32.totalorder %s20, 0
        %s173 = scalar_select %p172, %s20, 0
        %s174 = smul.addr %s173, 4
        %s175 = scalar_lea.vmem %s1, %s174
      $region16: #{forward.11} parent=11 // pred_fallthru
        _
      // Predicated region
      $region17: #{forward.11} parent=11 // pred_check
        %p176 = pneg %p100
      $region18: #{forward.11} parent=11 // pred_check_branch
        %178 = sbr.rel (%p176) target = $region20
      $region19: #{forward.11} parent=11 // pred_region
        %p179 = scmp.lt.s32.totalorder %s20, 0
        %s180 = scalar_select %p179, %s20, 0
        %s181 = scalar_lea.vmem %s2, %s180
      $region20: #{forward.11} parent=11 // pred_fallthru
        _
      // Predicated region
      $region21: #{forward.11} parent=11 // pred_check
        %p182 = pneg %p126
      $region22: #{forward.11} parent=11 // pred_check_branch
        %184 = sbr.rel (%p182) target = $region24
      $region23: #{forward.11} parent=11 // pred_region
        %p185 = scmp.lt.s32.totalorder %s20, 0
        %s186 = scalar_select %p185, %s20, 0
        %s187 = scalar_lea.vmem %s3, %s186
      $region24: #{forward.11} parent=11 // pred_fallthru
        _
    $region12: #{forward.11} parent=5 // pred_fallthru
      _
    %p188 = scmp.lt.s32.totalorder %s10, 8
    // Predicated region
    $region25: #{forward.11} parent=5 // pred_check
      %p189 = pneg %p188
    $region26: #{forward.11} parent=5 // pred_check_branch
      %191 = sbr.rel (%p189) target = $region28
    $region27: #{forward.11} parent=5 // pred_region
      // Predicated region
      $region29: #{forward.11} parent=27 // pred_check
        %p192 = pneg %p42
      $region30: #{forward.11} parent=27 // pred_check_branch
        %194 = sbr.rel (%p192) target = $region32
      $region31: #{forward.11} parent=27 // pred_region
        %s195 = smul.u32 32, %s17
        %p196 = scmp.lt.s32.totalorder %s195, 255
        %s197 = scalar_select %p196, %s195, 255
        %s198 = smul.addr %s197, 2
        %s199 = smul.addr %s198, 4
        %s200 = scalar_lea.vmem %s0, %s199
        %s201 = smul.u32 32, %s17
      $region32: #{forward.11} parent=27 // pred_fallthru
        _
    $region28: #{forward.11} parent=5 // pred_fallthru
      _
    %p202 = scmp.le.s32.totalorder 1, %s10
    %p203 = scmp.lt.s32.totalorder %s10, 9
    %p204 = pnand %p202, %p203
    %p205 = pneg %p204
    // Predicated region
    $region33: #{forward.11} parent=5 // pred_check
      _
    $region34: #{forward.11} parent=5 // pred_check_branch
      %207 = sbr.rel (%p204) target = $region36
    $region35: #{forward.11} parent=5 // pred_region
      %s208 = ssub.s32 %s10, 1
      %s209 = smul.u32 32, %s19
      %p210 = scmp.lt.s32.totalorder %s209, 255
      %s211 = scalar_select %p210, %s209, 255
      %s212 = smul.addr %s211, 2
      %s213 = smul.addr %s212, 4
      %s214 = scalar_lea.vmem %s0, %s213
      %p215 = pneg %p48
      %p216 = pneg %p45
      %p217 = scmp.lt.s32.totalorder %s20, 0
      %s218 = scalar_select %p217, %s20, 0
      %s219 = smul.addr %s218, 4
      %s220 = scalar_lea.vmem %s1, %s219
      %p221 = pneg %p74
      %p222 = pneg %p71
      %p223 = scmp.lt.s32.totalorder %s20, 0
      %s224 = scalar_select %p223, %s20, 0
      %s225 = scalar_lea.vmem %s2, %s224
      %p226 = pneg %p100
      %p227 = pneg %p97
      %p228 = scmp.lt.s32.totalorder %s20, 0
      %s229 = scalar_select %p228, %s20, 0
      %s230 = scalar_lea.vmem %s3, %s229
      %p231 = pneg %p126
      %p232 = pneg %p123
      %p233 = pneg %p154
      %p234 = pneg %p151
      %s235 = smul.u32 32, %s19
      %p236 = scmp.lt.s32.totalorder %s235, 255
      %s237 = scalar_select %p236, %s235, 255
      %p238 = scmp.lt.s32.totalorder %s20, 0
      %s239 = scalar_select %p238, %s20, 0
      %s240 = sadd.s32 %s239, %s237
      %s241 = smul.addr %s240, 4
      %s242 = scalar_lea.vmem %s4, %s241
      %s243 = smul.u32 32, %s19
      %p244 = scmp.lt.s32.totalorder %s243, 255
      %s245 = scalar_select %p244, %s243, 255
      %s246 = smul.addr %s245, 2
      %s247 = smul.addr %s246, 4
      %s248 = scalar_lea.vmem %s0, %s247
      %s249 = smul.u32 32, %s19
      %p250 = scmp.lt.s32.totalorder %s20, 0
      %s251 = scalar_select %p250, %s20, 0
      %s252 = smul.addr %s251, 4
      %s253 = scalar_lea.vmem %s1, %s252
      %p254 = scmp.lt.s32.totalorder %s20, 0
      %s255 = scalar_select %p254, %s20, 0
      %s256 = scalar_lea.vmem %s2, %s255
      %p257 = scmp.lt.s32.totalorder %s20, 0
      %s258 = scalar_select %p257, %s20, 0
      %s259 = scalar_lea.vmem %s3, %s258
      %s260 = smul.u32 32, %s19
      %p261 = scmp.lt.s32.totalorder %s260, 255
      %s262 = scalar_select %p261, %s260, 255
      %p263 = scmp.lt.s32.totalorder %s20, 0
      %s264 = scalar_select %p263, %s20, 0
      %s265 = sadd.s32 %s264, %s262
      %s266 = smul.addr %s265, 4
      %s267 = scalar_lea.vmem %s4, %s266
      %s268 = smul.u32 32, %s19
      %v269 = vld [vmem:[%s248] sm:$0xff]
      %v270 = vld [vmem:[%s248 + $0x8] sm:$0xff]
      %v271 = vld [vmem:[%s248 + $0x10] sm:$0xff]
      %v272 = vld [vmem:[%s248 + $0x18] sm:$0xff]
      %v273 = vld [vmem:[%s248 + $0x20] sm:$0xff]
      %v274 = vld [vmem:[%s248 + $0x28] sm:$0xff]
      %v275 = vld [vmem:[%s248 + $0x30] sm:$0xff]
      %v276 = vld [vmem:[%s248 + $0x38] sm:$0xff]
      %v277 = vld [vmem:[%s248 + $0x40] sm:$0xff]
      %v278 = vld [vmem:[%s248 + $0x48] sm:$0xff]
      %v279 = vld [vmem:[%s248 + $0x50] sm:$0xff]
      %v280 = vld [vmem:[%s248 + $0x58] sm:$0xff]
      %v281 = vld [vmem:[%s248 + $0x60] sm:$0xff]
      %v282 = vld [vmem:[%s248 + $0x68] sm:$0xff]
      %v283 = vld [vmem:[%s248 + $0x70] sm:$0xff]
      %v284 = vld [vmem:[%s248 + $0x78] sm:$0xff]
      %v285 = vld [vmem:[%s248 + $0x80] sm:$0xff]
      %v286 = vld [vmem:[%s248 + $0x88] sm:$0xff]
      %v287 = vld [vmem:[%s248 + $0x90] sm:$0xff]
      %v288 = vld [vmem:[%s248 + $0x98] sm:$0xff]
      %v289 = vld [vmem:[%s248 + $0xa0] sm:$0xff]
      %v290 = vld [vmem:[%s248 + $0xa8] sm:$0xff]
      %v291 = vld [vmem:[%s248 + $0xb0] sm:$0xff]
      %v292 = vld [vmem:[%s248 + $0xb8] sm:$0xff]
      %v293 = vld [vmem:[%s248 + $0xc0] sm:$0xff]
      %v294 = vld [vmem:[%s248 + $0xc8] sm:$0xff]
      %v295 = vld [vmem:[%s248 + $0xd0] sm:$0xff]
      %v296 = vld [vmem:[%s248 + $0xd8] sm:$0xff]
      %v297 = vld [vmem:[%s248 + $0xe0] sm:$0xff]
      %v298 = vld [vmem:[%s248 + $0xe8] sm:$0xff]
      %v299 = vld [vmem:[%s248 + $0xf0] sm:$0xff]
      %v300 = vld [vmem:[%s248 + $0xf8] sm:$0xff]
      %v301 = vld [vmem:[%s253] sm:$0xf]
      %v302 = vld [vmem:[%s253 + $0x4] sm:$0xf]
      %v303 = vld [vmem:[%s253 + $0x8] sm:$0xf]
      %v304 = vld [vmem:[%s253 + $0xc] sm:$0xf]
      %v305 = vld [vmem:[%s253 + $0x10] sm:$0xf]
      %v306 = vld [vmem:[%s253 + $0x14] sm:$0xf]
      %v307 = vld [vmem:[%s253 + $0x18] sm:$0xf]
      %v308 = vld [vmem:[%s253 + $0x1c] sm:$0xf]
      %v309 = vld [vmem:[%s253 + $0x20] sm:$0xf]
      %v310 = vld [vmem:[%s253 + $0x24] sm:$0xf]
      %v311 = vld [vmem:[%s253 + $0x28] sm:$0xf]
      %v312 = vld [vmem:[%s253 + $0x2c] sm:$0xf]
      %v313 = vld [vmem:[%s253 + $0x30] sm:$0xf]
      %v314 = vld [vmem:[%s253 + $0x34] sm:$0xf]
      %v315 = vld [vmem:[%s253 + $0x38] sm:$0xf]
      %v316 = vld [vmem:[%s253 + $0x3c] sm:$0xf]
      %v317 = vld [vmem:[%s253 + $0x40] sm:$0xf]
      %v318 = vld [vmem:[%s253 + $0x44] sm:$0xf]
      %v319 = vld [vmem:[%s253 + $0x48] sm:$0xf]
      %v320 = vld [vmem:[%s253 + $0x4c] sm:$0xf]
      %v321 = vld [vmem:[%s253 + $0x50] sm:$0xf]
      %v322 = vld [vmem:[%s253 + $0x54] sm:$0xf]
      %v323 = vld [vmem:[%s253 + $0x58] sm:$0xf]
      %v324 = vld [vmem:[%s253 + $0x5c] sm:$0xf]
      %v325 = vld [vmem:[%s253 + $0x60] sm:$0xf]
      %v326 = vld [vmem:[%s253 + $0x64] sm:$0xf]
      %v327 = vld [vmem:[%s253 + $0x68] sm:$0xf]
      %v328 = vld [vmem:[%s253 + $0x6c] sm:$0xf]
      %v329 = vld [vmem:[%s253 + $0x70] sm:$0xf]
      %v330 = vld [vmem:[%s253 + $0x74] sm:$0xf]
      %v331 = vld [vmem:[%s253 + $0x78] sm:$0xf]
      %v332 = vld [vmem:[%s253 + $0x7c] sm:$0xf]
      %v365 = vunpack.c.l.b16 %v269
      %v366 = vunpack.c.h.b16 %v269
      %v367 = vunpack.c.l.b16 %v270
      %v368 = vunpack.c.h.b16 %v270
      %v369 = vunpack.c.l.b16 %v271
      %v370 = vunpack.c.h.b16 %v271
      %v371 = vunpack.c.l.b16 %v272
      %v372 = vunpack.c.h.b16 %v272
      %v373 = vunpack.c.l.b16 %v273
      %v374 = vunpack.c.h.b16 %v273
      %v375 = vunpack.c.l.b16 %v274
      %v376 = vunpack.c.h.b16 %v274
      %v377 = vunpack.c.l.b16 %v275
      %v378 = vunpack.c.h.b16 %v275
      %v379 = vunpack.c.l.b16 %v276
      %v380 = vunpack.c.h.b16 %v276
      %v381 = vunpack.c.l.b16 %v277
      %v382 = vunpack.c.h.b16 %v277
      %v383 = vunpack.c.l.b16 %v278
      %v384 = vunpack.c.h.b16 %v278
      %v385 = vunpack.c.l.b16 %v279
      %v386 = vunpack.c.h.b16 %v279
      %v387 = vunpack.c.l.b16 %v280
      %v388 = vunpack.c.h.b16 %v280
      %v389 = vunpack.c.l.b16 %v281
      %v390 = vunpack.c.h.b16 %v281
      %v391 = vunpack.c.l.b16 %v282
      %v392 = vunpack.c.h.b16 %v282
      %v393 = vunpack.c.l.b16 %v283
      %v394 = vunpack.c.h.b16 %v283
      %v395 = vunpack.c.l.b16 %v284
      %v396 = vunpack.c.h.b16 %v284
      %v397 = vunpack.c.l.b16 %v285
      %v398 = vunpack.c.h.b16 %v285
      %v399 = vunpack.c.l.b16 %v286
      %v400 = vunpack.c.h.b16 %v286
      %v401 = vunpack.c.l.b16 %v287
      %v402 = vunpack.c.h.b16 %v287
      %v403 = vunpack.c.l.b16 %v288
      %v404 = vunpack.c.h.b16 %v288
      %v405 = vunpack.c.l.b16 %v289
      %v406 = vunpack.c.h.b16 %v289
      %v407 = vunpack.c.l.b16 %v290
      %v408 = vunpack.c.h.b16 %v290
      %v409 = vunpack.c.l.b16 %v291
      %v410 = vunpack.c.h.b16 %v291
      %v411 = vunpack.c.l.b16 %v292
      %v412 = vunpack.c.h.b16 %v292
      %v413 = vunpack.c.l.b16 %v293
      %v414 = vunpack.c.h.b16 %v293
      %v415 = vunpack.c.l.b16 %v294
      %v416 = vunpack.c.h.b16 %v294
      %v417 = vunpack.c.l.b16 %v295
      %v418 = vunpack.c.h.b16 %v295
      %v419 = vunpack.c.l.b16 %v296
      %v420 = vunpack.c.h.b16 %v296
      %v421 = vunpack.c.l.b16 %v297
      %v422 = vunpack.c.h.b16 %v297
      %v423 = vunpack.c.l.b16 %v298
      %v424 = vunpack.c.h.b16 %v298
      %v425 = vunpack.c.l.b16 %v299
      %v426 = vunpack.c.h.b16 %v299
      %v427 = vunpack.c.l.b16 %v300
      %v428 = vunpack.c.h.b16 %v300
      %v429 = vpack.c.b16 %v367, %v365
      %v430 = vpack.c.b16 %v368, %v366
      %v431 = vpack.c.b16 %v371, %v369
      %v432 = vpack.c.b16 %v372, %v370
      %v433 = vpack.c.b16 %v375, %v373
      %v434 = vpack.c.b16 %v376, %v374
      %v435 = vpack.c.b16 %v379, %v377
      %v436 = vpack.c.b16 %v380, %v378
      %v437 = vpack.c.b16 %v383, %v381
      %v438 = vpack.c.b16 %v384, %v382
      %v439 = vpack.c.b16 %v387, %v385
      %v440 = vpack.c.b16 %v388, %v386
      %v441 = vpack.c.b16 %v391, %v389
      %v442 = vpack.c.b16 %v392, %v390
      %v443 = vpack.c.b16 %v395, %v393
      %v444 = vpack.c.b16 %v396, %v394
      %v445 = vpack.c.b16 %v399, %v397
      %v446 = vpack.c.b16 %v400, %v398
      %v447 = vpack.c.b16 %v403, %v401
      %v448 = vpack.c.b16 %v404, %v402
      %v449 = vpack.c.b16 %v407, %v405
      %v450 = vpack.c.b16 %v408, %v406
      %v451 = vpack.c.b16 %v411, %v409
      %v452 = vpack.c.b16 %v412, %v410
      %v453 = vpack.c.b16 %v415, %v413
      %v454 = vpack.c.b16 %v416, %v414
      %v455 = vpack.c.b16 %v419, %v417
      %v456 = vpack.c.b16 %v420, %v418
      %v457 = vpack.c.b16 %v423, %v421
      %v458 = vpack.c.b16 %v424, %v422
      %v459 = vpack.c.b16 %v427, %v425
      %v460 = vpack.c.b16 %v428, %v426
      %v525 = vunpack.c.l.b16 %v301
      %v526 = vunpack.c.l.b16 %v302
      %v527 = vunpack.c.l.b16 %v303
      %v528 = vunpack.c.l.b16 %v304
      %v529 = vunpack.c.l.b16 %v305
      %v530 = vunpack.c.l.b16 %v306
      %v531 = vunpack.c.l.b16 %v307
      %v532 = vunpack.c.l.b16 %v308
      %v533 = vunpack.c.l.b16 %v309
      %v534 = vunpack.c.l.b16 %v310
      %v535 = vunpack.c.l.b16 %v311
      %v536 = vunpack.c.l.b16 %v312
      %v537 = vunpack.c.l.b16 %v313
      %v538 = vunpack.c.l.b16 %v314
      %v539 = vunpack.c.l.b16 %v315
      %v540 = vunpack.c.l.b16 %v316
      %v541 = vunpack.c.l.b16 %v317
      %v542 = vunpack.c.l.b16 %v318
      %v543 = vunpack.c.l.b16 %v319
      %v544 = vunpack.c.l.b16 %v320
      %v545 = vunpack.c.l.b16 %v321
      %v546 = vunpack.c.l.b16 %v322
      %v547 = vunpack.c.l.b16 %v323
      %v548 = vunpack.c.l.b16 %v324
      %v549 = vunpack.c.l.b16 %v325
      %v550 = vunpack.c.l.b16 %v326
      %v551 = vunpack.c.l.b16 %v327
      %v552 = vunpack.c.l.b16 %v328
      %v553 = vunpack.c.l.b16 %v329
      %v554 = vunpack.c.l.b16 %v330
      %v555 = vunpack.c.l.b16 %v331
      %v556 = vunpack.c.l.b16 %v332
      %v557 = vpack.c.b16 %v526, %v525
      %v558 = vpack.c.b16 %v528, %v527
      %v559 = vpack.c.b16 %v530, %v529
      %v560 = vpack.c.b16 %v532, %v531
      %v561 = vpack.c.b16 %v534, %v533
      %v562 = vpack.c.b16 %v536, %v535
      %v563 = vpack.c.b16 %v538, %v537
      %v564 = vpack.c.b16 %v540, %v539
      %v565 = vpack.c.b16 %v542, %v541
      %v566 = vpack.c.b16 %v544, %v543
      %v567 = vpack.c.b16 %v546, %v545
      %v568 = vpack.c.b16 %v548, %v547
      %v569 = vpack.c.b16 %v550, %v549
      %v570 = vpack.c.b16 %v552, %v551
      %v571 = vpack.c.b16 %v554, %v553
      %v572 = vpack.c.b16 %v556, %v555
      %589 = vmatpush.bf16.msra.mxu0 %v564
      %590 = vmatpush.bf16.msra.mxu0 %v563
      %591 = vmatpush.bf16.msra.mxu0 %v562
      %592 = vmatpush.bf16.msra.mxu0 %v561
      %593 = vmatpush.bf16.msra.mxu0 %v560
      %594 = vmatpush.bf16.msra.mxu0 %v559
      %595 = vmatpush.bf16.msra.mxu0 %v558
      %596 = vmatpush.bf16.msra.mxu0 %v557
      %597 = vmatmul.bf16.gmra.mxu0 %v429
      %v598 = vpop.f32.mrf.mxu0
      %v599 = vadd.f32 0.0, %v598
      %v600 = vpop.f32.mrf.mxu0
      %v601 = vadd.f32 0.0, %v600
      %602 = vmatmul.bf16.gmra.mxu0 %v431
      %v603 = vpop.f32.mrf.mxu0
      %v604 = vadd.f32 0.0, %v603
      %v605 = vpop.f32.mrf.mxu0
      %v606 = vadd.f32 0.0, %v605
      %607 = vmatmul.bf16.gmra.mxu0 %v433
      %v608 = vpop.f32.mrf.mxu0
      %v609 = vadd.f32 0.0, %v608
      %v610 = vpop.f32.mrf.mxu0
      %v611 = vadd.f32 0.0, %v610
      %612 = vmatmul.bf16.gmra.mxu0 %v435
      %v613 = vpop.f32.mrf.mxu0
      %v614 = vadd.f32 0.0, %v613
      %v615 = vpop.f32.mrf.mxu0
      %v616 = vadd.f32 0.0, %v615
      %617 = vmatmul.bf16.gmra.mxu0 %v437
      %v618 = vpop.f32.mrf.mxu0
      %v619 = vadd.f32 0.0, %v618
      %v620 = vpop.f32.mrf.mxu0
      %v621 = vadd.f32 0.0, %v620
      %622 = vmatmul.bf16.gmra.mxu0 %v439
      %v623 = vpop.f32.mrf.mxu0
      %v624 = vadd.f32 0.0, %v623
      %v625 = vpop.f32.mrf.mxu0
      %v626 = vadd.f32 0.0, %v625
      %627 = vmatmul.bf16.gmra.mxu0 %v441
      %v628 = vpop.f32.mrf.mxu0
      %v629 = vadd.f32 0.0, %v628
      %v630 = vpop.f32.mrf.mxu0
      %v631 = vadd.f32 0.0, %v630
      %632 = vmatmul.bf16.gmra.mxu0 %v443
      %v633 = vpop.f32.mrf.mxu0
      %v634 = vadd.f32 0.0, %v633
      %v635 = vpop.f32.mrf.mxu0
      %v636 = vadd.f32 0.0, %v635
      %637 = vmatmul.bf16.gmra.mxu0 %v445
      %v638 = vpop.f32.mrf.mxu0
      %v639 = vadd.f32 0.0, %v638
      %v640 = vpop.f32.mrf.mxu0
      %v641 = vadd.f32 0.0, %v640
      %642 = vmatmul.bf16.gmra.mxu0 %v447
      %v643 = vpop.f32.mrf.mxu0
      %v644 = vadd.f32 0.0, %v643
      %v645 = vpop.f32.mrf.mxu0
      %v646 = vadd.f32 0.0, %v645
      %647 = vmatmul.bf16.gmra.mxu0 %v449
      %v648 = vpop.f32.mrf.mxu0
      %v649 = vadd.f32 0.0, %v648
      %v650 = vpop.f32.mrf.mxu0
      %v651 = vadd.f32 0.0, %v650
      %652 = vmatmul.bf16.gmra.mxu0 %v451
      %v653 = vpop.f32.mrf.mxu0
      %v654 = vadd.f32 0.0, %v653
      %v655 = vpop.f32.mrf.mxu0
      %v656 = vadd.f32 0.0, %v655
      %657 = vmatmul.bf16.gmra.mxu0 %v453
      %v658 = vpop.f32.mrf.mxu0
      %v659 = vadd.f32 0.0, %v658
      %v660 = vpop.f32.mrf.mxu0
      %v661 = vadd.f32 0.0, %v660
      %662 = vmatmul.bf16.gmra.mxu0 %v455
      %v663 = vpop.f32.mrf.mxu0
      %v664 = vadd.f32 0.0, %v663
      %v665 = vpop.f32.mrf.mxu0
      %v666 = vadd.f32 0.0, %v665
      %667 = vmatmul.bf16.gmra.mxu0 %v457
      %v668 = vpop.f32.mrf.mxu0
      %v669 = vadd.f32 0.0, %v668
      %v670 = vpop.f32.mrf.mxu0
      %v671 = vadd.f32 0.0, %v670
      %672 = vmatmul.bf16.gmra.mxu0 %v459
      %v673 = vpop.f32.mrf.mxu0
      %v674 = vadd.f32 0.0, %v673
      %v675 = vpop.f32.mrf.mxu0
      %v676 = vadd.f32 0.0, %v675
      %677 = vdwg.mxu0
      %678 = vmatpush.bf16.msra.mxu0 %v572
      %679 = vmatpush.bf16.msra.mxu0 %v571
      %680 = vmatpush.bf16.msra.mxu0 %v570
      %681 = vmatpush.bf16.msra.mxu0 %v569
      %682 = vmatpush.bf16.msra.mxu0 %v568
      %683 = vmatpush.bf16.msra.mxu0 %v567
      %684 = vmatpush.bf16.msra.mxu0 %v566
      %685 = vmatpush.bf16.msra.mxu0 %v565
      %686 = vmatmul.bf16.gmra.mxu0 %v430
      %v687 = vpop.f32.mrf.mxu0
      %v688 = vadd.f32 %v599, %v687
      %v689 = vpop.f32.mrf.mxu0
      %v690 = vadd.f32 %v601, %v689
      %691 = vmatmul.bf16.gmra.mxu0 %v432
      %v692 = vpop.f32.mrf.mxu0
      %v693 = vadd.f32 %v604, %v692
      %v694 = vpop.f32.mrf.mxu0
      %v695 = vadd.f32 %v606, %v694
      %696 = vmatmul.bf16.gmra.mxu0 %v434
      %v697 = vpop.f32.mrf.mxu0
      %v698 = vadd.f32 %v609, %v697
      %v699 = vpop.f32.mrf.mxu0
      %v700 = vadd.f32 %v611, %v699
      %701 = vmatmul.bf16.gmra.mxu0 %v436
      %v702 = vpop.f32.mrf.mxu0
      %v703 = vadd.f32 %v614, %v702
      %v704 = vpop.f32.mrf.mxu0
      %v705 = vadd.f32 %v616, %v704
      %706 = vmatmul.bf16.gmra.mxu0 %v438
      %v707 = vpop.f32.mrf.mxu0
      %v708 = vadd.f32 %v619, %v707
      %v709 = vpop.f32.mrf.mxu0
      %v710 = vadd.f32 %v621, %v709
      %711 = vmatmul.bf16.gmra.mxu0 %v440
      %v712 = vpop.f32.mrf.mxu0
      %v713 = vadd.f32 %v624, %v712
      %v714 = vpop.f32.mrf.mxu0
      %v715 = vadd.f32 %v626, %v714
      %716 = vmatmul.bf16.gmra.mxu0 %v442
      %v717 = vpop.f32.mrf.mxu0
      %v718 = vadd.f32 %v629, %v717
      %v719 = vpop.f32.mrf.mxu0
      %v720 = vadd.f32 %v631, %v719
      %721 = vmatmul.bf16.gmra.mxu0 %v444
      %v722 = vpop.f32.mrf.mxu0
      %v723 = vadd.f32 %v634, %v722
      %v724 = vpop.f32.mrf.mxu0
      %v725 = vadd.f32 %v636, %v724
      %726 = vmatmul.bf16.gmra.mxu0 %v446
      %v727 = vpop.f32.mrf.mxu0
      %v728 = vadd.f32 %v639, %v727
      %v729 = vpop.f32.mrf.mxu0
      %v730 = vadd.f32 %v641, %v729
      %731 = vmatmul.bf16.gmra.mxu0 %v448
      %v732 = vpop.f32.mrf.mxu0
      %v733 = vadd.f32 %v644, %v732
      %v734 = vpop.f32.mrf.mxu0
      %v735 = vadd.f32 %v646, %v734
      %736 = vmatmul.bf16.gmra.mxu0 %v450
      %v737 = vpop.f32.mrf.mxu0
      %v738 = vadd.f32 %v649, %v737
      %v739 = vpop.f32.mrf.mxu0
      %v740 = vadd.f32 %v651, %v739
      %741 = vmatmul.bf16.gmra.mxu0 %v452
      %v742 = vpop.f32.mrf.mxu0
      %v743 = vadd.f32 %v654, %v742
      %v744 = vpop.f32.mrf.mxu0
      %v745 = vadd.f32 %v656, %v744
      %746 = vmatmul.bf16.gmra.mxu0 %v454
      %v747 = vpop.f32.mrf.mxu0
      %v748 = vadd.f32 %v659, %v747
      %v749 = vpop.f32.mrf.mxu0
      %v750 = vadd.f32 %v661, %v749
      %751 = vmatmul.bf16.gmra.mxu0 %v456
      %v752 = vpop.f32.mrf.mxu0
      %v753 = vadd.f32 %v664, %v752
      %v754 = vpop.f32.mrf.mxu0
      %v755 = vadd.f32 %v666, %v754
      %756 = vmatmul.bf16.gmra.mxu0 %v458
      %v757 = vpop.f32.mrf.mxu0
      %v758 = vadd.f32 %v669, %v757
      %v759 = vpop.f32.mrf.mxu0
      %v760 = vadd.f32 %v671, %v759
      %761 = vmatmul.bf16.gmra.mxu0 %v460
      %v762 = vpop.f32.mrf.mxu0
      %v763 = vadd.f32 %v674, %v762
      %v764 = vpop.f32.mrf.mxu0
      %v765 = vadd.f32 %v676, %v764
      %766 = vdwg.mxu0
      %v767 = vld [vmem:[%s256] sm:$0x1]
      %v769 = vperm.slane %v767, 0
      %v771 = vmul.f32 %v688, %v769
      %v772 = vmul.f32 %v690, %v769
      %v773 = vmul.f32 %v693, %v769
      %v774 = vmul.f32 %v695, %v769
      %v775 = vmul.f32 %v698, %v769
      %v776 = vmul.f32 %v700, %v769
      %v777 = vmul.f32 %v703, %v769
      %v778 = vmul.f32 %v705, %v769
      %v779 = vmul.f32 %v708, %v769
      %v780 = vmul.f32 %v710, %v769
      %v781 = vmul.f32 %v713, %v769
      %v782 = vmul.f32 %v715, %v769
      %v783 = vmul.f32 %v718, %v769
      %v784 = vmul.f32 %v720, %v769
      %v785 = vmul.f32 %v723, %v769
      %v786 = vmul.f32 %v725, %v769
      %v787 = vmul.f32 %v728, %v769
      %v788 = vmul.f32 %v730, %v769
      %v789 = vmul.f32 %v733, %v769
      %v790 = vmul.f32 %v735, %v769
      %v791 = vmul.f32 %v738, %v769
      %v792 = vmul.f32 %v740, %v769
      %v793 = vmul.f32 %v743, %v769
      %v794 = vmul.f32 %v745, %v769
      %v795 = vmul.f32 %v748, %v769
      %v796 = vmul.f32 %v750, %v769
      %v797 = vmul.f32 %v753, %v769
      %v798 = vmul.f32 %v755, %v769
      %v799 = vmul.f32 %v758, %v769
      %v800 = vmul.f32 %v760, %v769
      %v801 = vmul.f32 %v763, %v769
      %v802 = vmul.f32 %v765, %v769
      %v803 = vld [vmem:[%s259] sm:$0x1]
      %v805 = vperm.slane %v803, 0
      %v807 = vadd.f32 %v771, %v805
      %v808 = vadd.f32 %v772, %v805
      %v809 = vadd.f32 %v773, %v805
      %v810 = vadd.f32 %v774, %v805
      %v811 = vadd.f32 %v775, %v805
      %v812 = vadd.f32 %v776, %v805
      %v813 = vadd.f32 %v777, %v805
      %v814 = vadd.f32 %v778, %v805
      %v815 = vadd.f32 %v779, %v805
      %v816 = vadd.f32 %v780, %v805
      %v817 = vadd.f32 %v781, %v805
      %v818 = vadd.f32 %v782, %v805
      %v819 = vadd.f32 %v783, %v805
      %v820 = vadd.f32 %v784, %v805
      %v821 = vadd.f32 %v785, %v805
      %v822 = vadd.f32 %v786, %v805
      %v823 = vadd.f32 %v787, %v805
      %v824 = vadd.f32 %v788, %v805
      %v825 = vadd.f32 %v789, %v805
      %v826 = vadd.f32 %v790, %v805
      %v827 = vadd.f32 %v791, %v805
      %v828 = vadd.f32 %v792, %v805
      %v829 = vadd.f32 %v793, %v805
      %v830 = vadd.f32 %v794, %v805
      %v831 = vadd.f32 %v795, %v805
      %v832 = vadd.f32 %v796, %v805
      %v833 = vadd.f32 %v797, %v805
      %v834 = vadd.f32 %v798, %v805
      %v835 = vadd.f32 %v799, %v805
      %v836 = vadd.f32 %v800, %v805
      %v837 = vadd.f32 %v801, %v805
      %v838 = vadd.f32 %v802, %v805
      %v839 = vmax.f32 %v807, 0.0
      %v840 = vmax.f32 %v808, 0.0
      %v841 = vmax.f32 %v809, 0.0
      %v842 = vmax.f32 %v810, 0.0
      %v843 = vmax.f32 %v811, 0.0
      %v844 = vmax.f32 %v812, 0.0
      %v845 = vmax.f32 %v813, 0.0
      %v846 = vmax.f32 %v814, 0.0
      %v847 = vmax.f32 %v815, 0.0
      %v848 = vmax.f32 %v816, 0.0
      %v849 = vmax.f32 %v817, 0.0
      %v850 = vmax.f32 %v818, 0.0
      %v851 = vmax.f32 %v819, 0.0
      %v852 = vmax.f32 %v820, 0.0
      %v853 = vmax.f32 %v821, 0.0
      %v854 = vmax.f32 %v822, 0.0
      %v855 = vmax.f32 %v823, 0.0
      %v856 = vmax.f32 %v824, 0.0
      %v857 = vmax.f32 %v825, 0.0
      %v858 = vmax.f32 %v826, 0.0
      %v859 = vmax.f32 %v827, 0.0
      %v860 = vmax.f32 %v828, 0.0
      %v861 = vmax.f32 %v829, 0.0
      %v862 = vmax.f32 %v830, 0.0
      %v863 = vmax.f32 %v831, 0.0
      %v864 = vmax.f32 %v832, 0.0
      %v865 = vmax.f32 %v833, 0.0
      %v866 = vmax.f32 %v834, 0.0
      %v867 = vmax.f32 %v835, 0.0
      %v868 = vmax.f32 %v836, 0.0
      %v869 = vmax.f32 %v837, 0.0
      %v870 = vmax.f32 %v838, 0.0
      %v871 = vpack.c.bf16 %v839, %v839
      %v872 = vpack.c.bf16 %v840, %v840
      %v873 = vpack.c.bf16 %v841, %v841
      %v874 = vpack.c.bf16 %v842, %v842
      %v875 = vpack.c.bf16 %v843, %v843
      %v876 = vpack.c.bf16 %v844, %v844
      %v877 = vpack.c.bf16 %v845, %v845
      %v878 = vpack.c.bf16 %v846, %v846
      %v879 = vpack.c.bf16 %v847, %v847
      %v880 = vpack.c.bf16 %v848, %v848
      %v881 = vpack.c.bf16 %v849, %v849
      %v882 = vpack.c.bf16 %v850, %v850
      %v883 = vpack.c.bf16 %v851, %v851
      %v884 = vpack.c.bf16 %v852, %v852
      %v885 = vpack.c.bf16 %v853, %v853
      %v886 = vpack.c.bf16 %v854, %v854
      %v887 = vpack.c.bf16 %v855, %v855
      %v888 = vpack.c.bf16 %v856, %v856
      %v889 = vpack.c.bf16 %v857, %v857
      %v890 = vpack.c.bf16 %v858, %v858
      %v891 = vpack.c.bf16 %v859, %v859
      %v892 = vpack.c.bf16 %v860, %v860
      %v893 = vpack.c.bf16 %v861, %v861
      %v894 = vpack.c.bf16 %v862, %v862
      %v895 = vpack.c.bf16 %v863, %v863
      %v896 = vpack.c.bf16 %v864, %v864
      %v897 = vpack.c.bf16 %v865, %v865
      %v898 = vpack.c.bf16 %v866, %v866
      %v899 = vpack.c.bf16 %v867, %v867
      %v900 = vpack.c.bf16 %v868, %v868
      %v901 = vpack.c.bf16 %v869, %v869
      %v902 = vpack.c.bf16 %v870, %v870
      %903 = vst [vmem:[%s267] sm:$0xf] %v871
      %904 = vst [vmem:[%s267 + $0x4] sm:$0xf] %v872
      %905 = vst [vmem:[%s267 + $0x8] sm:$0xf] %v873
      %906 = vst [vmem:[%s267 + $0xc] sm:$0xf] %v874
      %907 = vst [vmem:[%s267 + $0x10] sm:$0xf] %v875
      %908 = vst [vmem:[%s267 + $0x14] sm:$0xf] %v876
      %909 = vst [vmem:[%s267 + $0x18] sm:$0xf] %v877
      %910 = vst [vmem:[%s267 + $0x1c] sm:$0xf] %v878
      %911 = vst [vmem:[%s267 + $0x20] sm:$0xf] %v879
      %912 = vst [vmem:[%s267 + $0x24] sm:$0xf] %v880
      %913 = vst [vmem:[%s267 + $0x28] sm:$0xf] %v881
      %914 = vst [vmem:[%s267 + $0x2c] sm:$0xf] %v882
      %915 = vst [vmem:[%s267 + $0x30] sm:$0xf] %v883
      %916 = vst [vmem:[%s267 + $0x34] sm:$0xf] %v884
      %917 = vst [vmem:[%s267 + $0x38] sm:$0xf] %v885
      %918 = vst [vmem:[%s267 + $0x3c] sm:$0xf] %v886
      %919 = vst [vmem:[%s267 + $0x40] sm:$0xf] %v887
      %920 = vst [vmem:[%s267 + $0x44] sm:$0xf] %v888
      %921 = vst [vmem:[%s267 + $0x48] sm:$0xf] %v889
      %922 = vst [vmem:[%s267 + $0x4c] sm:$0xf] %v890
      %923 = vst [vmem:[%s267 + $0x50] sm:$0xf] %v891
      %924 = vst [vmem:[%s267 + $0x54] sm:$0xf] %v892
      %925 = vst [vmem:[%s267 + $0x58] sm:$0xf] %v893
      %926 = vst [vmem:[%s267 + $0x5c] sm:$0xf] %v894
      %927 = vst [vmem:[%s267 + $0x60] sm:$0xf] %v895
      %928 = vst [vmem:[%s267 + $0x64] sm:$0xf] %v896
      %929 = vst [vmem:[%s267 + $0x68] sm:$0xf] %v897
      %930 = vst [vmem:[%s267 + $0x6c] sm:$0xf] %v898
      %931 = vst [vmem:[%s267 + $0x70] sm:$0xf] %v899
      %932 = vst [vmem:[%s267 + $0x74] sm:$0xf] %v900
      %933 = vst [vmem:[%s267 + $0x78] sm:$0xf] %v901
      %934 = vst [vmem:[%s267 + $0x7c] sm:$0xf] %v902
      %s935 = smul.u32 32, %s19
      %p936 = scmp.lt.s32.totalorder %s935, 255
      %s937 = scalar_select %p936, %s935, 255
      %p938 = scmp.lt.s32.totalorder %s20, 0
      %s939 = scalar_select %p938, %s20, 0
      %s940 = sadd.s32 %s939, %s937
      %s941 = smul.addr %s940, 4
      %s942 = scalar_lea.vmem %s4, %s941
      // Predicated region
      $region37: #{forward.11} parent=35 // pred_check
        %p943 = pneg %p151
      $region38: #{forward.11} parent=35 // pred_check_branch
        %945 = sbr.rel (%p943) target = $region40
      $region39: #{forward.11} parent=35 // pred_region
        %s946 = smul.u32 32, %s19
      $region40: #{forward.11} parent=35 // pred_fallthru
        _
    $region36: #{forward.11} parent=5 // pred_fallthru
      _
    %p947 = scmp.le.s32.totalorder 2, %s10
    // Predicated region
    $region41: #{forward.11} parent=5 // pred_check
      %p948 = pneg %p947
    $region42: #{forward.11} parent=5 // pred_check_branch
      %950 = sbr.rel (%p948) target = $region44
    $region43: #{forward.11} parent=5 // pred_region
      %s951 = ssub.s32 %s10, 2
      // Predicated region
      $region45: #{forward.11} parent=43 // pred_check
        %p952 = pneg %p157
      $region46: #{forward.11} parent=43 // pred_check_branch
        %954 = sbr.rel (%p952) target = $region48
      $region47: #{forward.11} parent=43 // pred_region
        %s955 = smul.u32 32, %s21
        %p956 = scmp.lt.s32.totalorder %s955, 255
        %s957 = scalar_select %p956, %s955, 255
        %p958 = scmp.lt.s32.totalorder %s22, 0
        %s959 = scalar_select %p958, %s22, 0
        %s960 = sadd.s32 %s959, %s957
        %s961 = smul.addr %s960, 4
        %s962 = scalar_lea.vmem %s4, %s961
      $region48: #{forward.11} parent=43 // pred_fallthru
        _
    $region44: #{forward.11} parent=5 // pred_fallthru
      _
  $region6: #{forward.11} parent=0 // loop_footer
    %s14 = sadd.s32 1, %s10
  $region7: #{forward.11} parent=0 // loop_footer_branch
    %9 = sbr.rel target = $region3
  $region8: #{forward.11} parent=0 // loop_exit
    _

// kernel: forward.12
$region0: #{forward.12}
  #allocation0 [shape = 'u32[]', space=smem, size = 0x4, offset = 0x4, fixed_abs, tag = 'smem constant byte address 0x4 - core index']
  #allocation1 [shape = 'u32[72,128]{1,0:T(1,128)}', space=vmem, size = 0x9000, scoped, tag = 'internal scratch']
  %s0 = inlined_call_operand.vmem [shape: bf16[2,17,17,64], index: 0, kind: input, shape index: {}]
  %s1 = inlined_call_operand.vmem [shape: bf16[2,17,17,64], index: 1, kind: input, shape index: {}]
  %s2 = inlined_call_operand.vmem [shape: bf16[2,17,17,64], index: 2, kind: input, shape index: {}]
  %s3 = inlined_call_operand.vmem [shape: bf16[2,17,17,64], index: 3, kind: input, shape index: {}]
  %s4 = inlined_call_operand.vmem [shape: bf16[2,16,16,64], index: 4, kind: output, shape index: {}]
  %s5 = sld [smem:[#allocation0]]
  $region49: #{forward.12} parent=0
    _
  %s7 = ssub.s32 1, %s5
  %s8 = scalar_select 0, %s7, %s5
  loop: start=0, step=1, limit=4
  $region2: #{forward.12} parent=0 // loop_pre_header
    _
  $region3: #{forward.12} parent=0 // loop_header
    %s10 = sphi 0, %s14
    %p11 = scmp.ge.s32.totalorder %s10, 4
    %s20 = sphi 0, %s22
    %s23 = sphi 0, %s20
    %s24 = sphi 0, %s23
    %s40 = sphi 0, %s24
    %s46 = sphi 0, %s48
    %s49 = sphi 0, %s46
    %s50 = sphi 0, %s49
    %s66 = sphi 0, %s50
    %s72 = sphi 0, %s74
    %s75 = sphi 0, %s72
    %s76 = sphi 0, %s75
    %s92 = sphi 0, %s76
    %s98 = sphi 0, %s100
    %s101 = sphi 0, %s98
    %s102 = sphi 0, %s101
    %s118 = sphi 0, %s102
    %s124 = sphi 0, %s126
    %s127 = sphi 0, %s124
    %s128 = sphi 0, %s127
    %s144 = sphi 0, %s128
  $region4: #{forward.12} parent=0 // loop_header_branch
    %13 = sbr.rel (%p11) target = $region8
  $region5: #{forward.12} parent=0 // loop_body
    %s15 = ssub.s32 %s10, 1
    %s16 = ssub.s32 %s10, 2
    %s17 = sadd.s32 %s10, 1
    %s18 = ssub.s32 %s10, %s17
    %p19 = scmp.eq.s32.totalorder %s18, 0
    %s21 = sadd.s32 %s20, 1
    %s22 = scalar_select %p19, %s20, %s21
    %p25 = pneg %p19
    %p26 = scmp.eq.s32.totalorder %s10, 1
    %p27 = por %p25, %p26
    %p28 = scmp.ne.s32.totalorder %s20, %s23
    %p29 = scmp.eq.s32.totalorder %s10, 0
    %p30 = por %p28, %p29
    %p31 = scmp.ne.s32.totalorder %s20, %s23
    %p32 = scmp.eq.s32.totalorder %s15, 1
    %p33 = por %p31, %p32
    %p34 = scmp.ne.s32.totalorder %s23, %s24
    %p35 = scmp.eq.s32.totalorder %s15, 0
    %p36 = por %p34, %p35
    %p37 = scmp.ne.s32.totalorder %s23, %s24
    %p38 = scmp.eq.s32.totalorder %s16, 1
    %p39 = por %p37, %p38
    %p41 = scmp.ne.s32.totalorder %s24, %s40
    %p42 = scmp.eq.s32.totalorder %s16, 0
    %p43 = por %p41, %p42
    %s44 = ssub.s32 %s10, %s17
    %p45 = scmp.eq.s32.totalorder %s44, 0
    %s47 = sadd.s32 %s46, 1
    %s48 = scalar_select %p45, %s46, %s47
    %p51 = pneg %p45
    %p52 = scmp.eq.s32.totalorder %s10, 1
    %p53 = por %p51, %p52
    %p54 = scmp.ne.s32.totalorder %s46, %s49
    %p55 = scmp.eq.s32.totalorder %s10, 0
    %p56 = por %p54, %p55
    %p57 = scmp.ne.s32.totalorder %s46, %s49
    %p58 = scmp.eq.s32.totalorder %s15, 1
    %p59 = por %p57, %p58
    %p60 = scmp.ne.s32.totalorder %s49, %s50
    %p61 = scmp.eq.s32.totalorder %s15, 0
    %p62 = por %p60, %p61
    %p63 = scmp.ne.s32.totalorder %s49, %s50
    %p64 = scmp.eq.s32.totalorder %s16, 1
    %p65 = por %p63, %p64
    %p67 = scmp.ne.s32.totalorder %s50, %s66
    %p68 = scmp.eq.s32.totalorder %s16, 0
    %p69 = por %p67, %p68
    %s70 = ssub.s32 %s10, %s17
    %p71 = scmp.eq.s32.totalorder %s70, 0
    %s73 = sadd.s32 %s72, 1
    %s74 = scalar_select %p71, %s72, %s73
    %p77 = pneg %p71
    %p78 = scmp.eq.s32.totalorder %s10, 1
    %p79 = por %p77, %p78
    %p80 = scmp.ne.s32.totalorder %s72, %s75
    %p81 = scmp.eq.s32.totalorder %s10, 0
    %p82 = por %p80, %p81
    %p83 = scmp.ne.s32.totalorder %s72, %s75
    %p84 = scmp.eq.s32.totalorder %s15, 1
    %p85 = por %p83, %p84
    %p86 = scmp.ne.s32.totalorder %s75, %s76
    %p87 = scmp.eq.s32.totalorder %s15, 0
    %p88 = por %p86, %p87
    %p89 = scmp.ne.s32.totalorder %s75, %s76
    %p90 = scmp.eq.s32.totalorder %s16, 1
    %p91 = por %p89, %p90
    %p93 = scmp.ne.s32.totalorder %s76, %s92
    %p94 = scmp.eq.s32.totalorder %s16, 0
    %p95 = por %p93, %p94
    %s96 = ssub.s32 %s10, %s17
    %p97 = scmp.eq.s32.totalorder %s96, 0
    %s99 = sadd.s32 %s98, 1
    %s100 = scalar_select %p97, %s98, %s99
    %p103 = pneg %p97
    %p104 = scmp.eq.s32.totalorder %s10, 1
    %p105 = por %p103, %p104
    %p106 = scmp.ne.s32.totalorder %s98, %s101
    %p107 = scmp.eq.s32.totalorder %s10, 0
    %p108 = por %p106, %p107
    %p109 = scmp.ne.s32.totalorder %s98, %s101
    %p110 = scmp.eq.s32.totalorder %s15, 1
    %p111 = por %p109, %p110
    %p112 = scmp.ne.s32.totalorder %s101, %s102
    %p113 = scmp.eq.s32.totalorder %s15, 0
    %p114 = por %p112, %p113
    %p115 = scmp.ne.s32.totalorder %s101, %s102
    %p116 = scmp.eq.s32.totalorder %s16, 1
    %p117 = por %p115, %p116
    %p119 = scmp.ne.s32.totalorder %s102, %s118
    %p120 = scmp.eq.s32.totalorder %s16, 0
    %p121 = por %p119, %p120
    %s122 = ssub.s32 %s10, %s17
    %p123 = scmp.eq.s32.totalorder %s122, 0
    %s125 = sadd.s32 %s124, 1
    %s126 = scalar_select %p123, %s124, %s125
    %p129 = pneg %p123
    %p130 = scmp.eq.s32.totalorder %s10, 1
    %p131 = por %p129, %p130
    %p132 = scmp.ne.s32.totalorder %s124, %s127
    %p133 = scmp.eq.s32.totalorder %s10, 0
    %p134 = por %p132, %p133
    %p135 = scmp.ne.s32.totalorder %s124, %s127
    %p136 = scmp.eq.s32.totalorder %s15, 1
    %p137 = por %p135, %p136
    %p138 = scmp.ne.s32.totalorder %s127, %s128
    %p139 = scmp.eq.s32.totalorder %s15, 0
    %p140 = por %p138, %p139
    %p141 = scmp.ne.s32.totalorder %s127, %s128
    %p142 = scmp.eq.s32.totalorder %s16, 1
    %p143 = por %p141, %p142
    %p145 = scmp.ne.s32.totalorder %s128, %s144
    %p146 = scmp.eq.s32.totalorder %s16, 0
    %p147 = por %p145, %p146
    %p148 = scmp.le.s32.totalorder 1, %s10
    %p149 = scmp.lt.s32.totalorder %s10, 3
    %p150 = pnand %p148, %p149
    %p151 = pneg %p150
    // Predicated region
    $region9: #{forward.12} parent=5 // pred_check
      _
    $region10: #{forward.12} parent=5 // pred_check_branch
      %153 = sbr.rel (%p150) target = $region12
    $region11: #{forward.12} parent=5 // pred_region
      %s154 = ssub.s32 %s10, 1
    $region12: #{forward.12} parent=5 // pred_fallthru
      _
    %p155 = scmp.lt.s32.totalorder %s10, 2
    // Predicated region
    $region13: #{forward.12} parent=5 // pred_check
      %p156 = pneg %p155
    $region14: #{forward.12} parent=5 // pred_check_branch
      %158 = sbr.rel (%p156) target = $region16
    $region15: #{forward.12} parent=5 // pred_region
      // Predicated region
      $region17: #{forward.12} parent=15 // pred_check
        %p159 = pneg %p30
      $region18: #{forward.12} parent=15 // pred_check_branch
        %161 = sbr.rel (%p159) target = $region20
      $region19: #{forward.12} parent=15 // pred_region
        %p162 = scmp.lt.s32.totalorder %s10, 1
        %s163 = scalar_select %p162, %s10, 1
        %s164 = smul.addr %s163, 51
        %s165 = smul.addr %s164, 4
        %s166 = scalar_lea.vmem %s0, %s165
      $region20: #{forward.12} parent=15 // pred_fallthru
        _
      // Predicated region
      $region21: #{forward.12} parent=15 // pred_check
        %p167 = pneg %p56
      $region22: #{forward.12} parent=15 // pred_check_branch
        %169 = sbr.rel (%p167) target = $region24
      $region23: #{forward.12} parent=15 // pred_region
        %p170 = scmp.lt.s32.totalorder %s10, 1
        %s171 = scalar_select %p170, %s10, 1
        %s172 = smul.addr %s171, 51
        %s173 = smul.addr %s172, 4
        %s174 = scalar_lea.vmem %s1, %s173
      $region24: #{forward.12} parent=15 // pred_fallthru
        _
      // Predicated region
      $region25: #{forward.12} parent=15 // pred_check
        %p175 = pneg %p82
      $region26: #{forward.12} parent=15 // pred_check_branch
        %177 = sbr.rel (%p175) target = $region28
      $region27: #{forward.12} parent=15 // pred_region
        %p178 = scmp.lt.s32.totalorder %s10, 1
        %s179 = scalar_select %p178, %s10, 1
        %s180 = smul.addr %s179, 51
        %s181 = smul.addr %s180, 4
        %s182 = scalar_lea.vmem %s2, %s181
      $region28: #{forward.12} parent=15 // pred_fallthru
        _
      // Predicated region
      $region29: #{forward.12} parent=15 // pred_check
        %p183 = pneg %p108
      $region30: #{forward.12} parent=15 // pred_check_branch
        %185 = sbr.rel (%p183) target = $region32
      $region31: #{forward.12} parent=15 // pred_region
        %p186 = scmp.lt.s32.totalorder %s10, 1
        %s187 = scalar_select %p186, %s10, 1
        %s188 = smul.addr %s187, 51
        %s189 = smul.addr %s188, 4
        %s190 = scalar_lea.vmem %s3, %s189
      $region32: #{forward.12} parent=15 // pred_fallthru
        _
    $region16: #{forward.12} parent=5 // pred_fallthru
      _
    %p191 = scmp.le.s32.totalorder 1, %s10
    %p192 = scmp.lt.s32.totalorder %s10, 3
    %p193 = pnand %p191, %p192
    %p194 = pneg %p193
    // Predicated region
    $region33: #{forward.12} parent=5 // pred_check
      _
    $region34: #{forward.12} parent=5 // pred_check_branch
      %196 = sbr.rel (%p193) target = $region36
    $region35: #{forward.12} parent=5 // pred_region
      %s197 = ssub.s32 %s10, 1
      %p198 = scmp.lt.s32.totalorder %s15, 1
      %s199 = scalar_select %p198, %s15, 1
      %s200 = smul.addr %s199, 51
      %s201 = smul.addr %s200, 4
      %s202 = scalar_lea.vmem %s0, %s201
      %p203 = pneg %p36
      %p204 = pneg %p33
      %p205 = scmp.lt.s32.totalorder %s15, 1
      %s206 = scalar_select %p205, %s15, 1
      %s207 = smul.addr %s206, 51
      %s208 = smul.addr %s207, 4
      %s209 = scalar_lea.vmem %s1, %s208
      %p210 = pneg %p62
      %p211 = pneg %p59
      %p212 = scmp.lt.s32.totalorder %s15, 1
      %s213 = scalar_select %p212, %s15, 1
      %s214 = smul.addr %s213, 51
      %s215 = smul.addr %s214, 4
      %s216 = scalar_lea.vmem %s2, %s215
      %p217 = pneg %p88
      %p218 = pneg %p85
      %p219 = scmp.lt.s32.totalorder %s15, 1
      %s220 = scalar_select %p219, %s15, 1
      %s221 = smul.addr %s220, 51
      %s222 = smul.addr %s221, 4
      %s223 = scalar_lea.vmem %s3, %s222
      %p224 = pneg %p114
      %p225 = pneg %p111
      %p226 = pneg %p140
      %p227 = pneg %p137
      %p228 = scmp.lt.s32.totalorder %s15, 1
      %s229 = scalar_select %p228, %s15, 1
      %s230 = smul.addr %s229, 32
      %s231 = smul.addr %s230, 4
      %s232 = scalar_lea.vmem %s4, %s231
      %p233 = scmp.lt.s32.totalorder %s15, 1
      %s234 = scalar_select %p233, %s15, 1
      %s235 = smul.addr %s234, 51
      %s236 = smul.addr %s235, 4
      %s237 = scalar_lea.vmem %s0, %s236
      %p238 = scmp.lt.s32.totalorder %s15, 1
      %s239 = scalar_select %p238, %s15, 1
      %s240 = smul.addr %s239, 51
      %s241 = smul.addr %s240, 4
      %s242 = scalar_lea.vmem %s1, %s241
      %p243 = scmp.lt.s32.totalorder %s15, 1
      %s244 = scalar_select %p243, %s15, 1
      %s245 = smul.addr %s244, 51
      %s246 = smul.addr %s245, 4
      %s247 = scalar_lea.vmem %s2, %s246
      %p248 = scmp.lt.s32.totalorder %s15, 1
      %s249 = scalar_select %p248, %s15, 1
      %s250 = smul.addr %s249, 51
      %s251 = smul.addr %s250, 4
      %s252 = scalar_lea.vmem %s3, %s251
      %p253 = scmp.lt.s32.totalorder %s15, 1
      %s254 = scalar_select %p253, %s15, 1
      %s255 = smul.addr %s254, 32
      %s256 = smul.addr %s255, 4
      %s257 = scalar_lea.vmem %s4, %s256
      %v258 = vld [vmem:[%s237] sm:$0xf]
      %v259 = vld [vmem:[%s237 + $0x4] sm:$0xf]
      %v260 = vld [vmem:[%s237 + $0x8] sm:$0x1]
      %v261 = vld [vmem:[%s237 + $0xc] sm:$0xf]
      %v262 = vld [vmem:[%s237 + $0x10] sm:$0xf]
      %v263 = vld [vmem:[%s237 + $0x14] sm:$0x1]
      %v264 = vld [vmem:[%s237 + $0x18] sm:$0xf]
      %v265 = vld [vmem:[%s237 + $0x1c] sm:$0xf]
      %v266 = vld [vmem:[%s237 + $0x20] sm:$0x1]
      %v267 = vld [vmem:[%s237 + $0x24] sm:$0xf]
      %v268 = vld [vmem:[%s237 + $0x28] sm:$0xf]
      %v269 = vld [vmem:[%s237 + $0x2c] sm:$0x1]
      %v270 = vld [vmem:[%s237 + $0x30] sm:$0xf]
      %v271 = vld [vmem:[%s237 + $0x34] sm:$0xf]
      %v272 = vld [vmem:[%s237 + $0x38] sm:$0x1]
      %v273 = vld [vmem:[%s237 + $0x3c] sm:$0xf]
      %v274 = vld [vmem:[%s237 + $0x40] sm:$0xf]
      %v275 = vld [vmem:[%s237 + $0x44] sm:$0x1]
      %v276 = vld [vmem:[%s237 + $0x48] sm:$0xf]
      %v277 = vld [vmem:[%s237 + $0x4c] sm:$0xf]
      %v278 = vld [vmem:[%s237 + $0x50] sm:$0x1]
      %v279 = vld [vmem:[%s237 + $0x54] sm:$0xf]
      %v280 = vld [vmem:[%s237 + $0x58] sm:$0xf]
      %v281 = vld [vmem:[%s237 + $0x5c] sm:$0x1]
      %v282 = vld [vmem:[%s237 + $0x60] sm:$0xf]
      %v283 = vld [vmem:[%s237 + $0x64] sm:$0xf]
      %v284 = vld [vmem:[%s237 + $0x68] sm:$0x1]
      %v285 = vld [vmem:[%s237 + $0x6c] sm:$0xf]
      %v286 = vld [vmem:[%s237 + $0x70] sm:$0xf]
      %v287 = vld [vmem:[%s237 + $0x74] sm:$0x1]
      %v288 = vld [vmem:[%s237 + $0x78] sm:$0xf]
      %v289 = vld [vmem:[%s237 + $0x7c] sm:$0xf]
      %v290 = vld [vmem:[%s237 + $0x80] sm:$0x1]
      %v291 = vld [vmem:[%s237 + $0x84] sm:$0xf]
      %v292 = vld [vmem:[%s237 + $0x88] sm:$0xf]
      %v293 = vld [vmem:[%s237 + $0x8c] sm:$0x1]
      %v294 = vld [vmem:[%s237 + $0x90] sm:$0xf]
      %v295 = vld [vmem:[%s237 + $0x94] sm:$0xf]
      %v296 = vld [vmem:[%s237 + $0x98] sm:$0x1]
      %v297 = vld [vmem:[%s237 + $0x9c] sm:$0xf]
      %v298 = vld [vmem:[%s237 + $0xa0] sm:$0xf]
      %v299 = vld [vmem:[%s237 + $0xa4] sm:$0x1]
      %v300 = vld [vmem:[%s237 + $0xa8] sm:$0xf]
      %v301 = vld [vmem:[%s237 + $0xac] sm:$0xf]
      %v302 = vld [vmem:[%s237 + $0xb0] sm:$0x1]
      %v303 = vld [vmem:[%s237 + $0xb4] sm:$0xf]
      %v304 = vld [vmem:[%s237 + $0xb8] sm:$0xf]
      %v305 = vld [vmem:[%s237 + $0xbc] sm:$0x1]
      %v306 = vld [vmem:[%s237 + $0xc0] sm:$0xf]
      %v307 = vld [vmem:[%s237 + $0xc4] sm:$0xf]
      %v308 = vld [vmem:[%s237 + $0xc8] sm:$0x1]
      %v309 = vld [vmem:[%s242] sm:$0xf]
      %v310 = vld [vmem:[%s242 + $0x4] sm:$0xf]
      %v311 = vld [vmem:[%s242 + $0xc] sm:$0xf]
      %v312 = vld [vmem:[%s242 + $0x10] sm:$0xf]
      %v313 = vld [vmem:[%s242 + $0x18] sm:$0xf]
      %v314 = vld [vmem:[%s242 + $0x1c] sm:$0xf]
      %v315 = vld [vmem:[%s242 + $0x24] sm:$0xf]
      %v316 = vld [vmem:[%s242 + $0x28] sm:$0xf]
      %v317 = vld [vmem:[%s242 + $0x30] sm:$0xf]
      %v318 = vld [vmem:[%s242 + $0x34] sm:$0xf]
      %v319 = vld [vmem:[%s242 + $0x3c] sm:$0xf]
      %v320 = vld [vmem:[%s242 + $0x40] sm:$0xf]
      %v321 = vld [vmem:[%s242 + $0x48] sm:$0xf]
      %v322 = vld [vmem:[%s242 + $0x4c] sm:$0xf]
      %v323 = vld [vmem:[%s242 + $0x54] sm:$0xf]
      %v324 = vld [vmem:[%s242 + $0x58] sm:$0xf]
      %v325 = vld [vmem:[%s242 + $0x60] sm:$0xf]
      %v326 = vld [vmem:[%s242 + $0x64] sm:$0xf]
      %v327 = vld [vmem:[%s242 + $0x6c] sm:$0xf]
      %v328 = vld [vmem:[%s242 + $0x70] sm:$0xf]
      %v329 = vld [vmem:[%s242 + $0x78] sm:$0xf]
      %v330 = vld [vmem:[%s242 + $0x7c] sm:$0xf]
      %v331 = vld [vmem:[%s242 + $0x84] sm:$0xf]
      %v332 = vld [vmem:[%s242 + $0x88] sm:$0xf]
      %v333 = vld [vmem:[%s242 + $0x90] sm:$0xf]
      %v334 = vld [vmem:[%s242 + $0x94] sm:$0xf]
      %v335 = vld [vmem:[%s242 + $0x9c] sm:$0xf]
      %v336 = vld [vmem:[%s242 + $0xa0] sm:$0xf]
      %v337 = vld [vmem:[%s242 + $0xa8] sm:$0xf]
      %v338 = vld [vmem:[%s242 + $0xac] sm:$0xf]
      %v339 = vld [vmem:[%s242 + $0xb4] sm:$0xf]
      %v340 = vld [vmem:[%s242 + $0xb8] sm:$0xf]
      %v341 = vld [vmem:[%s242 + $0xc0] sm:$0xf]
      %v342 = vld [vmem:[%s242 + $0xc4] sm:$0xf]
      %v343 = vld [vmem:[%s247] sm:$0xf]
      %v344 = vld [vmem:[%s247 + $0x4] sm:$0xf]
      %v345 = vld [vmem:[%s247 + $0x8] sm:$0x1]
      %v346 = vld [vmem:[%s247 + $0xc] sm:$0xf]
      %v347 = vld [vmem:[%s247 + $0x10] sm:$0xf]
      %v348 = vld [vmem:[%s247 + $0x14] sm:$0x1]
      %v349 = vld [vmem:[%s247 + $0x18] sm:$0xf]
      %v350 = vld [vmem:[%s247 + $0x1c] sm:$0xf]
      %v351 = vld [vmem:[%s247 + $0x20] sm:$0x1]
      %v352 = vld [vmem:[%s247 + $0x24] sm:$0xf]
      %v353 = vld [vmem:[%s247 + $0x28] sm:$0xf]
      %v354 = vld [vmem:[%s247 + $0x2c] sm:$0x1]
      %v355 = vld [vmem:[%s247 + $0x30] sm:$0xf]
      %v356 = vld [vmem:[%s247 + $0x34] sm:$0xf]
      %v357 = vld [vmem:[%s247 + $0x38] sm:$0x1]
      %v358 = vld [vmem:[%s247 + $0x3c] sm:$0xf]
      %v359 = vld [vmem:[%s247 + $0x40] sm:$0xf]
      %v360 = vld [vmem:[%s247 + $0x44] sm:$0x1]
      %v361 = vld [vmem:[%s247 + $0x48] sm:$0xf]
      %v362 = vld [vmem:[%s247 + $0x4c] sm:$0xf]
      %v363 = vld [vmem:[%s247 + $0x50] sm:$0x1]
      %v364 = vld [vmem:[%s247 + $0x54] sm:$0xf]
      %v365 = vld [vmem:[%s247 + $0x58] sm:$0xf]
      %v366 = vld [vmem:[%s247 + $0x5c] sm:$0x1]
      %v367 = vld [vmem:[%s247 + $0x60] sm:$0xf]
      %v368 = vld [vmem:[%s247 + $0x64] sm:$0xf]
      %v369 = vld [vmem:[%s247 + $0x68] sm:$0x1]
      %v370 = vld [vmem:[%s247 + $0x6c] sm:$0xf]
      %v371 = vld [vmem:[%s247 + $0x70] sm:$0xf]
      %v372 = vld [vmem:[%s247 + $0x74] sm:$0x1]
      %v373 = vld [vmem:[%s247 + $0x78] sm:$0xf]
      %v374 = vld [vmem:[%s247 + $0x7c] sm:$0xf]
      %v375 = vld [vmem:[%s247 + $0x80] sm:$0x1]
      %v376 = vld [vmem:[%s247 + $0x84] sm:$0xf]
      %v377 = vld [vmem:[%s247 + $0x88] sm:$0xf]
      %v378 = vld [vmem:[%s247 + $0x8c] sm:$0x1]
      %v379 = vld [vmem:[%s247 + $0x90] sm:$0xf]
      %v380 = vld [vmem:[%s247 + $0x94] sm:$0xf]
      %v381 = vld [vmem:[%s247 + $0x98] sm:$0x1]
      %v382 = vld [vmem:[%s247 + $0x9c] sm:$0xf]
      %v383 = vld [vmem:[%s247 + $0xa0] sm:$0xf]
      %v384 = vld [vmem:[%s247 + $0xa4] sm:$0x1]
      %v385 = vld [vmem:[%s247 + $0xa8] sm:$0xf]
      %v386 = vld [vmem:[%s247 + $0xac] sm:$0xf]
      %v387 = vld [vmem:[%s247 + $0xb0] sm:$0x1]
      %v388 = vld [vmem:[%s247 + $0xb4] sm:$0xf]
      %v389 = vld [vmem:[%s247 + $0xb8] sm:$0xf]
      %v390 = vld [vmem:[%s247 + $0xbc] sm:$0x1]
      %v391 = vld [vmem:[%s252] sm:$0xf]
      %v392 = vld [vmem:[%s252 + $0x4] sm:$0xf]
      %v393 = vld [vmem:[%s252 + $0xc] sm:$0xf]
      %v394 = vld [vmem:[%s252 + $0x10] sm:$0xf]
      %v395 = vld [vmem:[%s252 + $0x18] sm:$0xf]
      %v396 = vld [vmem:[%s252 + $0x1c] sm:$0xf]
      %v397 = vld [vmem:[%s252 + $0x24] sm:$0xf]
      %v398 = vld [vmem:[%s252 + $0x28] sm:$0xf]
      %v399 = vld [vmem:[%s252 + $0x30] sm:$0xf]
      %v400 = vld [vmem:[%s252 + $0x34] sm:$0xf]
      %v401 = vld [vmem:[%s252 + $0x3c] sm:$0xf]
      %v402 = vld [vmem:[%s252 + $0x40] sm:$0xf]
      %v403 = vld [vmem:[%s252 + $0x48] sm:$0xf]
      %v404 = vld [vmem:[%s252 + $0x4c] sm:$0xf]
      %v405 = vld [vmem:[%s252 + $0x54] sm:$0xf]
      %v406 = vld [vmem:[%s252 + $0x58] sm:$0xf]
      %v407 = vld [vmem:[%s252 + $0x60] sm:$0xf]
      %v408 = vld [vmem:[%s252 + $0x64] sm:$0xf]
      %v409 = vld [vmem:[%s252 + $0x6c] sm:$0xf]
      %v410 = vld [vmem:[%s252 + $0x70] sm:$0xf]
      %v411 = vld [vmem:[%s252 + $0x78] sm:$0xf]
      %v412 = vld [vmem:[%s252 + $0x7c] sm:$0xf]
      %v413 = vld [vmem:[%s252 + $0x84] sm:$0xf]
      %v414 = vld [vmem:[%s252 + $0x88] sm:$0xf]
      %v415 = vld [vmem:[%s252 + $0x90] sm:$0xf]
      %v416 = vld [vmem:[%s252 + $0x94] sm:$0xf]
      %v417 = vld [vmem:[%s252 + $0x9c] sm:$0xf]
      %v418 = vld [vmem:[%s252 + $0xa0] sm:$0xf]
      %v419 = vld [vmem:[%s252 + $0xa8] sm:$0xf]
      %v420 = vld [vmem:[%s252 + $0xac] sm:$0xf]
      %v421 = vld [vmem:[%s252 + $0xb4] sm:$0xf]
      %v422 = vld [vmem:[%s252 + $0xb8] sm:$0xf]
      %v423 = vunpack.c.l.bf16 %v258
      %v424 = vunpack.c.l.bf16 %v259
      %v425 = vunpack.c.l.bf16 %v261
      %v426 = vunpack.c.l.bf16 %v262
      %v427 = vunpack.c.l.bf16 %v264
      %v428 = vunpack.c.l.bf16 %v265
      %v429 = vunpack.c.l.bf16 %v267
      %v430 = vunpack.c.l.bf16 %v268
      %v431 = vunpack.c.l.bf16 %v270
      %v432 = vunpack.c.l.bf16 %v271
      %v433 = vunpack.c.l.bf16 %v273
      %v434 = vunpack.c.l.bf16 %v274
      %v435 = vunpack.c.l.bf16 %v276
      %v436 = vunpack.c.l.bf16 %v277
      %v437 = vunpack.c.l.bf16 %v279
      %v438 = vunpack.c.l.bf16 %v280
      %v439 = vunpack.c.l.bf16 %v282
      %v440 = vunpack.c.l.bf16 %v283
      %v441 = vunpack.c.l.bf16 %v285
      %v442 = vunpack.c.l.bf16 %v286
      %v443 = vunpack.c.l.bf16 %v288
      %v444 = vunpack.c.l.bf16 %v289
      %v445 = vunpack.c.l.bf16 %v291
      %v446 = vunpack.c.l.bf16 %v292
      %v447 = vunpack.c.l.bf16 %v294
      %v448 = vunpack.c.l.bf16 %v295
      %v449 = vunpack.c.l.bf16 %v297
      %v450 = vunpack.c.l.bf16 %v298
      %v451 = vunpack.c.l.bf16 %v300
      %v452 = vunpack.c.l.bf16 %v301
      %v453 = vunpack.c.l.bf16 %v303
      %v454 = vunpack.c.l.bf16 %v304
      %v455 = vunpack.c.l.bf16 %v309
      %v456 = vunpack.c.l.bf16 %v310
      %v457 = vunpack.c.l.bf16 %v311
      %v458 = vunpack.c.l.bf16 %v312
      %v459 = vunpack.c.l.bf16 %v313
      %v460 = vunpack.c.l.bf16 %v314
      %v461 = vunpack.c.l.bf16 %v315
      %v462 = vunpack.c.l.bf16 %v316
      %v463 = vunpack.c.l.bf16 %v317
      %v464 = vunpack.c.l.bf16 %v318
      %v465 = vunpack.c.l.bf16 %v319
      %v466 = vunpack.c.l.bf16 %v320
      %v467 = vunpack.c.l.bf16 %v321
      %v468 = vunpack.c.l.bf16 %v322
      %v469 = vunpack.c.l.bf16 %v323
      %v470 = vunpack.c.l.bf16 %v324
      %v471 = vunpack.c.l.bf16 %v325
      %v472 = vunpack.c.l.bf16 %v326
      %v473 = vunpack.c.l.bf16 %v327
      %v474 = vunpack.c.l.bf16 %v328
      %v475 = vunpack.c.l.bf16 %v329
      %v476 = vunpack.c.l.bf16 %v330
      %v477 = vunpack.c.l.bf16 %v331
      %v478 = vunpack.c.l.bf16 %v332
      %v479 = vunpack.c.l.bf16 %v333
      %v480 = vunpack.c.l.bf16 %v334
      %v481 = vunpack.c.l.bf16 %v335
      %v482 = vunpack.c.l.bf16 %v336
      %v483 = vunpack.c.l.bf16 %v337
      %v484 = vunpack.c.l.bf16 %v338
      %v485 = vunpack.c.l.bf16 %v339
      %v486 = vunpack.c.l.bf16 %v340
      %v487 = vmax.f32 %v423, %v455
      %v488 = vmax.f32 %v424, %v456
      %v489 = vmax.f32 %v425, %v457
      %v490 = vmax.f32 %v426, %v458
      %v491 = vmax.f32 %v427, %v459
      %v492 = vmax.f32 %v428, %v460
      %v493 = vmax.f32 %v429, %v461
      %v494 = vmax.f32 %v430, %v462
      %v495 = vmax.f32 %v431, %v463
      %v496 = vmax.f32 %v432, %v464
      %v497 = vmax.f32 %v433, %v465
      %v498 = vmax.f32 %v434, %v466
      %v499 = vmax.f32 %v435, %v467
      %v500 = vmax.f32 %v436, %v468
      %v501 = vmax.f32 %v437, %v469
      %v502 = vmax.f32 %v438, %v470
      %v503 = vmax.f32 %v439, %v471
      %v504 = vmax.f32 %v440, %v472
      %v505 = vmax.f32 %v441, %v473
      %v506 = vmax.f32 %v442, %v474
      %v507 = vmax.f32 %v443, %v475
      %v508 = vmax.f32 %v444, %v476
      %v509 = vmax.f32 %v445, %v477
      %v510 = vmax.f32 %v446, %v478
      %v511 = vmax.f32 %v447, %v479
      %v512 = vmax.f32 %v448, %v480
      %v513 = vmax.f32 %v449, %v481
      %v514 = vmax.f32 %v450, %v482
      %v515 = vmax.f32 %v451, %v483
      %v516 = vmax.f32 %v452, %v484
      %v517 = vmax.f32 %v453, %v485
      %v518 = vmax.f32 %v454, %v486
      %v519 = vpack.c.bf16 %v487, %v487
      %v520 = vpack.c.bf16 %v488, %v488
      %v521 = vpack.c.bf16 %v489, %v489
      %v522 = vpack.c.bf16 %v490, %v490
      %v523 = vpack.c.bf16 %v491, %v491
      %v524 = vpack.c.bf16 %v492, %v492
      %v525 = vpack.c.bf16 %v493, %v493
      %v526 = vpack.c.bf16 %v494, %v494
      %v527 = vpack.c.bf16 %v495, %v495
      %v528 = vpack.c.bf16 %v496, %v496
      %v529 = vpack.c.bf16 %v497, %v497
      %v530 = vpack.c.bf16 %v498, %v498
      %v531 = vpack.c.bf16 %v499, %v499
      %v532 = vpack.c.bf16 %v500, %v500
      %v533 = vpack.c.bf16 %v501, %v501
      %v534 = vpack.c.bf16 %v502, %v502
      %v535 = vpack.c.bf16 %v503, %v503
      %v536 = vpack.c.bf16 %v504, %v504
      %v537 = vpack.c.bf16 %v505, %v505
      %v538 = vpack.c.bf16 %v506, %v506
      %v539 = vpack.c.bf16 %v507, %v507
      %v540 = vpack.c.bf16 %v508, %v508
      %v541 = vpack.c.bf16 %v509, %v509
      %v542 = vpack.c.bf16 %v510, %v510
      %v543 = vpack.c.bf16 %v511, %v511
      %v544 = vpack.c.bf16 %v512, %v512
      %v545 = vpack.c.bf16 %v513, %v513
      %v546 = vpack.c.bf16 %v514, %v514
      %v547 = vpack.c.bf16 %v515, %v515
      %v548 = vpack.c.bf16 %v516, %v516
      %v549 = vpack.c.bf16 %v517, %v517
      %v550 = vpack.c.bf16 %v518, %v518
      %v551 = vunpack.c.l.bf16 %v519
      %v552 = vunpack.c.l.bf16 %v520
      %v553 = vunpack.c.l.bf16 %v521
      %v554 = vunpack.c.l.bf16 %v522
      %v555 = vunpack.c.l.bf16 %v523
      %v556 = vunpack.c.l.bf16 %v524
      %v557 = vunpack.c.l.bf16 %v525
      %v558 = vunpack.c.l.bf16 %v526
      %v559 = vunpack.c.l.bf16 %v527
      %v560 = vunpack.c.l.bf16 %v528
      %v561 = vunpack.c.l.bf16 %v529
      %v562 = vunpack.c.l.bf16 %v530
      %v563 = vunpack.c.l.bf16 %v531
      %v564 = vunpack.c.l.bf16 %v532
      %v565 = vunpack.c.l.bf16 %v533
      %v566 = vunpack.c.l.bf16 %v534
      %v567 = vunpack.c.l.bf16 %v535
      %v568 = vunpack.c.l.bf16 %v536
      %v569 = vunpack.c.l.bf16 %v537
      %v570 = vunpack.c.l.bf16 %v538
      %v571 = vunpack.c.l.bf16 %v539
      %v572 = vunpack.c.l.bf16 %v540
      %v573 = vunpack.c.l.bf16 %v541
      %v574 = vunpack.c.l.bf16 %v542
      %v575 = vunpack.c.l.bf16 %v543
      %v576 = vunpack.c.l.bf16 %v544
      %v577 = vunpack.c.l.bf16 %v545
      %v578 = vunpack.c.l.bf16 %v546
      %v579 = vunpack.c.l.bf16 %v547
      %v580 = vunpack.c.l.bf16 %v548
      %v581 = vunpack.c.l.bf16 %v549
      %v582 = vunpack.c.l.bf16 %v550
      %v583 = vunpack.c.l.bf16 %v260
      %v584 = vunpack.c.l.bf16 %v263
      %v585 = vunpack.c.l.bf16 %v266
      %v586 = vunpack.c.l.bf16 %v269
      %v587 = vunpack.c.l.bf16 %v272
      %v588 = vunpack.c.l.bf16 %v275
      %v589 = vunpack.c.l.bf16 %v278
      %v590 = vunpack.c.l.bf16 %v281
      %v591 = vunpack.c.l.bf16 %v284
      %v592 = vunpack.c.l.bf16 %v287
      %v593 = vunpack.c.l.bf16 %v290
      %v594 = vunpack.c.l.bf16 %v293
      %v595 = vunpack.c.l.bf16 %v296
      %v596 = vunpack.c.l.bf16 %v299
      %v597 = vunpack.c.l.bf16 %v302
      %v598 = vunpack.c.l.bf16 %v305
      %vm647 = vcmask 1046528
      %v648 = vrot.slane %v423, 1
      %v649 = vrot.slane %v424, 1
      %v650 = vsel %vm647, %v648, %v649
      %v651 = vrot.slane %v583, 1
      %v652 = vsel %vm647, %v649, %v651
      %v653 = vrot.slane %v425, 1
      %v654 = vrot.slane %v426, 1
      %v655 = vsel %vm647, %v653, %v654
      %v656 = vrot.slane %v584, 1
      %v657 = vsel %vm647, %v654, %v656
      %v658 = vrot.slane %v427, 1
      %v659 = vrot.slane %v428, 1
      %v660 = vsel %vm647, %v658, %v659
      %v661 = vrot.slane %v585, 1
      %v662 = vsel %vm647, %v659, %v661
      %v663 = vrot.slane %v429, 1
      %v664 = vrot.slane %v430, 1
      %v665 = vsel %vm647, %v663, %v664
      %v666 = vrot.slane %v586, 1
      %v667 = vsel %vm647, %v664, %v666
      %v668 = vrot.slane %v431, 1
      %v669 = vrot.slane %v432, 1
      %v670 = vsel %vm647, %v668, %v669
      %v671 = vrot.slane %v587, 1
      %v672 = vsel %vm647, %v669, %v671
      %v673 = vrot.slane %v433, 1
      %v674 = vrot.slane %v434, 1
      %v675 = vsel %vm647, %v673, %v674
      %v676 = vrot.slane %v588, 1
      %v677 = vsel %vm647, %v674, %v676
      %v678 = vrot.slane %v435, 1
      %v679 = vrot.slane %v436, 1
      %v680 = vsel %vm647, %v678, %v679
      %v681 = vrot.slane %v589, 1
      %v682 = vsel %vm647, %v679, %v681
      %v683 = vrot.slane %v437, 1
      %v684 = vrot.slane %v438, 1
      %v685 = vsel %vm647, %v683, %v684
      %v686 = vrot.slane %v590, 1
      %v687 = vsel %vm647, %v684, %v686
      %v688 = vrot.slane %v439, 1
      %v689 = vrot.slane %v440, 1
      %v690 = vsel %vm647, %v688, %v689
      %v691 = vrot.slane %v591, 1
      %v692 = vsel %vm647, %v689, %v691
      %v693 = vrot.slane %v441, 1
      %v694 = vrot.slane %v442, 1
      %v695 = vsel %vm647, %v693, %v694
      %v696 = vrot.slane %v592, 1
      %v697 = vsel %vm647, %v694, %v696
      %v698 = vrot.slane %v443, 1
      %v699 = vrot.slane %v444, 1
      %v700 = vsel %vm647, %v698, %v699
      %v701 = vrot.slane %v593, 1
      %v702 = vsel %vm647, %v699, %v701
      %v703 = vrot.slane %v445, 1
      %v704 = vrot.slane %v446, 1
      %v705 = vsel %vm647, %v703, %v704
      %v706 = vrot.slane %v594, 1
      %v707 = vsel %vm647, %v704, %v706
      %v708 = vrot.slane %v447, 1
      %v709 = vrot.slane %v448, 1
      %v710 = vsel %vm647, %v708, %v709
      %v711 = vrot.slane %v595, 1
      %v712 = vsel %vm647, %v709, %v711
      %v713 = vrot.slane %v449, 1
      %v714 = vrot.slane %v450, 1
      %v715 = vsel %vm647, %v713, %v714
      %v716 = vrot.slane %v596, 1
      %v717 = vsel %vm647, %v714, %v716
      %v718 = vrot.slane %v451, 1
      %v719 = vrot.slane %v452, 1
      %v720 = vsel %vm647, %v718, %v719
      %v721 = vrot.slane %v597, 1
      %v722 = vsel %vm647, %v719, %v721
      %v723 = vrot.slane %v453, 1
      %v724 = vrot.slane %v454, 1
      %v725 = vsel %vm647, %v723, %v724
      %v726 = vrot.slane %v598, 1
      %v727 = vsel %vm647, %v724, %v726
      %v760 = vmax.f32 %v551, %v650
      %v761 = vmax.f32 %v552, %v652
      %v762 = vmax.f32 %v553, %v655
      %v763 = vmax.f32 %v554, %v657
      %v764 = vmax.f32 %v555, %v660
      %v765 = vmax.f32 %v556, %v662
      %v766 = vmax.f32 %v557, %v665
      %v767 = vmax.f32 %v558, %v667
      %v768 = vmax.f32 %v559, %v670
      %v769 = vmax.f32 %v560, %v672
      %v770 = vmax.f32 %v561, %v675
      %v771 = vmax.f32 %v562, %v677
      %v772 = vmax.f32 %v563, %v680
      %v773 = vmax.f32 %v564, %v682
      %v774 = vmax.f32 %v565, %v685
      %v775 = vmax.f32 %v566, %v687
      %v776 = vmax.f32 %v567, %v690
      %v777 = vmax.f32 %v568, %v692
      %v778 = vmax.f32 %v569, %v695
      %v779 = vmax.f32 %v570, %v697
      %v780 = vmax.f32 %v571, %v700
      %v781 = vmax.f32 %v572, %v702
      %v782 = vmax.f32 %v573, %v705
      %v783 = vmax.f32 %v574, %v707
      %v784 = vmax.f32 %v575, %v710
      %v785 = vmax.f32 %v576, %v712
      %v786 = vmax.f32 %v577, %v715
      %v787 = vmax.f32 %v578, %v717
      %v788 = vmax.f32 %v579, %v720
      %v789 = vmax.f32 %v580, %v722
      %v790 = vmax.f32 %v581, %v725
      %v791 = vmax.f32 %v582, %v727
      %v792 = vpack.c.bf16 %v760, %v760
      %v793 = vpack.c.bf16 %v761, %v761
      %v794 = vpack.c.bf16 %v762, %v762
      %v795 = vpack.c.bf16 %v763, %v763
      %v796 = vpack.c.bf16 %v764, %v764
      %v797 = vpack.c.bf16 %v765, %v765
      %v798 = vpack.c.bf16 %v766, %v766
      %v799 = vpack.c.bf16 %v767, %v767
      %v800 = vpack.c.bf16 %v768, %v768
      %v801 = vpack.c.bf16 %v769, %v769
      %v802 = vpack.c.bf16 %v770, %v770
      %v803 = vpack.c.bf16 %v771, %v771
      %v804 = vpack.c.bf16 %v772, %v772
      %v805 = vpack.c.bf16 %v773, %v773
      %v806 = vpack.c.bf16 %v774, %v774
      %v807 = vpack.c.bf16 %v775, %v775
      %v808 = vpack.c.bf16 %v776, %v776
      %v809 = vpack.c.bf16 %v777, %v777
      %v810 = vpack.c.bf16 %v778, %v778
      %v811 = vpack.c.bf16 %v779, %v779
      %v812 = vpack.c.bf16 %v780, %v780
      %v813 = vpack.c.bf16 %v781, %v781
      %v814 = vpack.c.bf16 %v782, %v782
      %v815 = vpack.c.bf16 %v783, %v783
      %v816 = vpack.c.bf16 %v784, %v784
      %v817 = vpack.c.bf16 %v785, %v785
      %v818 = vpack.c.bf16 %v786, %v786
      %v819 = vpack.c.bf16 %v787, %v787
      %v820 = vpack.c.bf16 %v788, %v788
      %v821 = vpack.c.bf16 %v789, %v789
      %v822 = vpack.c.bf16 %v790, %v790
      %v823 = vpack.c.bf16 %v791, %v791
      %v824 = vunpack.c.l.bf16 %v792
      %v825 = vunpack.c.l.bf16 %v793
      %v826 = vunpack.c.l.bf16 %v794
      %v827 = vunpack.c.l.bf16 %v795
      %v828 = vunpack.c.l.bf16 %v796
      %v829 = vunpack.c.l.bf16 %v797
      %v830 = vunpack.c.l.bf16 %v798
      %v831 = vunpack.c.l.bf16 %v799
      %v832 = vunpack.c.l.bf16 %v800
      %v833 = vunpack.c.l.bf16 %v801
      %v834 = vunpack.c.l.bf16 %v802
      %v835 = vunpack.c.l.bf16 %v803
      %v836 = vunpack.c.l.bf16 %v804
      %v837 = vunpack.c.l.bf16 %v805
      %v838 = vunpack.c.l.bf16 %v806
      %v839 = vunpack.c.l.bf16 %v807
      %v840 = vunpack.c.l.bf16 %v808
      %v841 = vunpack.c.l.bf16 %v809
      %v842 = vunpack.c.l.bf16 %v810
      %v843 = vunpack.c.l.bf16 %v811
      %v844 = vunpack.c.l.bf16 %v812
      %v845 = vunpack.c.l.bf16 %v813
      %v846 = vunpack.c.l.bf16 %v814
      %v847 = vunpack.c.l.bf16 %v815
      %v848 = vunpack.c.l.bf16 %v816
      %v849 = vunpack.c.l.bf16 %v817
      %v850 = vunpack.c.l.bf16 %v818
      %v851 = vunpack.c.l.bf16 %v819
      %v852 = vunpack.c.l.bf16 %v820
      %v853 = vunpack.c.l.bf16 %v821
      %v854 = vunpack.c.l.bf16 %v822
      %v855 = vunpack.c.l.bf16 %v823
      %v856 = vunpack.c.l.bf16 %v343
      %v857 = vunpack.c.l.bf16 %v344
      %v858 = vunpack.c.l.bf16 %v346
      %v859 = vunpack.c.l.bf16 %v347
      %v860 = vunpack.c.l.bf16 %v349
      %v861 = vunpack.c.l.bf16 %v350
      %v862 = vunpack.c.l.bf16 %v352
      %v863 = vunpack.c.l.bf16 %v353
      %v864 = vunpack.c.l.bf16 %v355
      %v865 = vunpack.c.l.bf16 %v356
      %v866 = vunpack.c.l.bf16 %v358
      %v867 = vunpack.c.l.bf16 %v359
      %v868 = vunpack.c.l.bf16 %v361
      %v869 = vunpack.c.l.bf16 %v362
      %v870 = vunpack.c.l.bf16 %v364
      %v871 = vunpack.c.l.bf16 %v365
      %v872 = vunpack.c.l.bf16 %v367
      %v873 = vunpack.c.l.bf16 %v368
      %v874 = vunpack.c.l.bf16 %v370
      %v875 = vunpack.c.l.bf16 %v371
      %v876 = vunpack.c.l.bf16 %v373
      %v877 = vunpack.c.l.bf16 %v374
      %v878 = vunpack.c.l.bf16 %v376
      %v879 = vunpack.c.l.bf16 %v377
      %v880 = vunpack.c.l.bf16 %v379
      %v881 = vunpack.c.l.bf16 %v380
      %v882 = vunpack.c.l.bf16 %v382
      %v883 = vunpack.c.l.bf16 %v383
      %v884 = vunpack.c.l.bf16 %v385
      %v885 = vunpack.c.l.bf16 %v386
      %v886 = vunpack.c.l.bf16 %v388
      %v887 = vunpack.c.l.bf16 %v389
      %v888 = vmax.f32 %v824, %v856
      %v889 = vmax.f32 %v825, %v857
      %v890 = vmax.f32 %v826, %v858
      %v891 = vmax.f32 %v827, %v859
      %v892 = vmax.f32 %v828, %v860
      %v893 = vmax.f32 %v829, %v861
      %v894 = vmax.f32 %v830, %v862
      %v895 = vmax.f32 %v831, %v863
      %v896 = vmax.f32 %v832, %v864
      %v897 = vmax.f32 %v833, %v865
      %v898 = vmax.f32 %v834, %v866
      %v899 = vmax.f32 %v835, %v867
      %v900 = vmax.f32 %v836, %v868
      %v901 = vmax.f32 %v837, %v869
      %v902 = vmax.f32 %v838, %v870
      %v903 = vmax.f32 %v839, %v871
      %v904 = vmax.f32 %v840, %v872
      %v905 = vmax.f32 %v841, %v873
      %v906 = vmax.f32 %v842, %v874
      %v907 = vmax.f32 %v843, %v875
      %v908 = vmax.f32 %v844, %v876
      %v909 = vmax.f32 %v845, %v877
      %v910 = vmax.f32 %v846, %v878
      %v911 = vmax.f32 %v847, %v879
      %v912 = vmax.f32 %v848, %v880
      %v913 = vmax.f32 %v849, %v881
      %v914 = vmax.f32 %v850, %v882
      %v915 = vmax.f32 %v851, %v883
      %v916 = vmax.f32 %v852, %v884
      %v917 = vmax.f32 %v853, %v885
      %v918 = vmax.f32 %v854, %v886
      %v919 = vmax.f32 %v855, %v887
      %v920 = vpack.c.bf16 %v888, %v888
      %v921 = vpack.c.bf16 %v889, %v889
      %v922 = vpack.c.bf16 %v890, %v890
      %v923 = vpack.c.bf16 %v891, %v891
      %v924 = vpack.c.bf16 %v892, %v892
      %v925 = vpack.c.bf16 %v893, %v893
      %v926 = vpack.c.bf16 %v894, %v894
      %v927 = vpack.c.bf16 %v895, %v895
      %v928 = vpack.c.bf16 %v896, %v896
      %v929 = vpack.c.bf16 %v897, %v897
      %v930 = vpack.c.bf16 %v898, %v898
      %v931 = vpack.c.bf16 %v899, %v899
      %v932 = vpack.c.bf16 %v900, %v900
      %v933 = vpack.c.bf16 %v901, %v901
      %v934 = vpack.c.bf16 %v902, %v902
      %v935 = vpack.c.bf16 %v903, %v903
      %v936 = vpack.c.bf16 %v904, %v904
      %v937 = vpack.c.bf16 %v905, %v905
      %v938 = vpack.c.bf16 %v906, %v906
      %v939 = vpack.c.bf16 %v907, %v907
      %v940 = vpack.c.bf16 %v908, %v908
      %v941 = vpack.c.bf16 %v909, %v909
      %v942 = vpack.c.bf16 %v910, %v910
      %v943 = vpack.c.bf16 %v911, %v911
      %v944 = vpack.c.bf16 %v912, %v912
      %v945 = vpack.c.bf16 %v913, %v913
      %v946 = vpack.c.bf16 %v914, %v914
      %v947 = vpack.c.bf16 %v915, %v915
      %v948 = vpack.c.bf16 %v916, %v916
      %v949 = vpack.c.bf16 %v917, %v917
      %v950 = vpack.c.bf16 %v918, %v918
      %v951 = vpack.c.bf16 %v919, %v919
      %v952 = vunpack.c.l.bf16 %v920
      %v953 = vunpack.c.l.bf16 %v921
      %v954 = vunpack.c.l.bf16 %v922
      %v955 = vunpack.c.l.bf16 %v923
      %v956 = vunpack.c.l.bf16 %v924
      %v957 = vunpack.c.l.bf16 %v925
      %v958 = vunpack.c.l.bf16 %v926
      %v959 = vunpack.c.l.bf16 %v927
      %v960 = vunpack.c.l.bf16 %v928
      %v961 = vunpack.c.l.bf16 %v929
      %v962 = vunpack.c.l.bf16 %v930
      %v963 = vunpack.c.l.bf16 %v931
      %v964 = vunpack.c.l.bf16 %v932
      %v965 = vunpack.c.l.bf16 %v933
      %v966 = vunpack.c.l.bf16 %v934
      %v967 = vunpack.c.l.bf16 %v935
      %v968 = vunpack.c.l.bf16 %v936
      %v969 = vunpack.c.l.bf16 %v937
      %v970 = vunpack.c.l.bf16 %v938
      %v971 = vunpack.c.l.bf16 %v939
      %v972 = vunpack.c.l.bf16 %v940
      %v973 = vunpack.c.l.bf16 %v941
      %v974 = vunpack.c.l.bf16 %v942
      %v975 = vunpack.c.l.bf16 %v943
      %v976 = vunpack.c.l.bf16 %v944
      %v977 = vunpack.c.l.bf16 %v945
      %v978 = vunpack.c.l.bf16 %v946
      %v979 = vunpack.c.l.bf16 %v947
      %v980 = vunpack.c.l.bf16 %v948
      %v981 = vunpack.c.l.bf16 %v949
      %v982 = vunpack.c.l.bf16 %v950
      %v983 = vunpack.c.l.bf16 %v951
      %v984 = vunpack.c.l.bf16 %v391
      %v985 = vunpack.c.l.bf16 %v392
      %v986 = vunpack.c.l.bf16 %v393
      %v987 = vunpack.c.l.bf16 %v394
      %v988 = vunpack.c.l.bf16 %v395
      %v989 = vunpack.c.l.bf16 %v396
      %v990 = vunpack.c.l.bf16 %v397
      %v991 = vunpack.c.l.bf16 %v398
      %v992 = vunpack.c.l.bf16 %v399
      %v993 = vunpack.c.l.bf16 %v400
      %v994 = vunpack.c.l.bf16 %v401
      %v995 = vunpack.c.l.bf16 %v402
      %v996 = vunpack.c.l.bf16 %v403
      %v997 = vunpack.c.l.bf16 %v404
      %v998 = vunpack.c.l.bf16 %v405
      %v999 = vunpack.c.l.bf16 %v406
      %v1000 = vunpack.c.l.bf16 %v407
      %v1001 = vunpack.c.l.bf16 %v408
      %v1002 = vunpack.c.l.bf16 %v409
      %v1003 = vunpack.c.l.bf16 %v410
      %v1004 = vunpack.c.l.bf16 %v411
      %v1005 = vunpack.c.l.bf16 %v412
      %v1006 = vunpack.c.l.bf16 %v413
      %v1007 = vunpack.c.l.bf16 %v414
      %v1008 = vunpack.c.l.bf16 %v415
      %v1009 = vunpack.c.l.bf16 %v416
      %v1010 = vunpack.c.l.bf16 %v417
      %v1011 = vunpack.c.l.bf16 %v418
      %v1012 = vunpack.c.l.bf16 %v419
      %v1013 = vunpack.c.l.bf16 %v420
      %v1014 = vunpack.c.l.bf16 %v421
      %v1015 = vunpack.c.l.bf16 %v422
      %v1016 = vmax.f32 %v952, %v984
      %v1017 = vmax.f32 %v953, %v985
      %v1018 = vmax.f32 %v954, %v986
      %v1019 = vmax.f32 %v955, %v987
      %v1020 = vmax.f32 %v956, %v988
      %v1021 = vmax.f32 %v957, %v989
      %v1022 = vmax.f32 %v958, %v990
      %v1023 = vmax.f32 %v959, %v991
      %v1024 = vmax.f32 %v960, %v992
      %v1025 = vmax.f32 %v961, %v993
      %v1026 = vmax.f32 %v962, %v994
      %v1027 = vmax.f32 %v963, %v995
      %v1028 = vmax.f32 %v964, %v996
      %v1029 = vmax.f32 %v965, %v997
      %v1030 = vmax.f32 %v966, %v998
      %v1031 = vmax.f32 %v967, %v999
      %v1032 = vmax.f32 %v968, %v1000
      %v1033 = vmax.f32 %v969, %v1001
      %v1034 = vmax.f32 %v970, %v1002
      %v1035 = vmax.f32 %v971, %v1003
      %v1036 = vmax.f32 %v972, %v1004
      %v1037 = vmax.f32 %v973, %v1005
      %v1038 = vmax.f32 %v974, %v1006
      %v1039 = vmax.f32 %v975, %v1007
      %v1040 = vmax.f32 %v976, %v1008
      %v1041 = vmax.f32 %v977, %v1009
      %v1042 = vmax.f32 %v978, %v1010
      %v1043 = vmax.f32 %v979, %v1011
      %v1044 = vmax.f32 %v980, %v1012
      %v1045 = vmax.f32 %v981, %v1013
      %v1046 = vmax.f32 %v982, %v1014
      %v1047 = vmax.f32 %v983, %v1015
      %v1048 = vpack.c.bf16 %v1016, %v1016
      %v1049 = vpack.c.bf16 %v1017, %v1017
      %v1050 = vpack.c.bf16 %v1018, %v1018
      %v1051 = vpack.c.bf16 %v1019, %v1019
      %v1052 = vpack.c.bf16 %v1020, %v1020
      %v1053 = vpack.c.bf16 %v1021, %v1021
      %v1054 = vpack.c.bf16 %v1022, %v1022
      %v1055 = vpack.c.bf16 %v1023, %v1023
      %v1056 = vpack.c.bf16 %v1024, %v1024
      %v1057 = vpack.c.bf16 %v1025, %v1025
      %v1058 = vpack.c.bf16 %v1026, %v1026
      %v1059 = vpack.c.bf16 %v1027, %v1027
      %v1060 = vpack.c.bf16 %v1028, %v1028
      %v1061 = vpack.c.bf16 %v1029, %v1029
      %v1062 = vpack.c.bf16 %v1030, %v1030
      %v1063 = vpack.c.bf16 %v1031, %v1031
      %v1064 = vpack.c.bf16 %v1032, %v1032
      %v1065 = vpack.c.bf16 %v1033, %v1033
      %v1066 = vpack.c.bf16 %v1034, %v1034
      %v1067 = vpack.c.bf16 %v1035, %v1035
      %v1068 = vpack.c.bf16 %v1036, %v1036
      %v1069 = vpack.c.bf16 %v1037, %v1037
      %v1070 = vpack.c.bf16 %v1038, %v1038
      %v1071 = vpack.c.bf16 %v1039, %v1039
      %v1072 = vpack.c.bf16 %v1040, %v1040
      %v1073 = vpack.c.bf16 %v1041, %v1041
      %v1074 = vpack.c.bf16 %v1042, %v1042
      %v1075 = vpack.c.bf16 %v1043, %v1043
      %v1076 = vpack.c.bf16 %v1044, %v1044
      %v1077 = vpack.c.bf16 %v1045, %v1045
      %v1078 = vpack.c.bf16 %v1046, %v1046
      %v1079 = vpack.c.bf16 %v1047, %v1047
      %v1080 = vunpack.c.l.bf16 %v1048
      %v1081 = vunpack.c.l.bf16 %v1049
      %v1082 = vunpack.c.l.bf16 %v1050
      %v1083 = vunpack.c.l.bf16 %v1051
      %v1084 = vunpack.c.l.bf16 %v1052
      %v1085 = vunpack.c.l.bf16 %v1053
      %v1086 = vunpack.c.l.bf16 %v1054
      %v1087 = vunpack.c.l.bf16 %v1055
      %v1088 = vunpack.c.l.bf16 %v1056
      %v1089 = vunpack.c.l.bf16 %v1057
      %v1090 = vunpack.c.l.bf16 %v1058
      %v1091 = vunpack.c.l.bf16 %v1059
      %v1092 = vunpack.c.l.bf16 %v1060
      %v1093 = vunpack.c.l.bf16 %v1061
      %v1094 = vunpack.c.l.bf16 %v1062
      %v1095 = vunpack.c.l.bf16 %v1063
      %v1096 = vunpack.c.l.bf16 %v1064
      %v1097 = vunpack.c.l.bf16 %v1065
      %v1098 = vunpack.c.l.bf16 %v1066
      %v1099 = vunpack.c.l.bf16 %v1067
      %v1100 = vunpack.c.l.bf16 %v1068
      %v1101 = vunpack.c.l.bf16 %v1069
      %v1102 = vunpack.c.l.bf16 %v1070
      %v1103 = vunpack.c.l.bf16 %v1071
      %v1104 = vunpack.c.l.bf16 %v1072
      %v1105 = vunpack.c.l.bf16 %v1073
      %v1106 = vunpack.c.l.bf16 %v1074
      %v1107 = vunpack.c.l.bf16 %v1075
      %v1108 = vunpack.c.l.bf16 %v1076
      %v1109 = vunpack.c.l.bf16 %v1077
      %v1110 = vunpack.c.l.bf16 %v1078
      %v1111 = vunpack.c.l.bf16 %v1079
      %v1112 = vunpack.c.l.bf16 %v345
      %v1113 = vunpack.c.l.bf16 %v348
      %v1114 = vunpack.c.l.bf16 %v351
      %v1115 = vunpack.c.l.bf16 %v354
      %v1116 = vunpack.c.l.bf16 %v357
      %v1117 = vunpack.c.l.bf16 %v360
      %v1118 = vunpack.c.l.bf16 %v363
      %v1119 = vunpack.c.l.bf16 %v366
      %v1120 = vunpack.c.l.bf16 %v369
      %v1121 = vunpack.c.l.bf16 %v372
      %v1122 = vunpack.c.l.bf16 %v375
      %v1123 = vunpack.c.l.bf16 %v378
      %v1124 = vunpack.c.l.bf16 %v381
      %v1125 = vunpack.c.l.bf16 %v384
      %v1126 = vunpack.c.l.bf16 %v387
      %v1127 = vunpack.c.l.bf16 %v390
      %v1176 = vrot.slane %v856, 1
      %v1177 = vrot.slane %v857, 1
      %v1178 = vsel %vm647, %v1176, %v1177
      %v1179 = vrot.slane %v1112, 1
      %v1180 = vsel %vm647, %v1177, %v1179
      %v1181 = vrot.slane %v858, 1
      %v1182 = vrot.slane %v859, 1
      %v1183 = vsel %vm647, %v1181, %v1182
      %v1184 = vrot.slane %v1113, 1
      %v1185 = vsel %vm647, %v1182, %v1184
      %v1186 = vrot.slane %v860, 1
      %v1187 = vrot.slane %v861, 1
      %v1188 = vsel %vm647, %v1186, %v1187
      %v1189 = vrot.slane %v1114, 1
      %v1190 = vsel %vm647, %v1187, %v1189
      %v1191 = vrot.slane %v862, 1
      %v1192 = vrot.slane %v863, 1
      %v1193 = vsel %vm647, %v1191, %v1192
      %v1194 = vrot.slane %v1115, 1
      %v1195 = vsel %vm647, %v1192, %v1194
      %v1196 = vrot.slane %v864, 1
      %v1197 = vrot.slane %v865, 1
      %v1198 = vsel %vm647, %v1196, %v1197
      %v1199 = vrot.slane %v1116, 1
      %v1200 = vsel %vm647, %v1197, %v1199
      %v1201 = vrot.slane %v866, 1
      %v1202 = vrot.slane %v867, 1
      %v1203 = vsel %vm647, %v1201, %v1202
      %v1204 = vrot.slane %v1117, 1
      %v1205 = vsel %vm647, %v1202, %v1204
      %v1206 = vrot.slane %v868, 1
      %v1207 = vrot.slane %v869, 1
      %v1208 = vsel %vm647, %v1206, %v1207
      %v1209 = vrot.slane %v1118, 1
      %v1210 = vsel %vm647, %v1207, %v1209
      %v1211 = vrot.slane %v870, 1
      %v1212 = vrot.slane %v871, 1
      %v1213 = vsel %vm647, %v1211, %v1212
      %v1214 = vrot.slane %v1119, 1
      %v1215 = vsel %vm647, %v1212, %v1214
      %v1216 = vrot.slane %v872, 1
      %v1217 = vrot.slane %v873, 1
      %v1218 = vsel %vm647, %v1216, %v1217
      %v1219 = vrot.slane %v1120, 1
      %v1220 = vsel %vm647, %v1217, %v1219
      %v1221 = vrot.slane %v874, 1
      %v1222 = vrot.slane %v875, 1
      %v1223 = vsel %vm647, %v1221, %v1222
      %v1224 = vrot.slane %v1121, 1
      %v1225 = vsel %vm647, %v1222, %v1224
      %v1226 = vrot.slane %v876, 1
      %v1227 = vrot.slane %v877, 1
      %v1228 = vsel %vm647, %v1226, %v1227
      %v1229 = vrot.slane %v1122, 1
      %v1230 = vsel %vm647, %v1227, %v1229
      %v1231 = vrot.slane %v878, 1
      %v1232 = vrot.slane %v879, 1
      %v1233 = vsel %vm647, %v1231, %v1232
      %v1234 = vrot.slane %v1123, 1
      %v1235 = vsel %vm647, %v1232, %v1234
      %v1236 = vrot.slane %v880, 1
      %v1237 = vrot.slane %v881, 1
      %v1238 = vsel %vm647, %v1236, %v1237
      %v1239 = vrot.slane %v1124, 1
      %v1240 = vsel %vm647, %v1237, %v1239
      %v1241 = vrot.slane %v882, 1
      %v1242 = vrot.slane %v883, 1
      %v1243 = vsel %vm647, %v1241, %v1242
      %v1244 = vrot.slane %v1125, 1
      %v1245 = vsel %vm647, %v1242, %v1244
      %v1246 = vrot.slane %v884, 1
      %v1247 = vrot.slane %v885, 1
      %v1248 = vsel %vm647, %v1246, %v1247
      %v1249 = vrot.slane %v1126, 1
      %v1250 = vsel %vm647, %v1247, %v1249
      %v1251 = vrot.slane %v886, 1
      %v1252 = vrot.slane %v887, 1
      %v1253 = vsel %vm647, %v1251, %v1252
      %v1254 = vrot.slane %v1127, 1
      %v1255 = vsel %vm647, %v1252, %v1254
      %v1288 = vmax.f32 %v1080, %v1178
      %v1289 = vmax.f32 %v1081, %v1180
      %v1290 = vmax.f32 %v1082, %v1183
      %v1291 = vmax.f32 %v1083, %v1185
      %v1292 = vmax.f32 %v1084, %v1188
      %v1293 = vmax.f32 %v1085, %v1190
      %v1294 = vmax.f32 %v1086, %v1193
      %v1295 = vmax.f32 %v1087, %v1195
      %v1296 = vmax.f32 %v1088, %v1198
      %v1297 = vmax.f32 %v1089, %v1200
      %v1298 = vmax.f32 %v1090, %v1203
      %v1299 = vmax.f32 %v1091, %v1205
      %v1300 = vmax.f32 %v1092, %v1208
      %v1301 = vmax.f32 %v1093, %v1210
      %v1302 = vmax.f32 %v1094, %v1213
      %v1303 = vmax.f32 %v1095, %v1215
      %v1304 = vmax.f32 %v1096, %v1218
      %v1305 = vmax.f32 %v1097, %v1220
      %v1306 = vmax.f32 %v1098, %v1223
      %v1307 = vmax.f32 %v1099, %v1225
      %v1308 = vmax.f32 %v1100, %v1228
      %v1309 = vmax.f32 %v1101, %v1230
      %v1310 = vmax.f32 %v1102, %v1233
      %v1311 = vmax.f32 %v1103, %v1235
      %v1312 = vmax.f32 %v1104, %v1238
      %v1313 = vmax.f32 %v1105, %v1240
      %v1314 = vmax.f32 %v1106, %v1243
      %v1315 = vmax.f32 %v1107, %v1245
      %v1316 = vmax.f32 %v1108, %v1248
      %v1317 = vmax.f32 %v1109, %v1250
      %v1318 = vmax.f32 %v1110, %v1253
      %v1319 = vmax.f32 %v1111, %v1255
      %v1320 = vpack.c.bf16 %v1288, %v1288
      %v1321 = vpack.c.bf16 %v1289, %v1289
      %v1322 = vpack.c.bf16 %v1290, %v1290
      %v1323 = vpack.c.bf16 %v1291, %v1291
      %v1324 = vpack.c.bf16 %v1292, %v1292
      %v1325 = vpack.c.bf16 %v1293, %v1293
      %v1326 = vpack.c.bf16 %v1294, %v1294
      %v1327 = vpack.c.bf16 %v1295, %v1295
      %v1328 = vpack.c.bf16 %v1296, %v1296
      %v1329 = vpack.c.bf16 %v1297, %v1297
      %v1330 = vpack.c.bf16 %v1298, %v1298
      %v1331 = vpack.c.bf16 %v1299, %v1299
      %v1332 = vpack.c.bf16 %v1300, %v1300
      %v1333 = vpack.c.bf16 %v1301, %v1301
      %v1334 = vpack.c.bf16 %v1302, %v1302
      %v1335 = vpack.c.bf16 %v1303, %v1303
      %v1336 = vpack.c.bf16 %v1304, %v1304
      %v1337 = vpack.c.bf16 %v1305, %v1305
      %v1338 = vpack.c.bf16 %v1306, %v1306
      %v1339 = vpack.c.bf16 %v1307, %v1307
      %v1340 = vpack.c.bf16 %v1308, %v1308
      %v1341 = vpack.c.bf16 %v1309, %v1309
      %v1342 = vpack.c.bf16 %v1310, %v1310
      %v1343 = vpack.c.bf16 %v1311, %v1311
      %v1344 = vpack.c.bf16 %v1312, %v1312
      %v1345 = vpack.c.bf16 %v1313, %v1313
      %v1346 = vpack.c.bf16 %v1314, %v1314
      %v1347 = vpack.c.bf16 %v1315, %v1315
      %v1348 = vpack.c.bf16 %v1316, %v1316
      %v1349 = vpack.c.bf16 %v1317, %v1317
      %v1350 = vpack.c.bf16 %v1318, %v1318
      %v1351 = vpack.c.bf16 %v1319, %v1319
      %v1352 = vunpack.c.l.bf16 %v1320
      %v1353 = vunpack.c.l.bf16 %v1321
      %v1354 = vunpack.c.l.bf16 %v1322
      %v1355 = vunpack.c.l.bf16 %v1323
      %v1356 = vunpack.c.l.bf16 %v1324
      %v1357 = vunpack.c.l.bf16 %v1325
      %v1358 = vunpack.c.l.bf16 %v1326
      %v1359 = vunpack.c.l.bf16 %v1327
      %v1360 = vunpack.c.l.bf16 %v1328
      %v1361 = vunpack.c.l.bf16 %v1329
      %v1362 = vunpack.c.l.bf16 %v1330
      %v1363 = vunpack.c.l.bf16 %v1331
      %v1364 = vunpack.c.l.bf16 %v1332
      %v1365 = vunpack.c.l.bf16 %v1333
      %v1366 = vunpack.c.l.bf16 %v1334
      %v1367 = vunpack.c.l.bf16 %v1335
      %v1368 = vunpack.c.l.bf16 %v1336
      %v1369 = vunpack.c.l.bf16 %v1337
      %v1370 = vunpack.c.l.bf16 %v1338
      %v1371 = vunpack.c.l.bf16 %v1339
      %v1372 = vunpack.c.l.bf16 %v1340
      %v1373 = vunpack.c.l.bf16 %v1341
      %v1374 = vunpack.c.l.bf16 %v1342
      %v1375 = vunpack.c.l.bf16 %v1343
      %v1376 = vunpack.c.l.bf16 %v1344
      %v1377 = vunpack.c.l.bf16 %v1345
      %v1378 = vunpack.c.l.bf16 %v1346
      %v1379 = vunpack.c.l.bf16 %v1347
      %v1380 = vunpack.c.l.bf16 %v1348
      %v1381 = vunpack.c.l.bf16 %v1349
      %v1382 = vunpack.c.l.bf16 %v1350
      %v1383 = vunpack.c.l.bf16 %v1351
      %v1384 = vunpack.c.l.bf16 %v306
      %v1385 = vunpack.c.l.bf16 %v307
      %v1386 = vmax.f32 %v1352, %v425
      %v1387 = vmax.f32 %v1353, %v426
      %v1388 = vmax.f32 %v1354, %v427
      %v1389 = vmax.f32 %v1355, %v428
      %v1390 = vmax.f32 %v1356, %v429
      %v1391 = vmax.f32 %v1357, %v430
      %v1392 = vmax.f32 %v1358, %v431
      %v1393 = vmax.f32 %v1359, %v432
      %v1394 = vmax.f32 %v1360, %v433
      %v1395 = vmax.f32 %v1361, %v434
      %v1396 = vmax.f32 %v1362, %v435
      %v1397 = vmax.f32 %v1363, %v436
      %v1398 = vmax.f32 %v1364, %v437
      %v1399 = vmax.f32 %v1365, %v438
      %v1400 = vmax.f32 %v1366, %v439
      %v1401 = vmax.f32 %v1367, %v440
      %v1402 = vmax.f32 %v1368, %v441
      %v1403 = vmax.f32 %v1369, %v442
      %v1404 = vmax.f32 %v1370, %v443
      %v1405 = vmax.f32 %v1371, %v444
      %v1406 = vmax.f32 %v1372, %v445
      %v1407 = vmax.f32 %v1373, %v446
      %v1408 = vmax.f32 %v1374, %v447
      %v1409 = vmax.f32 %v1375, %v448
      %v1410 = vmax.f32 %v1376, %v449
      %v1411 = vmax.f32 %v1377, %v450
      %v1412 = vmax.f32 %v1378, %v451
      %v1413 = vmax.f32 %v1379, %v452
      %v1414 = vmax.f32 %v1380, %v453
      %v1415 = vmax.f32 %v1381, %v454
      %v1416 = vmax.f32 %v1382, %v1384
      %v1417 = vmax.f32 %v1383, %v1385
      %v1418 = vpack.c.bf16 %v1386, %v1386
      %v1419 = vpack.c.bf16 %v1387, %v1387
      %v1420 = vpack.c.bf16 %v1388, %v1388
      %v1421 = vpack.c.bf16 %v1389, %v1389
      %v1422 = vpack.c.bf16 %v1390, %v1390
      %v1423 = vpack.c.bf16 %v1391, %v1391
      %v1424 = vpack.c.bf16 %v1392, %v1392
      %v1425 = vpack.c.bf16 %v1393, %v1393
      %v1426 = vpack.c.bf16 %v1394, %v1394
      %v1427 = vpack.c.bf16 %v1395, %v1395
      %v1428 = vpack.c.bf16 %v1396, %v1396
      %v1429 = vpack.c.bf16 %v1397, %v1397
      %v1430 = vpack.c.bf16 %v1398, %v1398
      %v1431 = vpack.c.bf16 %v1399, %v1399
      %v1432 = vpack.c.bf16 %v1400, %v1400
      %v1433 = vpack.c.bf16 %v1401, %v1401
      %v1434 = vpack.c.bf16 %v1402, %v1402
      %v1435 = vpack.c.bf16 %v1403, %v1403
      %v1436 = vpack.c.bf16 %v1404, %v1404
      %v1437 = vpack.c.bf16 %v1405, %v1405
      %v1438 = vpack.c.bf16 %v1406, %v1406
      %v1439 = vpack.c.bf16 %v1407, %v1407
      %v1440 = vpack.c.bf16 %v1408, %v1408
      %v1441 = vpack.c.bf16 %v1409, %v1409
      %v1442 = vpack.c.bf16 %v1410, %v1410
      %v1443 = vpack.c.bf16 %v1411, %v1411
      %v1444 = vpack.c.bf16 %v1412, %v1412
      %v1445 = vpack.c.bf16 %v1413, %v1413
      %v1446 = vpack.c.bf16 %v1414, %v1414
      %v1447 = vpack.c.bf16 %v1415, %v1415
      %v1448 = vpack.c.bf16 %v1416, %v1416
      %v1449 = vpack.c.bf16 %v1417, %v1417
      %v1450 = vunpack.c.l.bf16 %v1418
      %v1451 = vunpack.c.l.bf16 %v1419
      %v1452 = vunpack.c.l.bf16 %v1420
      %v1453 = vunpack.c.l.bf16 %v1421
      %v1454 = vunpack.c.l.bf16 %v1422
      %v1455 = vunpack.c.l.bf16 %v1423
      %v1456 = vunpack.c.l.bf16 %v1424
      %v1457 = vunpack.c.l.bf16 %v1425
      %v1458 = vunpack.c.l.bf16 %v1426
      %v1459 = vunpack.c.l.bf16 %v1427
      %v1460 = vunpack.c.l.bf16 %v1428
      %v1461 = vunpack.c.l.bf16 %v1429
      %v1462 = vunpack.c.l.bf16 %v1430
      %v1463 = vunpack.c.l.bf16 %v1431
      %v1464 = vunpack.c.l.bf16 %v1432
      %v1465 = vunpack.c.l.bf16 %v1433
      %v1466 = vunpack.c.l.bf16 %v1434
      %v1467 = vunpack.c.l.bf16 %v1435
      %v1468 = vunpack.c.l.bf16 %v1436
      %v1469 = vunpack.c.l.bf16 %v1437
      %v1470 = vunpack.c.l.bf16 %v1438
      %v1471 = vunpack.c.l.bf16 %v1439
      %v1472 = vunpack.c.l.bf16 %v1440
      %v1473 = vunpack.c.l.bf16 %v1441
      %v1474 = vunpack.c.l.bf16 %v1442
      %v1475 = vunpack.c.l.bf16 %v1443
      %v1476 = vunpack.c.l.bf16 %v1444
      %v1477 = vunpack.c.l.bf16 %v1445
      %v1478 = vunpack.c.l.bf16 %v1446
      %v1479 = vunpack.c.l.bf16 %v1447
      %v1480 = vunpack.c.l.bf16 %v1448
      %v1481 = vunpack.c.l.bf16 %v1449
      %v1482 = vunpack.c.l.bf16 %v341
      %v1483 = vunpack.c.l.bf16 %v342
      %v1484 = vmax.f32 %v1450, %v457
      %v1485 = vmax.f32 %v1451, %v458
      %v1486 = vmax.f32 %v1452, %v459
      %v1487 = vmax.f32 %v1453, %v460
      %v1488 = vmax.f32 %v1454, %v461
      %v1489 = vmax.f32 %v1455, %v462
      %v1490 = vmax.f32 %v1456, %v463
      %v1491 = vmax.f32 %v1457, %v464
      %v1492 = vmax.f32 %v1458, %v465
      %v1493 = vmax.f32 %v1459, %v466
      %v1494 = vmax.f32 %v1460, %v467
      %v1495 = vmax.f32 %v1461, %v468
      %v1496 = vmax.f32 %v1462, %v469
      %v1497 = vmax.f32 %v1463, %v470
      %v1498 = vmax.f32 %v1464, %v471
      %v1499 = vmax.f32 %v1465, %v472
      %v1500 = vmax.f32 %v1466, %v473
      %v1501 = vmax.f32 %v1467, %v474
      %v1502 = vmax.f32 %v1468, %v475
      %v1503 = vmax.f32 %v1469, %v476
      %v1504 = vmax.f32 %v1470, %v477
      %v1505 = vmax.f32 %v1471, %v478
      %v1506 = vmax.f32 %v1472, %v479
      %v1507 = vmax.f32 %v1473, %v480
      %v1508 = vmax.f32 %v1474, %v481
      %v1509 = vmax.f32 %v1475, %v482
      %v1510 = vmax.f32 %v1476, %v483
      %v1511 = vmax.f32 %v1477, %v484
      %v1512 = vmax.f32 %v1478, %v485
      %v1513 = vmax.f32 %v1479, %v486
      %v1514 = vmax.f32 %v1480, %v1482
      %v1515 = vmax.f32 %v1481, %v1483
      %v1516 = vpack.c.bf16 %v1484, %v1484
      %v1517 = vpack.c.bf16 %v1485, %v1485
      %v1518 = vpack.c.bf16 %v1486, %v1486
      %v1519 = vpack.c.bf16 %v1487, %v1487
      %v1520 = vpack.c.bf16 %v1488, %v1488
      %v1521 = vpack.c.bf16 %v1489, %v1489
      %v1522 = vpack.c.bf16 %v1490, %v1490
      %v1523 = vpack.c.bf16 %v1491, %v1491
      %v1524 = vpack.c.bf16 %v1492, %v1492
      %v1525 = vpack.c.bf16 %v1493, %v1493
      %v1526 = vpack.c.bf16 %v1494, %v1494
      %v1527 = vpack.c.bf16 %v1495, %v1495
      %v1528 = vpack.c.bf16 %v1496, %v1496
      %v1529 = vpack.c.bf16 %v1497, %v1497
      %v1530 = vpack.c.bf16 %v1498, %v1498
      %v1531 = vpack.c.bf16 %v1499, %v1499
      %v1532 = vpack.c.bf16 %v1500, %v1500
      %v1533 = vpack.c.bf16 %v1501, %v1501
      %v1534 = vpack.c.bf16 %v1502, %v1502
      %v1535 = vpack.c.bf16 %v1503, %v1503
      %v1536 = vpack.c.bf16 %v1504, %v1504
      %v1537 = vpack.c.bf16 %v1505, %v1505
      %v1538 = vpack.c.bf16 %v1506, %v1506
      %v1539 = vpack.c.bf16 %v1507, %v1507
      %v1540 = vpack.c.bf16 %v1508, %v1508
      %v1541 = vpack.c.bf16 %v1509, %v1509
      %v1542 = vpack.c.bf16 %v1510, %v1510
      %v1543 = vpack.c.bf16 %v1511, %v1511
      %v1544 = vpack.c.bf16 %v1512, %v1512
      %v1545 = vpack.c.bf16 %v1513, %v1513
      %v1546 = vpack.c.bf16 %v1514, %v1514
      %v1547 = vpack.c.bf16 %v1515, %v1515
      %v1548 = vunpack.c.l.bf16 %v1516
      %v1549 = vunpack.c.l.bf16 %v1517
      %v1550 = vunpack.c.l.bf16 %v1518
      %v1551 = vunpack.c.l.bf16 %v1519
      %v1552 = vunpack.c.l.bf16 %v1520
      %v1553 = vunpack.c.l.bf16 %v1521
      %v1554 = vunpack.c.l.bf16 %v1522
      %v1555 = vunpack.c.l.bf16 %v1523
      %v1556 = vunpack.c.l.bf16 %v1524
      %v1557 = vunpack.c.l.bf16 %v1525
      %v1558 = vunpack.c.l.bf16 %v1526
      %v1559 = vunpack.c.l.bf16 %v1527
      %v1560 = vunpack.c.l.bf16 %v1528
      %v1561 = vunpack.c.l.bf16 %v1529
      %v1562 = vunpack.c.l.bf16 %v1530
      %v1563 = vunpack.c.l.bf16 %v1531
      %v1564 = vunpack.c.l.bf16 %v1532
      %v1565 = vunpack.c.l.bf16 %v1533
      %v1566 = vunpack.c.l.bf16 %v1534
      %v1567 = vunpack.c.l.bf16 %v1535
      %v1568 = vunpack.c.l.bf16 %v1536
      %v1569 = vunpack.c.l.bf16 %v1537
      %v1570 = vunpack.c.l.bf16 %v1538
      %v1571 = vunpack.c.l.bf16 %v1539
      %v1572 = vunpack.c.l.bf16 %v1540
      %v1573 = vunpack.c.l.bf16 %v1541
      %v1574 = vunpack.c.l.bf16 %v1542
      %v1575 = vunpack.c.l.bf16 %v1543
      %v1576 = vunpack.c.l.bf16 %v1544
      %v1577 = vunpack.c.l.bf16 %v1545
      %v1578 = vunpack.c.l.bf16 %v1546
      %v1579 = vunpack.c.l.bf16 %v1547
      %v1580 = vunpack.c.l.bf16 %v308
      %v1584 = vrot.slane %v1384, 1
      %v1585 = vrot.slane %v1385, 1
      %v1586 = vsel %vm647, %v1584, %v1585
      %v1587 = vrot.slane %v1580, 1
      %v1588 = vsel %vm647, %v1585, %v1587
      %v1591 = vmax.f32 %v1548, %v655
      %v1592 = vmax.f32 %v1549, %v657
      %v1593 = vmax.f32 %v1550, %v660
      %v1594 = vmax.f32 %v1551, %v662
      %v1595 = vmax.f32 %v1552, %v665
      %v1596 = vmax.f32 %v1553, %v667
      %v1597 = vmax.f32 %v1554, %v670
      %v1598 = vmax.f32 %v1555, %v672
      %v1599 = vmax.f32 %v1556, %v675
      %v1600 = vmax.f32 %v1557, %v677
      %v1601 = vmax.f32 %v1558, %v680
      %v1602 = vmax.f32 %v1559, %v682
      %v1603 = vmax.f32 %v1560, %v685
      %v1604 = vmax.f32 %v1561, %v687
      %v1605 = vmax.f32 %v1562, %v690
      %v1606 = vmax.f32 %v1563, %v692
      %v1607 = vmax.f32 %v1564, %v695
      %v1608 = vmax.f32 %v1565, %v697
      %v1609 = vmax.f32 %v1566, %v700
      %v1610 = vmax.f32 %v1567, %v702
      %v1611 = vmax.f32 %v1568, %v705
      %v1612 = vmax.f32 %v1569, %v707
      %v1613 = vmax.f32 %v1570, %v710
      %v1614 = vmax.f32 %v1571, %v712
      %v1615 = vmax.f32 %v1572, %v715
      %v1616 = vmax.f32 %v1573, %v717
      %v1617 = vmax.f32 %v1574, %v720
      %v1618 = vmax.f32 %v1575, %v722
      %v1619 = vmax.f32 %v1576, %v725
      %v1620 = vmax.f32 %v1577, %v727
      %v1621 = vmax.f32 %v1578, %v1586
      %v1622 = vmax.f32 %v1579, %v1588
      %v1623 = vpack.c.bf16 %v1591, %v1591
      %v1624 = vpack.c.bf16 %v1592, %v1592
      %v1625 = vpack.c.bf16 %v1593, %v1593
      %v1626 = vpack.c.bf16 %v1594, %v1594
      %v1627 = vpack.c.bf16 %v1595, %v1595
      %v1628 = vpack.c.bf16 %v1596, %v1596
      %v1629 = vpack.c.bf16 %v1597, %v1597
      %v1630 = vpack.c.bf16 %v1598, %v1598
      %v1631 = vpack.c.bf16 %v1599, %v1599
      %v1632 = vpack.c.bf16 %v1600, %v1600
      %v1633 = vpack.c.bf16 %v1601, %v1601
      %v1634 = vpack.c.bf16 %v1602, %v1602
      %v1635 = vpack.c.bf16 %v1603, %v1603
      %v1636 = vpack.c.bf16 %v1604, %v1604
      %v1637 = vpack.c.bf16 %v1605, %v1605
      %v1638 = vpack.c.bf16 %v1606, %v1606
      %v1639 = vpack.c.bf16 %v1607, %v1607
      %v1640 = vpack.c.bf16 %v1608, %v1608
      %v1641 = vpack.c.bf16 %v1609, %v1609
      %v1642 = vpack.c.bf16 %v1610, %v1610
      %v1643 = vpack.c.bf16 %v1611, %v1611
      %v1644 = vpack.c.bf16 %v1612, %v1612
      %v1645 = vpack.c.bf16 %v1613, %v1613
      %v1646 = vpack.c.bf16 %v1614, %v1614
      %v1647 = vpack.c.bf16 %v1615, %v1615
      %v1648 = vpack.c.bf16 %v1616, %v1616
      %v1649 = vpack.c.bf16 %v1617, %v1617
      %v1650 = vpack.c.bf16 %v1618, %v1618
      %v1651 = vpack.c.bf16 %v1619, %v1619
      %v1652 = vpack.c.bf16 %v1620, %v1620
      %v1653 = vpack.c.bf16 %v1621, %v1621
      %v1654 = vpack.c.bf16 %v1622, %v1622
      %vm1655 = vcmask 519168
      %1656 = vst.msk [vmem:[%s257] sm:$0xf] %vm1655, %v1623
      %1657 = vst.msk [vmem:[%s257 + $0x4] sm:$0xf] %vm1655, %v1624
      %1658 = vst.msk [vmem:[%s257 + $0x8] sm:$0xf] %vm1655, %v1625
      %1659 = vst.msk [vmem:[%s257 + $0xc] sm:$0xf] %vm1655, %v1626
      %1660 = vst.msk [vmem:[%s257 + $0x10] sm:$0xf] %vm1655, %v1627
      %1661 = vst.msk [vmem:[%s257 + $0x14] sm:$0xf] %vm1655, %v1628
      %1662 = vst.msk [vmem:[%s257 + $0x18] sm:$0xf] %vm1655, %v1629
      %1663 = vst.msk [vmem:[%s257 + $0x1c] sm:$0xf] %vm1655, %v1630
      %1664 = vst.msk [vmem:[%s257 + $0x20] sm:$0xf] %vm1655, %v1631
      %1665 = vst.msk [vmem:[%s257 + $0x24] sm:$0xf] %vm1655, %v1632
      %1666 = vst.msk [vmem:[%s257 + $0x28] sm:$0xf] %vm1655, %v1633
      %1667 = vst.msk [vmem:[%s257 + $0x2c] sm:$0xf] %vm1655, %v1634
      %1668 = vst.msk [vmem:[%s257 + $0x30] sm:$0xf] %vm1655, %v1635
      %1669 = vst.msk [vmem:[%s257 + $0x34] sm:$0xf] %vm1655, %v1636
      %1670 = vst.msk [vmem:[%s257 + $0x38] sm:$0xf] %vm1655, %v1637
      %1671 = vst.msk [vmem:[%s257 + $0x3c] sm:$0xf] %vm1655, %v1638
      %1672 = vst.msk [vmem:[%s257 + $0x40] sm:$0xf] %vm1655, %v1639
      %1673 = vst.msk [vmem:[%s257 + $0x44] sm:$0xf] %vm1655, %v1640
      %1674 = vst.msk [vmem:[%s257 + $0x48] sm:$0xf] %vm1655, %v1641
      %1675 = vst.msk [vmem:[%s257 + $0x4c] sm:$0xf] %vm1655, %v1642
      %1676 = vst.msk [vmem:[%s257 + $0x50] sm:$0xf] %vm1655, %v1643
      %1677 = vst.msk [vmem:[%s257 + $0x54] sm:$0xf] %vm1655, %v1644
      %1678 = vst.msk [vmem:[%s257 + $0x58] sm:$0xf] %vm1655, %v1645
      %1679 = vst.msk [vmem:[%s257 + $0x5c] sm:$0xf] %vm1655, %v1646
      %1680 = vst.msk [vmem:[%s257 + $0x60] sm:$0xf] %vm1655, %v1647
      %1681 = vst.msk [vmem:[%s257 + $0x64] sm:$0xf] %vm1655, %v1648
      %1682 = vst.msk [vmem:[%s257 + $0x68] sm:$0xf] %vm1655, %v1649
      %1683 = vst.msk [vmem:[%s257 + $0x6c] sm:$0xf] %vm1655, %v1650
      %1684 = vst.msk [vmem:[%s257 + $0x70] sm:$0xf] %vm1655, %v1651
      %1685 = vst.msk [vmem:[%s257 + $0x74] sm:$0xf] %vm1655, %v1652
      %1686 = vst.msk [vmem:[%s257 + $0x78] sm:$0xf] %vm1655, %v1653
      %1687 = vst.msk [vmem:[%s257 + $0x7c] sm:$0xf] %vm1655, %v1654
      %p1688 = scmp.lt.s32.totalorder %s15, 1
      %s1689 = scalar_select %p1688, %s15, 1
      %s1690 = smul.addr %s1689, 32
      %s1691 = smul.addr %s1690, 4
      %s1692 = scalar_lea.vmem %s4, %s1691
      // Predicated region
      $region37: #{forward.12} parent=35 // pred_check
        %p1693 = pneg %p137
      $region38: #{forward.12} parent=35 // pred_check_branch
        %1695 = sbr.rel (%p1693) target = $region40
      $region39: #{forward.12} parent=35 // pred_region
        _
      $region40: #{forward.12} parent=35 // pred_fallthru
        _
    $region36: #{forward.12} parent=5 // pred_fallthru
      _
    %p1696 = scmp.le.s32.totalorder 2, %s10
    // Predicated region
    $region41: #{forward.12} parent=5 // pred_check
      %p1697 = pneg %p1696
    $region42: #{forward.12} parent=5 // pred_check_branch
      %1699 = sbr.rel (%p1697) target = $region44
    $region43: #{forward.12} parent=5 // pred_region
      %s1700 = ssub.s32 %s10, 2
      // Predicated region
      $region45: #{forward.12} parent=43 // pred_check
        %p1701 = pneg %p143
      $region46: #{forward.12} parent=43 // pred_check_branch
        %1703 = sbr.rel (%p1701) target = $region48
      $region47: #{forward.12} parent=43 // pred_region
        %p1704 = scmp.lt.s32.totalorder %s16, 1
        %s1705 = scalar_select %p1704, %s16, 1
        %s1706 = smul.addr %s1705, 32
        %s1707 = smul.addr %s1706, 4
        %s1708 = scalar_lea.vmem %s4, %s1707
      $region48: #{forward.12} parent=43 // pred_fallthru
        _
    $region44: #{forward.12} parent=5 // pred_fallthru
      _
  $region6: #{forward.12} parent=0 // loop_footer
    %s14 = sadd.s32 1, %s10
  $region7: #{forward.12} parent=0 // loop_footer_branch
    %9 = sbr.rel target = $region3
  $region8: #{forward.12} parent=0 // loop_exit
    _

// kernel: forward.13
$region0: #{forward.13}
  #allocation0 [shape = 'u32[]', space=smem, size = 0x4, offset = 0x4, fixed_abs, tag = 'smem constant byte address 0x4 - core index']
  #allocation1 [shape = 'u32[72,128]{1,0:T(1,128)}', space=vmem, size = 0x9000, scoped, tag = 'internal scratch']
  %s0 = inlined_call_operand.vmem [shape: bf16[512,640], index: 0, kind: input, shape index: {}]
  %s1 = inlined_call_operand.vmem [shape: bf16[640,128], index: 1, kind: input, shape index: {}]
  %s2 = inlined_call_operand.vmem [shape: f32[1,128], index: 2, kind: input, shape index: {}]
  %s3 = inlined_call_operand.vmem [shape: f32[1,128], index: 3, kind: input, shape index: {}]
  %s4 = inlined_call_operand.vmem [shape: bf16[512,128], index: 4, kind: output, shape index: {}]
  %s5 = sld [smem:[#allocation0]]
  $region49: #{forward.13} parent=0
    _
  %s7 = ssub.s32 1, %s5
  %s8 = scalar_select 0, %s7, %s5
  loop: start=0, step=1, limit=4
  $region2: #{forward.13} parent=0 // loop_pre_header
    _
  $region3: #{forward.13} parent=0 // loop_header
    %s10 = sphi 0, %s14
    %p11 = scmp.ge.s32.totalorder %s10, 4
    %s17 = sphi 0, %s29
    %s18 = sphi 0, %s25
    %s19 = sphi 0, %s17
    %s20 = sphi 0, %s18
    %s21 = sphi 0, %s19
    %s22 = sphi 0, %s20
    %s32 = sphi 0, %s34
    %s35 = sphi 0, %s32
    %s36 = sphi 0, %s35
    %s52 = sphi 0, %s36
    %s58 = sphi 0, %s60
    %s61 = sphi 0, %s58
    %s62 = sphi 0, %s61
    %s78 = sphi 0, %s62
    %s84 = sphi 0, %s86
    %s87 = sphi 0, %s84
    %s88 = sphi 0, %s87
    %s104 = sphi 0, %s88
    %s110 = sphi 0, %s112
    %s113 = sphi 0, %s110
    %s114 = sphi 0, %s113
    %s130 = sphi 0, %s114
    %s138 = sphi 0, %s140
    %s141 = sphi 0, %s138
    %s142 = sphi 0, %s141
    %s158 = sphi 0, %s142
  $region4: #{forward.13} parent=0 // loop_header_branch
    %13 = sbr.rel (%p11) target = $region8
  $region5: #{forward.13} parent=0 // loop_body
    %s15 = ssub.s32 %s10, 1
    %s16 = ssub.s32 %s10, 2
    %s23 = sadd.s32 1, %s18
    %p24 = scmp.ge.s32.totalorder %s23, 1
    %s25 = scalar_select %p24, 0, %s23
    %s26 = sadd.s32 1, %s17
    %s27 = scalar_select %p24, %s26, %s17
    %p28 = scmp.ge.s32.totalorder %s27, 2
    %s29 = scalar_select %p28, 0, %s27
    %s30 = ssub.s32 %s17, %s29
    %p31 = scmp.eq.s32.totalorder %s30, 0
    %s33 = sadd.s32 %s32, 1
    %s34 = scalar_select %p31, %s32, %s33
    %p37 = pneg %p31
    %p38 = scmp.eq.s32.totalorder %s10, 1
    %p39 = por %p37, %p38
    %p40 = scmp.ne.s32.totalorder %s32, %s35
    %p41 = scmp.eq.s32.totalorder %s10, 0
    %p42 = por %p40, %p41
    %p43 = scmp.ne.s32.totalorder %s32, %s35
    %p44 = scmp.eq.s32.totalorder %s15, 1
    %p45 = por %p43, %p44
    %p46 = scmp.ne.s32.totalorder %s35, %s36
    %p47 = scmp.eq.s32.totalorder %s15, 0
    %p48 = por %p46, %p47
    %p49 = scmp.ne.s32.totalorder %s35, %s36
    %p50 = scmp.eq.s32.totalorder %s16, 1
    %p51 = por %p49, %p50
    %p53 = scmp.ne.s32.totalorder %s36, %s52
    %p54 = scmp.eq.s32.totalorder %s16, 0
    %p55 = por %p53, %p54
    %s56 = ssub.s32 %s18, %s25
    %p57 = scmp.eq.s32.totalorder %s56, 0
    %s59 = sadd.s32 %s58, 1
    %s60 = scalar_select %p57, %s58, %s59
    %p63 = pneg %p57
    %p64 = scmp.eq.s32.totalorder %s10, 1
    %p65 = por %p63, %p64
    %p66 = scmp.ne.s32.totalorder %s58, %s61
    %p67 = scmp.eq.s32.totalorder %s10, 0
    %p68 = por %p66, %p67
    %p69 = scmp.ne.s32.totalorder %s58, %s61
    %p70 = scmp.eq.s32.totalorder %s15, 1
    %p71 = por %p69, %p70
    %p72 = scmp.ne.s32.totalorder %s61, %s62
    %p73 = scmp.eq.s32.totalorder %s15, 0
    %p74 = por %p72, %p73
    %p75 = scmp.ne.s32.totalorder %s61, %s62
    %p76 = scmp.eq.s32.totalorder %s16, 1
    %p77 = por %p75, %p76
    %p79 = scmp.ne.s32.totalorder %s62, %s78
    %p80 = scmp.eq.s32.totalorder %s16, 0
    %p81 = por %p79, %p80
    %s82 = ssub.s32 %s18, %s25
    %p83 = scmp.eq.s32.totalorder %s82, 0
    %s85 = sadd.s32 %s84, 1
    %s86 = scalar_select %p83, %s84, %s85
    %p89 = pneg %p83
    %p90 = scmp.eq.s32.totalorder %s10, 1
    %p91 = por %p89, %p90
    %p92 = scmp.ne.s32.totalorder %s84, %s87
    %p93 = scmp.eq.s32.totalorder %s10, 0
    %p94 = por %p92, %p93
    %p95 = scmp.ne.s32.totalorder %s84, %s87
    %p96 = scmp.eq.s32.totalorder %s15, 1
    %p97 = por %p95, %p96
    %p98 = scmp.ne.s32.totalorder %s87, %s88
    %p99 = scmp.eq.s32.totalorder %s15, 0
    %p100 = por %p98, %p99
    %p101 = scmp.ne.s32.totalorder %s87, %s88
    %p102 = scmp.eq.s32.totalorder %s16, 1
    %p103 = por %p101, %p102
    %p105 = scmp.ne.s32.totalorder %s88, %s104
    %p106 = scmp.eq.s32.totalorder %s16, 0
    %p107 = por %p105, %p106
    %s108 = ssub.s32 %s18, %s25
    %p109 = scmp.eq.s32.totalorder %s108, 0
    %s111 = sadd.s32 %s110, 1
    %s112 = scalar_select %p109, %s110, %s111
    %p115 = pneg %p109
    %p116 = scmp.eq.s32.totalorder %s10, 1
    %p117 = por %p115, %p116
    %p118 = scmp.ne.s32.totalorder %s110, %s113
    %p119 = scmp.eq.s32.totalorder %s10, 0
    %p120 = por %p118, %p119
    %p121 = scmp.ne.s32.totalorder %s110, %s113
    %p122 = scmp.eq.s32.totalorder %s15, 1
    %p123 = por %p121, %p122
    %p124 = scmp.ne.s32.totalorder %s113, %s114
    %p125 = scmp.eq.s32.totalorder %s15, 0
    %p126 = por %p124, %p125
    %p127 = scmp.ne.s32.totalorder %s113, %s114
    %p128 = scmp.eq.s32.totalorder %s16, 1
    %p129 = por %p127, %p128
    %p131 = scmp.ne.s32.totalorder %s114, %s130
    %p132 = scmp.eq.s32.totalorder %s16, 0
    %p133 = por %p131, %p132
    %s134 = ssub.s32 %s17, %s29
    %s135 = ssub.s32 %s18, %s25
    %s136 = sor.u32 %s134, %s135
    %p137 = scmp.eq.s32.totalorder %s136, 0
    %s139 = sadd.s32 %s138, 1
    %s140 = scalar_select %p137, %s138, %s139
    %p143 = pneg %p137
    %p144 = scmp.eq.s32.totalorder %s10, 1
    %p145 = por %p143, %p144
    %p146 = scmp.ne.s32.totalorder %s138, %s141
    %p147 = scmp.eq.s32.totalorder %s10, 0
    %p148 = por %p146, %p147
    %p149 = scmp.ne.s32.totalorder %s138, %s141
    %p150 = scmp.eq.s32.totalorder %s15, 1
    %p151 = por %p149, %p150
    %p152 = scmp.ne.s32.totalorder %s141, %s142
    %p153 = scmp.eq.s32.totalorder %s15, 0
    %p154 = por %p152, %p153
    %p155 = scmp.ne.s32.totalorder %s141, %s142
    %p156 = scmp.eq.s32.totalorder %s16, 1
    %p157 = por %p155, %p156
    %p159 = scmp.ne.s32.totalorder %s142, %s158
    %p160 = scmp.eq.s32.totalorder %s16, 0
    %p161 = por %p159, %p160
    %p162 = scmp.le.s32.totalorder 1, %s10
    %p163 = scmp.lt.s32.totalorder %s10, 3
    %p164 = pnand %p162, %p163
    %p165 = pneg %p164
    // Predicated region
    $region9: #{forward.13} parent=5 // pred_check
      _
    $region10: #{forward.13} parent=5 // pred_check_branch
      %167 = sbr.rel (%p164) target = $region12
    $region11: #{forward.13} parent=5 // pred_region
      %s168 = ssub.s32 %s10, 1
      // Predicated region
      $region13: #{forward.13} parent=11 // pred_check
        %p169 = pneg %p74
      $region14: #{forward.13} parent=11 // pred_check_branch
        %171 = sbr.rel (%p169) target = $region16
      $region15: #{forward.13} parent=11 // pred_region
        %p172 = scmp.lt.s32.totalorder %s20, 0
        %s173 = scalar_select %p172, %s20, 0
        %s174 = smul.addr %s173, 4
        %s175 = scalar_lea.vmem %s1, %s174
      $region16: #{forward.13} parent=11 // pred_fallthru
        _
      // Predicated region
      $region17: #{forward.13} parent=11 // pred_check
        %p176 = pneg %p100
      $region18: #{forward.13} parent=11 // pred_check_branch
        %178 = sbr.rel (%p176) target = $region20
      $region19: #{forward.13} parent=11 // pred_region
        %p179 = scmp.lt.s32.totalorder %s20, 0
        %s180 = scalar_select %p179, %s20, 0
        %s181 = scalar_lea.vmem %s2, %s180
      $region20: #{forward.13} parent=11 // pred_fallthru
        _
      // Predicated region
      $region21: #{forward.13} parent=11 // pred_check
        %p182 = pneg %p126
      $region22: #{forward.13} parent=11 // pred_check_branch
        %184 = sbr.rel (%p182) target = $region24
      $region23: #{forward.13} parent=11 // pred_region
        %p185 = scmp.lt.s32.totalorder %s20, 0
        %s186 = scalar_select %p185, %s20, 0
        %s187 = scalar_lea.vmem %s3, %s186
      $region24: #{forward.13} parent=11 // pred_fallthru
        _
    $region12: #{forward.13} parent=5 // pred_fallthru
      _
    %p188 = scmp.lt.s32.totalorder %s10, 2
    // Predicated region
    $region25: #{forward.13} parent=5 // pred_check
      %p189 = pneg %p188
    $region26: #{forward.13} parent=5 // pred_check_branch
      %191 = sbr.rel (%p189) target = $region28
    $region27: #{forward.13} parent=5 // pred_region
      // Predicated region
      $region29: #{forward.13} parent=27 // pred_check
        %p192 = pneg %p42
      $region30: #{forward.13} parent=27 // pred_check_branch
        %194 = sbr.rel (%p192) target = $region32
      $region31: #{forward.13} parent=27 // pred_region
        %s195 = smul.u32 32, %s17
        %p196 = scmp.lt.s32.totalorder %s195, 63
        %s197 = scalar_select %p196, %s195, 63
        %s198 = smul.addr %s197, 5
        %s199 = smul.addr %s198, 4
        %s200 = scalar_lea.vmem %s0, %s199
        %s201 = smul.u32 32, %s17
      $region32: #{forward.13} parent=27 // pred_fallthru
        _
    $region28: #{forward.13} parent=5 // pred_fallthru
      _
    %p202 = scmp.le.s32.totalorder 1, %s10
    %p203 = scmp.lt.s32.totalorder %s10, 3
    %p204 = pnand %p202, %p203
    %p205 = pneg %p204
    // Predicated region
    $region33: #{forward.13} parent=5 // pred_check
      _
    $region34: #{forward.13} parent=5 // pred_check_branch
      %207 = sbr.rel (%p204) target = $region36
    $region35: #{forward.13} parent=5 // pred_region
      %s208 = ssub.s32 %s10, 1
      %s209 = smul.u32 32, %s19
      %p210 = scmp.lt.s32.totalorder %s209, 63
      %s211 = scalar_select %p210, %s209, 63
      %s212 = smul.addr %s211, 5
      %s213 = smul.addr %s212, 4
      %s214 = scalar_lea.vmem %s0, %s213
      %p215 = pneg %p48
      %p216 = pneg %p45
      %p217 = scmp.lt.s32.totalorder %s20, 0
      %s218 = scalar_select %p217, %s20, 0
      %s219 = smul.addr %s218, 4
      %s220 = scalar_lea.vmem %s1, %s219
      %p221 = pneg %p74
      %p222 = pneg %p71
      %p223 = scmp.lt.s32.totalorder %s20, 0
      %s224 = scalar_select %p223, %s20, 0
      %s225 = scalar_lea.vmem %s2, %s224
      %p226 = pneg %p100
      %p227 = pneg %p97
      %p228 = scmp.lt.s32.totalorder %s20, 0
      %s229 = scalar_select %p228, %s20, 0
      %s230 = scalar_lea.vmem %s3, %s229
      %p231 = pneg %p126
      %p232 = pneg %p123
      %p233 = pneg %p154
      %p234 = pneg %p151
      %s235 = smul.u32 32, %s19
      %p236 = scmp.lt.s32.totalorder %s235, 63
      %s237 = scalar_select %p236, %s235, 63
      %p238 = scmp.lt.s32.totalorder %s20, 0
      %s239 = scalar_select %p238, %s20, 0
      %s240 = sadd.s32 %s239, %s237
      %s241 = smul.addr %s240, 4
      %s242 = scalar_lea.vmem %s4, %s241
      %s243 = smul.u32 32, %s19
      %p244 = scmp.lt.s32.totalorder %s243, 63
      %s245 = scalar_select %p244, %s243, 63
      %s246 = smul.addr %s245, 5
      %s247 = smul.addr %s246, 4
      %s248 = scalar_lea.vmem %s0, %s247
      %s249 = smul.u32 32, %s19
      %p250 = scmp.lt.s32.totalorder %s20, 0
      %s251 = scalar_select %p250, %s20, 0
      %s252 = smul.addr %s251, 4
      %s253 = scalar_lea.vmem %s1, %s252
      %p254 = scmp.lt.s32.totalorder %s20, 0
      %s255 = scalar_select %p254, %s20, 0
      %s256 = scalar_lea.vmem %s2, %s255
      %p257 = scmp.lt.s32.totalorder %s20, 0
      %s258 = scalar_select %p257, %s20, 0
      %s259 = scalar_lea.vmem %s3, %s258
      %s260 = smul.u32 32, %s19
      %p261 = scmp.lt.s32.totalorder %s260, 63
      %s262 = scalar_select %p261, %s260, 63
      %p263 = scmp.lt.s32.totalorder %s20, 0
      %s264 = scalar_select %p263, %s20, 0
      %s265 = sadd.s32 %s264, %s262
      %s266 = smul.addr %s265, 4
      %s267 = scalar_lea.vmem %s4, %s266
      %s268 = smul.u32 32, %s19
      %v269 = vld [vmem:[%s248] sm:$0xff]
      %v270 = vld [vmem:[%s248 + $0x8] sm:$0xff]
      %v271 = vld [vmem:[%s248 + $0x10] sm:$0xf]
      %v272 = vld [vmem:[%s248 + $0x14] sm:$0xff]
      %v273 = vld [vmem:[%s248 + $0x1c] sm:$0xff]
      %v274 = vld [vmem:[%s248 + $0x24] sm:$0xf]
      %v275 = vld [vmem:[%s248 + $0x28] sm:$0xff]
      %v276 = vld [vmem:[%s248 + $0x30] sm:$0xff]
      %v277 = vld [vmem:[%s248 + $0x38] sm:$0xf]
      %v278 = vld [vmem:[%s248 + $0x3c] sm:$0xff]
      %v279 = vld [vmem:[%s248 + $0x44] sm:$0xff]
      %v280 = vld [vmem:[%s248 + $0x4c] sm:$0xf]
      %v281 = vld [vmem:[%s248 + $0x50] sm:$0xff]
      %v282 = vld [vmem:[%s248 + $0x58] sm:$0xff]
      %v283 = vld [vmem:[%s248 + $0x60] sm:$0xf]
      %v284 = vld [vmem:[%s248 + $0x64] sm:$0xff]
      %v285 = vld [vmem:[%s248 + $0x6c] sm:$0xff]
      %v286 = vld [vmem:[%s248 + $0x74] sm:$0xf]
      %v287 = vld [vmem:[%s248 + $0x78] sm:$0xff]
      %v288 = vld [vmem:[%s248 + $0x80] sm:$0xff]
      %v289 = vld [vmem:[%s248 + $0x88] sm:$0xf]
      %v290 = vld [vmem:[%s248 + $0x8c] sm:$0xff]
      %v291 = vld [vmem:[%s248 + $0x94] sm:$0xff]
      %v292 = vld [vmem:[%s248 + $0x9c] sm:$0xf]
      %v293 = vld [vmem:[%s248 + $0xa0] sm:$0xff]
      %v294 = vld [vmem:[%s248 + $0xa8] sm:$0xff]
      %v295 = vld [vmem:[%s248 + $0xb0] sm:$0xf]
      %v296 = vld [vmem:[%s248 + $0xb4] sm:$0xff]
      %v297 = vld [vmem:[%s248 + $0xbc] sm:$0xff]
      %v298 = vld [vmem:[%s248 + $0xc4] sm:$0xf]
      %v299 = vld [vmem:[%s248 + $0xc8] sm:$0xff]
      %v300 = vld [vmem:[%s248 + $0xd0] sm:$0xff]
      %v301 = vld [vmem:[%s248 + $0xd8] sm:$0xf]
      %v302 = vld [vmem:[%s248 + $0xdc] sm:$0xff]
      %v303 = vld [vmem:[%s248 + $0xe4] sm:$0xff]
      %v304 = vld [vmem:[%s248 + $0xec] sm:$0xf]
      %v305 = vld [vmem:[%s248 + $0xf0] sm:$0xff]
      %v306 = vld [vmem:[%s248 + $0xf8] sm:$0xff]
      %v307 = vld [vmem:[%s248 + $0x100] sm:$0xf]
      %v308 = vld [vmem:[%s248 + $0x104] sm:$0xff]
      %v309 = vld [vmem:[%s248 + $0x10c] sm:$0xff]
      %v310 = vld [vmem:[%s248 + $0x114] sm:$0xf]
      %v311 = vld [vmem:[%s248 + $0x118] sm:$0xff]
      %v312 = vld [vmem:[%s248 + $0x120] sm:$0xff]
      %v313 = vld [vmem:[%s248 + $0x128] sm:$0xf]
      %v314 = vld [vmem:[%s248 + $0x12c] sm:$0xff]
      %v315 = vld [vmem:[%s248 + $0x134] sm:$0xff]
      %v316 = vld [vmem:[%s248 + $0x13c] sm:$0xf]
      %v317 = vld [vmem:[%s248 + $0x140] sm:$0xff]
      %v318 = vld [vmem:[%s248 + $0x148] sm:$0xff]
      %v319 = vld [vmem:[%s248 + $0x150] sm:$0xf]
      %v320 = vld [vmem:[%s248 + $0x154] sm:$0xff]
      %v321 = vld [vmem:[%s248 + $0x15c] sm:$0xff]
      %v322 = vld [vmem:[%s248 + $0x164] sm:$0xf]
      %v323 = vld [vmem:[%s248 + $0x168] sm:$0xff]
      %v324 = vld [vmem:[%s248 + $0x170] sm:$0xff]
      %v325 = vld [vmem:[%s248 + $0x178] sm:$0xf]
      %v326 = vld [vmem:[%s248 + $0x17c] sm:$0xff]
      %v327 = vld [vmem:[%s248 + $0x184] sm:$0xff]
      %v328 = vld [vmem:[%s248 + $0x18c] sm:$0xf]
      %v329 = vld [vmem:[%s248 + $0x190] sm:$0xff]
      %v330 = vld [vmem:[%s248 + $0x198] sm:$0xff]
      %v331 = vld [vmem:[%s248 + $0x1a0] sm:$0xf]
      %v332 = vld [vmem:[%s248 + $0x1a4] sm:$0xff]
      %v333 = vld [vmem:[%s248 + $0x1ac] sm:$0xff]
      %v334 = vld [vmem:[%s248 + $0x1b4] sm:$0xf]
      %v335 = vld [vmem:[%s248 + $0x1b8] sm:$0xff]
      %v336 = vld [vmem:[%s248 + $0x1c0] sm:$0xff]
      %v337 = vld [vmem:[%s248 + $0x1c8] sm:$0xf]
      %v338 = vld [vmem:[%s248 + $0x1cc] sm:$0xff]
      %v339 = vld [vmem:[%s248 + $0x1d4] sm:$0xff]
      %v340 = vld [vmem:[%s248 + $0x1dc] sm:$0xf]
      %v341 = vld [vmem:[%s248 + $0x1e0] sm:$0xff]
      %v342 = vld [vmem:[%s248 + $0x1e8] sm:$0xff]
      %v343 = vld [vmem:[%s248 + $0x1f0] sm:$0xf]
      %v344 = vld [vmem:[%s248 + $0x1f4] sm:$0xff]
      %v345 = vld [vmem:[%s248 + $0x1fc] sm:$0xff]
      %v346 = vld [vmem:[%s248 + $0x204] sm:$0xf]
      %v347 = vld [vmem:[%s248 + $0x208] sm:$0xff]
      %v348 = vld [vmem:[%s248 + $0x210] sm:$0xff]
      %v349 = vld [vmem:[%s248 + $0x218] sm:$0xf]
      %v350 = vld [vmem:[%s248 + $0x21c] sm:$0xff]
      %v351 = vld [vmem:[%s248 + $0x224] sm:$0xff]
      %v352 = vld [vmem:[%s248 + $0x22c] sm:$0xf]
      %v353 = vld [vmem:[%s248 + $0x230] sm:$0xff]
      %v354 = vld [vmem:[%s248 + $0x238] sm:$0xff]
      %v355 = vld [vmem:[%s248 + $0x240] sm:$0xf]
      %v356 = vld [vmem:[%s248 + $0x244] sm:$0xff]
      %v357 = vld [vmem:[%s248 + $0x24c] sm:$0xff]
      %v358 = vld [vmem:[%s248 + $0x254] sm:$0xf]
      %v359 = vld [vmem:[%s248 + $0x258] sm:$0xff]
      %v360 = vld [vmem:[%s248 + $0x260] sm:$0xff]
      %v361 = vld [vmem:[%s248 + $0x268] sm:$0xf]
      %v362 = vld [vmem:[%s248 + $0x26c] sm:$0xff]
      %v363 = vld [vmem:[%s248 + $0x274] sm:$0xff]
      %v364 = vld [vmem:[%s248 + $0x27c] sm:$0xf]
      %v365 = vld [vmem:[%s253] sm:$0xf]
      %v366 = vld [vmem:[%s253 + $0x4] sm:$0xf]
      %v367 = vld [vmem:[%s253 + $0x8] sm:$0xf]
      %v368 = vld [vmem:[%s253 + $0xc] sm:$0xf]
      %v369 = vld [vmem:[%s253 + $0x10] sm:$0xf]
      %v370 = vld [vmem:[%s253 + $0x14] sm:$0xf]
      %v371 = vld [vmem:[%s253 + $0x18] sm:$0xf]
      %v372 = vld [vmem:[%s253 + $0x1c] sm:$0xf]
      %v373 = vld [vmem:[%s253 + $0x20] sm:$0xf]
      %v374 = vld [vmem:[%s253 + $0x24] sm:$0xf]
      %v375 = vld [vmem:[%s253 + $0x28] sm:$0xf]
      %v376 = vld [vmem:[%s253 + $0x2c] sm:$0xf]
      %v377 = vld [vmem:[%s253 + $0x30] sm:$0xf]
      %v378 = vld [vmem:[%s253 + $0x34] sm:$0xf]
      %v379 = vld [vmem:[%s253 + $0x38] sm:$0xf]
      %v380 = vld [vmem:[%s253 + $0x3c] sm:$0xf]
      %v381 = vld [vmem:[%s253 + $0x40] sm:$0xf]
      %v382 = vld [vmem:[%s253 + $0x44] sm:$0xf]
      %v383 = vld [vmem:[%s253 + $0x48] sm:$0xf]
      %v384 = vld [vmem:[%s253 + $0x4c] sm:$0xf]
      %v385 = vld [vmem:[%s253 + $0x50] sm:$0xf]
      %v386 = vld [vmem:[%s253 + $0x54] sm:$0xf]
      %v387 = vld [vmem:[%s253 + $0x58] sm:$0xf]
      %v388 = vld [vmem:[%s253 + $0x5c] sm:$0xf]
      %v389 = vld [vmem:[%s253 + $0x60] sm:$0xf]
      %v390 = vld [vmem:[%s253 + $0x64] sm:$0xf]
      %v391 = vld [vmem:[%s253 + $0x68] sm:$0xf]
      %v392 = vld [vmem:[%s253 + $0x6c] sm:$0xf]
      %v393 = vld [vmem:[%s253 + $0x70] sm:$0xf]
      %v394 = vld [vmem:[%s253 + $0x74] sm:$0xf]
      %v395 = vld [vmem:[%s253 + $0x78] sm:$0xf]
      %v396 = vld [vmem:[%s253 + $0x7c] sm:$0xf]
      %v397 = vld [vmem:[%s253 + $0x80] sm:$0xf]
      %v398 = vld [vmem:[%s253 + $0x84] sm:$0xf]
      %v399 = vld [vmem:[%s253 + $0x88] sm:$0xf]
      %v400 = vld [vmem:[%s253 + $0x8c] sm:$0xf]
      %v401 = vld [vmem:[%s253 + $0x90] sm:$0xf]
      %v402 = vld [vmem:[%s253 + $0x94] sm:$0xf]
      %v403 = vld [vmem:[%s253 + $0x98] sm:$0xf]
      %v404 = vld [vmem:[%s253 + $0x9c] sm:$0xf]
      %v405 = vld [vmem:[%s253 + $0xa0] sm:$0xf]
      %v406 = vld [vmem:[%s253 + $0xa4] sm:$0xf]
      %v407 = vld [vmem:[%s253 + $0xa8] sm:$0xf]
      %v408 = vld [vmem:[%s253 + $0xac] sm:$0xf]
      %v409 = vld [vmem:[%s253 + $0xb0] sm:$0xf]
      %v410 = vld [vmem:[%s253 + $0xb4] sm:$0xf]
      %v411 = vld [vmem:[%s253 + $0xb8] sm:$0xf]
      %v412 = vld [vmem:[%s253 + $0xbc] sm:$0xf]
      %v413 = vld [vmem:[%s253 + $0xc0] sm:$0xf]
      %v414 = vld [vmem:[%s253 + $0xc4] sm:$0xf]
      %v415 = vld [vmem:[%s253 + $0xc8] sm:$0xf]
      %v416 = vld [vmem:[%s253 + $0xcc] sm:$0xf]
      %v417 = vld [vmem:[%s253 + $0xd0] sm:$0xf]
      %v418 = vld [vmem:[%s253 + $0xd4] sm:$0xf]
      %v419 = vld [vmem:[%s253 + $0xd8] sm:$0xf]
      %v420 = vld [vmem:[%s253 + $0xdc] sm:$0xf]
      %v421 = vld [vmem:[%s253 + $0xe0] sm:$0xf]
      %v422 = vld [vmem:[%s253 + $0xe4] sm:$0xf]
      %v423 = vld [vmem:[%s253 + $0xe8] sm:$0xf]
      %v424 = vld [vmem:[%s253 + $0xec] sm:$0xf]
      %v425 = vld [vmem:[%s253 + $0xf0] sm:$0xf]
      %v426 = vld [vmem:[%s253 + $0xf4] sm:$0xf]
      %v427 = vld [vmem:[%s253 + $0xf8] sm:$0xf]
      %v428 = vld [vmem:[%s253 + $0xfc] sm:$0xf]
      %v429 = vld [vmem:[%s253 + $0x100] sm:$0xf]
      %v430 = vld [vmem:[%s253 + $0x104] sm:$0xf]
      %v431 = vld [vmem:[%s253 + $0x108] sm:$0xf]
      %v432 = vld [vmem:[%s253 + $0x10c] sm:$0xf]
      %v433 = vld [vmem:[%s253 + $0x110] sm:$0xf]
      %v434 = vld [vmem:[%s253 + $0x114] sm:$0xf]
      %v435 = vld [vmem:[%s253 + $0x118] sm:$0xf]
      %v436 = vld [vmem:[%s253 + $0x11c] sm:$0xf]
      %v437 = vld [vmem:[%s253 + $0x120] sm:$0xf]
      %v438 = vld [vmem:[%s253 + $0x124] sm:$0xf]
      %v439 = vld [vmem:[%s253 + $0x128] sm:$0xf]
      %v440 = vld [vmem:[%s253 + $0x12c] sm:$0xf]
      %v441 = vld [vmem:[%s253 + $0x130] sm:$0xf]
      %v442 = vld [vmem:[%s253 + $0x134] sm:$0xf]
      %v443 = vld [vmem:[%s253 + $0x138] sm:$0xf]
      %v444 = vld [vmem:[%s253 + $0x13c] sm:$0xf]
      %v541 = vunpack.c.l.b16 %v269
      %v542 = vunpack.c.h.b16 %v269
      %v543 = vunpack.c.l.b16 %v270
      %v544 = vunpack.c.h.b16 %v270
      %v545 = vunpack.c.l.b16 %v271
      %v546 = vunpack.c.l.b16 %v272
      %v547 = vunpack.c.h.b16 %v272
      %v548 = vunpack.c.l.b16 %v273
      %v549 = vunpack.c.h.b16 %v273
      %v550 = vunpack.c.l.b16 %v274
      %v551 = vunpack.c.l.b16 %v275
      %v552 = vunpack.c.h.b16 %v275
      %v553 = vunpack.c.l.b16 %v276
      %v554 = vunpack.c.h.b16 %v276
      %v555 = vunpack.c.l.b16 %v277
      %v556 = vunpack.c.l.b16 %v278
      %v557 = vunpack.c.h.b16 %v278
      %v558 = vunpack.c.l.b16 %v279
      %v559 = vunpack.c.h.b16 %v279
      %v560 = vunpack.c.l.b16 %v280
      %v561 = vunpack.c.l.b16 %v281
      %v562 = vunpack.c.h.b16 %v281
      %v563 = vunpack.c.l.b16 %v282
      %v564 = vunpack.c.h.b16 %v282
      %v565 = vunpack.c.l.b16 %v283
      %v566 = vunpack.c.l.b16 %v284
      %v567 = vunpack.c.h.b16 %v284
      %v568 = vunpack.c.l.b16 %v285
      %v569 = vunpack.c.h.b16 %v285
      %v570 = vunpack.c.l.b16 %v286
      %v571 = vunpack.c.l.b16 %v287
      %v572 = vunpack.c.h.b16 %v287
      %v573 = vunpack.c.l.b16 %v288
      %v574 = vunpack.c.h.b16 %v288
      %v575 = vunpack.c.l.b16 %v289
      %v576 = vunpack.c.l.b16 %v290
      %v577 = vunpack.c.h.b16 %v290
      %v578 = vunpack.c.l.b16 %v291
      %v579 = vunpack.c.h.b16 %v291
      %v580 = vunpack.c.l.b16 %v292
      %v581 = vunpack.c.l.b16 %v293
      %v582 = vunpack.c.h.b16 %v293
      %v583 = vunpack.c.l.b16 %v294
      %v584 = vunpack.c.h.b16 %v294
      %v585 = vunpack.c.l.b16 %v295
      %v586 = vunpack.c.l.b16 %v296
      %v587 = vunpack.c.h.b16 %v296
      %v588 = vunpack.c.l.b16 %v297
      %v589 = vunpack.c.h.b16 %v297
      %v590 = vunpack.c.l.b16 %v298
      %v591 = vunpack.c.l.b16 %v299
      %v592 = vunpack.c.h.b16 %v299
      %v593 = vunpack.c.l.b16 %v300
      %v594 = vunpack.c.h.b16 %v300
      %v595 = vunpack.c.l.b16 %v301
      %v596 = vunpack.c.l.b16 %v302
      %v597 = vunpack.c.h.b16 %v302
      %v598 = vunpack.c.l.b16 %v303
      %v599 = vunpack.c.h.b16 %v303
      %v600 = vunpack.c.l.b16 %v304
      %v601 = vunpack.c.l.b16 %v305
      %v602 = vunpack.c.h.b16 %v305
      %v603 = vunpack.c.l.b16 %v306
      %v604 = vunpack.c.h.b16 %v306
      %v605 = vunpack.c.l.b16 %v307
      %v606 = vunpack.c.l.b16 %v308
      %v607 = vunpack.c.h.b16 %v308
      %v608 = vunpack.c.l.b16 %v309
      %v609 = vunpack.c.h.b16 %v309
      %v610 = vunpack.c.l.b16 %v310
      %v611 = vunpack.c.l.b16 %v311
      %v612 = vunpack.c.h.b16 %v311
      %v613 = vunpack.c.l.b16 %v312
      %v614 = vunpack.c.h.b16 %v312
      %v615 = vunpack.c.l.b16 %v313
      %v616 = vunpack.c.l.b16 %v314
      %v617 = vunpack.c.h.b16 %v314
      %v618 = vunpack.c.l.b16 %v315
      %v619 = vunpack.c.h.b16 %v315
      %v620 = vunpack.c.l.b16 %v316
      %v621 = vunpack.c.l.b16 %v317
      %v622 = vunpack.c.h.b16 %v317
      %v623 = vunpack.c.l.b16 %v318
      %v624 = vunpack.c.h.b16 %v318
      %v625 = vunpack.c.l.b16 %v319
      %v626 = vunpack.c.l.b16 %v320
      %v627 = vunpack.c.h.b16 %v320
      %v628 = vunpack.c.l.b16 %v321
      %v629 = vunpack.c.h.b16 %v321
      %v630 = vunpack.c.l.b16 %v322
      %v631 = vunpack.c.l.b16 %v323
      %v632 = vunpack.c.h.b16 %v323
      %v633 = vunpack.c.l.b16 %v324
      %v634 = vunpack.c.h.b16 %v324
      %v635 = vunpack.c.l.b16 %v325
      %v636 = vunpack.c.l.b16 %v326
      %v637 = vunpack.c.h.b16 %v326
      %v638 = vunpack.c.l.b16 %v327
      %v639 = vunpack.c.h.b16 %v327
      %v640 = vunpack.c.l.b16 %v328
      %v641 = vunpack.c.l.b16 %v329
      %v642 = vunpack.c.h.b16 %v329
      %v643 = vunpack.c.l.b16 %v330
      %v644 = vunpack.c.h.b16 %v330
      %v645 = vunpack.c.l.b16 %v331
      %v646 = vunpack.c.l.b16 %v332
      %v647 = vunpack.c.h.b16 %v332
      %v648 = vunpack.c.l.b16 %v333
      %v649 = vunpack.c.h.b16 %v333
      %v650 = vunpack.c.l.b16 %v334
      %v651 = vunpack.c.l.b16 %v335
      %v652 = vunpack.c.h.b16 %v335
      %v653 = vunpack.c.l.b16 %v336
      %v654 = vunpack.c.h.b16 %v336
      %v655 = vunpack.c.l.b16 %v337
      %v656 = vunpack.c.l.b16 %v338
      %v657 = vunpack.c.h.b16 %v338
      %v658 = vunpack.c.l.b16 %v339
      %v659 = vunpack.c.h.b16 %v339
      %v660 = vunpack.c.l.b16 %v340
      %v661 = vunpack.c.l.b16 %v341
      %v662 = vunpack.c.h.b16 %v341
      %v663 = vunpack.c.l.b16 %v342
      %v664 = vunpack.c.h.b16 %v342
      %v665 = vunpack.c.l.b16 %v343
      %v666 = vunpack.c.l.b16 %v344
      %v667 = vunpack.c.h.b16 %v344
      %v668 = vunpack.c.l.b16 %v345
      %v669 = vunpack.c.h.b16 %v345
      %v670 = vunpack.c.l.b16 %v346
      %v671 = vunpack.c.l.b16 %v347
      %v672 = vunpack.c.h.b16 %v347
      %v673 = vunpack.c.l.b16 %v348
      %v674 = vunpack.c.h.b16 %v348
      %v675 = vunpack.c.l.b16 %v349
      %v676 = vunpack.c.l.b16 %v350
      %v677 = vunpack.c.h.b16 %v350
      %v678 = vunpack.c.l.b16 %v351
      %v679 = vunpack.c.h.b16 %v351
      %v680 = vunpack.c.l.b16 %v352
      %v681 = vunpack.c.l.b16 %v353
      %v682 = vunpack.c.h.b16 %v353
      %v683 = vunpack.c.l.b16 %v354
      %v684 = vunpack.c.h.b16 %v354
      %v685 = vunpack.c.l.b16 %v355
      %v686 = vunpack.c.l.b16 %v356
      %v687 = vunpack.c.h.b16 %v356
      %v688 = vunpack.c.l.b16 %v357
      %v689 = vunpack.c.h.b16 %v357
      %v690 = vunpack.c.l.b16 %v358
      %v691 = vunpack.c.l.b16 %v359
      %v692 = vunpack.c.h.b16 %v359
      %v693 = vunpack.c.l.b16 %v360
      %v694 = vunpack.c.h.b16 %v360
      %v695 = vunpack.c.l.b16 %v361
      %v696 = vunpack.c.l.b16 %v362
      %v697 = vunpack.c.h.b16 %v362
      %v698 = vunpack.c.l.b16 %v363
      %v699 = vunpack.c.h.b16 %v363
      %v700 = vunpack.c.l.b16 %v364
      %v701 = vpack.c.b16 %v546, %v541
      %v702 = vpack.c.b16 %v547, %v542
      %v703 = vpack.c.b16 %v548, %v543
      %v704 = vpack.c.b16 %v549, %v544
      %v705 = vpack.c.b16 %v550, %v545
      %v706 = vpack.c.b16 %v556, %v551
      %v707 = vpack.c.b16 %v557, %v552
      %v708 = vpack.c.b16 %v558, %v553
      %v709 = vpack.c.b16 %v559, %v554
      %v710 = vpack.c.b16 %v560, %v555
      %v711 = vpack.c.b16 %v566, %v561
      %v712 = vpack.c.b16 %v567, %v562
      %v713 = vpack.c.b16 %v568, %v563
      %v714 = vpack.c.b16 %v569, %v564
      %v715 = vpack.c.b16 %v570, %v565
      %v716 = vpack.c.b16 %v576, %v571
      %v717 = vpack.c.b16 %v577, %v572
      %v718 = vpack.c.b16 %v578, %v573
      %v719 = vpack.c.b16 %v579, %v574
      %v720 = vpack.c.b16 %v580, %v575
      %v721 = vpack.c.b16 %v586, %v581
      %v722 = vpack.c.b16 %v587, %v582
      %v723 = vpack.c.b16 %v588, %v583
      %v724 = vpack.c.b16 %v589, %v584
      %v725 = vpack.c.b16 %v590, %v585
      %v726 = vpack.c.b16 %v596, %v591
      %v727 = vpack.c.b16 %v597, %v592
      %v728 = vpack.c.b16 %v598, %v593
      %v729 = vpack.c.b16 %v599, %v594
      %v730 = vpack.c.b16 %v600, %v595
      %v731 = vpack.c.b16 %v606, %v601
      %v732 = vpack.c.b16 %v607, %v602
      %v733 = vpack.c.b16 %v608, %v603
      %v734 = vpack.c.b16 %v609, %v604
      %v735 = vpack.c.b16 %v610, %v605
      %v736 = vpack.c.b16 %v616, %v611
      %v737 = vpack.c.b16 %v617, %v612
      %v738 = vpack.c.b16 %v618, %v613
      %v739 = vpack.c.b16 %v619, %v614
      %v740 = vpack.c.b16 %v620, %v615
      %v741 = vpack.c.b16 %v626, %v621
      %v742 = vpack.c.b16 %v627, %v622
      %v743 = vpack.c.b16 %v628, %v623
      %v744 = vpack.c.b16 %v629, %v624
      %v745 = vpack.c.b16 %v630, %v625
      %v746 = vpack.c.b16 %v636, %v631
      %v747 = vpack.c.b16 %v637, %v632
      %v748 = vpack.c.b16 %v638, %v633
      %v749 = vpack.c.b16 %v639, %v634
      %v750 = vpack.c.b16 %v640, %v635
      %v751 = vpack.c.b16 %v646, %v641
      %v752 = vpack.c.b16 %v647, %v642
      %v753 = vpack.c.b16 %v648, %v643
      %v754 = vpack.c.b16 %v649, %v644
      %v755 = vpack.c.b16 %v650, %v645
      %v756 = vpack.c.b16 %v656, %v651
      %v757 = vpack.c.b16 %v657, %v652
      %v758 = vpack.c.b16 %v658, %v653
      %v759 = vpack.c.b16 %v659, %v654
      %v760 = vpack.c.b16 %v660, %v655
      %v761 = vpack.c.b16 %v666, %v661
      %v762 = vpack.c.b16 %v667, %v662
      %v763 = vpack.c.b16 %v668, %v663
      %v764 = vpack.c.b16 %v669, %v664
      %v765 = vpack.c.b16 %v670, %v665
      %v766 = vpack.c.b16 %v676, %v671
      %v767 = vpack.c.b16 %v677, %v672
      %v768 = vpack.c.b16 %v678, %v673
      %v769 = vpack.c.b16 %v679, %v674
      %v770 = vpack.c.b16 %v680, %v675
      %v771 = vpack.c.b16 %v686, %v681
      %v772 = vpack.c.b16 %v687, %v682
      %v773 = vpack.c.b16 %v688, %v683
      %v774 = vpack.c.b16 %v689, %v684
      %v775 = vpack.c.b16 %v690, %v685
      %v776 = vpack.c.b16 %v696, %v691
      %v777 = vpack.c.b16 %v697, %v692
      %v778 = vpack.c.b16 %v698, %v693
      %v779 = vpack.c.b16 %v699, %v694
      %v780 = vpack.c.b16 %v700, %v695
      %v941 = vunpack.c.l.b16 %v365
      %v942 = vunpack.c.l.b16 %v366
      %v943 = vunpack.c.l.b16 %v367
      %v944 = vunpack.c.l.b16 %v368
      %v945 = vunpack.c.l.b16 %v369
      %v946 = vunpack.c.l.b16 %v370
      %v947 = vunpack.c.l.b16 %v371
      %v948 = vunpack.c.l.b16 %v372
      %v949 = vunpack.c.l.b16 %v373
      %v950 = vunpack.c.l.b16 %v374
      %v951 = vunpack.c.l.b16 %v375
      %v952 = vunpack.c.l.b16 %v376
      %v953 = vunpack.c.l.b16 %v377
      %v954 = vunpack.c.l.b16 %v378
      %v955 = vunpack.c.l.b16 %v379
      %v956 = vunpack.c.l.b16 %v380
      %v957 = vunpack.c.l.b16 %v381
      %v958 = vunpack.c.l.b16 %v382
      %v959 = vunpack.c.l.b16 %v383
      %v960 = vunpack.c.l.b16 %v384
      %v961 = vunpack.c.l.b16 %v385
      %v962 = vunpack.c.l.b16 %v386
      %v963 = vunpack.c.l.b16 %v387
      %v964 = vunpack.c.l.b16 %v388
      %v965 = vunpack.c.l.b16 %v389
      %v966 = vunpack.c.l.b16 %v390
      %v967 = vunpack.c.l.b16 %v391
      %v968 = vunpack.c.l.b16 %v392
      %v969 = vunpack.c.l.b16 %v393
      %v970 = vunpack.c.l.b16 %v394
      %v971 = vunpack.c.l.b16 %v395
      %v972 = vunpack.c.l.b16 %v396
      %v973 = vunpack.c.l.b16 %v397
      %v974 = vunpack.c.l.b16 %v398
      %v975 = vunpack.c.l.b16 %v399
      %v976 = vunpack.c.l.b16 %v400
      %v977 = vunpack.c.l.b16 %v401
      %v978 = vunpack.c.l.b16 %v402
      %v979 = vunpack.c.l.b16 %v403
      %v980 = vunpack.c.l.b16 %v404
      %v981 = vunpack.c.l.b16 %v405
      %v982 = vunpack.c.l.b16 %v406
      %v983 = vunpack.c.l.b16 %v407
      %v984 = vunpack.c.l.b16 %v408
      %v985 = vunpack.c.l.b16 %v409
      %v986 = vunpack.c.l.b16 %v410
      %v987 = vunpack.c.l.b16 %v411
      %v988 = vunpack.c.l.b16 %v412
      %v989 = vunpack.c.l.b16 %v413
      %v990 = vunpack.c.l.b16 %v414
      %v991 = vunpack.c.l.b16 %v415
      %v992 = vunpack.c.l.b16 %v416
      %v993 = vunpack.c.l.b16 %v417
      %v994 = vunpack.c.l.b16 %v418
      %v995 = vunpack.c.l.b16 %v419
      %v996 = vunpack.c.l.b16 %v420
      %v997 = vunpack.c.l.b16 %v421
      %v998 = vunpack.c.l.b16 %v422
      %v999 = vunpack.c.l.b16 %v423
      %v1000 = vunpack.c.l.b16 %v424
      %v1001 = vunpack.c.l.b16 %v425
      %v1002 = vunpack.c.l.b16 %v426
      %v1003 = vunpack.c.l.b16 %v427
      %v1004 = vunpack.c.l.b16 %v428
      %v1005 = vunpack.c.l.b16 %v429
      %v1006 = vunpack.c.l.b16 %v430
      %v1007 = vunpack.c.l.b16 %v431
      %v1008 = vunpack.c.l.b16 %v432
      %v1009 = vunpack.c.l.b16 %v433
      %v1010 = vunpack.c.l.b16 %v434
      %v1011 = vunpack.c.l.b16 %v435
      %v1012 = vunpack.c.l.b16 %v436
      %v1013 = vunpack.c.l.b16 %v437
      %v1014 = vunpack.c.l.b16 %v438
      %v1015 = vunpack.c.l.b16 %v439
      %v1016 = vunpack.c.l.b16 %v440
      %v1017 = vunpack.c.l.b16 %v441
      %v1018 = vunpack.c.l.b16 %v442
      %v1019 = vunpack.c.l.b16 %v443
      %v1020 = vunpack.c.l.b16 %v444
      %v1021 = vpack.c.b16 %v942, %v941
      %v1022 = vpack.c.b16 %v944, %v943
      %v1023 = vpack.c.b16 %v946, %v945
      %v1024 = vpack.c.b16 %v948, %v947
      %v1025 = vpack.c.b16 %v950, %v949
      %v1026 = vpack.c.b16 %v952, %v951
      %v1027 = vpack.c.b16 %v954, %v953
      %v1028 = vpack.c.b16 %v956, %v955
      %v1029 = vpack.c.b16 %v958, %v957
      %v1030 = vpack.c.b16 %v960, %v959
      %v1031 = vpack.c.b16 %v962, %v961
      %v1032 = vpack.c.b16 %v964, %v963
      %v1033 = vpack.c.b16 %v966, %v965
      %v1034 = vpack.c.b16 %v968, %v967
      %v1035 = vpack.c.b16 %v970, %v969
      %v1036 = vpack.c.b16 %v972, %v971
      %v1037 = vpack.c.b16 %v974, %v973
      %v1038 = vpack.c.b16 %v976, %v975
      %v1039 = vpack.c.b16 %v978, %v977
      %v1040 = vpack.c.b16 %v980, %v979
      %v1041 = vpack.c.b16 %v982, %v981
      %v1042 = vpack.c.b16 %v984, %v983
      %v1043 = vpack.c.b16 %v986, %v985
      %v1044 = vpack.c.b16 %v988, %v987
      %v1045 = vpack.c.b16 %v990, %v989
      %v1046 = vpack.c.b16 %v992, %v991
      %v1047 = vpack.c.b16 %v994, %v993
      %v1048 = vpack.c.b16 %v996, %v995
      %v1049 = vpack.c.b16 %v998, %v997
      %v1050 = vpack.c.b16 %v1000, %v999
      %v1051 = vpack.c.b16 %v1002, %v1001
      %v1052 = vpack.c.b16 %v1004, %v1003
      %v1053 = vpack.c.b16 %v1006, %v1005
      %v1054 = vpack.c.b16 %v1008, %v1007
      %v1055 = vpack.c.b16 %v1010, %v1009
      %v1056 = vpack.c.b16 %v1012, %v1011
      %v1057 = vpack.c.b16 %v1014, %v1013
      %v1058 = vpack.c.b16 %v1016, %v1015
      %v1059 = vpack.c.b16 %v1018, %v1017
      %v1060 = vpack.c.b16 %v1020, %v1019
      %1101 = vmatpush.bf16.msra.mxu0 %v1028
      %1102 = vmatpush.bf16.msra.mxu0 %v1027
      %1103 = vmatpush.bf16.msra.mxu0 %v1026
      %1104 = vmatpush.bf16.msra.mxu0 %v1025
      %1105 = vmatpush.bf16.msra.mxu0 %v1024
      %1106 = vmatpush.bf16.msra.mxu0 %v1023
      %1107 = vmatpush.bf16.msra.mxu0 %v1022
      %1108 = vmatpush.bf16.msra.mxu0 %v1021
      %1109 = vmatmul.bf16.gmra.mxu0 %v701
      %v1110 = vpop.f32.mrf.mxu0
      %v1111 = vadd.f32 0.0, %v1110
      %v1112 = vpop.f32.mrf.mxu0
      %v1113 = vadd.f32 0.0, %v1112
      %1114 = vmatmul.bf16.gmra.mxu0 %v706
      %v1115 = vpop.f32.mrf.mxu0
      %v1116 = vadd.f32 0.0, %v1115
      %v1117 = vpop.f32.mrf.mxu0
      %v1118 = vadd.f32 0.0, %v1117
      %1119 = vmatmul.bf16.gmra.mxu0 %v711
      %v1120 = vpop.f32.mrf.mxu0
      %v1121 = vadd.f32 0.0, %v1120
      %v1122 = vpop.f32.mrf.mxu0
      %v1123 = vadd.f32 0.0, %v1122
      %1124 = vmatmul.bf16.gmra.mxu0 %v716
      %v1125 = vpop.f32.mrf.mxu0
      %v1126 = vadd.f32 0.0, %v1125
      %v1127 = vpop.f32.mrf.mxu0
      %v1128 = vadd.f32 0.0, %v1127
      %1129 = vmatmul.bf16.gmra.mxu0 %v721
      %v1130 = vpop.f32.mrf.mxu0
      %v1131 = vadd.f32 0.0, %v1130
      %v1132 = vpop.f32.mrf.mxu0
      %v1133 = vadd.f32 0.0, %v1132
      %1134 = vmatmul.bf16.gmra.mxu0 %v726
      %v1135 = vpop.f32.mrf.mxu0
      %v1136 = vadd.f32 0.0, %v1135
      %v1137 = vpop.f32.mrf.mxu0
      %v1138 = vadd.f32 0.0, %v1137
      %1139 = vmatmul.bf16.gmra.mxu0 %v731
      %v1140 = vpop.f32.mrf.mxu0
      %v1141 = vadd.f32 0.0, %v1140
      %v1142 = vpop.f32.mrf.mxu0
      %v1143 = vadd.f32 0.0, %v1142
      %1144 = vmatmul.bf16.gmra.mxu0 %v736
      %v1145 = vpop.f32.mrf.mxu0
      %v1146 = vadd.f32 0.0, %v1145
      %v1147 = vpop.f32.mrf.mxu0
      %v1148 = vadd.f32 0.0, %v1147
      %1149 = vmatmul.bf16.gmra.mxu0 %v741
      %v1150 = vpop.f32.mrf.mxu0
      %v1151 = vadd.f32 0.0, %v1150
      %v1152 = vpop.f32.mrf.mxu0
      %v1153 = vadd.f32 0.0, %v1152
      %1154 = vmatmul.bf16.gmra.mxu0 %v746
      %v1155 = vpop.f32.mrf.mxu0
      %v1156 = vadd.f32 0.0, %v1155
      %v1157 = vpop.f32.mrf.mxu0
      %v1158 = vadd.f32 0.0, %v1157
      %1159 = vmatmul.bf16.gmra.mxu0 %v751
      %v1160 = vpop.f32.mrf.mxu0
      %v1161 = vadd.f32 0.0, %v1160
      %v1162 = vpop.f32.mrf.mxu0
      %v1163 = vadd.f32 0.0, %v1162
      %1164 = vmatmul.bf16.gmra.mxu0 %v756
      %v1165 = vpop.f32.mrf.mxu0
      %v1166 = vadd.f32 0.0, %v1165
      %v1167 = vpop.f32.mrf.mxu0
      %v1168 = vadd.f32 0.0, %v1167
      %1169 = vmatmul.bf16.gmra.mxu0 %v761
      %v1170 = vpop.f32.mrf.mxu0
      %v1171 = vadd.f32 0.0, %v1170
      %v1172 = vpop.f32.mrf.mxu0
      %v1173 = vadd.f32 0.0, %v1172
      %1174 = vmatmul.bf16.gmra.mxu0 %v766
      %v1175 = vpop.f32.mrf.mxu0
      %v1176 = vadd.f32 0.0, %v1175
      %v1177 = vpop.f32.mrf.mxu0
      %v1178 = vadd.f32 0.0, %v1177
      %1179 = vmatmul.bf16.gmra.mxu0 %v771
      %v1180 = vpop.f32.mrf.mxu0
      %v1181 = vadd.f32 0.0, %v1180
      %v1182 = vpop.f32.mrf.mxu0
      %v1183 = vadd.f32 0.0, %v1182
      %1184 = vmatmul.bf16.gmra.mxu0 %v776
      %v1185 = vpop.f32.mrf.mxu0
      %v1186 = vadd.f32 0.0, %v1185
      %v1187 = vpop.f32.mrf.mxu0
      %v1188 = vadd.f32 0.0, %v1187
      %1189 = vdwg.mxu0
      %1190 = vmatpush.bf16.msra.mxu0 %v1036
      %1191 = vmatpush.bf16.msra.mxu0 %v1035
      %1192 = vmatpush.bf16.msra.mxu0 %v1034
      %1193 = vmatpush.bf16.msra.mxu0 %v1033
      %1194 = vmatpush.bf16.msra.mxu0 %v1032
      %1195 = vmatpush.bf16.msra.mxu0 %v1031
      %1196 = vmatpush.bf16.msra.mxu0 %v1030
      %1197 = vmatpush.bf16.msra.mxu0 %v1029
      %1198 = vmatmul.bf16.gmra.mxu0 %v702
      %v1199 = vpop.f32.mrf.mxu0
      %v1200 = vadd.f32 %v1111, %v1199
      %v1201 = vpop.f32.mrf.mxu0
      %v1202 = vadd.f32 %v1113, %v1201
      %1203 = vmatmul.bf16.gmra.mxu0 %v707
      %v1204 = vpop.f32.mrf.mxu0
      %v1205 = vadd.f32 %v1116, %v1204
      %v1206 = vpop.f32.mrf.mxu0
      %v1207 = vadd.f32 %v1118, %v1206
      %1208 = vmatmul.bf16.gmra.mxu0 %v712
      %v1209 = vpop.f32.mrf.mxu0
      %v1210 = vadd.f32 %v1121, %v1209
      %v1211 = vpop.f32.mrf.mxu0
      %v1212 = vadd.f32 %v1123, %v1211
      %1213 = vmatmul.bf16.gmra.mxu0 %v717
      %v1214 = vpop.f32.mrf.mxu0
      %v1215 = vadd.f32 %v1126, %v1214
      %v1216 = vpop.f32.mrf.mxu0
      %v1217 = vadd.f32 %v1128, %v1216
      %1218 = vmatmul.bf16.gmra.mxu0 %v722
      %v1219 = vpop.f32.mrf.mxu0
      %v1220 = vadd.f32 %v1131, %v1219
      %v1221 = vpop.f32.mrf.mxu0
      %v1222 = vadd.f32 %v1133, %v1221
      %1223 = vmatmul.bf16.gmra.mxu0 %v727
      %v1224 = vpop.f32.mrf.mxu0
      %v1225 = vadd.f32 %v1136, %v1224
      %v1226 = vpop.f32.mrf.mxu0
      %v1227 = vadd.f32 %v1138, %v1226
      %1228 = vmatmul.bf16.gmra.mxu0 %v732
      %v1229 = vpop.f32.mrf.mxu0
      %v1230 = vadd.f32 %v1141, %v1229
      %v1231 = vpop.f32.mrf.mxu0
      %v1232 = vadd.f32 %v1143, %v1231
      %1233 = vmatmul.bf16.gmra.mxu0 %v737
      %v1234 = vpop.f32.mrf.mxu0
      %v1235 = vadd.f32 %v1146, %v1234
      %v1236 = vpop.f32.mrf.mxu0
      %v1237 = vadd.f32 %v1148, %v1236
      %1238 = vmatmul.bf16.gmra.mxu0 %v742
      %v1239 = vpop.f32.mrf.mxu0
      %v1240 = vadd.f32 %v1151, %v1239
      %v1241 = vpop.f32.mrf.mxu0
      %v1242 = vadd.f32 %v1153, %v1241
      %1243 = vmatmul.bf16.gmra.mxu0 %v747
      %v1244 = vpop.f32.mrf.mxu0
      %v1245 = vadd.f32 %v1156, %v1244
      %v1246 = vpop.f32.mrf.mxu0
      %v1247 = vadd.f32 %v1158, %v1246
      %1248 = vmatmul.bf16.gmra.mxu0 %v752
      %v1249 = vpop.f32.mrf.mxu0
      %v1250 = vadd.f32 %v1161, %v1249
      %v1251 = vpop.f32.mrf.mxu0
      %v1252 = vadd.f32 %v1163, %v1251
      %1253 = vmatmul.bf16.gmra.mxu0 %v757
      %v1254 = vpop.f32.mrf.mxu0
      %v1255 = vadd.f32 %v1166, %v1254
      %v1256 = vpop.f32.mrf.mxu0
      %v1257 = vadd.f32 %v1168, %v1256
      %1258 = vmatmul.bf16.gmra.mxu0 %v762
      %v1259 = vpop.f32.mrf.mxu0
      %v1260 = vadd.f32 %v1171, %v1259
      %v1261 = vpop.f32.mrf.mxu0
      %v1262 = vadd.f32 %v1173, %v1261
      %1263 = vmatmul.bf16.gmra.mxu0 %v767
      %v1264 = vpop.f32.mrf.mxu0
      %v1265 = vadd.f32 %v1176, %v1264
      %v1266 = vpop.f32.mrf.mxu0
      %v1267 = vadd.f32 %v1178, %v1266
      %1268 = vmatmul.bf16.gmra.mxu0 %v772
      %v1269 = vpop.f32.mrf.mxu0
      %v1270 = vadd.f32 %v1181, %v1269
      %v1271 = vpop.f32.mrf.mxu0
      %v1272 = vadd.f32 %v1183, %v1271
      %1273 = vmatmul.bf16.gmra.mxu0 %v777
      %v1274 = vpop.f32.mrf.mxu0
      %v1275 = vadd.f32 %v1186, %v1274
      %v1276 = vpop.f32.mrf.mxu0
      %v1277 = vadd.f32 %v1188, %v1276
      %1278 = vdwg.mxu0
      %1279 = vmatpush.bf16.msra.mxu0 %v1044
      %1280 = vmatpush.bf16.msra.mxu0 %v1043
      %1281 = vmatpush.bf16.msra.mxu0 %v1042
      %1282 = vmatpush.bf16.msra.mxu0 %v1041
      %1283 = vmatpush.bf16.msra.mxu0 %v1040
      %1284 = vmatpush.bf16.msra.mxu0 %v1039
      %1285 = vmatpush.bf16.msra.mxu0 %v1038
      %1286 = vmatpush.bf16.msra.mxu0 %v1037
      %1287 = vmatmul.bf16.gmra.mxu0 %v703
      %v1288 = vpop.f32.mrf.mxu0
      %v1289 = vadd.f32 %v1200, %v1288
      %v1290 = vpop.f32.mrf.mxu0
      %v1291 = vadd.f32 %v1202, %v1290
      %1292 = vmatmul.bf16.gmra.mxu0 %v708
      %v1293 = vpop.f32.mrf.mxu0
      %v1294 = vadd.f32 %v1205, %v1293
      %v1295 = vpop.f32.mrf.mxu0
      %v1296 = vadd.f32 %v1207, %v1295
      %1297 = vmatmul.bf16.gmra.mxu0 %v713
      %v1298 = vpop.f32.mrf.mxu0
      %v1299 = vadd.f32 %v1210, %v1298
      %v1300 = vpop.f32.mrf.mxu0
      %v1301 = vadd.f32 %v1212, %v1300
      %1302 = vmatmul.bf16.gmra.mxu0 %v718
      %v1303 = vpop.f32.mrf.mxu0
      %v1304 = vadd.f32 %v1215, %v1303
      %v1305 = vpop.f32.mrf.mxu0
      %v1306 = vadd.f32 %v1217, %v1305
      %1307 = vmatmul.bf16.gmra.mxu0 %v723
      %v1308 = vpop.f32.mrf.mxu0
      %v1309 = vadd.f32 %v1220, %v1308
      %v1310 = vpop.f32.mrf.mxu0
      %v1311 = vadd.f32 %v1222, %v1310
      %1312 = vmatmul.bf16.gmra.mxu0 %v728
      %v1313 = vpop.f32.mrf.mxu0
      %v1314 = vadd.f32 %v1225, %v1313
      %v1315 = vpop.f32.mrf.mxu0
      %v1316 = vadd.f32 %v1227, %v1315
      %1317 = vmatmul.bf16.gmra.mxu0 %v733
      %v1318 = vpop.f32.mrf.mxu0
      %v1319 = vadd.f32 %v1230, %v1318
      %v1320 = vpop.f32.mrf.mxu0
      %v1321 = vadd.f32 %v1232, %v1320
      %1322 = vmatmul.bf16.gmra.mxu0 %v738
      %v1323 = vpop.f32.mrf.mxu0
      %v1324 = vadd.f32 %v1235, %v1323
      %v1325 = vpop.f32.mrf.mxu0
      %v1326 = vadd.f32 %v1237, %v1325
      %1327 = vmatmul.bf16.gmra.mxu0 %v743
      %v1328 = vpop.f32.mrf.mxu0
      %v1329 = vadd.f32 %v1240, %v1328
      %v1330 = vpop.f32.mrf.mxu0
      %v1331 = vadd.f32 %v1242, %v1330
      %1332 = vmatmul.bf16.gmra.mxu0 %v748
      %v1333 = vpop.f32.mrf.mxu0
      %v1334 = vadd.f32 %v1245, %v1333
      %v1335 = vpop.f32.mrf.mxu0
      %v1336 = vadd.f32 %v1247, %v1335
      %1337 = vmatmul.bf16.gmra.mxu0 %v753
      %v1338 = vpop.f32.mrf.mxu0
      %v1339 = vadd.f32 %v1250, %v1338
      %v1340 = vpop.f32.mrf.mxu0
      %v1341 = vadd.f32 %v1252, %v1340
      %1342 = vmatmul.bf16.gmra.mxu0 %v758
      %v1343 = vpop.f32.mrf.mxu0
      %v1344 = vadd.f32 %v1255, %v1343
      %v1345 = vpop.f32.mrf.mxu0
      %v1346 = vadd.f32 %v1257, %v1345
      %1347 = vmatmul.bf16.gmra.mxu0 %v763
      %v1348 = vpop.f32.mrf.mxu0
      %v1349 = vadd.f32 %v1260, %v1348
      %v1350 = vpop.f32.mrf.mxu0
      %v1351 = vadd.f32 %v1262, %v1350
      %1352 = vmatmul.bf16.gmra.mxu0 %v768
      %v1353 = vpop.f32.mrf.mxu0
      %v1354 = vadd.f32 %v1265, %v1353
      %v1355 = vpop.f32.mrf.mxu0
      %v1356 = vadd.f32 %v1267, %v1355
      %1357 = vmatmul.bf16.gmra.mxu0 %v773
      %v1358 = vpop.f32.mrf.mxu0
      %v1359 = vadd.f32 %v1270, %v1358
      %v1360 = vpop.f32.mrf.mxu0
      %v1361 = vadd.f32 %v1272, %v1360
      %1362 = vmatmul.bf16.gmra.mxu0 %v778
      %v1363 = vpop.f32.mrf.mxu0
      %v1364 = vadd.f32 %v1275, %v1363
      %v1365 = vpop.f32.mrf.mxu0
      %v1366 = vadd.f32 %v1277, %v1365
      %1367 = vdwg.mxu0
      %1368 = vmatpush.bf16.msra.mxu0 %v1052
      %1369 = vmatpush.bf16.msra.mxu0 %v1051
      %1370 = vmatpush.bf16.msra.mxu0 %v1050
      %1371 = vmatpush.bf16.msra.mxu0 %v1049
      %1372 = vmatpush.bf16.msra.mxu0 %v1048
      %1373 = vmatpush.bf16.msra.mxu0 %v1047
      %1374 = vmatpush.bf16.msra.mxu0 %v1046
      %1375 = vmatpush.bf16.msra.mxu0 %v1045
      %1376 = vmatmul.bf16.gmra.mxu0 %v704
      %v1377 = vpop.f32.mrf.mxu0
      %v1378 = vadd.f32 %v1289, %v1377
      %v1379 = vpop.f32.mrf.mxu0
      %v1380 = vadd.f32 %v1291, %v1379
      %1381 = vmatmul.bf16.gmra.mxu0 %v709
      %v1382 = vpop.f32.mrf.mxu0
      %v1383 = vadd.f32 %v1294, %v1382
      %v1384 = vpop.f32.mrf.mxu0
      %v1385 = vadd.f32 %v1296, %v1384
      %1386 = vmatmul.bf16.gmra.mxu0 %v714
      %v1387 = vpop.f32.mrf.mxu0
      %v1388 = vadd.f32 %v1299, %v1387
      %v1389 = vpop.f32.mrf.mxu0
      %v1390 = vadd.f32 %v1301, %v1389
      %1391 = vmatmul.bf16.gmra.mxu0 %v719
      %v1392 = vpop.f32.mrf.mxu0
      %v1393 = vadd.f32 %v1304, %v1392
      %v1394 = vpop.f32.mrf.mxu0
      %v1395 = vadd.f32 %v1306, %v1394
      %1396 = vmatmul.bf16.gmra.mxu0 %v724
      %v1397 = vpop.f32.mrf.mxu0
      %v1398 = vadd.f32 %v1309, %v1397
      %v1399 = vpop.f32.mrf.mxu0
      %v1400 = vadd.f32 %v1311, %v1399
      %1401 = vmatmul.bf16.gmra.mxu0 %v729
      %v1402 = vpop.f32.mrf.mxu0
      %v1403 = vadd.f32 %v1314, %v1402
      %v1404 = vpop.f32.mrf.mxu0
      %v1405 = vadd.f32 %v1316, %v1404
      %1406 = vmatmul.bf16.gmra.mxu0 %v734
      %v1407 = vpop.f32.mrf.mxu0
      %v1408 = vadd.f32 %v1319, %v1407
      %v1409 = vpop.f32.mrf.mxu0
      %v1410 = vadd.f32 %v1321, %v1409
      %1411 = vmatmul.bf16.gmra.mxu0 %v739
      %v1412 = vpop.f32.mrf.mxu0
      %v1413 = vadd.f32 %v1324, %v1412
      %v1414 = vpop.f32.mrf.mxu0
      %v1415 = vadd.f32 %v1326, %v1414
      %1416 = vmatmul.bf16.gmra.mxu0 %v744
      %v1417 = vpop.f32.mrf.mxu0
      %v1418 = vadd.f32 %v1329, %v1417
      %v1419 = vpop.f32.mrf.mxu0
      %v1420 = vadd.f32 %v1331, %v1419
      %1421 = vmatmul.bf16.gmra.mxu0 %v749
      %v1422 = vpop.f32.mrf.mxu0
      %v1423 = vadd.f32 %v1334, %v1422
      %v1424 = vpop.f32.mrf.mxu0
      %v1425 = vadd.f32 %v1336, %v1424
      %1426 = vmatmul.bf16.gmra.mxu0 %v754
      %v1427 = vpop.f32.mrf.mxu0
      %v1428 = vadd.f32 %v1339, %v1427
      %v1429 = vpop.f32.mrf.mxu0
      %v1430 = vadd.f32 %v1341, %v1429
      %1431 = vmatmul.bf16.gmra.mxu0 %v759
      %v1432 = vpop.f32.mrf.mxu0
      %v1433 = vadd.f32 %v1344, %v1432
      %v1434 = vpop.f32.mrf.mxu0
      %v1435 = vadd.f32 %v1346, %v1434
      %1436 = vmatmul.bf16.gmra.mxu0 %v764
      %v1437 = vpop.f32.mrf.mxu0
      %v1438 = vadd.f32 %v1349, %v1437
      %v1439 = vpop.f32.mrf.mxu0
      %v1440 = vadd.f32 %v1351, %v1439
      %1441 = vmatmul.bf16.gmra.mxu0 %v769
      %v1442 = vpop.f32.mrf.mxu0
      %v1443 = vadd.f32 %v1354, %v1442
      %v1444 = vpop.f32.mrf.mxu0
      %v1445 = vadd.f32 %v1356, %v1444
      %1446 = vmatmul.bf16.gmra.mxu0 %v774
      %v1447 = vpop.f32.mrf.mxu0
      %v1448 = vadd.f32 %v1359, %v1447
      %v1449 = vpop.f32.mrf.mxu0
      %v1450 = vadd.f32 %v1361, %v1449
      %1451 = vmatmul.bf16.gmra.mxu0 %v779
      %v1452 = vpop.f32.mrf.mxu0
      %v1453 = vadd.f32 %v1364, %v1452
      %v1454 = vpop.f32.mrf.mxu0
      %v1455 = vadd.f32 %v1366, %v1454
      %1456 = vdwg.mxu0
      %1457 = vmatpush.bf16.msra.mxu0 %v1060
      %1458 = vmatpush.bf16.msra.mxu0 %v1059
      %1459 = vmatpush.bf16.msra.mxu0 %v1058
      %1460 = vmatpush.bf16.msra.mxu0 %v1057
      %1461 = vmatpush.bf16.msra.mxu0 %v1056
      %1462 = vmatpush.bf16.msra.mxu0 %v1055
      %1463 = vmatpush.bf16.msra.mxu0 %v1054
      %1464 = vmatpush.bf16.msra.mxu0 %v1053
      %1465 = vmatmul.bf16.gmra.mxu0 %v705
      %v1466 = vpop.f32.mrf.mxu0
      %v1467 = vadd.f32 %v1378, %v1466
      %v1468 = vpop.f32.mrf.mxu0
      %v1469 = vadd.f32 %v1380, %v1468
      %1470 = vmatmul.bf16.gmra.mxu0 %v710
      %v1471 = vpop.f32.mrf.mxu0
      %v1472 = vadd.f32 %v1383, %v1471
      %v1473 = vpop.f32.mrf.mxu0
      %v1474 = vadd.f32 %v1385, %v1473
      %1475 = vmatmul.bf16.gmra.mxu0 %v715
      %v1476 = vpop.f32.mrf.mxu0
      %v1477 = vadd.f32 %v1388, %v1476
      %v1478 = vpop.f32.mrf.mxu0
      %v1479 = vadd.f32 %v1390, %v1478
      %1480 = vmatmul.bf16.gmra.mxu0 %v720
      %v1481 = vpop.f32.mrf.mxu0
      %v1482 = vadd.f32 %v1393, %v1481
      %v1483 = vpop.f32.mrf.mxu0
      %v1484 = vadd.f32 %v1395, %v1483
      %1485 = vmatmul.bf16.gmra.mxu0 %v725
      %v1486 = vpop.f32.mrf.mxu0
      %v1487 = vadd.f32 %v1398, %v1486
      %v1488 = vpop.f32.mrf.mxu0
      %v1489 = vadd.f32 %v1400, %v1488
      %1490 = vmatmul.bf16.gmra.mxu0 %v730
      %v1491 = vpop.f32.mrf.mxu0
      %v1492 = vadd.f32 %v1403, %v1491
      %v1493 = vpop.f32.mrf.mxu0
      %v1494 = vadd.f32 %v1405, %v1493
      %1495 = vmatmul.bf16.gmra.mxu0 %v735
      %v1496 = vpop.f32.mrf.mxu0
      %v1497 = vadd.f32 %v1408, %v1496
      %v1498 = vpop.f32.mrf.mxu0
      %v1499 = vadd.f32 %v1410, %v1498
      %1500 = vmatmul.bf16.gmra.mxu0 %v740
      %v1501 = vpop.f32.mrf.mxu0
      %v1502 = vadd.f32 %v1413, %v1501
      %v1503 = vpop.f32.mrf.mxu0
      %v1504 = vadd.f32 %v1415, %v1503
      %1505 = vmatmul.bf16.gmra.mxu0 %v745
      %v1506 = vpop.f32.mrf.mxu0
      %v1507 = vadd.f32 %v1418, %v1506
      %v1508 = vpop.f32.mrf.mxu0
      %v1509 = vadd.f32 %v1420, %v1508
      %1510 = vmatmul.bf16.gmra.mxu0 %v750
      %v1511 = vpop.f32.mrf.mxu0
      %v1512 = vadd.f32 %v1423, %v1511
      %v1513 = vpop.f32.mrf.mxu0
      %v1514 = vadd.f32 %v1425, %v1513
      %1515 = vmatmul.bf16.gmra.mxu0 %v755
      %v1516 = vpop.f32.mrf.mxu0
      %v1517 = vadd.f32 %v1428, %v1516
      %v1518 = vpop.f32.mrf.mxu0
      %v1519 = vadd.f32 %v1430, %v1518
      %1520 = vmatmul.bf16.gmra.mxu0 %v760
      %v1521 = vpop.f32.mrf.mxu0
      %v1522 = vadd.f32 %v1433, %v1521
      %v1523 = vpop.f32.mrf.mxu0
      %v1524 = vadd.f32 %v1435, %v1523
      %1525 = vmatmul.bf16.gmra.mxu0 %v765
      %v1526 = vpop.f32.mrf.mxu0
      %v1527 = vadd.f32 %v1438, %v1526
      %v1528 = vpop.f32.mrf.mxu0
      %v1529 = vadd.f32 %v1440, %v1528
      %1530 = vmatmul.bf16.gmra.mxu0 %v770
      %v1531 = vpop.f32.mrf.mxu0
      %v1532 = vadd.f32 %v1443, %v1531
      %v1533 = vpop.f32.mrf.mxu0
      %v1534 = vadd.f32 %v1445, %v1533
      %1535 = vmatmul.bf16.gmra.mxu0 %v775
      %v1536 = vpop.f32.mrf.mxu0
      %v1537 = vadd.f32 %v1448, %v1536
      %v1538 = vpop.f32.mrf.mxu0
      %v1539 = vadd.f32 %v1450, %v1538
      %1540 = vmatmul.bf16.gmra.mxu0 %v780
      %v1541 = vpop.f32.mrf.mxu0
      %v1542 = vadd.f32 %v1453, %v1541
      %v1543 = vpop.f32.mrf.mxu0
      %v1544 = vadd.f32 %v1455, %v1543
      %1545 = vdwg.mxu0
      %v1546 = vld [vmem:[%s256] sm:$0x1]
      %v1548 = vperm.slane %v1546, 0
      %v1550 = vmul.f32 %v1467, %v1548
      %v1551 = vmul.f32 %v1469, %v1548
      %v1552 = vmul.f32 %v1472, %v1548
      %v1553 = vmul.f32 %v1474, %v1548
      %v1554 = vmul.f32 %v1477, %v1548
      %v1555 = vmul.f32 %v1479, %v1548
      %v1556 = vmul.f32 %v1482, %v1548
      %v1557 = vmul.f32 %v1484, %v1548
      %v1558 = vmul.f32 %v1487, %v1548
      %v1559 = vmul.f32 %v1489, %v1548
      %v1560 = vmul.f32 %v1492, %v1548
      %v1561 = vmul.f32 %v1494, %v1548
      %v1562 = vmul.f32 %v1497, %v1548
      %v1563 = vmul.f32 %v1499, %v1548
      %v1564 = vmul.f32 %v1502, %v1548
      %v1565 = vmul.f32 %v1504, %v1548
      %v1566 = vmul.f32 %v1507, %v1548
      %v1567 = vmul.f32 %v1509, %v1548
      %v1568 = vmul.f32 %v1512, %v1548
      %v1569 = vmul.f32 %v1514, %v1548
      %v1570 = vmul.f32 %v1517, %v1548
      %v1571 = vmul.f32 %v1519, %v1548
      %v1572 = vmul.f32 %v1522, %v1548
      %v1573 = vmul.f32 %v1524, %v1548
      %v1574 = vmul.f32 %v1527, %v1548
      %v1575 = vmul.f32 %v1529, %v1548
      %v1576 = vmul.f32 %v1532, %v1548
      %v1577 = vmul.f32 %v1534, %v1548
      %v1578 = vmul.f32 %v1537, %v1548
      %v1579 = vmul.f32 %v1539, %v1548
      %v1580 = vmul.f32 %v1542, %v1548
      %v1581 = vmul.f32 %v1544, %v1548
      %v1582 = vld [vmem:[%s259] sm:$0x1]
      %v1584 = vperm.slane %v1582, 0
      %v1586 = vadd.f32 %v1550, %v1584
      %v1587 = vadd.f32 %v1551, %v1584
      %v1588 = vadd.f32 %v1552, %v1584
      %v1589 = vadd.f32 %v1553, %v1584
      %v1590 = vadd.f32 %v1554, %v1584
      %v1591 = vadd.f32 %v1555, %v1584
      %v1592 = vadd.f32 %v1556, %v1584
      %v1593 = vadd.f32 %v1557, %v1584
      %v1594 = vadd.f32 %v1558, %v1584
      %v1595 = vadd.f32 %v1559, %v1584
      %v1596 = vadd.f32 %v1560, %v1584
      %v1597 = vadd.f32 %v1561, %v1584
      %v1598 = vadd.f32 %v1562, %v1584
      %v1599 = vadd.f32 %v1563, %v1584
      %v1600 = vadd.f32 %v1564, %v1584
      %v1601 = vadd.f32 %v1565, %v1584
      %v1602 = vadd.f32 %v1566, %v1584
      %v1603 = vadd.f32 %v1567, %v1584
      %v1604 = vadd.f32 %v1568, %v1584
      %v1605 = vadd.f32 %v1569, %v1584
      %v1606 = vadd.f32 %v1570, %v1584
      %v1607 = vadd.f32 %v1571, %v1584
      %v1608 = vadd.f32 %v1572, %v1584
      %v1609 = vadd.f32 %v1573, %v1584
      %v1610 = vadd.f32 %v1574, %v1584
      %v1611 = vadd.f32 %v1575, %v1584
      %v1612 = vadd.f32 %v1576, %v1584
      %v1613 = vadd.f32 %v1577, %v1584
      %v1614 = vadd.f32 %v1578, %v1584
      %v1615 = vadd.f32 %v1579, %v1584
      %v1616 = vadd.f32 %v1580, %v1584
      %v1617 = vadd.f32 %v1581, %v1584
      %v1618 = vmax.f32 %v1586, 0.0
      %v1619 = vmax.f32 %v1587, 0.0
      %v1620 = vmax.f32 %v1588, 0.0
      %v1621 = vmax.f32 %v1589, 0.0
      %v1622 = vmax.f32 %v1590, 0.0
      %v1623 = vmax.f32 %v1591, 0.0
      %v1624 = vmax.f32 %v1592, 0.0
      %v1625 = vmax.f32 %v1593, 0.0
      %v1626 = vmax.f32 %v1594, 0.0
      %v1627 = vmax.f32 %v1595, 0.0
      %v1628 = vmax.f32 %v1596, 0.0
      %v1629 = vmax.f32 %v1597, 0.0
      %v1630 = vmax.f32 %v1598, 0.0
      %v1631 = vmax.f32 %v1599, 0.0
      %v1632 = vmax.f32 %v1600, 0.0
      %v1633 = vmax.f32 %v1601, 0.0
      %v1634 = vmax.f32 %v1602, 0.0
      %v1635 = vmax.f32 %v1603, 0.0
      %v1636 = vmax.f32 %v1604, 0.0
      %v1637 = vmax.f32 %v1605, 0.0
      %v1638 = vmax.f32 %v1606, 0.0
      %v1639 = vmax.f32 %v1607, 0.0
      %v1640 = vmax.f32 %v1608, 0.0
      %v1641 = vmax.f32 %v1609, 0.0
      %v1642 = vmax.f32 %v1610, 0.0
      %v1643 = vmax.f32 %v1611, 0.0
      %v1644 = vmax.f32 %v1612, 0.0
      %v1645 = vmax.f32 %v1613, 0.0
      %v1646 = vmax.f32 %v1614, 0.0
      %v1647 = vmax.f32 %v1615, 0.0
      %v1648 = vmax.f32 %v1616, 0.0
      %v1649 = vmax.f32 %v1617, 0.0
      %v1650 = vpack.c.bf16 %v1618, %v1618
      %v1651 = vpack.c.bf16 %v1619, %v1619
      %v1652 = vpack.c.bf16 %v1620, %v1620
      %v1653 = vpack.c.bf16 %v1621, %v1621
      %v1654 = vpack.c.bf16 %v1622, %v1622
      %v1655 = vpack.c.bf16 %v1623, %v1623
      %v1656 = vpack.c.bf16 %v1624, %v1624
      %v1657 = vpack.c.bf16 %v1625, %v1625
      %v1658 = vpack.c.bf16 %v1626, %v1626
      %v1659 = vpack.c.bf16 %v1627, %v1627
      %v1660 = vpack.c.bf16 %v1628, %v1628
      %v1661 = vpack.c.bf16 %v1629, %v1629
      %v1662 = vpack.c.bf16 %v1630, %v1630
      %v1663 = vpack.c.bf16 %v1631, %v1631
      %v1664 = vpack.c.bf16 %v1632, %v1632
      %v1665 = vpack.c.bf16 %v1633, %v1633
      %v1666 = vpack.c.bf16 %v1634, %v1634
      %v1667 = vpack.c.bf16 %v1635, %v1635
      %v1668 = vpack.c.bf16 %v1636, %v1636
      %v1669 = vpack.c.bf16 %v1637, %v1637
      %v1670 = vpack.c.bf16 %v1638, %v1638
      %v1671 = vpack.c.bf16 %v1639, %v1639
      %v1672 = vpack.c.bf16 %v1640, %v1640
      %v1673 = vpack.c.bf16 %v1641, %v1641
      %v1674 = vpack.c.bf16 %v1642, %v1642
      %v1675 = vpack.c.bf16 %v1643, %v1643
      %v1676 = vpack.c.bf16 %v1644, %v1644
      %v1677 = vpack.c.bf16 %v1645, %v1645
      %v1678 = vpack.c.bf16 %v1646, %v1646
      %v1679 = vpack.c.bf16 %v1647, %v1647
      %v1680 = vpack.c.bf16 %v1648, %v1648
      %v1681 = vpack.c.bf16 %v1649, %v1649
      %1682 = vst [vmem:[%s267] sm:$0xf] %v1650
      %1683 = vst [vmem:[%s267 + $0x4] sm:$0xf] %v1651
      %1684 = vst [vmem:[%s267 + $0x8] sm:$0xf] %v1652
      %1685 = vst [vmem:[%s267 + $0xc] sm:$0xf] %v1653
      %1686 = vst [vmem:[%s267 + $0x10] sm:$0xf] %v1654
      %1687 = vst [vmem:[%s267 + $0x14] sm:$0xf] %v1655
      %1688 = vst [vmem:[%s267 + $0x18] sm:$0xf] %v1656
      %1689 = vst [vmem:[%s267 + $0x1c] sm:$0xf] %v1657
      %1690 = vst [vmem:[%s267 + $0x20] sm:$0xf] %v1658
      %1691 = vst [vmem:[%s267 + $0x24] sm:$0xf] %v1659
      %1692 = vst [vmem:[%s267 + $0x28] sm:$0xf] %v1660
      %1693 = vst [vmem:[%s267 + $0x2c] sm:$0xf] %v1661
      %1694 = vst [vmem:[%s267 + $0x30] sm:$0xf] %v1662
      %1695 = vst [vmem:[%s267 + $0x34] sm:$0xf] %v1663
      %1696 = vst [vmem:[%s267 + $0x38] sm:$0xf] %v1664
      %1697 = vst [vmem:[%s267 + $0x3c] sm:$0xf] %v1665
      %1698 = vst [vmem:[%s267 + $0x40] sm:$0xf] %v1666
      %1699 = vst [vmem:[%s267 + $0x44] sm:$0xf] %v1667
      %1700 = vst [vmem:[%s267 + $0x48] sm:$0xf] %v1668
      %1701 = vst [vmem:[%s267 + $0x4c] sm:$0xf] %v1669
      %1702 = vst [vmem:[%s267 + $0x50] sm:$0xf] %v1670
      %1703 = vst [vmem:[%s267 + $0x54] sm:$0xf] %v1671
      %1704 = vst [vmem:[%s267 + $0x58] sm:$0xf] %v1672
      %1705 = vst [vmem:[%s267 + $0x5c] sm:$0xf] %v1673
      %1706 = vst [vmem:[%s267 + $0x60] sm:$0xf] %v1674
      %1707 = vst [vmem:[%s267 + $0x64] sm:$0xf] %v1675
      %1708 = vst [vmem:[%s267 + $0x68] sm:$0xf] %v1676
      %1709 = vst [vmem:[%s267 + $0x6c] sm:$0xf] %v1677
      %1710 = vst [vmem:[%s267 + $0x70] sm:$0xf] %v1678
      %1711 = vst [vmem:[%s267 + $0x74] sm:$0xf] %v1679
      %1712 = vst [vmem:[%s267 + $0x78] sm:$0xf] %v1680
      %1713 = vst [vmem:[%s267 + $0x7c] sm:$0xf] %v1681
      %s1714 = smul.u32 32, %s19
      %p1715 = scmp.lt.s32.totalorder %s1714, 63
      %s1716 = scalar_select %p1715, %s1714, 63
      %p1717 = scmp.lt.s32.totalorder %s20, 0
      %s1718 = scalar_select %p1717, %s20, 0
      %s1719 = sadd.s32 %s1718, %s1716
      %s1720 = smul.addr %s1719, 4
      %s1721 = scalar_lea.vmem %s4, %s1720
      // Predicated region
      $region37: #{forward.13} parent=35 // pred_check
        %p1722 = pneg %p151
      $region38: #{forward.13} parent=35 // pred_check_branch
        %1724 = sbr.rel (%p1722) target = $region40
      $region39: #{forward.13} parent=35 // pred_region
        %s1725 = smul.u32 32, %s19
      $region40: #{forward.13} parent=35 // pred_fallthru
        _
    $region36: #{forward.13} parent=5 // pred_fallthru
      _
    %p1726 = scmp.le.s32.totalorder 2, %s10
    // Predicated region
    $region41: #{forward.13} parent=5 // pred_check
      %p1727 = pneg %p1726
    $region42: #{forward.13} parent=5 // pred_check_branch
      %1729 = sbr.rel (%p1727) target = $region44
    $region43: #{forward.13} parent=5 // pred_region
      %s1730 = ssub.s32 %s10, 2
      // Predicated region
      $region45: #{forward.13} parent=43 // pred_check
        %p1731 = pneg %p157
      $region46: #{forward.13} parent=43 // pred_check_branch
        %1733 = sbr.rel (%p1731) target = $region48
      $region47: #{forward.13} parent=43 // pred_region
        %s1734 = smul.u32 32, %s21
        %p1735 = scmp.lt.s32.totalorder %s1734, 63
        %s1736 = scalar_select %p1735, %s1734, 63
        %p1737 = scmp.lt.s32.totalorder %s22, 0
        %s1738 = scalar_select %p1737, %s22, 0
        %s1739 = sadd.s32 %s1738, %s1736
        %s1740 = smul.addr %s1739, 4
        %s1741 = scalar_lea.vmem %s4, %s1740
      $region48: #{forward.13} parent=43 // pred_fallthru
        _
    $region44: #{forward.13} parent=5 // pred_fallthru
      _
  $region6: #{forward.13} parent=0 // loop_footer
    %s14 = sadd.s32 1, %s10
  $region7: #{forward.13} parent=0 // loop_footer_branch
    %9 = sbr.rel target = $region3
  $region8: #{forward.13} parent=0 // loop_exit
    _

// kernel: forward.14
$region0: #{forward.14}
  #allocation0 [shape = 'u32[]', space=smem, size = 0x4, offset = 0x4, fixed_abs, tag = 'smem constant byte address 0x4 - core index']
  #allocation1 [shape = 'u32[72,128]{1,0:T(1,128)}', space=vmem, size = 0x9000, scoped, tag = 'internal scratch']
  %s0 = inlined_call_operand.vmem [shape: bf16[512,640], index: 0, kind: input, shape index: {}]
  %s1 = inlined_call_operand.vmem [shape: bf16[640,128], index: 1, kind: input, shape index: {}]
  %s2 = inlined_call_operand.vmem [shape: f32[1,128], index: 2, kind: input, shape index: {}]
  %s3 = inlined_call_operand.vmem [shape: f32[1,128], index: 3, kind: input, shape index: {}]
  %s4 = inlined_call_operand.vmem [shape: bf16[512,128], index: 4, kind: input, shape index: {}]
  %s5 = inlined_call_operand.vmem [shape: bf16[512,128], index: 5, kind: output, shape index: {}]
  %s6 = sld [smem:[#allocation0]]
  $region53: #{forward.14} parent=0
    _
  %s8 = ssub.s32 1, %s6
  %s9 = scalar_select 0, %s8, %s6
  loop: start=0, step=1, limit=4
  $region2: #{forward.14} parent=0 // loop_pre_header
    _
  $region3: #{forward.14} parent=0 // loop_header
    %s11 = sphi 0, %s15
    %p12 = scmp.ge.s32.totalorder %s11, 4
    %s18 = sphi 0, %s30
    %s19 = sphi 0, %s26
    %s20 = sphi 0, %s18
    %s21 = sphi 0, %s19
    %s22 = sphi 0, %s20
    %s23 = sphi 0, %s21
    %s33 = sphi 0, %s35
    %s36 = sphi 0, %s33
    %s37 = sphi 0, %s36
    %s53 = sphi 0, %s37
    %s59 = sphi 0, %s61
    %s62 = sphi 0, %s59
    %s63 = sphi 0, %s62
    %s79 = sphi 0, %s63
    %s85 = sphi 0, %s87
    %s88 = sphi 0, %s85
    %s89 = sphi 0, %s88
    %s105 = sphi 0, %s89
    %s111 = sphi 0, %s113
    %s114 = sphi 0, %s111
    %s115 = sphi 0, %s114
    %s131 = sphi 0, %s115
    %s139 = sphi 0, %s141
    %s142 = sphi 0, %s139
    %s143 = sphi 0, %s142
    %s159 = sphi 0, %s143
    %s167 = sphi 0, %s169
    %s170 = sphi 0, %s167
    %s171 = sphi 0, %s170
    %s187 = sphi 0, %s171
  $region4: #{forward.14} parent=0 // loop_header_branch
    %14 = sbr.rel (%p12) target = $region8
  $region5: #{forward.14} parent=0 // loop_body
    %s16 = ssub.s32 %s11, 1
    %s17 = ssub.s32 %s11, 2
    %s24 = sadd.s32 1, %s19
    %p25 = scmp.ge.s32.totalorder %s24, 1
    %s26 = scalar_select %p25, 0, %s24
    %s27 = sadd.s32 1, %s18
    %s28 = scalar_select %p25, %s27, %s18
    %p29 = scmp.ge.s32.totalorder %s28, 2
    %s30 = scalar_select %p29, 0, %s28
    %s31 = ssub.s32 %s18, %s30
    %p32 = scmp.eq.s32.totalorder %s31, 0
    %s34 = sadd.s32 %s33, 1
    %s35 = scalar_select %p32, %s33, %s34
    %p38 = pneg %p32
    %p39 = scmp.eq.s32.totalorder %s11, 1
    %p40 = por %p38, %p39
    %p41 = scmp.ne.s32.totalorder %s33, %s36
    %p42 = scmp.eq.s32.totalorder %s11, 0
    %p43 = por %p41, %p42
    %p44 = scmp.ne.s32.totalorder %s33, %s36
    %p45 = scmp.eq.s32.totalorder %s16, 1
    %p46 = por %p44, %p45
    %p47 = scmp.ne.s32.totalorder %s36, %s37
    %p48 = scmp.eq.s32.totalorder %s16, 0
    %p49 = por %p47, %p48
    %p50 = scmp.ne.s32.totalorder %s36, %s37
    %p51 = scmp.eq.s32.totalorder %s17, 1
    %p52 = por %p50, %p51
    %p54 = scmp.ne.s32.totalorder %s37, %s53
    %p55 = scmp.eq.s32.totalorder %s17, 0
    %p56 = por %p54, %p55
    %s57 = ssub.s32 %s19, %s26
    %p58 = scmp.eq.s32.totalorder %s57, 0
    %s60 = sadd.s32 %s59, 1
    %s61 = scalar_select %p58, %s59, %s60
    %p64 = pneg %p58
    %p65 = scmp.eq.s32.totalorder %s11, 1
    %p66 = por %p64, %p65
    %p67 = scmp.ne.s32.totalorder %s59, %s62
    %p68 = scmp.eq.s32.totalorder %s11, 0
    %p69 = por %p67, %p68
    %p70 = scmp.ne.s32.totalorder %s59, %s62
    %p71 = scmp.eq.s32.totalorder %s16, 1
    %p72 = por %p70, %p71
    %p73 = scmp.ne.s32.totalorder %s62, %s63
    %p74 = scmp.eq.s32.totalorder %s16, 0
    %p75 = por %p73, %p74
    %p76 = scmp.ne.s32.totalorder %s62, %s63
    %p77 = scmp.eq.s32.totalorder %s17, 1
    %p78 = por %p76, %p77
    %p80 = scmp.ne.s32.totalorder %s63, %s79
    %p81 = scmp.eq.s32.totalorder %s17, 0
    %p82 = por %p80, %p81
    %s83 = ssub.s32 %s19, %s26
    %p84 = scmp.eq.s32.totalorder %s83, 0
    %s86 = sadd.s32 %s85, 1
    %s87 = scalar_select %p84, %s85, %s86
    %p90 = pneg %p84
    %p91 = scmp.eq.s32.totalorder %s11, 1
    %p92 = por %p90, %p91
    %p93 = scmp.ne.s32.totalorder %s85, %s88
    %p94 = scmp.eq.s32.totalorder %s11, 0
    %p95 = por %p93, %p94
    %p96 = scmp.ne.s32.totalorder %s85, %s88
    %p97 = scmp.eq.s32.totalorder %s16, 1
    %p98 = por %p96, %p97
    %p99 = scmp.ne.s32.totalorder %s88, %s89
    %p100 = scmp.eq.s32.totalorder %s16, 0
    %p101 = por %p99, %p100
    %p102 = scmp.ne.s32.totalorder %s88, %s89
    %p103 = scmp.eq.s32.totalorder %s17, 1
    %p104 = por %p102, %p103
    %p106 = scmp.ne.s32.totalorder %s89, %s105
    %p107 = scmp.eq.s32.totalorder %s17, 0
    %p108 = por %p106, %p107
    %s109 = ssub.s32 %s19, %s26
    %p110 = scmp.eq.s32.totalorder %s109, 0
    %s112 = sadd.s32 %s111, 1
    %s113 = scalar_select %p110, %s111, %s112
    %p116 = pneg %p110
    %p117 = scmp.eq.s32.totalorder %s11, 1
    %p118 = por %p116, %p117
    %p119 = scmp.ne.s32.totalorder %s111, %s114
    %p120 = scmp.eq.s32.totalorder %s11, 0
    %p121 = por %p119, %p120
    %p122 = scmp.ne.s32.totalorder %s111, %s114
    %p123 = scmp.eq.s32.totalorder %s16, 1
    %p124 = por %p122, %p123
    %p125 = scmp.ne.s32.totalorder %s114, %s115
    %p126 = scmp.eq.s32.totalorder %s16, 0
    %p127 = por %p125, %p126
    %p128 = scmp.ne.s32.totalorder %s114, %s115
    %p129 = scmp.eq.s32.totalorder %s17, 1
    %p130 = por %p128, %p129
    %p132 = scmp.ne.s32.totalorder %s115, %s131
    %p133 = scmp.eq.s32.totalorder %s17, 0
    %p134 = por %p132, %p133
    %s135 = ssub.s32 %s18, %s30
    %s136 = ssub.s32 %s19, %s26
    %s137 = sor.u32 %s135, %s136
    %p138 = scmp.eq.s32.totalorder %s137, 0
    %s140 = sadd.s32 %s139, 1
    %s141 = scalar_select %p138, %s139, %s140
    %p144 = pneg %p138
    %p145 = scmp.eq.s32.totalorder %s11, 1
    %p146 = por %p144, %p145
    %p147 = scmp.ne.s32.totalorder %s139, %s142
    %p148 = scmp.eq.s32.totalorder %s11, 0
    %p149 = por %p147, %p148
    %p150 = scmp.ne.s32.totalorder %s139, %s142
    %p151 = scmp.eq.s32.totalorder %s16, 1
    %p152 = por %p150, %p151
    %p153 = scmp.ne.s32.totalorder %s142, %s143
    %p154 = scmp.eq.s32.totalorder %s16, 0
    %p155 = por %p153, %p154
    %p156 = scmp.ne.s32.totalorder %s142, %s143
    %p157 = scmp.eq.s32.totalorder %s17, 1
    %p158 = por %p156, %p157
    %p160 = scmp.ne.s32.totalorder %s143, %s159
    %p161 = scmp.eq.s32.totalorder %s17, 0
    %p162 = por %p160, %p161
    %s163 = ssub.s32 %s18, %s30
    %s164 = ssub.s32 %s19, %s26
    %s165 = sor.u32 %s163, %s164
    %p166 = scmp.eq.s32.totalorder %s165, 0
    %s168 = sadd.s32 %s167, 1
    %s169 = scalar_select %p166, %s167, %s168
    %p172 = pneg %p166
    %p173 = scmp.eq.s32.totalorder %s11, 1
    %p174 = por %p172, %p173
    %p175 = scmp.ne.s32.totalorder %s167, %s170
    %p176 = scmp.eq.s32.totalorder %s11, 0
    %p177 = por %p175, %p176
    %p178 = scmp.ne.s32.totalorder %s167, %s170
    %p179 = scmp.eq.s32.totalorder %s16, 1
    %p180 = por %p178, %p179
    %p181 = scmp.ne.s32.totalorder %s170, %s171
    %p182 = scmp.eq.s32.totalorder %s16, 0
    %p183 = por %p181, %p182
    %p184 = scmp.ne.s32.totalorder %s170, %s171
    %p185 = scmp.eq.s32.totalorder %s17, 1
    %p186 = por %p184, %p185
    %p188 = scmp.ne.s32.totalorder %s171, %s187
    %p189 = scmp.eq.s32.totalorder %s17, 0
    %p190 = por %p188, %p189
    %p191 = scmp.le.s32.totalorder 1, %s11
    %p192 = scmp.lt.s32.totalorder %s11, 3
    %p193 = pnand %p191, %p192
    %p194 = pneg %p193
    // Predicated region
    $region9: #{forward.14} parent=5 // pred_check
      _
    $region10: #{forward.14} parent=5 // pred_check_branch
      %196 = sbr.rel (%p193) target = $region12
    $region11: #{forward.14} parent=5 // pred_region
      %s197 = ssub.s32 %s11, 1
      // Predicated region
      $region13: #{forward.14} parent=11 // pred_check
        %p198 = pneg %p75
      $region14: #{forward.14} parent=11 // pred_check_branch
        %200 = sbr.rel (%p198) target = $region16
      $region15: #{forward.14} parent=11 // pred_region
        %p201 = scmp.lt.s32.totalorder %s21, 0
        %s202 = scalar_select %p201, %s21, 0
        %s203 = smul.addr %s202, 4
        %s204 = scalar_lea.vmem %s1, %s203
      $region16: #{forward.14} parent=11 // pred_fallthru
        _
      // Predicated region
      $region17: #{forward.14} parent=11 // pred_check
        %p205 = pneg %p101
      $region18: #{forward.14} parent=11 // pred_check_branch
        %207 = sbr.rel (%p205) target = $region20
      $region19: #{forward.14} parent=11 // pred_region
        %p208 = scmp.lt.s32.totalorder %s21, 0
        %s209 = scalar_select %p208, %s21, 0
        %s210 = scalar_lea.vmem %s2, %s209
      $region20: #{forward.14} parent=11 // pred_fallthru
        _
      // Predicated region
      $region21: #{forward.14} parent=11 // pred_check
        %p211 = pneg %p127
      $region22: #{forward.14} parent=11 // pred_check_branch
        %213 = sbr.rel (%p211) target = $region24
      $region23: #{forward.14} parent=11 // pred_region
        %p214 = scmp.lt.s32.totalorder %s21, 0
        %s215 = scalar_select %p214, %s21, 0
        %s216 = scalar_lea.vmem %s3, %s215
      $region24: #{forward.14} parent=11 // pred_fallthru
        _
    $region12: #{forward.14} parent=5 // pred_fallthru
      _
    %p217 = scmp.lt.s32.totalorder %s11, 2
    // Predicated region
    $region25: #{forward.14} parent=5 // pred_check
      %p218 = pneg %p217
    $region26: #{forward.14} parent=5 // pred_check_branch
      %220 = sbr.rel (%p218) target = $region28
    $region27: #{forward.14} parent=5 // pred_region
      // Predicated region
      $region29: #{forward.14} parent=27 // pred_check
        %p221 = pneg %p43
      $region30: #{forward.14} parent=27 // pred_check_branch
        %223 = sbr.rel (%p221) target = $region32
      $region31: #{forward.14} parent=27 // pred_region
        %s224 = smul.u32 32, %s18
        %p225 = scmp.lt.s32.totalorder %s224, 63
        %s226 = scalar_select %p225, %s224, 63
        %s227 = smul.addr %s226, 5
        %s228 = smul.addr %s227, 4
        %s229 = scalar_lea.vmem %s0, %s228
        %s230 = smul.u32 32, %s18
      $region32: #{forward.14} parent=27 // pred_fallthru
        _
      // Predicated region
      $region33: #{forward.14} parent=27 // pred_check
        %p231 = pneg %p149
      $region34: #{forward.14} parent=27 // pred_check_branch
        %233 = sbr.rel (%p231) target = $region36
      $region35: #{forward.14} parent=27 // pred_region
        %s234 = smul.u32 32, %s18
        %p235 = scmp.lt.s32.totalorder %s234, 63
        %s236 = scalar_select %p235, %s234, 63
        %p237 = scmp.lt.s32.totalorder %s19, 0
        %s238 = scalar_select %p237, %s19, 0
        %s239 = sadd.s32 %s238, %s236
        %s240 = smul.addr %s239, 4
        %s241 = scalar_lea.vmem %s4, %s240
        %s242 = smul.u32 32, %s18
      $region36: #{forward.14} parent=27 // pred_fallthru
        _
    $region28: #{forward.14} parent=5 // pred_fallthru
      _
    %p243 = scmp.le.s32.totalorder 1, %s11
    %p244 = scmp.lt.s32.totalorder %s11, 3
    %p245 = pnand %p243, %p244
    %p246 = pneg %p245
    // Predicated region
    $region37: #{forward.14} parent=5 // pred_check
      _
    $region38: #{forward.14} parent=5 // pred_check_branch
      %248 = sbr.rel (%p245) target = $region40
    $region39: #{forward.14} parent=5 // pred_region
      %s249 = ssub.s32 %s11, 1
      %s250 = smul.u32 32, %s20
      %p251 = scmp.lt.s32.totalorder %s250, 63
      %s252 = scalar_select %p251, %s250, 63
      %s253 = smul.addr %s252, 5
      %s254 = smul.addr %s253, 4
      %s255 = scalar_lea.vmem %s0, %s254
      %p256 = pneg %p49
      %p257 = pneg %p46
      %p258 = scmp.lt.s32.totalorder %s21, 0
      %s259 = scalar_select %p258, %s21, 0
      %s260 = smul.addr %s259, 4
      %s261 = scalar_lea.vmem %s1, %s260
      %p262 = pneg %p75
      %p263 = pneg %p72
      %p264 = scmp.lt.s32.totalorder %s21, 0
      %s265 = scalar_select %p264, %s21, 0
      %s266 = scalar_lea.vmem %s2, %s265
      %p267 = pneg %p101
      %p268 = pneg %p98
      %p269 = scmp.lt.s32.totalorder %s21, 0
      %s270 = scalar_select %p269, %s21, 0
      %s271 = scalar_lea.vmem %s3, %s270
      %p272 = pneg %p127
      %p273 = pneg %p124
      %s274 = smul.u32 32, %s20
      %p275 = scmp.lt.s32.totalorder %s274, 63
      %s276 = scalar_select %p275, %s274, 63
      %p277 = scmp.lt.s32.totalorder %s21, 0
      %s278 = scalar_select %p277, %s21, 0
      %s279 = sadd.s32 %s278, %s276
      %s280 = smul.addr %s279, 4
      %s281 = scalar_lea.vmem %s4, %s280
      %p282 = pneg %p155
      %p283 = pneg %p152
      %p284 = pneg %p183
      %p285 = pneg %p180
      %s286 = smul.u32 32, %s20
      %p287 = scmp.lt.s32.totalorder %s286, 63
      %s288 = scalar_select %p287, %s286, 63
      %p289 = scmp.lt.s32.totalorder %s21, 0
      %s290 = scalar_select %p289, %s21, 0
      %s291 = sadd.s32 %s290, %s288
      %s292 = smul.addr %s291, 4
      %s293 = scalar_lea.vmem %s5, %s292
      %s294 = smul.u32 32, %s20
      %p295 = scmp.lt.s32.totalorder %s294, 63
      %s296 = scalar_select %p295, %s294, 63
      %s297 = smul.addr %s296, 5
      %s298 = smul.addr %s297, 4
      %s299 = scalar_lea.vmem %s0, %s298
      %s300 = smul.u32 32, %s20
      %p301 = scmp.lt.s32.totalorder %s21, 0
      %s302 = scalar_select %p301, %s21, 0
      %s303 = smul.addr %s302, 4
      %s304 = scalar_lea.vmem %s1, %s303
      %p305 = scmp.lt.s32.totalorder %s21, 0
      %s306 = scalar_select %p305, %s21, 0
      %s307 = scalar_lea.vmem %s2, %s306
      %p308 = scmp.lt.s32.totalorder %s21, 0
      %s309 = scalar_select %p308, %s21, 0
      %s310 = scalar_lea.vmem %s3, %s309
      %s311 = smul.u32 32, %s20
      %p312 = scmp.lt.s32.totalorder %s311, 63
      %s313 = scalar_select %p312, %s311, 63
      %p314 = scmp.lt.s32.totalorder %s21, 0
      %s315 = scalar_select %p314, %s21, 0
      %s316 = sadd.s32 %s315, %s313
      %s317 = smul.addr %s316, 4
      %s318 = scalar_lea.vmem %s4, %s317
      %s319 = smul.u32 32, %s20
      %s320 = smul.u32 32, %s20
      %p321 = scmp.lt.s32.totalorder %s320, 63
      %s322 = scalar_select %p321, %s320, 63
      %p323 = scmp.lt.s32.totalorder %s21, 0
      %s324 = scalar_select %p323, %s21, 0
      %s325 = sadd.s32 %s324, %s322
      %s326 = smul.addr %s325, 4
      %s327 = scalar_lea.vmem %s5, %s326
      %s328 = smul.u32 32, %s20
      %v329 = vld [vmem:[%s299] sm:$0xff]
      %v330 = vld [vmem:[%s299 + $0x8] sm:$0xff]
      %v331 = vld [vmem:[%s299 + $0x10] sm:$0xf]
      %v332 = vld [vmem:[%s299 + $0x14] sm:$0xff]
      %v333 = vld [vmem:[%s299 + $0x1c] sm:$0xff]
      %v334 = vld [vmem:[%s299 + $0x24] sm:$0xf]
      %v335 = vld [vmem:[%s299 + $0x28] sm:$0xff]
      %v336 = vld [vmem:[%s299 + $0x30] sm:$0xff]
      %v337 = vld [vmem:[%s299 + $0x38] sm:$0xf]
      %v338 = vld [vmem:[%s299 + $0x3c] sm:$0xff]
      %v339 = vld [vmem:[%s299 + $0x44] sm:$0xff]
      %v340 = vld [vmem:[%s299 + $0x4c] sm:$0xf]
      %v341 = vld [vmem:[%s299 + $0x50] sm:$0xff]
      %v342 = vld [vmem:[%s299 + $0x58] sm:$0xff]
      %v343 = vld [vmem:[%s299 + $0x60] sm:$0xf]
      %v344 = vld [vmem:[%s299 + $0x64] sm:$0xff]
      %v345 = vld [vmem:[%s299 + $0x6c] sm:$0xff]
      %v346 = vld [vmem:[%s299 + $0x74] sm:$0xf]
      %v347 = vld [vmem:[%s299 + $0x78] sm:$0xff]
      %v348 = vld [vmem:[%s299 + $0x80] sm:$0xff]
      %v349 = vld [vmem:[%s299 + $0x88] sm:$0xf]
      %v350 = vld [vmem:[%s299 + $0x8c] sm:$0xff]
      %v351 = vld [vmem:[%s299 + $0x94] sm:$0xff]
      %v352 = vld [vmem:[%s299 + $0x9c] sm:$0xf]
      %v353 = vld [vmem:[%s299 + $0xa0] sm:$0xff]
      %v354 = vld [vmem:[%s299 + $0xa8] sm:$0xff]
      %v355 = vld [vmem:[%s299 + $0xb0] sm:$0xf]
      %v356 = vld [vmem:[%s299 + $0xb4] sm:$0xff]
      %v357 = vld [vmem:[%s299 + $0xbc] sm:$0xff]
      %v358 = vld [vmem:[%s299 + $0xc4] sm:$0xf]
      %v359 = vld [vmem:[%s299 + $0xc8] sm:$0xff]
      %v360 = vld [vmem:[%s299 + $0xd0] sm:$0xff]
      %v361 = vld [vmem:[%s299 + $0xd8] sm:$0xf]
      %v362 = vld [vmem:[%s299 + $0xdc] sm:$0xff]
      %v363 = vld [vmem:[%s299 + $0xe4] sm:$0xff]
      %v364 = vld [vmem:[%s299 + $0xec] sm:$0xf]
      %v365 = vld [vmem:[%s299 + $0xf0] sm:$0xff]
      %v366 = vld [vmem:[%s299 + $0xf8] sm:$0xff]
      %v367 = vld [vmem:[%s299 + $0x100] sm:$0xf]
      %v368 = vld [vmem:[%s299 + $0x104] sm:$0xff]
      %v369 = vld [vmem:[%s299 + $0x10c] sm:$0xff]
      %v370 = vld [vmem:[%s299 + $0x114] sm:$0xf]
      %v371 = vld [vmem:[%s299 + $0x118] sm:$0xff]
      %v372 = vld [vmem:[%s299 + $0x120] sm:$0xff]
      %v373 = vld [vmem:[%s299 + $0x128] sm:$0xf]
      %v374 = vld [vmem:[%s299 + $0x12c] sm:$0xff]
      %v375 = vld [vmem:[%s299 + $0x134] sm:$0xff]
      %v376 = vld [vmem:[%s299 + $0x13c] sm:$0xf]
      %v377 = vld [vmem:[%s299 + $0x140] sm:$0xff]
      %v378 = vld [vmem:[%s299 + $0x148] sm:$0xff]
      %v379 = vld [vmem:[%s299 + $0x150] sm:$0xf]
      %v380 = vld [vmem:[%s299 + $0x154] sm:$0xff]
      %v381 = vld [vmem:[%s299 + $0x15c] sm:$0xff]
      %v382 = vld [vmem:[%s299 + $0x164] sm:$0xf]
      %v383 = vld [vmem:[%s299 + $0x168] sm:$0xff]
      %v384 = vld [vmem:[%s299 + $0x170] sm:$0xff]
      %v385 = vld [vmem:[%s299 + $0x178] sm:$0xf]
      %v386 = vld [vmem:[%s299 + $0x17c] sm:$0xff]
      %v387 = vld [vmem:[%s299 + $0x184] sm:$0xff]
      %v388 = vld [vmem:[%s299 + $0x18c] sm:$0xf]
      %v389 = vld [vmem:[%s299 + $0x190] sm:$0xff]
      %v390 = vld [vmem:[%s299 + $0x198] sm:$0xff]
      %v391 = vld [vmem:[%s299 + $0x1a0] sm:$0xf]
      %v392 = vld [vmem:[%s299 + $0x1a4] sm:$0xff]
      %v393 = vld [vmem:[%s299 + $0x1ac] sm:$0xff]
      %v394 = vld [vmem:[%s299 + $0x1b4] sm:$0xf]
      %v395 = vld [vmem:[%s299 + $0x1b8] sm:$0xff]
      %v396 = vld [vmem:[%s299 + $0x1c0] sm:$0xff]
      %v397 = vld [vmem:[%s299 + $0x1c8] sm:$0xf]
      %v398 = vld [vmem:[%s299 + $0x1cc] sm:$0xff]
      %v399 = vld [vmem:[%s299 + $0x1d4] sm:$0xff]
      %v400 = vld [vmem:[%s299 + $0x1dc] sm:$0xf]
      %v401 = vld [vmem:[%s299 + $0x1e0] sm:$0xff]
      %v402 = vld [vmem:[%s299 + $0x1e8] sm:$0xff]
      %v403 = vld [vmem:[%s299 + $0x1f0] sm:$0xf]
      %v404 = vld [vmem:[%s299 + $0x1f4] sm:$0xff]
      %v405 = vld [vmem:[%s299 + $0x1fc] sm:$0xff]
      %v406 = vld [vmem:[%s299 + $0x204] sm:$0xf]
      %v407 = vld [vmem:[%s299 + $0x208] sm:$0xff]
      %v408 = vld [vmem:[%s299 + $0x210] sm:$0xff]
      %v409 = vld [vmem:[%s299 + $0x218] sm:$0xf]
      %v410 = vld [vmem:[%s299 + $0x21c] sm:$0xff]
      %v411 = vld [vmem:[%s299 + $0x224] sm:$0xff]
      %v412 = vld [vmem:[%s299 + $0x22c] sm:$0xf]
      %v413 = vld [vmem:[%s299 + $0x230] sm:$0xff]
      %v414 = vld [vmem:[%s299 + $0x238] sm:$0xff]
      %v415 = vld [vmem:[%s299 + $0x240] sm:$0xf]
      %v416 = vld [vmem:[%s299 + $0x244] sm:$0xff]
      %v417 = vld [vmem:[%s299 + $0x24c] sm:$0xff]
      %v418 = vld [vmem:[%s299 + $0x254] sm:$0xf]
      %v419 = vld [vmem:[%s299 + $0x258] sm:$0xff]
      %v420 = vld [vmem:[%s299 + $0x260] sm:$0xff]
      %v421 = vld [vmem:[%s299 + $0x268] sm:$0xf]
      %v422 = vld [vmem:[%s299 + $0x26c] sm:$0xff]
      %v423 = vld [vmem:[%s299 + $0x274] sm:$0xff]
      %v424 = vld [vmem:[%s299 + $0x27c] sm:$0xf]
      %v425 = vld [vmem:[%s304] sm:$0xf]
      %v426 = vld [vmem:[%s304 + $0x4] sm:$0xf]
      %v427 = vld [vmem:[%s304 + $0x8] sm:$0xf]
      %v428 = vld [vmem:[%s304 + $0xc] sm:$0xf]
      %v429 = vld [vmem:[%s304 + $0x10] sm:$0xf]
      %v430 = vld [vmem:[%s304 + $0x14] sm:$0xf]
      %v431 = vld [vmem:[%s304 + $0x18] sm:$0xf]
      %v432 = vld [vmem:[%s304 + $0x1c] sm:$0xf]
      %v433 = vld [vmem:[%s304 + $0x20] sm:$0xf]
      %v434 = vld [vmem:[%s304 + $0x24] sm:$0xf]
      %v435 = vld [vmem:[%s304 + $0x28] sm:$0xf]
      %v436 = vld [vmem:[%s304 + $0x2c] sm:$0xf]
      %v437 = vld [vmem:[%s304 + $0x30] sm:$0xf]
      %v438 = vld [vmem:[%s304 + $0x34] sm:$0xf]
      %v439 = vld [vmem:[%s304 + $0x38] sm:$0xf]
      %v440 = vld [vmem:[%s304 + $0x3c] sm:$0xf]
      %v441 = vld [vmem:[%s304 + $0x40] sm:$0xf]
      %v442 = vld [vmem:[%s304 + $0x44] sm:$0xf]
      %v443 = vld [vmem:[%s304 + $0x48] sm:$0xf]
      %v444 = vld [vmem:[%s304 + $0x4c] sm:$0xf]
      %v445 = vld [vmem:[%s304 + $0x50] sm:$0xf]
      %v446 = vld [vmem:[%s304 + $0x54] sm:$0xf]
      %v447 = vld [vmem:[%s304 + $0x58] sm:$0xf]
      %v448 = vld [vmem:[%s304 + $0x5c] sm:$0xf]
      %v449 = vld [vmem:[%s304 + $0x60] sm:$0xf]
      %v450 = vld [vmem:[%s304 + $0x64] sm:$0xf]
      %v451 = vld [vmem:[%s304 + $0x68] sm:$0xf]
      %v452 = vld [vmem:[%s304 + $0x6c] sm:$0xf]
      %v453 = vld [vmem:[%s304 + $0x70] sm:$0xf]
      %v454 = vld [vmem:[%s304 + $0x74] sm:$0xf]
      %v455 = vld [vmem:[%s304 + $0x78] sm:$0xf]
      %v456 = vld [vmem:[%s304 + $0x7c] sm:$0xf]
      %v457 = vld [vmem:[%s304 + $0x80] sm:$0xf]
      %v458 = vld [vmem:[%s304 + $0x84] sm:$0xf]
      %v459 = vld [vmem:[%s304 + $0x88] sm:$0xf]
      %v460 = vld [vmem:[%s304 + $0x8c] sm:$0xf]
      %v461 = vld [vmem:[%s304 + $0x90] sm:$0xf]
      %v462 = vld [vmem:[%s304 + $0x94] sm:$0xf]
      %v463 = vld [vmem:[%s304 + $0x98] sm:$0xf]
      %v464 = vld [vmem:[%s304 + $0x9c] sm:$0xf]
      %v465 = vld [vmem:[%s304 + $0xa0] sm:$0xf]
      %v466 = vld [vmem:[%s304 + $0xa4] sm:$0xf]
      %v467 = vld [vmem:[%s304 + $0xa8] sm:$0xf]
      %v468 = vld [vmem:[%s304 + $0xac] sm:$0xf]
      %v469 = vld [vmem:[%s304 + $0xb0] sm:$0xf]
      %v470 = vld [vmem:[%s304 + $0xb4] sm:$0xf]
      %v471 = vld [vmem:[%s304 + $0xb8] sm:$0xf]
      %v472 = vld [vmem:[%s304 + $0xbc] sm:$0xf]
      %v473 = vld [vmem:[%s304 + $0xc0] sm:$0xf]
      %v474 = vld [vmem:[%s304 + $0xc4] sm:$0xf]
      %v475 = vld [vmem:[%s304 + $0xc8] sm:$0xf]
      %v476 = vld [vmem:[%s304 + $0xcc] sm:$0xf]
      %v477 = vld [vmem:[%s304 + $0xd0] sm:$0xf]
      %v478 = vld [vmem:[%s304 + $0xd4] sm:$0xf]
      %v479 = vld [vmem:[%s304 + $0xd8] sm:$0xf]
      %v480 = vld [vmem:[%s304 + $0xdc] sm:$0xf]
      %v481 = vld [vmem:[%s304 + $0xe0] sm:$0xf]
      %v482 = vld [vmem:[%s304 + $0xe4] sm:$0xf]
      %v483 = vld [vmem:[%s304 + $0xe8] sm:$0xf]
      %v484 = vld [vmem:[%s304 + $0xec] sm:$0xf]
      %v485 = vld [vmem:[%s304 + $0xf0] sm:$0xf]
      %v486 = vld [vmem:[%s304 + $0xf4] sm:$0xf]
      %v487 = vld [vmem:[%s304 + $0xf8] sm:$0xf]
      %v488 = vld [vmem:[%s304 + $0xfc] sm:$0xf]
      %v489 = vld [vmem:[%s304 + $0x100] sm:$0xf]
      %v490 = vld [vmem:[%s304 + $0x104] sm:$0xf]
      %v491 = vld [vmem:[%s304 + $0x108] sm:$0xf]
      %v492 = vld [vmem:[%s304 + $0x10c] sm:$0xf]
      %v493 = vld [vmem:[%s304 + $0x110] sm:$0xf]
      %v494 = vld [vmem:[%s304 + $0x114] sm:$0xf]
      %v495 = vld [vmem:[%s304 + $0x118] sm:$0xf]
      %v496 = vld [vmem:[%s304 + $0x11c] sm:$0xf]
      %v497 = vld [vmem:[%s304 + $0x120] sm:$0xf]
      %v498 = vld [vmem:[%s304 + $0x124] sm:$0xf]
      %v499 = vld [vmem:[%s304 + $0x128] sm:$0xf]
      %v500 = vld [vmem:[%s304 + $0x12c] sm:$0xf]
      %v501 = vld [vmem:[%s304 + $0x130] sm:$0xf]
      %v502 = vld [vmem:[%s304 + $0x134] sm:$0xf]
      %v503 = vld [vmem:[%s304 + $0x138] sm:$0xf]
      %v504 = vld [vmem:[%s304 + $0x13c] sm:$0xf]
      %v601 = vunpack.c.l.b16 %v329
      %v602 = vunpack.c.h.b16 %v329
      %v603 = vunpack.c.l.b16 %v330
      %v604 = vunpack.c.h.b16 %v330
      %v605 = vunpack.c.l.b16 %v331
      %v606 = vunpack.c.l.b16 %v332
      %v607 = vunpack.c.h.b16 %v332
      %v608 = vunpack.c.l.b16 %v333
      %v609 = vunpack.c.h.b16 %v333
      %v610 = vunpack.c.l.b16 %v334
      %v611 = vunpack.c.l.b16 %v335
      %v612 = vunpack.c.h.b16 %v335
      %v613 = vunpack.c.l.b16 %v336
      %v614 = vunpack.c.h.b16 %v336
      %v615 = vunpack.c.l.b16 %v337
      %v616 = vunpack.c.l.b16 %v338
      %v617 = vunpack.c.h.b16 %v338
      %v618 = vunpack.c.l.b16 %v339
      %v619 = vunpack.c.h.b16 %v339
      %v620 = vunpack.c.l.b16 %v340
      %v621 = vunpack.c.l.b16 %v341
      %v622 = vunpack.c.h.b16 %v341
      %v623 = vunpack.c.l.b16 %v342
      %v624 = vunpack.c.h.b16 %v342
      %v625 = vunpack.c.l.b16 %v343
      %v626 = vunpack.c.l.b16 %v344
      %v627 = vunpack.c.h.b16 %v344
      %v628 = vunpack.c.l.b16 %v345
      %v629 = vunpack.c.h.b16 %v345
      %v630 = vunpack.c.l.b16 %v346
      %v631 = vunpack.c.l.b16 %v347
      %v632 = vunpack.c.h.b16 %v347
      %v633 = vunpack.c.l.b16 %v348
      %v634 = vunpack.c.h.b16 %v348
      %v635 = vunpack.c.l.b16 %v349
      %v636 = vunpack.c.l.b16 %v350
      %v637 = vunpack.c.h.b16 %v350
      %v638 = vunpack.c.l.b16 %v351
      %v639 = vunpack.c.h.b16 %v351
      %v640 = vunpack.c.l.b16 %v352
      %v641 = vunpack.c.l.b16 %v353
      %v642 = vunpack.c.h.b16 %v353
      %v643 = vunpack.c.l.b16 %v354
      %v644 = vunpack.c.h.b16 %v354
      %v645 = vunpack.c.l.b16 %v355
      %v646 = vunpack.c.l.b16 %v356
      %v647 = vunpack.c.h.b16 %v356
      %v648 = vunpack.c.l.b16 %v357
      %v649 = vunpack.c.h.b16 %v357
      %v650 = vunpack.c.l.b16 %v358
      %v651 = vunpack.c.l.b16 %v359
      %v652 = vunpack.c.h.b16 %v359
      %v653 = vunpack.c.l.b16 %v360
      %v654 = vunpack.c.h.b16 %v360
      %v655 = vunpack.c.l.b16 %v361
      %v656 = vunpack.c.l.b16 %v362
      %v657 = vunpack.c.h.b16 %v362
      %v658 = vunpack.c.l.b16 %v363
      %v659 = vunpack.c.h.b16 %v363
      %v660 = vunpack.c.l.b16 %v364
      %v661 = vunpack.c.l.b16 %v365
      %v662 = vunpack.c.h.b16 %v365
      %v663 = vunpack.c.l.b16 %v366
      %v664 = vunpack.c.h.b16 %v366
      %v665 = vunpack.c.l.b16 %v367
      %v666 = vunpack.c.l.b16 %v368
      %v667 = vunpack.c.h.b16 %v368
      %v668 = vunpack.c.l.b16 %v369
      %v669 = vunpack.c.h.b16 %v369
      %v670 = vunpack.c.l.b16 %v370
      %v671 = vunpack.c.l.b16 %v371
      %v672 = vunpack.c.h.b16 %v371
      %v673 = vunpack.c.l.b16 %v372
      %v674 = vunpack.c.h.b16 %v372
      %v675 = vunpack.c.l.b16 %v373
      %v676 = vunpack.c.l.b16 %v374
      %v677 = vunpack.c.h.b16 %v374
      %v678 = vunpack.c.l.b16 %v375
      %v679 = vunpack.c.h.b16 %v375
      %v680 = vunpack.c.l.b16 %v376
      %v681 = vunpack.c.l.b16 %v377
      %v682 = vunpack.c.h.b16 %v377
      %v683 = vunpack.c.l.b16 %v378
      %v684 = vunpack.c.h.b16 %v378
      %v685 = vunpack.c.l.b16 %v379
      %v686 = vunpack.c.l.b16 %v380
      %v687 = vunpack.c.h.b16 %v380
      %v688 = vunpack.c.l.b16 %v381
      %v689 = vunpack.c.h.b16 %v381
      %v690 = vunpack.c.l.b16 %v382
      %v691 = vunpack.c.l.b16 %v383
      %v692 = vunpack.c.h.b16 %v383
      %v693 = vunpack.c.l.b16 %v384
      %v694 = vunpack.c.h.b16 %v384
      %v695 = vunpack.c.l.b16 %v385
      %v696 = vunpack.c.l.b16 %v386
      %v697 = vunpack.c.h.b16 %v386
      %v698 = vunpack.c.l.b16 %v387
      %v699 = vunpack.c.h.b16 %v387
      %v700 = vunpack.c.l.b16 %v388
      %v701 = vunpack.c.l.b16 %v389
      %v702 = vunpack.c.h.b16 %v389
      %v703 = vunpack.c.l.b16 %v390
      %v704 = vunpack.c.h.b16 %v390
      %v705 = vunpack.c.l.b16 %v391
      %v706 = vunpack.c.l.b16 %v392
      %v707 = vunpack.c.h.b16 %v392
      %v708 = vunpack.c.l.b16 %v393
      %v709 = vunpack.c.h.b16 %v393
      %v710 = vunpack.c.l.b16 %v394
      %v711 = vunpack.c.l.b16 %v395
      %v712 = vunpack.c.h.b16 %v395
      %v713 = vunpack.c.l.b16 %v396
      %v714 = vunpack.c.h.b16 %v396
      %v715 = vunpack.c.l.b16 %v397
      %v716 = vunpack.c.l.b16 %v398
      %v717 = vunpack.c.h.b16 %v398
      %v718 = vunpack.c.l.b16 %v399
      %v719 = vunpack.c.h.b16 %v399
      %v720 = vunpack.c.l.b16 %v400
      %v721 = vunpack.c.l.b16 %v401
      %v722 = vunpack.c.h.b16 %v401
      %v723 = vunpack.c.l.b16 %v402
      %v724 = vunpack.c.h.b16 %v402
      %v725 = vunpack.c.l.b16 %v403
      %v726 = vunpack.c.l.b16 %v404
      %v727 = vunpack.c.h.b16 %v404
      %v728 = vunpack.c.l.b16 %v405
      %v729 = vunpack.c.h.b16 %v405
      %v730 = vunpack.c.l.b16 %v406
      %v731 = vunpack.c.l.b16 %v407
      %v732 = vunpack.c.h.b16 %v407
      %v733 = vunpack.c.l.b16 %v408
      %v734 = vunpack.c.h.b16 %v408
      %v735 = vunpack.c.l.b16 %v409
      %v736 = vunpack.c.l.b16 %v410
      %v737 = vunpack.c.h.b16 %v410
      %v738 = vunpack.c.l.b16 %v411
      %v739 = vunpack.c.h.b16 %v411
      %v740 = vunpack.c.l.b16 %v412
      %v741 = vunpack.c.l.b16 %v413
      %v742 = vunpack.c.h.b16 %v413
      %v743 = vunpack.c.l.b16 %v414
      %v744 = vunpack.c.h.b16 %v414
      %v745 = vunpack.c.l.b16 %v415
      %v746 = vunpack.c.l.b16 %v416
      %v747 = vunpack.c.h.b16 %v416
      %v748 = vunpack.c.l.b16 %v417
      %v749 = vunpack.c.h.b16 %v417
      %v750 = vunpack.c.l.b16 %v418
      %v751 = vunpack.c.l.b16 %v419
      %v752 = vunpack.c.h.b16 %v419
      %v753 = vunpack.c.l.b16 %v420
      %v754 = vunpack.c.h.b16 %v420
      %v755 = vunpack.c.l.b16 %v421
      %v756 = vunpack.c.l.b16 %v422
      %v757 = vunpack.c.h.b16 %v422
      %v758 = vunpack.c.l.b16 %v423
      %v759 = vunpack.c.h.b16 %v423
      %v760 = vunpack.c.l.b16 %v424
      %v761 = vpack.c.b16 %v606, %v601
      %v762 = vpack.c.b16 %v607, %v602
      %v763 = vpack.c.b16 %v608, %v603
      %v764 = vpack.c.b16 %v609, %v604
      %v765 = vpack.c.b16 %v610, %v605
      %v766 = vpack.c.b16 %v616, %v611
      %v767 = vpack.c.b16 %v617, %v612
      %v768 = vpack.c.b16 %v618, %v613
      %v769 = vpack.c.b16 %v619, %v614
      %v770 = vpack.c.b16 %v620, %v615
      %v771 = vpack.c.b16 %v626, %v621
      %v772 = vpack.c.b16 %v627, %v622
      %v773 = vpack.c.b16 %v628, %v623
      %v774 = vpack.c.b16 %v629, %v624
      %v775 = vpack.c.b16 %v630, %v625
      %v776 = vpack.c.b16 %v636, %v631
      %v777 = vpack.c.b16 %v637, %v632
      %v778 = vpack.c.b16 %v638, %v633
      %v779 = vpack.c.b16 %v639, %v634
      %v780 = vpack.c.b16 %v640, %v635
      %v781 = vpack.c.b16 %v646, %v641
      %v782 = vpack.c.b16 %v647, %v642
      %v783 = vpack.c.b16 %v648, %v643
      %v784 = vpack.c.b16 %v649, %v644
      %v785 = vpack.c.b16 %v650, %v645
      %v786 = vpack.c.b16 %v656, %v651
      %v787 = vpack.c.b16 %v657, %v652
      %v788 = vpack.c.b16 %v658, %v653
      %v789 = vpack.c.b16 %v659, %v654
      %v790 = vpack.c.b16 %v660, %v655
      %v791 = vpack.c.b16 %v666, %v661
      %v792 = vpack.c.b16 %v667, %v662
      %v793 = vpack.c.b16 %v668, %v663
      %v794 = vpack.c.b16 %v669, %v664
      %v795 = vpack.c.b16 %v670, %v665
      %v796 = vpack.c.b16 %v676, %v671
      %v797 = vpack.c.b16 %v677, %v672
      %v798 = vpack.c.b16 %v678, %v673
      %v799 = vpack.c.b16 %v679, %v674
      %v800 = vpack.c.b16 %v680, %v675
      %v801 = vpack.c.b16 %v686, %v681
      %v802 = vpack.c.b16 %v687, %v682
      %v803 = vpack.c.b16 %v688, %v683
      %v804 = vpack.c.b16 %v689, %v684
      %v805 = vpack.c.b16 %v690, %v685
      %v806 = vpack.c.b16 %v696, %v691
      %v807 = vpack.c.b16 %v697, %v692
      %v808 = vpack.c.b16 %v698, %v693
      %v809 = vpack.c.b16 %v699, %v694
      %v810 = vpack.c.b16 %v700, %v695
      %v811 = vpack.c.b16 %v706, %v701
      %v812 = vpack.c.b16 %v707, %v702
      %v813 = vpack.c.b16 %v708, %v703
      %v814 = vpack.c.b16 %v709, %v704
      %v815 = vpack.c.b16 %v710, %v705
      %v816 = vpack.c.b16 %v716, %v711
      %v817 = vpack.c.b16 %v717, %v712
      %v818 = vpack.c.b16 %v718, %v713
      %v819 = vpack.c.b16 %v719, %v714
      %v820 = vpack.c.b16 %v720, %v715
      %v821 = vpack.c.b16 %v726, %v721
      %v822 = vpack.c.b16 %v727, %v722
      %v823 = vpack.c.b16 %v728, %v723
      %v824 = vpack.c.b16 %v729, %v724
      %v825 = vpack.c.b16 %v730, %v725
      %v826 = vpack.c.b16 %v736, %v731
      %v827 = vpack.c.b16 %v737, %v732
      %v828 = vpack.c.b16 %v738, %v733
      %v829 = vpack.c.b16 %v739, %v734
      %v830 = vpack.c.b16 %v740, %v735
      %v831 = vpack.c.b16 %v746, %v741
      %v832 = vpack.c.b16 %v747, %v742
      %v833 = vpack.c.b16 %v748, %v743
      %v834 = vpack.c.b16 %v749, %v744
      %v835 = vpack.c.b16 %v750, %v745
      %v836 = vpack.c.b16 %v756, %v751
      %v837 = vpack.c.b16 %v757, %v752
      %v838 = vpack.c.b16 %v758, %v753
      %v839 = vpack.c.b16 %v759, %v754
      %v840 = vpack.c.b16 %v760, %v755
      %v1001 = vunpack.c.l.b16 %v425
      %v1002 = vunpack.c.l.b16 %v426
      %v1003 = vunpack.c.l.b16 %v427
      %v1004 = vunpack.c.l.b16 %v428
      %v1005 = vunpack.c.l.b16 %v429
      %v1006 = vunpack.c.l.b16 %v430
      %v1007 = vunpack.c.l.b16 %v431
      %v1008 = vunpack.c.l.b16 %v432
      %v1009 = vunpack.c.l.b16 %v433
      %v1010 = vunpack.c.l.b16 %v434
      %v1011 = vunpack.c.l.b16 %v435
      %v1012 = vunpack.c.l.b16 %v436
      %v1013 = vunpack.c.l.b16 %v437
      %v1014 = vunpack.c.l.b16 %v438
      %v1015 = vunpack.c.l.b16 %v439
      %v1016 = vunpack.c.l.b16 %v440
      %v1017 = vunpack.c.l.b16 %v441
      %v1018 = vunpack.c.l.b16 %v442
      %v1019 = vunpack.c.l.b16 %v443
      %v1020 = vunpack.c.l.b16 %v444
      %v1021 = vunpack.c.l.b16 %v445
      %v1022 = vunpack.c.l.b16 %v446
      %v1023 = vunpack.c.l.b16 %v447
      %v1024 = vunpack.c.l.b16 %v448
      %v1025 = vunpack.c.l.b16 %v449
      %v1026 = vunpack.c.l.b16 %v450
      %v1027 = vunpack.c.l.b16 %v451
      %v1028 = vunpack.c.l.b16 %v452
      %v1029 = vunpack.c.l.b16 %v453
      %v1030 = vunpack.c.l.b16 %v454
      %v1031 = vunpack.c.l.b16 %v455
      %v1032 = vunpack.c.l.b16 %v456
      %v1033 = vunpack.c.l.b16 %v457
      %v1034 = vunpack.c.l.b16 %v458
      %v1035 = vunpack.c.l.b16 %v459
      %v1036 = vunpack.c.l.b16 %v460
      %v1037 = vunpack.c.l.b16 %v461
      %v1038 = vunpack.c.l.b16 %v462
      %v1039 = vunpack.c.l.b16 %v463
      %v1040 = vunpack.c.l.b16 %v464
      %v1041 = vunpack.c.l.b16 %v465
      %v1042 = vunpack.c.l.b16 %v466
      %v1043 = vunpack.c.l.b16 %v467
      %v1044 = vunpack.c.l.b16 %v468
      %v1045 = vunpack.c.l.b16 %v469
      %v1046 = vunpack.c.l.b16 %v470
      %v1047 = vunpack.c.l.b16 %v471
      %v1048 = vunpack.c.l.b16 %v472
      %v1049 = vunpack.c.l.b16 %v473
      %v1050 = vunpack.c.l.b16 %v474
      %v1051 = vunpack.c.l.b16 %v475
      %v1052 = vunpack.c.l.b16 %v476
      %v1053 = vunpack.c.l.b16 %v477
      %v1054 = vunpack.c.l.b16 %v478
      %v1055 = vunpack.c.l.b16 %v479
      %v1056 = vunpack.c.l.b16 %v480
      %v1057 = vunpack.c.l.b16 %v481
      %v1058 = vunpack.c.l.b16 %v482
      %v1059 = vunpack.c.l.b16 %v483
      %v1060 = vunpack.c.l.b16 %v484
      %v1061 = vunpack.c.l.b16 %v485
      %v1062 = vunpack.c.l.b16 %v486
      %v1063 = vunpack.c.l.b16 %v487
      %v1064 = vunpack.c.l.b16 %v488
      %v1065 = vunpack.c.l.b16 %v489
      %v1066 = vunpack.c.l.b16 %v490
      %v1067 = vunpack.c.l.b16 %v491
      %v1068 = vunpack.c.l.b16 %v492
      %v1069 = vunpack.c.l.b16 %v493
      %v1070 = vunpack.c.l.b16 %v494
      %v1071 = vunpack.c.l.b16 %v495
      %v1072 = vunpack.c.l.b16 %v496
      %v1073 = vunpack.c.l.b16 %v497
      %v1074 = vunpack.c.l.b16 %v498
      %v1075 = vunpack.c.l.b16 %v499
      %v1076 = vunpack.c.l.b16 %v500
      %v1077 = vunpack.c.l.b16 %v501
      %v1078 = vunpack.c.l.b16 %v502
      %v1079 = vunpack.c.l.b16 %v503
      %v1080 = vunpack.c.l.b16 %v504
      %v1081 = vpack.c.b16 %v1002, %v1001
      %v1082 = vpack.c.b16 %v1004, %v1003
      %v1083 = vpack.c.b16 %v1006, %v1005
      %v1084 = vpack.c.b16 %v1008, %v1007
      %v1085 = vpack.c.b16 %v1010, %v1009
      %v1086 = vpack.c.b16 %v1012, %v1011
      %v1087 = vpack.c.b16 %v1014, %v1013
      %v1088 = vpack.c.b16 %v1016, %v1015
      %v1089 = vpack.c.b16 %v1018, %v1017
      %v1090 = vpack.c.b16 %v1020, %v1019
      %v1091 = vpack.c.b16 %v1022, %v1021
      %v1092 = vpack.c.b16 %v1024, %v1023
      %v1093 = vpack.c.b16 %v1026, %v1025
      %v1094 = vpack.c.b16 %v1028, %v1027
      %v1095 = vpack.c.b16 %v1030, %v1029
      %v1096 = vpack.c.b16 %v1032, %v1031
      %v1097 = vpack.c.b16 %v1034, %v1033
      %v1098 = vpack.c.b16 %v1036, %v1035
      %v1099 = vpack.c.b16 %v1038, %v1037
      %v1100 = vpack.c.b16 %v1040, %v1039
      %v1101 = vpack.c.b16 %v1042, %v1041
      %v1102 = vpack.c.b16 %v1044, %v1043
      %v1103 = vpack.c.b16 %v1046, %v1045
      %v1104 = vpack.c.b16 %v1048, %v1047
      %v1105 = vpack.c.b16 %v1050, %v1049
      %v1106 = vpack.c.b16 %v1052, %v1051
      %v1107 = vpack.c.b16 %v1054, %v1053
      %v1108 = vpack.c.b16 %v1056, %v1055
      %v1109 = vpack.c.b16 %v1058, %v1057
      %v1110 = vpack.c.b16 %v1060, %v1059
      %v1111 = vpack.c.b16 %v1062, %v1061
      %v1112 = vpack.c.b16 %v1064, %v1063
      %v1113 = vpack.c.b16 %v1066, %v1065
      %v1114 = vpack.c.b16 %v1068, %v1067
      %v1115 = vpack.c.b16 %v1070, %v1069
      %v1116 = vpack.c.b16 %v1072, %v1071
      %v1117 = vpack.c.b16 %v1074, %v1073
      %v1118 = vpack.c.b16 %v1076, %v1075
      %v1119 = vpack.c.b16 %v1078, %v1077
      %v1120 = vpack.c.b16 %v1080, %v1079
      %1161 = vmatpush.bf16.msra.mxu0 %v1088
      %1162 = vmatpush.bf16.msra.mxu0 %v1087
      %1163 = vmatpush.bf16.msra.mxu0 %v1086
      %1164 = vmatpush.bf16.msra.mxu0 %v1085
      %1165 = vmatpush.bf16.msra.mxu0 %v1084
      %1166 = vmatpush.bf16.msra.mxu0 %v1083
      %1167 = vmatpush.bf16.msra.mxu0 %v1082
      %1168 = vmatpush.bf16.msra.mxu0 %v1081
      %1169 = vmatmul.bf16.gmra.mxu0 %v761
      %v1170 = vpop.f32.mrf.mxu0
      %v1171 = vadd.f32 0.0, %v1170
      %v1172 = vpop.f32.mrf.mxu0
      %v1173 = vadd.f32 0.0, %v1172
      %1174 = vmatmul.bf16.gmra.mxu0 %v766
      %v1175 = vpop.f32.mrf.mxu0
      %v1176 = vadd.f32 0.0, %v1175
      %v1177 = vpop.f32.mrf.mxu0
      %v1178 = vadd.f32 0.0, %v1177
      %1179 = vmatmul.bf16.gmra.mxu0 %v771
      %v1180 = vpop.f32.mrf.mxu0
      %v1181 = vadd.f32 0.0, %v1180
      %v1182 = vpop.f32.mrf.mxu0
      %v1183 = vadd.f32 0.0, %v1182
      %1184 = vmatmul.bf16.gmra.mxu0 %v776
      %v1185 = vpop.f32.mrf.mxu0
      %v1186 = vadd.f32 0.0, %v1185
      %v1187 = vpop.f32.mrf.mxu0
      %v1188 = vadd.f32 0.0, %v1187
      %1189 = vmatmul.bf16.gmra.mxu0 %v781
      %v1190 = vpop.f32.mrf.mxu0
      %v1191 = vadd.f32 0.0, %v1190
      %v1192 = vpop.f32.mrf.mxu0
      %v1193 = vadd.f32 0.0, %v1192
      %1194 = vmatmul.bf16.gmra.mxu0 %v786
      %v1195 = vpop.f32.mrf.mxu0
      %v1196 = vadd.f32 0.0, %v1195
      %v1197 = vpop.f32.mrf.mxu0
      %v1198 = vadd.f32 0.0, %v1197
      %1199 = vmatmul.bf16.gmra.mxu0 %v791
      %v1200 = vpop.f32.mrf.mxu0
      %v1201 = vadd.f32 0.0, %v1200
      %v1202 = vpop.f32.mrf.mxu0
      %v1203 = vadd.f32 0.0, %v1202
      %1204 = vmatmul.bf16.gmra.mxu0 %v796
      %v1205 = vpop.f32.mrf.mxu0
      %v1206 = vadd.f32 0.0, %v1205
      %v1207 = vpop.f32.mrf.mxu0
      %v1208 = vadd.f32 0.0, %v1207
      %1209 = vmatmul.bf16.gmra.mxu0 %v801
      %v1210 = vpop.f32.mrf.mxu0
      %v1211 = vadd.f32 0.0, %v1210
      %v1212 = vpop.f32.mrf.mxu0
      %v1213 = vadd.f32 0.0, %v1212
      %1214 = vmatmul.bf16.gmra.mxu0 %v806
      %v1215 = vpop.f32.mrf.mxu0
      %v1216 = vadd.f32 0.0, %v1215
      %v1217 = vpop.f32.mrf.mxu0
      %v1218 = vadd.f32 0.0, %v1217
      %1219 = vmatmul.bf16.gmra.mxu0 %v811
      %v1220 = vpop.f32.mrf.mxu0
      %v1221 = vadd.f32 0.0, %v1220
      %v1222 = vpop.f32.mrf.mxu0
      %v1223 = vadd.f32 0.0, %v1222
      %1224 = vmatmul.bf16.gmra.mxu0 %v816
      %v1225 = vpop.f32.mrf.mxu0
      %v1226 = vadd.f32 0.0, %v1225
      %v1227 = vpop.f32.mrf.mxu0
      %v1228 = vadd.f32 0.0, %v1227
      %1229 = vmatmul.bf16.gmra.mxu0 %v821
      %v1230 = vpop.f32.mrf.mxu0
      %v1231 = vadd.f32 0.0, %v1230
      %v1232 = vpop.f32.mrf.mxu0
      %v1233 = vadd.f32 0.0, %v1232
      %1234 = vmatmul.bf16.gmra.mxu0 %v826
      %v1235 = vpop.f32.mrf.mxu0
      %v1236 = vadd.f32 0.0, %v1235
      %v1237 = vpop.f32.mrf.mxu0
      %v1238 = vadd.f32 0.0, %v1237
      %1239 = vmatmul.bf16.gmra.mxu0 %v831
      %v1240 = vpop.f32.mrf.mxu0
      %v1241 = vadd.f32 0.0, %v1240
      %v1242 = vpop.f32.mrf.mxu0
      %v1243 = vadd.f32 0.0, %v1242
      %1244 = vmatmul.bf16.gmra.mxu0 %v836
      %v1245 = vpop.f32.mrf.mxu0
      %v1246 = vadd.f32 0.0, %v1245
      %v1247 = vpop.f32.mrf.mxu0
      %v1248 = vadd.f32 0.0, %v1247
      %1249 = vdwg.mxu0
      %1250 = vmatpush.bf16.msra.mxu0 %v1096
      %1251 = vmatpush.bf16.msra.mxu0 %v1095
      %1252 = vmatpush.bf16.msra.mxu0 %v1094
      %1253 = vmatpush.bf16.msra.mxu0 %v1093
      %1254 = vmatpush.bf16.msra.mxu0 %v1092
      %1255 = vmatpush.bf16.msra.mxu0 %v1091
      %1256 = vmatpush.bf16.msra.mxu0 %v1090
      %1257 = vmatpush.bf16.msra.mxu0 %v1089
      %1258 = vmatmul.bf16.gmra.mxu0 %v762
      %v1259 = vpop.f32.mrf.mxu0
      %v1260 = vadd.f32 %v1171, %v1259
      %v1261 = vpop.f32.mrf.mxu0
      %v1262 = vadd.f32 %v1173, %v1261
      %1263 = vmatmul.bf16.gmra.mxu0 %v767
      %v1264 = vpop.f32.mrf.mxu0
      %v1265 = vadd.f32 %v1176, %v1264
      %v1266 = vpop.f32.mrf.mxu0
      %v1267 = vadd.f32 %v1178, %v1266
      %1268 = vmatmul.bf16.gmra.mxu0 %v772
      %v1269 = vpop.f32.mrf.mxu0
      %v1270 = vadd.f32 %v1181, %v1269
      %v1271 = vpop.f32.mrf.mxu0
      %v1272 = vadd.f32 %v1183, %v1271
      %1273 = vmatmul.bf16.gmra.mxu0 %v777
      %v1274 = vpop.f32.mrf.mxu0
      %v1275 = vadd.f32 %v1186, %v1274
      %v1276 = vpop.f32.mrf.mxu0
      %v1277 = vadd.f32 %v1188, %v1276
      %1278 = vmatmul.bf16.gmra.mxu0 %v782
      %v1279 = vpop.f32.mrf.mxu0
      %v1280 = vadd.f32 %v1191, %v1279
      %v1281 = vpop.f32.mrf.mxu0
      %v1282 = vadd.f32 %v1193, %v1281
      %1283 = vmatmul.bf16.gmra.mxu0 %v787
      %v1284 = vpop.f32.mrf.mxu0
      %v1285 = vadd.f32 %v1196, %v1284
      %v1286 = vpop.f32.mrf.mxu0
      %v1287 = vadd.f32 %v1198, %v1286
      %1288 = vmatmul.bf16.gmra.mxu0 %v792
      %v1289 = vpop.f32.mrf.mxu0
      %v1290 = vadd.f32 %v1201, %v1289
      %v1291 = vpop.f32.mrf.mxu0
      %v1292 = vadd.f32 %v1203, %v1291
      %1293 = vmatmul.bf16.gmra.mxu0 %v797
      %v1294 = vpop.f32.mrf.mxu0
      %v1295 = vadd.f32 %v1206, %v1294
      %v1296 = vpop.f32.mrf.mxu0
      %v1297 = vadd.f32 %v1208, %v1296
      %1298 = vmatmul.bf16.gmra.mxu0 %v802
      %v1299 = vpop.f32.mrf.mxu0
      %v1300 = vadd.f32 %v1211, %v1299
      %v1301 = vpop.f32.mrf.mxu0
      %v1302 = vadd.f32 %v1213, %v1301
      %1303 = vmatmul.bf16.gmra.mxu0 %v807
      %v1304 = vpop.f32.mrf.mxu0
      %v1305 = vadd.f32 %v1216, %v1304
      %v1306 = vpop.f32.mrf.mxu0
      %v1307 = vadd.f32 %v1218, %v1306
      %1308 = vmatmul.bf16.gmra.mxu0 %v812
      %v1309 = vpop.f32.mrf.mxu0
      %v1310 = vadd.f32 %v1221, %v1309
      %v1311 = vpop.f32.mrf.mxu0
      %v1312 = vadd.f32 %v1223, %v1311
      %1313 = vmatmul.bf16.gmra.mxu0 %v817
      %v1314 = vpop.f32.mrf.mxu0
      %v1315 = vadd.f32 %v1226, %v1314
      %v1316 = vpop.f32.mrf.mxu0
      %v1317 = vadd.f32 %v1228, %v1316
      %1318 = vmatmul.bf16.gmra.mxu0 %v822
      %v1319 = vpop.f32.mrf.mxu0
      %v1320 = vadd.f32 %v1231, %v1319
      %v1321 = vpop.f32.mrf.mxu0
      %v1322 = vadd.f32 %v1233, %v1321
      %1323 = vmatmul.bf16.gmra.mxu0 %v827
      %v1324 = vpop.f32.mrf.mxu0
      %v1325 = vadd.f32 %v1236, %v1324
      %v1326 = vpop.f32.mrf.mxu0
      %v1327 = vadd.f32 %v1238, %v1326
      %1328 = vmatmul.bf16.gmra.mxu0 %v832
      %v1329 = vpop.f32.mrf.mxu0
      %v1330 = vadd.f32 %v1241, %v1329
      %v1331 = vpop.f32.mrf.mxu0
      %v1332 = vadd.f32 %v1243, %v1331
      %1333 = vmatmul.bf16.gmra.mxu0 %v837
      %v1334 = vpop.f32.mrf.mxu0
      %v1335 = vadd.f32 %v1246, %v1334
      %v1336 = vpop.f32.mrf.mxu0
      %v1337 = vadd.f32 %v1248, %v1336
      %1338 = vdwg.mxu0
      %1339 = vmatpush.bf16.msra.mxu0 %v1104
      %1340 = vmatpush.bf16.msra.mxu0 %v1103
      %1341 = vmatpush.bf16.msra.mxu0 %v1102
      %1342 = vmatpush.bf16.msra.mxu0 %v1101
      %1343 = vmatpush.bf16.msra.mxu0 %v1100
      %1344 = vmatpush.bf16.msra.mxu0 %v1099
      %1345 = vmatpush.bf16.msra.mxu0 %v1098
      %1346 = vmatpush.bf16.msra.mxu0 %v1097
      %1347 = vmatmul.bf16.gmra.mxu0 %v763
      %v1348 = vpop.f32.mrf.mxu0
      %v1349 = vadd.f32 %v1260, %v1348
      %v1350 = vpop.f32.mrf.mxu0
      %v1351 = vadd.f32 %v1262, %v1350
      %1352 = vmatmul.bf16.gmra.mxu0 %v768
      %v1353 = vpop.f32.mrf.mxu0
      %v1354 = vadd.f32 %v1265, %v1353
      %v1355 = vpop.f32.mrf.mxu0
      %v1356 = vadd.f32 %v1267, %v1355
      %1357 = vmatmul.bf16.gmra.mxu0 %v773
      %v1358 = vpop.f32.mrf.mxu0
      %v1359 = vadd.f32 %v1270, %v1358
      %v1360 = vpop.f32.mrf.mxu0
      %v1361 = vadd.f32 %v1272, %v1360
      %1362 = vmatmul.bf16.gmra.mxu0 %v778
      %v1363 = vpop.f32.mrf.mxu0
      %v1364 = vadd.f32 %v1275, %v1363
      %v1365 = vpop.f32.mrf.mxu0
      %v1366 = vadd.f32 %v1277, %v1365
      %1367 = vmatmul.bf16.gmra.mxu0 %v783
      %v1368 = vpop.f32.mrf.mxu0
      %v1369 = vadd.f32 %v1280, %v1368
      %v1370 = vpop.f32.mrf.mxu0
      %v1371 = vadd.f32 %v1282, %v1370
      %1372 = vmatmul.bf16.gmra.mxu0 %v788
      %v1373 = vpop.f32.mrf.mxu0
      %v1374 = vadd.f32 %v1285, %v1373
      %v1375 = vpop.f32.mrf.mxu0
      %v1376 = vadd.f32 %v1287, %v1375
      %1377 = vmatmul.bf16.gmra.mxu0 %v793
      %v1378 = vpop.f32.mrf.mxu0
      %v1379 = vadd.f32 %v1290, %v1378
      %v1380 = vpop.f32.mrf.mxu0
      %v1381 = vadd.f32 %v1292, %v1380
      %1382 = vmatmul.bf16.gmra.mxu0 %v798
      %v1383 = vpop.f32.mrf.mxu0
      %v1384 = vadd.f32 %v1295, %v1383
      %v1385 = vpop.f32.mrf.mxu0
      %v1386 = vadd.f32 %v1297, %v1385
      %1387 = vmatmul.bf16.gmra.mxu0 %v803
      %v1388 = vpop.f32.mrf.mxu0
      %v1389 = vadd.f32 %v1300, %v1388
      %v1390 = vpop.f32.mrf.mxu0
      %v1391 = vadd.f32 %v1302, %v1390
      %1392 = vmatmul.bf16.gmra.mxu0 %v808
      %v1393 = vpop.f32.mrf.mxu0
      %v1394 = vadd.f32 %v1305, %v1393
      %v1395 = vpop.f32.mrf.mxu0
      %v1396 = vadd.f32 %v1307, %v1395
      %1397 = vmatmul.bf16.gmra.mxu0 %v813
      %v1398 = vpop.f32.mrf.mxu0
      %v1399 = vadd.f32 %v1310, %v1398
      %v1400 = vpop.f32.mrf.mxu0
      %v1401 = vadd.f32 %v1312, %v1400
      %1402 = vmatmul.bf16.gmra.mxu0 %v818
      %v1403 = vpop.f32.mrf.mxu0
      %v1404 = vadd.f32 %v1315, %v1403
      %v1405 = vpop.f32.mrf.mxu0
      %v1406 = vadd.f32 %v1317, %v1405
      %1407 = vmatmul.bf16.gmra.mxu0 %v823
      %v1408 = vpop.f32.mrf.mxu0
      %v1409 = vadd.f32 %v1320, %v1408
      %v1410 = vpop.f32.mrf.mxu0
      %v1411 = vadd.f32 %v1322, %v1410
      %1412 = vmatmul.bf16.gmra.mxu0 %v828
      %v1413 = vpop.f32.mrf.mxu0
      %v1414 = vadd.f32 %v1325, %v1413
      %v1415 = vpop.f32.mrf.mxu0
      %v1416 = vadd.f32 %v1327, %v1415
      %1417 = vmatmul.bf16.gmra.mxu0 %v833
      %v1418 = vpop.f32.mrf.mxu0
      %v1419 = vadd.f32 %v1330, %v1418
      %v1420 = vpop.f32.mrf.mxu0
      %v1421 = vadd.f32 %v1332, %v1420
      %1422 = vmatmul.bf16.gmra.mxu0 %v838
      %v1423 = vpop.f32.mrf.mxu0
      %v1424 = vadd.f32 %v1335, %v1423
      %v1425 = vpop.f32.mrf.mxu0
      %v1426 = vadd.f32 %v1337, %v1425
      %1427 = vdwg.mxu0
      %1428 = vmatpush.bf16.msra.mxu0 %v1112
      %1429 = vmatpush.bf16.msra.mxu0 %v1111
      %1430 = vmatpush.bf16.msra.mxu0 %v1110
      %1431 = vmatpush.bf16.msra.mxu0 %v1109
      %1432 = vmatpush.bf16.msra.mxu0 %v1108
      %1433 = vmatpush.bf16.msra.mxu0 %v1107
      %1434 = vmatpush.bf16.msra.mxu0 %v1106
      %1435 = vmatpush.bf16.msra.mxu0 %v1105
      %1436 = vmatmul.bf16.gmra.mxu0 %v764
      %v1437 = vpop.f32.mrf.mxu0
      %v1438 = vadd.f32 %v1349, %v1437
      %v1439 = vpop.f32.mrf.mxu0
      %v1440 = vadd.f32 %v1351, %v1439
      %1441 = vmatmul.bf16.gmra.mxu0 %v769
      %v1442 = vpop.f32.mrf.mxu0
      %v1443 = vadd.f32 %v1354, %v1442
      %v1444 = vpop.f32.mrf.mxu0
      %v1445 = vadd.f32 %v1356, %v1444
      %1446 = vmatmul.bf16.gmra.mxu0 %v774
      %v1447 = vpop.f32.mrf.mxu0
      %v1448 = vadd.f32 %v1359, %v1447
      %v1449 = vpop.f32.mrf.mxu0
      %v1450 = vadd.f32 %v1361, %v1449
      %1451 = vmatmul.bf16.gmra.mxu0 %v779
      %v1452 = vpop.f32.mrf.mxu0
      %v1453 = vadd.f32 %v1364, %v1452
      %v1454 = vpop.f32.mrf.mxu0
      %v1455 = vadd.f32 %v1366, %v1454
      %1456 = vmatmul.bf16.gmra.mxu0 %v784
      %v1457 = vpop.f32.mrf.mxu0
      %v1458 = vadd.f32 %v1369, %v1457
      %v1459 = vpop.f32.mrf.mxu0
      %v1460 = vadd.f32 %v1371, %v1459
      %1461 = vmatmul.bf16.gmra.mxu0 %v789
      %v1462 = vpop.f32.mrf.mxu0
      %v1463 = vadd.f32 %v1374, %v1462
      %v1464 = vpop.f32.mrf.mxu0
      %v1465 = vadd.f32 %v1376, %v1464
      %1466 = vmatmul.bf16.gmra.mxu0 %v794
      %v1467 = vpop.f32.mrf.mxu0
      %v1468 = vadd.f32 %v1379, %v1467
      %v1469 = vpop.f32.mrf.mxu0
      %v1470 = vadd.f32 %v1381, %v1469
      %1471 = vmatmul.bf16.gmra.mxu0 %v799
      %v1472 = vpop.f32.mrf.mxu0
      %v1473 = vadd.f32 %v1384, %v1472
      %v1474 = vpop.f32.mrf.mxu0
      %v1475 = vadd.f32 %v1386, %v1474
      %1476 = vmatmul.bf16.gmra.mxu0 %v804
      %v1477 = vpop.f32.mrf.mxu0
      %v1478 = vadd.f32 %v1389, %v1477
      %v1479 = vpop.f32.mrf.mxu0
      %v1480 = vadd.f32 %v1391, %v1479
      %1481 = vmatmul.bf16.gmra.mxu0 %v809
      %v1482 = vpop.f32.mrf.mxu0
      %v1483 = vadd.f32 %v1394, %v1482
      %v1484 = vpop.f32.mrf.mxu0
      %v1485 = vadd.f32 %v1396, %v1484
      %1486 = vmatmul.bf16.gmra.mxu0 %v814
      %v1487 = vpop.f32.mrf.mxu0
      %v1488 = vadd.f32 %v1399, %v1487
      %v1489 = vpop.f32.mrf.mxu0
      %v1490 = vadd.f32 %v1401, %v1489
      %1491 = vmatmul.bf16.gmra.mxu0 %v819
      %v1492 = vpop.f32.mrf.mxu0
      %v1493 = vadd.f32 %v1404, %v1492
      %v1494 = vpop.f32.mrf.mxu0
      %v1495 = vadd.f32 %v1406, %v1494
      %1496 = vmatmul.bf16.gmra.mxu0 %v824
      %v1497 = vpop.f32.mrf.mxu0
      %v1498 = vadd.f32 %v1409, %v1497
      %v1499 = vpop.f32.mrf.mxu0
      %v1500 = vadd.f32 %v1411, %v1499
      %1501 = vmatmul.bf16.gmra.mxu0 %v829
      %v1502 = vpop.f32.mrf.mxu0
      %v1503 = vadd.f32 %v1414, %v1502
      %v1504 = vpop.f32.mrf.mxu0
      %v1505 = vadd.f32 %v1416, %v1504
      %1506 = vmatmul.bf16.gmra.mxu0 %v834
      %v1507 = vpop.f32.mrf.mxu0
      %v1508 = vadd.f32 %v1419, %v1507
      %v1509 = vpop.f32.mrf.mxu0
      %v1510 = vadd.f32 %v1421, %v1509
      %1511 = vmatmul.bf16.gmra.mxu0 %v839
      %v1512 = vpop.f32.mrf.mxu0
      %v1513 = vadd.f32 %v1424, %v1512
      %v1514 = vpop.f32.mrf.mxu0
      %v1515 = vadd.f32 %v1426, %v1514
      %1516 = vdwg.mxu0
      %1517 = vmatpush.bf16.msra.mxu0 %v1120
      %1518 = vmatpush.bf16.msra.mxu0 %v1119
      %1519 = vmatpush.bf16.msra.mxu0 %v1118
      %1520 = vmatpush.bf16.msra.mxu0 %v1117
      %1521 = vmatpush.bf16.msra.mxu0 %v1116
      %1522 = vmatpush.bf16.msra.mxu0 %v1115
      %1523 = vmatpush.bf16.msra.mxu0 %v1114
      %1524 = vmatpush.bf16.msra.mxu0 %v1113
      %1525 = vmatmul.bf16.gmra.mxu0 %v765
      %v1526 = vpop.f32.mrf.mxu0
      %v1527 = vadd.f32 %v1438, %v1526
      %v1528 = vpop.f32.mrf.mxu0
      %v1529 = vadd.f32 %v1440, %v1528
      %1530 = vmatmul.bf16.gmra.mxu0 %v770
      %v1531 = vpop.f32.mrf.mxu0
      %v1532 = vadd.f32 %v1443, %v1531
      %v1533 = vpop.f32.mrf.mxu0
      %v1534 = vadd.f32 %v1445, %v1533
      %1535 = vmatmul.bf16.gmra.mxu0 %v775
      %v1536 = vpop.f32.mrf.mxu0
      %v1537 = vadd.f32 %v1448, %v1536
      %v1538 = vpop.f32.mrf.mxu0
      %v1539 = vadd.f32 %v1450, %v1538
      %1540 = vmatmul.bf16.gmra.mxu0 %v780
      %v1541 = vpop.f32.mrf.mxu0
      %v1542 = vadd.f32 %v1453, %v1541
      %v1543 = vpop.f32.mrf.mxu0
      %v1544 = vadd.f32 %v1455, %v1543
      %1545 = vmatmul.bf16.gmra.mxu0 %v785
      %v1546 = vpop.f32.mrf.mxu0
      %v1547 = vadd.f32 %v1458, %v1546
      %v1548 = vpop.f32.mrf.mxu0
      %v1549 = vadd.f32 %v1460, %v1548
      %1550 = vmatmul.bf16.gmra.mxu0 %v790
      %v1551 = vpop.f32.mrf.mxu0
      %v1552 = vadd.f32 %v1463, %v1551
      %v1553 = vpop.f32.mrf.mxu0
      %v1554 = vadd.f32 %v1465, %v1553
      %1555 = vmatmul.bf16.gmra.mxu0 %v795
      %v1556 = vpop.f32.mrf.mxu0
      %v1557 = vadd.f32 %v1468, %v1556
      %v1558 = vpop.f32.mrf.mxu0
      %v1559 = vadd.f32 %v1470, %v1558
      %1560 = vmatmul.bf16.gmra.mxu0 %v800
      %v1561 = vpop.f32.mrf.mxu0
      %v1562 = vadd.f32 %v1473, %v1561
      %v1563 = vpop.f32.mrf.mxu0
      %v1564 = vadd.f32 %v1475, %v1563
      %1565 = vmatmul.bf16.gmra.mxu0 %v805
      %v1566 = vpop.f32.mrf.mxu0
      %v1567 = vadd.f32 %v1478, %v1566
      %v1568 = vpop.f32.mrf.mxu0
      %v1569 = vadd.f32 %v1480, %v1568
      %1570 = vmatmul.bf16.gmra.mxu0 %v810
      %v1571 = vpop.f32.mrf.mxu0
      %v1572 = vadd.f32 %v1483, %v1571
      %v1573 = vpop.f32.mrf.mxu0
      %v1574 = vadd.f32 %v1485, %v1573
      %1575 = vmatmul.bf16.gmra.mxu0 %v815
      %v1576 = vpop.f32.mrf.mxu0
      %v1577 = vadd.f32 %v1488, %v1576
      %v1578 = vpop.f32.mrf.mxu0
      %v1579 = vadd.f32 %v1490, %v1578
      %1580 = vmatmul.bf16.gmra.mxu0 %v820
      %v1581 = vpop.f32.mrf.mxu0
      %v1582 = vadd.f32 %v1493, %v1581
      %v1583 = vpop.f32.mrf.mxu0
      %v1584 = vadd.f32 %v1495, %v1583
      %1585 = vmatmul.bf16.gmra.mxu0 %v825
      %v1586 = vpop.f32.mrf.mxu0
      %v1587 = vadd.f32 %v1498, %v1586
      %v1588 = vpop.f32.mrf.mxu0
      %v1589 = vadd.f32 %v1500, %v1588
      %1590 = vmatmul.bf16.gmra.mxu0 %v830
      %v1591 = vpop.f32.mrf.mxu0
      %v1592 = vadd.f32 %v1503, %v1591
      %v1593 = vpop.f32.mrf.mxu0
      %v1594 = vadd.f32 %v1505, %v1593
      %1595 = vmatmul.bf16.gmra.mxu0 %v835
      %v1596 = vpop.f32.mrf.mxu0
      %v1597 = vadd.f32 %v1508, %v1596
      %v1598 = vpop.f32.mrf.mxu0
      %v1599 = vadd.f32 %v1510, %v1598
      %1600 = vmatmul.bf16.gmra.mxu0 %v840
      %v1601 = vpop.f32.mrf.mxu0
      %v1602 = vadd.f32 %v1513, %v1601
      %v1603 = vpop.f32.mrf.mxu0
      %v1604 = vadd.f32 %v1515, %v1603
      %1605 = vdwg.mxu0
      %v1606 = vld [vmem:[%s307] sm:$0x1]
      %v1608 = vperm.slane %v1606, 0
      %v1610 = vmul.f32 %v1527, %v1608
      %v1611 = vmul.f32 %v1529, %v1608
      %v1612 = vmul.f32 %v1532, %v1608
      %v1613 = vmul.f32 %v1534, %v1608
      %v1614 = vmul.f32 %v1537, %v1608
      %v1615 = vmul.f32 %v1539, %v1608
      %v1616 = vmul.f32 %v1542, %v1608
      %v1617 = vmul.f32 %v1544, %v1608
      %v1618 = vmul.f32 %v1547, %v1608
      %v1619 = vmul.f32 %v1549, %v1608
      %v1620 = vmul.f32 %v1552, %v1608
      %v1621 = vmul.f32 %v1554, %v1608
      %v1622 = vmul.f32 %v1557, %v1608
      %v1623 = vmul.f32 %v1559, %v1608
      %v1624 = vmul.f32 %v1562, %v1608
      %v1625 = vmul.f32 %v1564, %v1608
      %v1626 = vmul.f32 %v1567, %v1608
      %v1627 = vmul.f32 %v1569, %v1608
      %v1628 = vmul.f32 %v1572, %v1608
      %v1629 = vmul.f32 %v1574, %v1608
      %v1630 = vmul.f32 %v1577, %v1608
      %v1631 = vmul.f32 %v1579, %v1608
      %v1632 = vmul.f32 %v1582, %v1608
      %v1633 = vmul.f32 %v1584, %v1608
      %v1634 = vmul.f32 %v1587, %v1608
      %v1635 = vmul.f32 %v1589, %v1608
      %v1636 = vmul.f32 %v1592, %v1608
      %v1637 = vmul.f32 %v1594, %v1608
      %v1638 = vmul.f32 %v1597, %v1608
      %v1639 = vmul.f32 %v1599, %v1608
      %v1640 = vmul.f32 %v1602, %v1608
      %v1641 = vmul.f32 %v1604, %v1608
      %v1642 = vld [vmem:[%s310] sm:$0x1]
      %v1644 = vperm.slane %v1642, 0
      %v1646 = vadd.f32 %v1610, %v1644
      %v1647 = vadd.f32 %v1611, %v1644
      %v1648 = vadd.f32 %v1612, %v1644
      %v1649 = vadd.f32 %v1613, %v1644
      %v1650 = vadd.f32 %v1614, %v1644
      %v1651 = vadd.f32 %v1615, %v1644
      %v1652 = vadd.f32 %v1616, %v1644
      %v1653 = vadd.f32 %v1617, %v1644
      %v1654 = vadd.f32 %v1618, %v1644
      %v1655 = vadd.f32 %v1619, %v1644
      %v1656 = vadd.f32 %v1620, %v1644
      %v1657 = vadd.f32 %v1621, %v1644
      %v1658 = vadd.f32 %v1622, %v1644
      %v1659 = vadd.f32 %v1623, %v1644
      %v1660 = vadd.f32 %v1624, %v1644
      %v1661 = vadd.f32 %v1625, %v1644
      %v1662 = vadd.f32 %v1626, %v1644
      %v1663 = vadd.f32 %v1627, %v1644
      %v1664 = vadd.f32 %v1628, %v1644
      %v1665 = vadd.f32 %v1629, %v1644
      %v1666 = vadd.f32 %v1630, %v1644
      %v1667 = vadd.f32 %v1631, %v1644
      %v1668 = vadd.f32 %v1632, %v1644
      %v1669 = vadd.f32 %v1633, %v1644
      %v1670 = vadd.f32 %v1634, %v1644
      %v1671 = vadd.f32 %v1635, %v1644
      %v1672 = vadd.f32 %v1636, %v1644
      %v1673 = vadd.f32 %v1637, %v1644
      %v1674 = vadd.f32 %v1638, %v1644
      %v1675 = vadd.f32 %v1639, %v1644
      %v1676 = vadd.f32 %v1640, %v1644
      %v1677 = vadd.f32 %v1641, %v1644
      %v1678 = vld [vmem:[%s318] sm:$0xf]
      %v1679 = vld [vmem:[%s318 + $0x4] sm:$0xf]
      %v1680 = vld [vmem:[%s318 + $0x8] sm:$0xf]
      %v1681 = vld [vmem:[%s318 + $0xc] sm:$0xf]
      %v1682 = vld [vmem:[%s318 + $0x10] sm:$0xf]
      %v1683 = vld [vmem:[%s318 + $0x14] sm:$0xf]
      %v1684 = vld [vmem:[%s318 + $0x18] sm:$0xf]
      %v1685 = vld [vmem:[%s318 + $0x1c] sm:$0xf]
      %v1686 = vld [vmem:[%s318 + $0x20] sm:$0xf]
      %v1687 = vld [vmem:[%s318 + $0x24] sm:$0xf]
      %v1688 = vld [vmem:[%s318 + $0x28] sm:$0xf]
      %v1689 = vld [vmem:[%s318 + $0x2c] sm:$0xf]
      %v1690 = vld [vmem:[%s318 + $0x30] sm:$0xf]
      %v1691 = vld [vmem:[%s318 + $0x34] sm:$0xf]
      %v1692 = vld [vmem:[%s318 + $0x38] sm:$0xf]
      %v1693 = vld [vmem:[%s318 + $0x3c] sm:$0xf]
      %v1694 = vld [vmem:[%s318 + $0x40] sm:$0xf]
      %v1695 = vld [vmem:[%s318 + $0x44] sm:$0xf]
      %v1696 = vld [vmem:[%s318 + $0x48] sm:$0xf]
      %v1697 = vld [vmem:[%s318 + $0x4c] sm:$0xf]
      %v1698 = vld [vmem:[%s318 + $0x50] sm:$0xf]
      %v1699 = vld [vmem:[%s318 + $0x54] sm:$0xf]
      %v1700 = vld [vmem:[%s318 + $0x58] sm:$0xf]
      %v1701 = vld [vmem:[%s318 + $0x5c] sm:$0xf]
      %v1702 = vld [vmem:[%s318 + $0x60] sm:$0xf]
      %v1703 = vld [vmem:[%s318 + $0x64] sm:$0xf]
      %v1704 = vld [vmem:[%s318 + $0x68] sm:$0xf]
      %v1705 = vld [vmem:[%s318 + $0x6c] sm:$0xf]
      %v1706 = vld [vmem:[%s318 + $0x70] sm:$0xf]
      %v1707 = vld [vmem:[%s318 + $0x74] sm:$0xf]
      %v1708 = vld [vmem:[%s318 + $0x78] sm:$0xf]
      %v1709 = vld [vmem:[%s318 + $0x7c] sm:$0xf]
      %v1710 = vunpack.c.l.bf16 %v1678
      %v1711 = vunpack.c.l.bf16 %v1679
      %v1712 = vunpack.c.l.bf16 %v1680
      %v1713 = vunpack.c.l.bf16 %v1681
      %v1714 = vunpack.c.l.bf16 %v1682
      %v1715 = vunpack.c.l.bf16 %v1683
      %v1716 = vunpack.c.l.bf16 %v1684
      %v1717 = vunpack.c.l.bf16 %v1685
      %v1718 = vunpack.c.l.bf16 %v1686
      %v1719 = vunpack.c.l.bf16 %v1687
      %v1720 = vunpack.c.l.bf16 %v1688
      %v1721 = vunpack.c.l.bf16 %v1689
      %v1722 = vunpack.c.l.bf16 %v1690
      %v1723 = vunpack.c.l.bf16 %v1691
      %v1724 = vunpack.c.l.bf16 %v1692
      %v1725 = vunpack.c.l.bf16 %v1693
      %v1726 = vunpack.c.l.bf16 %v1694
      %v1727 = vunpack.c.l.bf16 %v1695
      %v1728 = vunpack.c.l.bf16 %v1696
      %v1729 = vunpack.c.l.bf16 %v1697
      %v1730 = vunpack.c.l.bf16 %v1698
      %v1731 = vunpack.c.l.bf16 %v1699
      %v1732 = vunpack.c.l.bf16 %v1700
      %v1733 = vunpack.c.l.bf16 %v1701
      %v1734 = vunpack.c.l.bf16 %v1702
      %v1735 = vunpack.c.l.bf16 %v1703
      %v1736 = vunpack.c.l.bf16 %v1704
      %v1737 = vunpack.c.l.bf16 %v1705
      %v1738 = vunpack.c.l.bf16 %v1706
      %v1739 = vunpack.c.l.bf16 %v1707
      %v1740 = vunpack.c.l.bf16 %v1708
      %v1741 = vunpack.c.l.bf16 %v1709
      %v1742 = vadd.f32 %v1646, %v1710
      %v1743 = vadd.f32 %v1647, %v1711
      %v1744 = vadd.f32 %v1648, %v1712
      %v1745 = vadd.f32 %v1649, %v1713
      %v1746 = vadd.f32 %v1650, %v1714
      %v1747 = vadd.f32 %v1651, %v1715
      %v1748 = vadd.f32 %v1652, %v1716
      %v1749 = vadd.f32 %v1653, %v1717
      %v1750 = vadd.f32 %v1654, %v1718
      %v1751 = vadd.f32 %v1655, %v1719
      %v1752 = vadd.f32 %v1656, %v1720
      %v1753 = vadd.f32 %v1657, %v1721
      %v1754 = vadd.f32 %v1658, %v1722
      %v1755 = vadd.f32 %v1659, %v1723
      %v1756 = vadd.f32 %v1660, %v1724
      %v1757 = vadd.f32 %v1661, %v1725
      %v1758 = vadd.f32 %v1662, %v1726
      %v1759 = vadd.f32 %v1663, %v1727
      %v1760 = vadd.f32 %v1664, %v1728
      %v1761 = vadd.f32 %v1665, %v1729
      %v1762 = vadd.f32 %v1666, %v1730
      %v1763 = vadd.f32 %v1667, %v1731
      %v1764 = vadd.f32 %v1668, %v1732
      %v1765 = vadd.f32 %v1669, %v1733
      %v1766 = vadd.f32 %v1670, %v1734
      %v1767 = vadd.f32 %v1671, %v1735
      %v1768 = vadd.f32 %v1672, %v1736
      %v1769 = vadd.f32 %v1673, %v1737
      %v1770 = vadd.f32 %v1674, %v1738
      %v1771 = vadd.f32 %v1675, %v1739
      %v1772 = vadd.f32 %v1676, %v1740
      %v1773 = vadd.f32 %v1677, %v1741
      %v1774 = vmax.f32 %v1742, 0.0
      %v1775 = vmax.f32 %v1743, 0.0
      %v1776 = vmax.f32 %v1744, 0.0
      %v1777 = vmax.f32 %v1745, 0.0
      %v1778 = vmax.f32 %v1746, 0.0
      %v1779 = vmax.f32 %v1747, 0.0
      %v1780 = vmax.f32 %v1748, 0.0
      %v1781 = vmax.f32 %v1749, 0.0
      %v1782 = vmax.f32 %v1750, 0.0
      %v1783 = vmax.f32 %v1751, 0.0
      %v1784 = vmax.f32 %v1752, 0.0
      %v1785 = vmax.f32 %v1753, 0.0
      %v1786 = vmax.f32 %v1754, 0.0
      %v1787 = vmax.f32 %v1755, 0.0
      %v1788 = vmax.f32 %v1756, 0.0
      %v1789 = vmax.f32 %v1757, 0.0
      %v1790 = vmax.f32 %v1758, 0.0
      %v1791 = vmax.f32 %v1759, 0.0
      %v1792 = vmax.f32 %v1760, 0.0
      %v1793 = vmax.f32 %v1761, 0.0
      %v1794 = vmax.f32 %v1762, 0.0
      %v1795 = vmax.f32 %v1763, 0.0
      %v1796 = vmax.f32 %v1764, 0.0
      %v1797 = vmax.f32 %v1765, 0.0
      %v1798 = vmax.f32 %v1766, 0.0
      %v1799 = vmax.f32 %v1767, 0.0
      %v1800 = vmax.f32 %v1768, 0.0
      %v1801 = vmax.f32 %v1769, 0.0
      %v1802 = vmax.f32 %v1770, 0.0
      %v1803 = vmax.f32 %v1771, 0.0
      %v1804 = vmax.f32 %v1772, 0.0
      %v1805 = vmax.f32 %v1773, 0.0
      %v1806 = vpack.c.bf16 %v1774, %v1774
      %v1807 = vpack.c.bf16 %v1775, %v1775
      %v1808 = vpack.c.bf16 %v1776, %v1776
      %v1809 = vpack.c.bf16 %v1777, %v1777
      %v1810 = vpack.c.bf16 %v1778, %v1778
      %v1811 = vpack.c.bf16 %v1779, %v1779
      %v1812 = vpack.c.bf16 %v1780, %v1780
      %v1813 = vpack.c.bf16 %v1781, %v1781
      %v1814 = vpack.c.bf16 %v1782, %v1782
      %v1815 = vpack.c.bf16 %v1783, %v1783
      %v1816 = vpack.c.bf16 %v1784, %v1784
      %v1817 = vpack.c.bf16 %v1785, %v1785
      %v1818 = vpack.c.bf16 %v1786, %v1786
      %v1819 = vpack.c.bf16 %v1787, %v1787
      %v1820 = vpack.c.bf16 %v1788, %v1788
      %v1821 = vpack.c.bf16 %v1789, %v1789
      %v1822 = vpack.c.bf16 %v1790, %v1790
      %v1823 = vpack.c.bf16 %v1791, %v1791
      %v1824 = vpack.c.bf16 %v1792, %v1792
      %v1825 = vpack.c.bf16 %v1793, %v1793
      %v1826 = vpack.c.bf16 %v1794, %v1794
      %v1827 = vpack.c.bf16 %v1795, %v1795
      %v1828 = vpack.c.bf16 %v1796, %v1796
      %v1829 = vpack.c.bf16 %v1797, %v1797
      %v1830 = vpack.c.bf16 %v1798, %v1798
      %v1831 = vpack.c.bf16 %v1799, %v1799
      %v1832 = vpack.c.bf16 %v1800, %v1800
      %v1833 = vpack.c.bf16 %v1801, %v1801
      %v1834 = vpack.c.bf16 %v1802, %v1802
      %v1835 = vpack.c.bf16 %v1803, %v1803
      %v1836 = vpack.c.bf16 %v1804, %v1804
      %v1837 = vpack.c.bf16 %v1805, %v1805
      %1838 = vst [vmem:[%s327] sm:$0xf] %v1806
      %1839 = vst [vmem:[%s327 + $0x4] sm:$0xf] %v1807
      %1840 = vst [vmem:[%s327 + $0x8] sm:$0xf] %v1808
      %1841 = vst [vmem:[%s327 + $0xc] sm:$0xf] %v1809
      %1842 = vst [vmem:[%s327 + $0x10] sm:$0xf] %v1810
      %1843 = vst [vmem:[%s327 + $0x14] sm:$0xf] %v1811
      %1844 = vst [vmem:[%s327 + $0x18] sm:$0xf] %v1812
      %1845 = vst [vmem:[%s327 + $0x1c] sm:$0xf] %v1813
      %1846 = vst [vmem:[%s327 + $0x20] sm:$0xf] %v1814
      %1847 = vst [vmem:[%s327 + $0x24] sm:$0xf] %v1815
      %1848 = vst [vmem:[%s327 + $0x28] sm:$0xf] %v1816
      %1849 = vst [vmem:[%s327 + $0x2c] sm:$0xf] %v1817
      %1850 = vst [vmem:[%s327 + $0x30] sm:$0xf] %v1818
      %1851 = vst [vmem:[%s327 + $0x34] sm:$0xf] %v1819
      %1852 = vst [vmem:[%s327 + $0x38] sm:$0xf] %v1820
      %1853 = vst [vmem:[%s327 + $0x3c] sm:$0xf] %v1821
      %1854 = vst [vmem:[%s327 + $0x40] sm:$0xf] %v1822
      %1855 = vst [vmem:[%s327 + $0x44] sm:$0xf] %v1823
      %1856 = vst [vmem:[%s327 + $0x48] sm:$0xf] %v1824
      %1857 = vst [vmem:[%s327 + $0x4c] sm:$0xf] %v1825
      %1858 = vst [vmem:[%s327 + $0x50] sm:$0xf] %v1826
      %1859 = vst [vmem:[%s327 + $0x54] sm:$0xf] %v1827
      %1860 = vst [vmem:[%s327 + $0x58] sm:$0xf] %v1828
      %1861 = vst [vmem:[%s327 + $0x5c] sm:$0xf] %v1829
      %1862 = vst [vmem:[%s327 + $0x60] sm:$0xf] %v1830
      %1863 = vst [vmem:[%s327 + $0x64] sm:$0xf] %v1831
      %1864 = vst [vmem:[%s327 + $0x68] sm:$0xf] %v1832
      %1865 = vst [vmem:[%s327 + $0x6c] sm:$0xf] %v1833
      %1866 = vst [vmem:[%s327 + $0x70] sm:$0xf] %v1834
      %1867 = vst [vmem:[%s327 + $0x74] sm:$0xf] %v1835
      %1868 = vst [vmem:[%s327 + $0x78] sm:$0xf] %v1836
      %1869 = vst [vmem:[%s327 + $0x7c] sm:$0xf] %v1837
      %s1870 = smul.u32 32, %s20
      %p1871 = scmp.lt.s32.totalorder %s1870, 63
      %s1872 = scalar_select %p1871, %s1870, 63
      %p1873 = scmp.lt.s32.totalorder %s21, 0
      %s1874 = scalar_select %p1873, %s21, 0
      %s1875 = sadd.s32 %s1874, %s1872
      %s1876 = smul.addr %s1875, 4
      %s1877 = scalar_lea.vmem %s5, %s1876
      // Predicated region
      $region41: #{forward.14} parent=39 // pred_check
        %p1878 = pneg %p180
      $region42: #{forward.14} parent=39 // pred_check_branch
        %1880 = sbr.rel (%p1878) target = $region44
      $region43: #{forward.14} parent=39 // pred_region
        %s1881 = smul.u32 32, %s20
      $region44: #{forward.14} parent=39 // pred_fallthru
        _
    $region40: #{forward.14} parent=5 // pred_fallthru
      _
    %p1882 = scmp.le.s32.totalorder 2, %s11
    // Predicated region
    $region45: #{forward.14} parent=5 // pred_check
      %p1883 = pneg %p1882
    $region46: #{forward.14} parent=5 // pred_check_branch
      %1885 = sbr.rel (%p1883) target = $region48
    $region47: #{forward.14} parent=5 // pred_region
      %s1886 = ssub.s32 %s11, 2
      // Predicated region
      $region49: #{forward.14} parent=47 // pred_check
        %p1887 = pneg %p186
      $region50: #{forward.14} parent=47 // pred_check_branch
        %1889 = sbr.rel (%p1887) target = $region52
      $region51: #{forward.14} parent=47 // pred_region
        %s1890 = smul.u32 32, %s22
        %p1891 = scmp.lt.s32.totalorder %s1890, 63
        %s1892 = scalar_select %p1891, %s1890, 63
        %p1893 = scmp.lt.s32.totalorder %s23, 0
        %s1894 = scalar_select %p1893, %s23, 0
        %s1895 = sadd.s32 %s1894, %s1892
        %s1896 = smul.addr %s1895, 4
        %s1897 = scalar_lea.vmem %s5, %s1896
      $region52: #{forward.14} parent=47 // pred_fallthru
        _
    $region48: #{forward.14} parent=5 // pred_fallthru
      _
  $region6: #{forward.14} parent=0 // loop_footer
    %s15 = sadd.s32 1, %s11
  $region7: #{forward.14} parent=0 // loop_footer_branch
    %10 = sbr.rel target = $region3
  $region8: #{forward.14} parent=0 // loop_exit
    _

// kernel: forward.18
$region0: #{forward.18}
  #allocation0 [shape = 'u32[]', space=smem, size = 0x4, offset = 0x4, fixed_abs, tag = 'smem constant byte address 0x4 - core index']
  #allocation1 [shape = 'u32[72,128]{1,0:T(1,128)}', space=vmem, size = 0x9000, scoped, tag = 'internal scratch']
  %s0 = inlined_call_operand.vmem [shape: bf16[128,640], index: 0, kind: input, shape index: {}]
  %s1 = inlined_call_operand.vmem [shape: bf16[640,128], index: 1, kind: input, shape index: {}]
  %s2 = inlined_call_operand.vmem [shape: f32[1,128], index: 2, kind: input, shape index: {}]
  %s3 = inlined_call_operand.hbm [shape: f32[1,128], index: 3, kind: input, shape index: {}]
  %s4 = inlined_call_operand.vmem [shape: bf16[128,128], index: 4, kind: output, shape index: {}]
  %s5 = sld [smem:[#allocation0]]
  $region53: #{forward.18} parent=0
    _
  %s7 = ssub.s32 1, %s5
  %s8 = scalar_select 0, %s7, %s5
  $region1: #{forward.18} parent=0
    #allocation2 [shape = 'u8[512]{0}', space=vmem, size = 0x400, scoped, tag = 'input window, operand 3, single buffered']
    #allocation3 [shape = 's32[2]{0}', space=sflag, size = 0x8, scoped, tag = 'scoped memory for forward.18']
    %9 = vsyncpa [#allocation3], 0
    loop: start=0, step=1, limit=4
    $region2: #{forward.18} parent=1 // loop_pre_header
      _
    $region3: #{forward.18} parent=1 // loop_header
      %s11 = sphi 0, %s15
      %p12 = scmp.ge.s32.totalorder %s11, 4
      %s18 = sphi 0, %s30
      %s19 = sphi 0, %s26
      %s20 = sphi 0, %s18
      %s21 = sphi 0, %s19
      %s22 = sphi 0, %s20
      %s23 = sphi 0, %s21
      %s33 = sphi 0, %s35
      %s36 = sphi 0, %s33
      %s37 = sphi 0, %s36
      %s53 = sphi 0, %s37
      %s59 = sphi 0, %s61
      %s62 = sphi 0, %s59
      %s63 = sphi 0, %s62
      %s79 = sphi 0, %s63
      %s85 = sphi 0, %s87
      %s88 = sphi 0, %s85
      %s89 = sphi 0, %s88
      %s105 = sphi 0, %s89
      %s111 = sphi 0, %s113
      %s114 = sphi 0, %s111
      %s115 = sphi 0, %s114
      %s131 = sphi 0, %s115
      %s139 = sphi 0, %s141
      %s142 = sphi 0, %s139
      %s143 = sphi 0, %s142
      %s159 = sphi 0, %s143
    $region4: #{forward.18} parent=1 // loop_header_branch
      %14 = sbr.rel (%p12) target = $region8
    $region5: #{forward.18} parent=1 // loop_body
      %s16 = ssub.s32 %s11, 1
      %s17 = ssub.s32 %s11, 2
      %s24 = sadd.s32 1, %s19
      %p25 = scmp.ge.s32.totalorder %s24, 1
      %s26 = scalar_select %p25, 0, %s24
      %s27 = sadd.s32 1, %s18
      %s28 = scalar_select %p25, %s27, %s18
      %p29 = scmp.ge.s32.totalorder %s28, 2
      %s30 = scalar_select %p29, 0, %s28
      %s31 = ssub.s32 %s18, %s30
      %p32 = scmp.eq.s32.totalorder %s31, 0
      %s34 = sadd.s32 %s33, 1
      %s35 = scalar_select %p32, %s33, %s34
      %p38 = pneg %p32
      %p39 = scmp.eq.s32.totalorder %s11, 1
      %p40 = por %p38, %p39
      %p41 = scmp.ne.s32.totalorder %s33, %s36
      %p42 = scmp.eq.s32.totalorder %s11, 0
      %p43 = por %p41, %p42
      %p44 = scmp.ne.s32.totalorder %s33, %s36
      %p45 = scmp.eq.s32.totalorder %s16, 1
      %p46 = por %p44, %p45
      %p47 = scmp.ne.s32.totalorder %s36, %s37
      %p48 = scmp.eq.s32.totalorder %s16, 0
      %p49 = por %p47, %p48
      %p50 = scmp.ne.s32.totalorder %s36, %s37
      %p51 = scmp.eq.s32.totalorder %s17, 1
      %p52 = por %p50, %p51
      %p54 = scmp.ne.s32.totalorder %s37, %s53
      %p55 = scmp.eq.s32.totalorder %s17, 0
      %p56 = por %p54, %p55
      %s57 = ssub.s32 %s19, %s26
      %p58 = scmp.eq.s32.totalorder %s57, 0
      %s60 = sadd.s32 %s59, 1
      %s61 = scalar_select %p58, %s59, %s60
      %p64 = pneg %p58
      %p65 = scmp.eq.s32.totalorder %s11, 1
      %p66 = por %p64, %p65
      %p67 = scmp.ne.s32.totalorder %s59, %s62
      %p68 = scmp.eq.s32.totalorder %s11, 0
      %p69 = por %p67, %p68
      %p70 = scmp.ne.s32.totalorder %s59, %s62
      %p71 = scmp.eq.s32.totalorder %s16, 1
      %p72 = por %p70, %p71
      %p73 = scmp.ne.s32.totalorder %s62, %s63
      %p74 = scmp.eq.s32.totalorder %s16, 0
      %p75 = por %p73, %p74
      %p76 = scmp.ne.s32.totalorder %s62, %s63
      %p77 = scmp.eq.s32.totalorder %s17, 1
      %p78 = por %p76, %p77
      %p80 = scmp.ne.s32.totalorder %s63, %s79
      %p81 = scmp.eq.s32.totalorder %s17, 0
      %p82 = por %p80, %p81
      %s83 = ssub.s32 %s19, %s26
      %p84 = scmp.eq.s32.totalorder %s83, 0
      %s86 = sadd.s32 %s85, 1
      %s87 = scalar_select %p84, %s85, %s86
      %p90 = pneg %p84
      %p91 = scmp.eq.s32.totalorder %s11, 1
      %p92 = por %p90, %p91
      %p93 = scmp.ne.s32.totalorder %s85, %s88
      %p94 = scmp.eq.s32.totalorder %s11, 0
      %p95 = por %p93, %p94
      %p96 = scmp.ne.s32.totalorder %s85, %s88
      %p97 = scmp.eq.s32.totalorder %s16, 1
      %p98 = por %p96, %p97
      %p99 = scmp.ne.s32.totalorder %s88, %s89
      %p100 = scmp.eq.s32.totalorder %s16, 0
      %p101 = por %p99, %p100
      %p102 = scmp.ne.s32.totalorder %s88, %s89
      %p103 = scmp.eq.s32.totalorder %s17, 1
      %p104 = por %p102, %p103
      %p106 = scmp.ne.s32.totalorder %s89, %s105
      %p107 = scmp.eq.s32.totalorder %s17, 0
      %p108 = por %p106, %p107
      %s109 = ssub.s32 %s19, %s26
      %p110 = scmp.eq.s32.totalorder %s109, 0
      %s112 = sadd.s32 %s111, 1
      %s113 = scalar_select %p110, %s111, %s112
      %p116 = pneg %p110
      %p117 = scmp.eq.s32.totalorder %s11, 1
      %p118 = por %p116, %p117
      %p119 = scmp.ne.s32.totalorder %s111, %s114
      %p120 = scmp.eq.s32.totalorder %s11, 0
      %p121 = por %p119, %p120
      %p122 = scmp.ne.s32.totalorder %s111, %s114
      %p123 = scmp.eq.s32.totalorder %s16, 1
      %p124 = por %p122, %p123
      %p125 = scmp.ne.s32.totalorder %s114, %s115
      %p126 = scmp.eq.s32.totalorder %s16, 0
      %p127 = por %p125, %p126
      %p128 = scmp.ne.s32.totalorder %s114, %s115
      %p129 = scmp.eq.s32.totalorder %s17, 1
      %p130 = por %p128, %p129
      %p132 = scmp.ne.s32.totalorder %s115, %s131
      %p133 = scmp.eq.s32.totalorder %s17, 0
      %p134 = por %p132, %p133
      %s135 = ssub.s32 %s18, %s30
      %s136 = ssub.s32 %s19, %s26
      %s137 = sor.u32 %s135, %s136
      %p138 = scmp.eq.s32.totalorder %s137, 0
      %s140 = sadd.s32 %s139, 1
      %s141 = scalar_select %p138, %s139, %s140
      %p144 = pneg %p138
      %p145 = scmp.eq.s32.totalorder %s11, 1
      %p146 = por %p144, %p145
      %p147 = scmp.ne.s32.totalorder %s139, %s142
      %p148 = scmp.eq.s32.totalorder %s11, 0
      %p149 = por %p147, %p148
      %p150 = scmp.ne.s32.totalorder %s139, %s142
      %p151 = scmp.eq.s32.totalorder %s16, 1
      %p152 = por %p150, %p151
      %p153 = scmp.ne.s32.totalorder %s142, %s143
      %p154 = scmp.eq.s32.totalorder %s16, 0
      %p155 = por %p153, %p154
      %p156 = scmp.ne.s32.totalorder %s142, %s143
      %p157 = scmp.eq.s32.totalorder %s17, 1
      %p158 = por %p156, %p157
      %p160 = scmp.ne.s32.totalorder %s143, %s159
      %p161 = scmp.eq.s32.totalorder %s17, 0
      %p162 = por %p160, %p161
      %p163 = scmp.le.s32.totalorder 1, %s11
      %p164 = scmp.lt.s32.totalorder %s11, 3
      %p165 = pnand %p163, %p164
      %p166 = pneg %p165
      // Predicated region
      $region9: #{forward.18} parent=5 // pred_check
        _
      $region10: #{forward.18} parent=5 // pred_check_branch
        %168 = sbr.rel (%p165) target = $region12
      $region11: #{forward.18} parent=5 // pred_region
        %s169 = ssub.s32 %s11, 1
        // Predicated region
        $region13: #{forward.18} parent=11 // pred_check
          %p170 = pneg %p75
        $region14: #{forward.18} parent=11 // pred_check_branch
          %172 = sbr.rel (%p170) target = $region16
        $region15: #{forward.18} parent=11 // pred_region
          %p173 = scmp.lt.s32.totalorder %s21, 0
          %s174 = scalar_select %p173, %s21, 0
          %s175 = smul.addr %s174, 4
          %s176 = scalar_lea.vmem %s1, %s175
        $region16: #{forward.18} parent=11 // pred_fallthru
          _
        // Predicated region
        $region17: #{forward.18} parent=11 // pred_check
          %p177 = pneg %p101
        $region18: #{forward.18} parent=11 // pred_check_branch
          %179 = sbr.rel (%p177) target = $region20
        $region19: #{forward.18} parent=11 // pred_region
          %p180 = scmp.lt.s32.totalorder %s21, 0
          %s181 = scalar_select %p180, %s21, 0
          %s182 = scalar_lea.vmem %s2, %s181
        $region20: #{forward.18} parent=11 // pred_fallthru
          _
        // Predicated region
        $region21: #{forward.18} parent=11 // pred_check
          %p183 = pneg %p127
        $region22: #{forward.18} parent=11 // pred_check_branch
          %185 = sbr.rel (%p183) target = $region24
        $region23: #{forward.18} parent=11 // pred_region
          %187 = vsyncadd [#allocation3], 0
          %s188 = scalar_lea.hbm %s3, %s21
          %s190 = sshll.u32 %s188, 4
          %s191 = int_to_ptr.hbm [resolvable:$true] %s190
          %s192 = sshll.u32 [#allocation2], 4
          %s193 = int_to_ptr.vmem [resolvable:$true] %s192
          %195 = dma.hbm_to_vmem [thread:$0]  %s191, 16, %s193, [#allocation3]
        $region24: #{forward.18} parent=11 // pred_fallthru
          _
      $region12: #{forward.18} parent=5 // pred_fallthru
        _
      %p196 = scmp.lt.s32.totalorder %s11, 2
      // Predicated region
      $region25: #{forward.18} parent=5 // pred_check
        %p197 = pneg %p196
      $region26: #{forward.18} parent=5 // pred_check_branch
        %199 = sbr.rel (%p197) target = $region28
      $region27: #{forward.18} parent=5 // pred_region
        // Predicated region
        $region29: #{forward.18} parent=27 // pred_check
          %p200 = pneg %p43
        $region30: #{forward.18} parent=27 // pred_check_branch
          %202 = sbr.rel (%p200) target = $region32
        $region31: #{forward.18} parent=27 // pred_region
          %s203 = smul.u32 8, %s18
          %p204 = scmp.lt.s32.totalorder %s203, 15
          %s205 = scalar_select %p204, %s203, 15
          %s206 = smul.addr %s205, 5
          %s207 = smul.addr %s206, 4
          %s208 = scalar_lea.vmem %s0, %s207
          %s209 = smul.u32 8, %s18
        $region32: #{forward.18} parent=27 // pred_fallthru
          _
      $region28: #{forward.18} parent=5 // pred_fallthru
        _
      %p210 = scmp.le.s32.totalorder 1, %s11
      %p211 = scmp.lt.s32.totalorder %s11, 3
      %p212 = pnand %p210, %p211
      %p213 = pneg %p212
      // Predicated region
      $region33: #{forward.18} parent=5 // pred_check
        _
      $region34: #{forward.18} parent=5 // pred_check_branch
        %215 = sbr.rel (%p212) target = $region36
      $region35: #{forward.18} parent=5 // pred_region
        %s216 = ssub.s32 %s11, 1
        // Predicated region
        $region37: #{forward.18} parent=35 // pred_check
          %p217 = pneg %p127
        $region38: #{forward.18} parent=35 // pred_check_branch
          %219 = sbr.rel (%p217) target = $region40
        $region39: #{forward.18} parent=35 // pred_region
          %221 = dma.done [#allocation3], 16
        $region40: #{forward.18} parent=35 // pred_fallthru
          _
        %s222 = smul.u32 8, %s20
        %p223 = scmp.lt.s32.totalorder %s222, 15
        %s224 = scalar_select %p223, %s222, 15
        %s225 = smul.addr %s224, 5
        %s226 = smul.addr %s225, 4
        %s227 = scalar_lea.vmem %s0, %s226
        %p228 = pneg %p49
        %p229 = pneg %p46
        %p230 = scmp.lt.s32.totalorder %s21, 0
        %s231 = scalar_select %p230, %s21, 0
        %s232 = smul.addr %s231, 4
        %s233 = scalar_lea.vmem %s1, %s232
        %p234 = pneg %p75
        %p235 = pneg %p72
        %p236 = scmp.lt.s32.totalorder %s21, 0
        %s237 = scalar_select %p236, %s21, 0
        %s238 = scalar_lea.vmem %s2, %s237
        %p239 = pneg %p101
        %p240 = pneg %p98
        %p241 = pneg %p127
        %p242 = pneg %p124
        %p243 = pneg %p155
        %p244 = pneg %p152
        %s245 = smul.u32 8, %s20
        %p246 = scmp.lt.s32.totalorder %s245, 15
        %s247 = scalar_select %p246, %s245, 15
        %p248 = scmp.lt.s32.totalorder %s21, 0
        %s249 = scalar_select %p248, %s21, 0
        %s250 = sadd.s32 %s249, %s247
        %s251 = smul.addr %s250, 4
        %s252 = scalar_lea.vmem %s4, %s251
        %s253 = smul.u32 8, %s20
        %p254 = scmp.lt.s32.totalorder %s253, 15
        %s255 = scalar_select %p254, %s253, 15
        %s256 = smul.addr %s255, 5
        %s257 = smul.addr %s256, 4
        %s258 = scalar_lea.vmem %s0, %s257
        %s259 = smul.u32 8, %s20
        %p260 = scmp.lt.s32.totalorder %s21, 0
        %s261 = scalar_select %p260, %s21, 0
        %s262 = smul.addr %s261, 4
        %s263 = scalar_lea.vmem %s1, %s262
        %p264 = scmp.lt.s32.totalorder %s21, 0
        %s265 = scalar_select %p264, %s21, 0
        %s266 = scalar_lea.vmem %s2, %s265
        %s267 = smul.u32 8, %s20
        %p268 = scmp.lt.s32.totalorder %s267, 15
        %s269 = scalar_select %p268, %s267, 15
        %p270 = scmp.lt.s32.totalorder %s21, 0
        %s271 = scalar_select %p270, %s21, 0
        %s272 = sadd.s32 %s271, %s269
        %s273 = smul.addr %s272, 4
        %s274 = scalar_lea.vmem %s4, %s273
        %s275 = smul.u32 8, %s20
        %v276 = vld [vmem:[%s258] sm:$0xff]
        %v277 = vld [vmem:[%s258 + $0x8] sm:$0xff]
        %v278 = vld [vmem:[%s258 + $0x10] sm:$0xf]
        %v279 = vld [vmem:[%s258 + $0x14] sm:$0xff]
        %v280 = vld [vmem:[%s258 + $0x1c] sm:$0xff]
        %v281 = vld [vmem:[%s258 + $0x24] sm:$0xf]
        %v282 = vld [vmem:[%s258 + $0x28] sm:$0xff]
        %v283 = vld [vmem:[%s258 + $0x30] sm:$0xff]
        %v284 = vld [vmem:[%s258 + $0x38] sm:$0xf]
        %v285 = vld [vmem:[%s258 + $0x3c] sm:$0xff]
        %v286 = vld [vmem:[%s258 + $0x44] sm:$0xff]
        %v287 = vld [vmem:[%s258 + $0x4c] sm:$0xf]
        %v288 = vld [vmem:[%s258 + $0x50] sm:$0xff]
        %v289 = vld [vmem:[%s258 + $0x58] sm:$0xff]
        %v290 = vld [vmem:[%s258 + $0x60] sm:$0xf]
        %v291 = vld [vmem:[%s258 + $0x64] sm:$0xff]
        %v292 = vld [vmem:[%s258 + $0x6c] sm:$0xff]
        %v293 = vld [vmem:[%s258 + $0x74] sm:$0xf]
        %v294 = vld [vmem:[%s258 + $0x78] sm:$0xff]
        %v295 = vld [vmem:[%s258 + $0x80] sm:$0xff]
        %v296 = vld [vmem:[%s258 + $0x88] sm:$0xf]
        %v297 = vld [vmem:[%s258 + $0x8c] sm:$0xff]
        %v298 = vld [vmem:[%s258 + $0x94] sm:$0xff]
        %v299 = vld [vmem:[%s258 + $0x9c] sm:$0xf]
        %v300 = vld [vmem:[%s263] sm:$0xf]
        %v301 = vld [vmem:[%s263 + $0x4] sm:$0xf]
        %v302 = vld [vmem:[%s263 + $0x8] sm:$0xf]
        %v303 = vld [vmem:[%s263 + $0xc] sm:$0xf]
        %v304 = vld [vmem:[%s263 + $0x10] sm:$0xf]
        %v305 = vld [vmem:[%s263 + $0x14] sm:$0xf]
        %v306 = vld [vmem:[%s263 + $0x18] sm:$0xf]
        %v307 = vld [vmem:[%s263 + $0x1c] sm:$0xf]
        %v308 = vld [vmem:[%s263 + $0x20] sm:$0xf]
        %v309 = vld [vmem:[%s263 + $0x24] sm:$0xf]
        %v310 = vld [vmem:[%s263 + $0x28] sm:$0xf]
        %v311 = vld [vmem:[%s263 + $0x2c] sm:$0xf]
        %v312 = vld [vmem:[%s263 + $0x30] sm:$0xf]
        %v313 = vld [vmem:[%s263 + $0x34] sm:$0xf]
        %v314 = vld [vmem:[%s263 + $0x38] sm:$0xf]
        %v315 = vld [vmem:[%s263 + $0x3c] sm:$0xf]
        %v316 = vld [vmem:[%s263 + $0x40] sm:$0xf]
        %v317 = vld [vmem:[%s263 + $0x44] sm:$0xf]
        %v318 = vld [vmem:[%s263 + $0x48] sm:$0xf]
        %v319 = vld [vmem:[%s263 + $0x4c] sm:$0xf]
        %v320 = vld [vmem:[%s263 + $0x50] sm:$0xf]
        %v321 = vld [vmem:[%s263 + $0x54] sm:$0xf]
        %v322 = vld [vmem:[%s263 + $0x58] sm:$0xf]
        %v323 = vld [vmem:[%s263 + $0x5c] sm:$0xf]
        %v324 = vld [vmem:[%s263 + $0x60] sm:$0xf]
        %v325 = vld [vmem:[%s263 + $0x64] sm:$0xf]
        %v326 = vld [vmem:[%s263 + $0x68] sm:$0xf]
        %v327 = vld [vmem:[%s263 + $0x6c] sm:$0xf]
        %v328 = vld [vmem:[%s263 + $0x70] sm:$0xf]
        %v329 = vld [vmem:[%s263 + $0x74] sm:$0xf]
        %v330 = vld [vmem:[%s263 + $0x78] sm:$0xf]
        %v331 = vld [vmem:[%s263 + $0x7c] sm:$0xf]
        %v332 = vld [vmem:[%s263 + $0x80] sm:$0xf]
        %v333 = vld [vmem:[%s263 + $0x84] sm:$0xf]
        %v334 = vld [vmem:[%s263 + $0x88] sm:$0xf]
        %v335 = vld [vmem:[%s263 + $0x8c] sm:$0xf]
        %v336 = vld [vmem:[%s263 + $0x90] sm:$0xf]
        %v337 = vld [vmem:[%s263 + $0x94] sm:$0xf]
        %v338 = vld [vmem:[%s263 + $0x98] sm:$0xf]
        %v339 = vld [vmem:[%s263 + $0x9c] sm:$0xf]
        %v340 = vld [vmem:[%s263 + $0xa0] sm:$0xf]
        %v341 = vld [vmem:[%s263 + $0xa4] sm:$0xf]
        %v342 = vld [vmem:[%s263 + $0xa8] sm:$0xf]
        %v343 = vld [vmem:[%s263 + $0xac] sm:$0xf]
        %v344 = vld [vmem:[%s263 + $0xb0] sm:$0xf]
        %v345 = vld [vmem:[%s263 + $0xb4] sm:$0xf]
        %v346 = vld [vmem:[%s263 + $0xb8] sm:$0xf]
        %v347 = vld [vmem:[%s263 + $0xbc] sm:$0xf]
        %v348 = vld [vmem:[%s263 + $0xc0] sm:$0xf]
        %v349 = vld [vmem:[%s263 + $0xc4] sm:$0xf]
        %v350 = vld [vmem:[%s263 + $0xc8] sm:$0xf]
        %v351 = vld [vmem:[%s263 + $0xcc] sm:$0xf]
        %v352 = vld [vmem:[%s263 + $0xd0] sm:$0xf]
        %v353 = vld [vmem:[%s263 + $0xd4] sm:$0xf]
        %v354 = vld [vmem:[%s263 + $0xd8] sm:$0xf]
        %v355 = vld [vmem:[%s263 + $0xdc] sm:$0xf]
        %v356 = vld [vmem:[%s263 + $0xe0] sm:$0xf]
        %v357 = vld [vmem:[%s263 + $0xe4] sm:$0xf]
        %v358 = vld [vmem:[%s263 + $0xe8] sm:$0xf]
        %v359 = vld [vmem:[%s263 + $0xec] sm:$0xf]
        %v360 = vld [vmem:[%s263 + $0xf0] sm:$0xf]
        %v361 = vld [vmem:[%s263 + $0xf4] sm:$0xf]
        %v362 = vld [vmem:[%s263 + $0xf8] sm:$0xf]
        %v363 = vld [vmem:[%s263 + $0xfc] sm:$0xf]
        %v364 = vld [vmem:[%s263 + $0x100] sm:$0xf]
        %v365 = vld [vmem:[%s263 + $0x104] sm:$0xf]
        %v366 = vld [vmem:[%s263 + $0x108] sm:$0xf]
        %v367 = vld [vmem:[%s263 + $0x10c] sm:$0xf]
        %v368 = vld [vmem:[%s263 + $0x110] sm:$0xf]
        %v369 = vld [vmem:[%s263 + $0x114] sm:$0xf]
        %v370 = vld [vmem:[%s263 + $0x118] sm:$0xf]
        %v371 = vld [vmem:[%s263 + $0x11c] sm:$0xf]
        %v372 = vld [vmem:[%s263 + $0x120] sm:$0xf]
        %v373 = vld [vmem:[%s263 + $0x124] sm:$0xf]
        %v374 = vld [vmem:[%s263 + $0x128] sm:$0xf]
        %v375 = vld [vmem:[%s263 + $0x12c] sm:$0xf]
        %v376 = vld [vmem:[%s263 + $0x130] sm:$0xf]
        %v377 = vld [vmem:[%s263 + $0x134] sm:$0xf]
        %v378 = vld [vmem:[%s263 + $0x138] sm:$0xf]
        %v379 = vld [vmem:[%s263 + $0x13c] sm:$0xf]
        %v404 = vunpack.c.l.b16 %v276
        %v405 = vunpack.c.h.b16 %v276
        %v406 = vunpack.c.l.b16 %v277
        %v407 = vunpack.c.h.b16 %v277
        %v408 = vunpack.c.l.b16 %v278
        %v409 = vunpack.c.l.b16 %v279
        %v410 = vunpack.c.h.b16 %v279
        %v411 = vunpack.c.l.b16 %v280
        %v412 = vunpack.c.h.b16 %v280
        %v413 = vunpack.c.l.b16 %v281
        %v414 = vunpack.c.l.b16 %v282
        %v415 = vunpack.c.h.b16 %v282
        %v416 = vunpack.c.l.b16 %v283
        %v417 = vunpack.c.h.b16 %v283
        %v418 = vunpack.c.l.b16 %v284
        %v419 = vunpack.c.l.b16 %v285
        %v420 = vunpack.c.h.b16 %v285
        %v421 = vunpack.c.l.b16 %v286
        %v422 = vunpack.c.h.b16 %v286
        %v423 = vunpack.c.l.b16 %v287
        %v424 = vunpack.c.l.b16 %v288
        %v425 = vunpack.c.h.b16 %v288
        %v426 = vunpack.c.l.b16 %v289
        %v427 = vunpack.c.h.b16 %v289
        %v428 = vunpack.c.l.b16 %v290
        %v429 = vunpack.c.l.b16 %v291
        %v430 = vunpack.c.h.b16 %v291
        %v431 = vunpack.c.l.b16 %v292
        %v432 = vunpack.c.h.b16 %v292
        %v433 = vunpack.c.l.b16 %v293
        %v434 = vunpack.c.l.b16 %v294
        %v435 = vunpack.c.h.b16 %v294
        %v436 = vunpack.c.l.b16 %v295
        %v437 = vunpack.c.h.b16 %v295
        %v438 = vunpack.c.l.b16 %v296
        %v439 = vunpack.c.l.b16 %v297
        %v440 = vunpack.c.h.b16 %v297
        %v441 = vunpack.c.l.b16 %v298
        %v442 = vunpack.c.h.b16 %v298
        %v443 = vunpack.c.l.b16 %v299
        %v444 = vpack.c.b16 %v409, %v404
        %v445 = vpack.c.b16 %v410, %v405
        %v446 = vpack.c.b16 %v411, %v406
        %v447 = vpack.c.b16 %v412, %v407
        %v448 = vpack.c.b16 %v413, %v408
        %v449 = vpack.c.b16 %v419, %v414
        %v450 = vpack.c.b16 %v420, %v415
        %v451 = vpack.c.b16 %v421, %v416
        %v452 = vpack.c.b16 %v422, %v417
        %v453 = vpack.c.b16 %v423, %v418
        %v454 = vpack.c.b16 %v429, %v424
        %v455 = vpack.c.b16 %v430, %v425
        %v456 = vpack.c.b16 %v431, %v426
        %v457 = vpack.c.b16 %v432, %v427
        %v458 = vpack.c.b16 %v433, %v428
        %v459 = vpack.c.b16 %v439, %v434
        %v460 = vpack.c.b16 %v440, %v435
        %v461 = vpack.c.b16 %v441, %v436
        %v462 = vpack.c.b16 %v442, %v437
        %v463 = vpack.c.b16 %v443, %v438
        %v564 = vunpack.c.l.b16 %v300
        %v565 = vunpack.c.l.b16 %v301
        %v566 = vunpack.c.l.b16 %v302
        %v567 = vunpack.c.l.b16 %v303
        %v568 = vunpack.c.l.b16 %v304
        %v569 = vunpack.c.l.b16 %v305
        %v570 = vunpack.c.l.b16 %v306
        %v571 = vunpack.c.l.b16 %v307
        %v572 = vunpack.c.l.b16 %v308
        %v573 = vunpack.c.l.b16 %v309
        %v574 = vunpack.c.l.b16 %v310
        %v575 = vunpack.c.l.b16 %v311
        %v576 = vunpack.c.l.b16 %v312
        %v577 = vunpack.c.l.b16 %v313
        %v578 = vunpack.c.l.b16 %v314
        %v579 = vunpack.c.l.b16 %v315
        %v580 = vunpack.c.l.b16 %v316
        %v581 = vunpack.c.l.b16 %v317
        %v582 = vunpack.c.l.b16 %v318
        %v583 = vunpack.c.l.b16 %v319
        %v584 = vunpack.c.l.b16 %v320
        %v585 = vunpack.c.l.b16 %v321
        %v586 = vunpack.c.l.b16 %v322
        %v587 = vunpack.c.l.b16 %v323
        %v588 = vunpack.c.l.b16 %v324
        %v589 = vunpack.c.l.b16 %v325
        %v590 = vunpack.c.l.b16 %v326
        %v591 = vunpack.c.l.b16 %v327
        %v592 = vunpack.c.l.b16 %v328
        %v593 = vunpack.c.l.b16 %v329
        %v594 = vunpack.c.l.b16 %v330
        %v595 = vunpack.c.l.b16 %v331
        %v596 = vunpack.c.l.b16 %v332
        %v597 = vunpack.c.l.b16 %v333
        %v598 = vunpack.c.l.b16 %v334
        %v599 = vunpack.c.l.b16 %v335
        %v600 = vunpack.c.l.b16 %v336
        %v601 = vunpack.c.l.b16 %v337
        %v602 = vunpack.c.l.b16 %v338
        %v603 = vunpack.c.l.b16 %v339
        %v604 = vunpack.c.l.b16 %v340
        %v605 = vunpack.c.l.b16 %v341
        %v606 = vunpack.c.l.b16 %v342
        %v607 = vunpack.c.l.b16 %v343
        %v608 = vunpack.c.l.b16 %v344
        %v609 = vunpack.c.l.b16 %v345
        %v610 = vunpack.c.l.b16 %v346
        %v611 = vunpack.c.l.b16 %v347
        %v612 = vunpack.c.l.b16 %v348
        %v613 = vunpack.c.l.b16 %v349
        %v614 = vunpack.c.l.b16 %v350
        %v615 = vunpack.c.l.b16 %v351
        %v616 = vunpack.c.l.b16 %v352
        %v617 = vunpack.c.l.b16 %v353
        %v618 = vunpack.c.l.b16 %v354
        %v619 = vunpack.c.l.b16 %v355
        %v620 = vunpack.c.l.b16 %v356
        %v621 = vunpack.c.l.b16 %v357
        %v622 = vunpack.c.l.b16 %v358
        %v623 = vunpack.c.l.b16 %v359
        %v624 = vunpack.c.l.b16 %v360
        %v625 = vunpack.c.l.b16 %v361
        %v626 = vunpack.c.l.b16 %v362
        %v627 = vunpack.c.l.b16 %v363
        %v628 = vunpack.c.l.b16 %v364
        %v629 = vunpack.c.l.b16 %v365
        %v630 = vunpack.c.l.b16 %v366
        %v631 = vunpack.c.l.b16 %v367
        %v632 = vunpack.c.l.b16 %v368
        %v633 = vunpack.c.l.b16 %v369
        %v634 = vunpack.c.l.b16 %v370
        %v635 = vunpack.c.l.b16 %v371
        %v636 = vunpack.c.l.b16 %v372
        %v637 = vunpack.c.l.b16 %v373
        %v638 = vunpack.c.l.b16 %v374
        %v639 = vunpack.c.l.b16 %v375
        %v640 = vunpack.c.l.b16 %v376
        %v641 = vunpack.c.l.b16 %v377
        %v642 = vunpack.c.l.b16 %v378
        %v643 = vunpack.c.l.b16 %v379
        %v644 = vpack.c.b16 %v565, %v564
        %v645 = vpack.c.b16 %v567, %v566
        %v646 = vpack.c.b16 %v569, %v568
        %v647 = vpack.c.b16 %v571, %v570
        %v648 = vpack.c.b16 %v573, %v572
        %v649 = vpack.c.b16 %v575, %v574
        %v650 = vpack.c.b16 %v577, %v576
        %v651 = vpack.c.b16 %v579, %v578
        %v652 = vpack.c.b16 %v581, %v580
        %v653 = vpack.c.b16 %v583, %v582
        %v654 = vpack.c.b16 %v585, %v584
        %v655 = vpack.c.b16 %v587, %v586
        %v656 = vpack.c.b16 %v589, %v588
        %v657 = vpack.c.b16 %v591, %v590
        %v658 = vpack.c.b16 %v593, %v592
        %v659 = vpack.c.b16 %v595, %v594
        %v660 = vpack.c.b16 %v597, %v596
        %v661 = vpack.c.b16 %v599, %v598
        %v662 = vpack.c.b16 %v601, %v600
        %v663 = vpack.c.b16 %v603, %v602
        %v664 = vpack.c.b16 %v605, %v604
        %v665 = vpack.c.b16 %v607, %v606
        %v666 = vpack.c.b16 %v609, %v608
        %v667 = vpack.c.b16 %v611, %v610
        %v668 = vpack.c.b16 %v613, %v612
        %v669 = vpack.c.b16 %v615, %v614
        %v670 = vpack.c.b16 %v617, %v616
        %v671 = vpack.c.b16 %v619, %v618
        %v672 = vpack.c.b16 %v621, %v620
        %v673 = vpack.c.b16 %v623, %v622
        %v674 = vpack.c.b16 %v625, %v624
        %v675 = vpack.c.b16 %v627, %v626
        %v676 = vpack.c.b16 %v629, %v628
        %v677 = vpack.c.b16 %v631, %v630
        %v678 = vpack.c.b16 %v633, %v632
        %v679 = vpack.c.b16 %v635, %v634
        %v680 = vpack.c.b16 %v637, %v636
        %v681 = vpack.c.b16 %v639, %v638
        %v682 = vpack.c.b16 %v641, %v640
        %v683 = vpack.c.b16 %v643, %v642
        %724 = vmatpush.bf16.msra.mxu0 %v651
        %725 = vmatpush.bf16.msra.mxu0 %v650
        %726 = vmatpush.bf16.msra.mxu0 %v649
        %727 = vmatpush.bf16.msra.mxu0 %v648
        %728 = vmatpush.bf16.msra.mxu0 %v647
        %729 = vmatpush.bf16.msra.mxu0 %v646
        %730 = vmatpush.bf16.msra.mxu0 %v645
        %731 = vmatpush.bf16.msra.mxu0 %v644
        %732 = vmatmul.bf16.gmra.mxu0 %v444
        %v733 = vpop.f32.mrf.mxu0
        %v734 = vadd.f32 0.0, %v733
        %v735 = vpop.f32.mrf.mxu0
        %v736 = vadd.f32 0.0, %v735
        %737 = vmatmul.bf16.gmra.mxu0 %v449
        %v738 = vpop.f32.mrf.mxu0
        %v739 = vadd.f32 0.0, %v738
        %v740 = vpop.f32.mrf.mxu0
        %v741 = vadd.f32 0.0, %v740
        %742 = vmatmul.bf16.gmra.mxu0 %v454
        %v743 = vpop.f32.mrf.mxu0
        %v744 = vadd.f32 0.0, %v743
        %v745 = vpop.f32.mrf.mxu0
        %v746 = vadd.f32 0.0, %v745
        %747 = vmatmul.bf16.gmra.mxu0 %v459
        %v748 = vpop.f32.mrf.mxu0
        %v749 = vadd.f32 0.0, %v748
        %v750 = vpop.f32.mrf.mxu0
        %v751 = vadd.f32 0.0, %v750
        %752 = vdwg.mxu0
        %753 = vmatpush.bf16.msra.mxu0 %v659
        %754 = vmatpush.bf16.msra.mxu0 %v658
        %755 = vmatpush.bf16.msra.mxu0 %v657
        %756 = vmatpush.bf16.msra.mxu0 %v656
        %757 = vmatpush.bf16.msra.mxu0 %v655
        %758 = vmatpush.bf16.msra.mxu0 %v654
        %759 = vmatpush.bf16.msra.mxu0 %v653
        %760 = vmatpush.bf16.msra.mxu0 %v652
        %761 = vmatmul.bf16.gmra.mxu0 %v445
        %v762 = vpop.f32.mrf.mxu0
        %v763 = vadd.f32 %v734, %v762
        %v764 = vpop.f32.mrf.mxu0
        %v765 = vadd.f32 %v736, %v764
        %766 = vmatmul.bf16.gmra.mxu0 %v450
        %v767 = vpop.f32.mrf.mxu0
        %v768 = vadd.f32 %v739, %v767
        %v769 = vpop.f32.mrf.mxu0
        %v770 = vadd.f32 %v741, %v769
        %771 = vmatmul.bf16.gmra.mxu0 %v455
        %v772 = vpop.f32.mrf.mxu0
        %v773 = vadd.f32 %v744, %v772
        %v774 = vpop.f32.mrf.mxu0
        %v775 = vadd.f32 %v746, %v774
        %776 = vmatmul.bf16.gmra.mxu0 %v460
        %v777 = vpop.f32.mrf.mxu0
        %v778 = vadd.f32 %v749, %v777
        %v779 = vpop.f32.mrf.mxu0
        %v780 = vadd.f32 %v751, %v779
        %781 = vdwg.mxu0
        %782 = vmatpush.bf16.msra.mxu0 %v667
        %783 = vmatpush.bf16.msra.mxu0 %v666
        %784 = vmatpush.bf16.msra.mxu0 %v665
        %785 = vmatpush.bf16.msra.mxu0 %v664
        %786 = vmatpush.bf16.msra.mxu0 %v663
        %787 = vmatpush.bf16.msra.mxu0 %v662
        %788 = vmatpush.bf16.msra.mxu0 %v661
        %789 = vmatpush.bf16.msra.mxu0 %v660
        %790 = vmatmul.bf16.gmra.mxu0 %v446
        %v791 = vpop.f32.mrf.mxu0
        %v792 = vadd.f32 %v763, %v791
        %v793 = vpop.f32.mrf.mxu0
        %v794 = vadd.f32 %v765, %v793
        %795 = vmatmul.bf16.gmra.mxu0 %v451
        %v796 = vpop.f32.mrf.mxu0
        %v797 = vadd.f32 %v768, %v796
        %v798 = vpop.f32.mrf.mxu0
        %v799 = vadd.f32 %v770, %v798
        %800 = vmatmul.bf16.gmra.mxu0 %v456
        %v801 = vpop.f32.mrf.mxu0
        %v802 = vadd.f32 %v773, %v801
        %v803 = vpop.f32.mrf.mxu0
        %v804 = vadd.f32 %v775, %v803
        %805 = vmatmul.bf16.gmra.mxu0 %v461
        %v806 = vpop.f32.mrf.mxu0
        %v807 = vadd.f32 %v778, %v806
        %v808 = vpop.f32.mrf.mxu0
        %v809 = vadd.f32 %v780, %v808
        %810 = vdwg.mxu0
        %811 = vmatpush.bf16.msra.mxu0 %v675
        %812 = vmatpush.bf16.msra.mxu0 %v674
        %813 = vmatpush.bf16.msra.mxu0 %v673
        %814 = vmatpush.bf16.msra.mxu0 %v672
        %815 = vmatpush.bf16.msra.mxu0 %v671
        %816 = vmatpush.bf16.msra.mxu0 %v670
        %817 = vmatpush.bf16.msra.mxu0 %v669
        %818 = vmatpush.bf16.msra.mxu0 %v668
        %819 = vmatmul.bf16.gmra.mxu0 %v447
        %v820 = vpop.f32.mrf.mxu0
        %v821 = vadd.f32 %v792, %v820
        %v822 = vpop.f32.mrf.mxu0
        %v823 = vadd.f32 %v794, %v822
        %824 = vmatmul.bf16.gmra.mxu0 %v452
        %v825 = vpop.f32.mrf.mxu0
        %v826 = vadd.f32 %v797, %v825
        %v827 = vpop.f32.mrf.mxu0
        %v828 = vadd.f32 %v799, %v827
        %829 = vmatmul.bf16.gmra.mxu0 %v457
        %v830 = vpop.f32.mrf.mxu0
        %v831 = vadd.f32 %v802, %v830
        %v832 = vpop.f32.mrf.mxu0
        %v833 = vadd.f32 %v804, %v832
        %834 = vmatmul.bf16.gmra.mxu0 %v462
        %v835 = vpop.f32.mrf.mxu0
        %v836 = vadd.f32 %v807, %v835
        %v837 = vpop.f32.mrf.mxu0
        %v838 = vadd.f32 %v809, %v837
        %839 = vdwg.mxu0
        %840 = vmatpush.bf16.msra.mxu0 %v683
        %841 = vmatpush.bf16.msra.mxu0 %v682
        %842 = vmatpush.bf16.msra.mxu0 %v681
        %843 = vmatpush.bf16.msra.mxu0 %v680
        %844 = vmatpush.bf16.msra.mxu0 %v679
        %845 = vmatpush.bf16.msra.mxu0 %v678
        %846 = vmatpush.bf16.msra.mxu0 %v677
        %847 = vmatpush.bf16.msra.mxu0 %v676
        %848 = vmatmul.bf16.gmra.mxu0 %v448
        %v849 = vpop.f32.mrf.mxu0
        %v850 = vadd.f32 %v821, %v849
        %v851 = vpop.f32.mrf.mxu0
        %v852 = vadd.f32 %v823, %v851
        %853 = vmatmul.bf16.gmra.mxu0 %v453
        %v854 = vpop.f32.mrf.mxu0
        %v855 = vadd.f32 %v826, %v854
        %v856 = vpop.f32.mrf.mxu0
        %v857 = vadd.f32 %v828, %v856
        %858 = vmatmul.bf16.gmra.mxu0 %v458
        %v859 = vpop.f32.mrf.mxu0
        %v860 = vadd.f32 %v831, %v859
        %v861 = vpop.f32.mrf.mxu0
        %v862 = vadd.f32 %v833, %v861
        %863 = vmatmul.bf16.gmra.mxu0 %v463
        %v864 = vpop.f32.mrf.mxu0
        %v865 = vadd.f32 %v836, %v864
        %v866 = vpop.f32.mrf.mxu0
        %v867 = vadd.f32 %v838, %v866
        %868 = vdwg.mxu0
        %v869 = vld [vmem:[%s266] sm:$0x1]
        %v871 = vperm.slane %v869, 0
        %v873 = vmul.f32 %v850, %v871
        %v874 = vmul.f32 %v852, %v871
        %v875 = vmul.f32 %v855, %v871
        %v876 = vmul.f32 %v857, %v871
        %v877 = vmul.f32 %v860, %v871
        %v878 = vmul.f32 %v862, %v871
        %v879 = vmul.f32 %v865, %v871
        %v880 = vmul.f32 %v867, %v871
        %v881 = vld [vmem:[#allocation2] sm:$0x1]
        %v883 = vperm.slane %v881, 0
        %v885 = vadd.f32 %v873, %v883
        %v886 = vadd.f32 %v874, %v883
        %v887 = vadd.f32 %v875, %v883
        %v888 = vadd.f32 %v876, %v883
        %v889 = vadd.f32 %v877, %v883
        %v890 = vadd.f32 %v878, %v883
        %v891 = vadd.f32 %v879, %v883
        %v892 = vadd.f32 %v880, %v883
        %v893 = vmax.f32 %v885, 0.0
        %v894 = vmax.f32 %v886, 0.0
        %v895 = vmax.f32 %v887, 0.0
        %v896 = vmax.f32 %v888, 0.0
        %v897 = vmax.f32 %v889, 0.0
        %v898 = vmax.f32 %v890, 0.0
        %v899 = vmax.f32 %v891, 0.0
        %v900 = vmax.f32 %v892, 0.0
        %v901 = vpack.c.bf16 %v893, %v893
        %v902 = vpack.c.bf16 %v894, %v894
        %v903 = vpack.c.bf16 %v895, %v895
        %v904 = vpack.c.bf16 %v896, %v896
        %v905 = vpack.c.bf16 %v897, %v897
        %v906 = vpack.c.bf16 %v898, %v898
        %v907 = vpack.c.bf16 %v899, %v899
        %v908 = vpack.c.bf16 %v900, %v900
        %909 = vst [vmem:[%s274] sm:$0xf] %v901
        %910 = vst [vmem:[%s274 + $0x4] sm:$0xf] %v902
        %911 = vst [vmem:[%s274 + $0x8] sm:$0xf] %v903
        %912 = vst [vmem:[%s274 + $0xc] sm:$0xf] %v904
        %913 = vst [vmem:[%s274 + $0x10] sm:$0xf] %v905
        %914 = vst [vmem:[%s274 + $0x14] sm:$0xf] %v906
        %915 = vst [vmem:[%s274 + $0x18] sm:$0xf] %v907
        %916 = vst [vmem:[%s274 + $0x1c] sm:$0xf] %v908
        %s917 = smul.u32 8, %s20
        %p918 = scmp.lt.s32.totalorder %s917, 15
        %s919 = scalar_select %p918, %s917, 15
        %p920 = scmp.lt.s32.totalorder %s21, 0
        %s921 = scalar_select %p920, %s21, 0
        %s922 = sadd.s32 %s921, %s919
        %s923 = smul.addr %s922, 4
        %s924 = scalar_lea.vmem %s4, %s923
        // Predicated region
        $region41: #{forward.18} parent=35 // pred_check
          %p925 = pneg %p152
        $region42: #{forward.18} parent=35 // pred_check_branch
          %927 = sbr.rel (%p925) target = $region44
        $region43: #{forward.18} parent=35 // pred_region
          %s928 = smul.u32 8, %s20
        $region44: #{forward.18} parent=35 // pred_fallthru
          _
      $region36: #{forward.18} parent=5 // pred_fallthru
        _
      %p929 = scmp.le.s32.totalorder 2, %s11
      // Predicated region
      $region45: #{forward.18} parent=5 // pred_check
        %p930 = pneg %p929
      $region46: #{forward.18} parent=5 // pred_check_branch
        %932 = sbr.rel (%p930) target = $region48
      $region47: #{forward.18} parent=5 // pred_region
        %s933 = ssub.s32 %s11, 2
        // Predicated region
        $region49: #{forward.18} parent=47 // pred_check
          %p934 = pneg %p158
        $region50: #{forward.18} parent=47 // pred_check_branch
          %936 = sbr.rel (%p934) target = $region52
        $region51: #{forward.18} parent=47 // pred_region
          %s937 = smul.u32 8, %s22
          %p938 = scmp.lt.s32.totalorder %s937, 15
          %s939 = scalar_select %p938, %s937, 15
          %p940 = scmp.lt.s32.totalorder %s23, 0
          %s941 = scalar_select %p940, %s23, 0
          %s942 = sadd.s32 %s941, %s939
          %s943 = smul.addr %s942, 4
          %s944 = scalar_lea.vmem %s4, %s943
        $region52: #{forward.18} parent=47 // pred_fallthru
          _
      $region48: #{forward.18} parent=5 // pred_fallthru
        _
    $region6: #{forward.18} parent=1 // loop_footer
      %s15 = sadd.s32 1, %s11
    $region7: #{forward.18} parent=1 // loop_footer_branch
      %10 = sbr.rel target = $region3
    $region8: #{forward.18} parent=1 // loop_exit
      _
    %945 = vsyncpa [#allocation3], 1
    %s946 = scalar_lea.sflag [#allocation3], 1
    %947 = vsyncpa %s946, 1

// kernel: forward.17
$region0: #{forward.17}
  #allocation0 [shape = 'u32[]', space=smem, size = 0x4, offset = 0x4, fixed_abs, tag = 'smem constant byte address 0x4 - core index']
  #allocation1 [shape = 'u32[72,128]{1,0:T(1,128)}', space=vmem, size = 0x9000, scoped, tag = 'internal scratch']
  %s0 = inlined_call_operand.vmem [shape: bf16[128,128], index: 0, kind: input, shape index: {}]
  %s1 = inlined_call_operand.vmem [shape: bf16[128,128], index: 1, kind: input, shape index: {}]
  %s2 = inlined_call_operand.hbm [shape: f32[1,128], index: 2, kind: input, shape index: {}]
  %s3 = inlined_call_operand.hbm [shape: f32[1,128], index: 3, kind: input, shape index: {}]
  %s4 = inlined_call_operand.vmem [shape: bf16[128,128], index: 4, kind: output, shape index: {}]
  %s5 = sld [smem:[#allocation0]]
  $region57: #{forward.17} parent=0
    _
  %s7 = ssub.s32 1, %s5
  %s8 = scalar_select 0, %s7, %s5
  $region1: #{forward.17} parent=0
    #allocation2 [shape = 'u8[512]{0}', space=vmem, size = 0x400, scoped, tag = 'input window, operand 2, single buffered']
    #allocation3 [shape = 's32[2]{0}', space=sflag, size = 0x8, scoped, tag = 'scoped memory for forward.17']
    #allocation4 [shape = 'u8[512]{0}', space=vmem, size = 0x400, scoped, tag = 'input window, operand 3, single buffered']
    #allocation5 [shape = 's32[1]{0}', space=sflag, size = 0x4, scoped, tag = 'scoped memory for forward.17']
    %9 = vsyncpa [#allocation3], 0
    %10 = vsyncpa [#allocation5], 0
    loop: start=0, step=1, limit=4
    $region2: #{forward.17} parent=1 // loop_pre_header
      _
    $region3: #{forward.17} parent=1 // loop_header
      %s12 = sphi 0, %s16
      %p13 = scmp.ge.s32.totalorder %s12, 4
      %s19 = sphi 0, %s31
      %s20 = sphi 0, %s27
      %s21 = sphi 0, %s19
      %s22 = sphi 0, %s20
      %s23 = sphi 0, %s21
      %s24 = sphi 0, %s22
      %s34 = sphi 0, %s36
      %s37 = sphi 0, %s34
      %s38 = sphi 0, %s37
      %s54 = sphi 0, %s38
      %s60 = sphi 0, %s62
      %s63 = sphi 0, %s60
      %s64 = sphi 0, %s63
      %s80 = sphi 0, %s64
      %s86 = sphi 0, %s88
      %s89 = sphi 0, %s86
      %s90 = sphi 0, %s89
      %s106 = sphi 0, %s90
      %s112 = sphi 0, %s114
      %s115 = sphi 0, %s112
      %s116 = sphi 0, %s115
      %s132 = sphi 0, %s116
      %s140 = sphi 0, %s142
      %s143 = sphi 0, %s140
      %s144 = sphi 0, %s143
      %s160 = sphi 0, %s144
    $region4: #{forward.17} parent=1 // loop_header_branch
      %15 = sbr.rel (%p13) target = $region8
    $region5: #{forward.17} parent=1 // loop_body
      %s17 = ssub.s32 %s12, 1
      %s18 = ssub.s32 %s12, 2
      %s25 = sadd.s32 1, %s20
      %p26 = scmp.ge.s32.totalorder %s25, 1
      %s27 = scalar_select %p26, 0, %s25
      %s28 = sadd.s32 1, %s19
      %s29 = scalar_select %p26, %s28, %s19
      %p30 = scmp.ge.s32.totalorder %s29, 2
      %s31 = scalar_select %p30, 0, %s29
      %s32 = ssub.s32 %s19, %s31
      %p33 = scmp.eq.s32.totalorder %s32, 0
      %s35 = sadd.s32 %s34, 1
      %s36 = scalar_select %p33, %s34, %s35
      %p39 = pneg %p33
      %p40 = scmp.eq.s32.totalorder %s12, 1
      %p41 = por %p39, %p40
      %p42 = scmp.ne.s32.totalorder %s34, %s37
      %p43 = scmp.eq.s32.totalorder %s12, 0
      %p44 = por %p42, %p43
      %p45 = scmp.ne.s32.totalorder %s34, %s37
      %p46 = scmp.eq.s32.totalorder %s17, 1
      %p47 = por %p45, %p46
      %p48 = scmp.ne.s32.totalorder %s37, %s38
      %p49 = scmp.eq.s32.totalorder %s17, 0
      %p50 = por %p48, %p49
      %p51 = scmp.ne.s32.totalorder %s37, %s38
      %p52 = scmp.eq.s32.totalorder %s18, 1
      %p53 = por %p51, %p52
      %p55 = scmp.ne.s32.totalorder %s38, %s54
      %p56 = scmp.eq.s32.totalorder %s18, 0
      %p57 = por %p55, %p56
      %s58 = ssub.s32 %s20, %s27
      %p59 = scmp.eq.s32.totalorder %s58, 0
      %s61 = sadd.s32 %s60, 1
      %s62 = scalar_select %p59, %s60, %s61
      %p65 = pneg %p59
      %p66 = scmp.eq.s32.totalorder %s12, 1
      %p67 = por %p65, %p66
      %p68 = scmp.ne.s32.totalorder %s60, %s63
      %p69 = scmp.eq.s32.totalorder %s12, 0
      %p70 = por %p68, %p69
      %p71 = scmp.ne.s32.totalorder %s60, %s63
      %p72 = scmp.eq.s32.totalorder %s17, 1
      %p73 = por %p71, %p72
      %p74 = scmp.ne.s32.totalorder %s63, %s64
      %p75 = scmp.eq.s32.totalorder %s17, 0
      %p76 = por %p74, %p75
      %p77 = scmp.ne.s32.totalorder %s63, %s64
      %p78 = scmp.eq.s32.totalorder %s18, 1
      %p79 = por %p77, %p78
      %p81 = scmp.ne.s32.totalorder %s64, %s80
      %p82 = scmp.eq.s32.totalorder %s18, 0
      %p83 = por %p81, %p82
      %s84 = ssub.s32 %s20, %s27
      %p85 = scmp.eq.s32.totalorder %s84, 0
      %s87 = sadd.s32 %s86, 1
      %s88 = scalar_select %p85, %s86, %s87
      %p91 = pneg %p85
      %p92 = scmp.eq.s32.totalorder %s12, 1
      %p93 = por %p91, %p92
      %p94 = scmp.ne.s32.totalorder %s86, %s89
      %p95 = scmp.eq.s32.totalorder %s12, 0
      %p96 = por %p94, %p95
      %p97 = scmp.ne.s32.totalorder %s86, %s89
      %p98 = scmp.eq.s32.totalorder %s17, 1
      %p99 = por %p97, %p98
      %p100 = scmp.ne.s32.totalorder %s89, %s90
      %p101 = scmp.eq.s32.totalorder %s17, 0
      %p102 = por %p100, %p101
      %p103 = scmp.ne.s32.totalorder %s89, %s90
      %p104 = scmp.eq.s32.totalorder %s18, 1
      %p105 = por %p103, %p104
      %p107 = scmp.ne.s32.totalorder %s90, %s106
      %p108 = scmp.eq.s32.totalorder %s18, 0
      %p109 = por %p107, %p108
      %s110 = ssub.s32 %s20, %s27
      %p111 = scmp.eq.s32.totalorder %s110, 0
      %s113 = sadd.s32 %s112, 1
      %s114 = scalar_select %p111, %s112, %s113
      %p117 = pneg %p111
      %p118 = scmp.eq.s32.totalorder %s12, 1
      %p119 = por %p117, %p118
      %p120 = scmp.ne.s32.totalorder %s112, %s115
      %p121 = scmp.eq.s32.totalorder %s12, 0
      %p122 = por %p120, %p121
      %p123 = scmp.ne.s32.totalorder %s112, %s115
      %p124 = scmp.eq.s32.totalorder %s17, 1
      %p125 = por %p123, %p124
      %p126 = scmp.ne.s32.totalorder %s115, %s116
      %p127 = scmp.eq.s32.totalorder %s17, 0
      %p128 = por %p126, %p127
      %p129 = scmp.ne.s32.totalorder %s115, %s116
      %p130 = scmp.eq.s32.totalorder %s18, 1
      %p131 = por %p129, %p130
      %p133 = scmp.ne.s32.totalorder %s116, %s132
      %p134 = scmp.eq.s32.totalorder %s18, 0
      %p135 = por %p133, %p134
      %s136 = ssub.s32 %s19, %s31
      %s137 = ssub.s32 %s20, %s27
      %s138 = sor.u32 %s136, %s137
      %p139 = scmp.eq.s32.totalorder %s138, 0
      %s141 = sadd.s32 %s140, 1
      %s142 = scalar_select %p139, %s140, %s141
      %p145 = pneg %p139
      %p146 = scmp.eq.s32.totalorder %s12, 1
      %p147 = por %p145, %p146
      %p148 = scmp.ne.s32.totalorder %s140, %s143
      %p149 = scmp.eq.s32.totalorder %s12, 0
      %p150 = por %p148, %p149
      %p151 = scmp.ne.s32.totalorder %s140, %s143
      %p152 = scmp.eq.s32.totalorder %s17, 1
      %p153 = por %p151, %p152
      %p154 = scmp.ne.s32.totalorder %s143, %s144
      %p155 = scmp.eq.s32.totalorder %s17, 0
      %p156 = por %p154, %p155
      %p157 = scmp.ne.s32.totalorder %s143, %s144
      %p158 = scmp.eq.s32.totalorder %s18, 1
      %p159 = por %p157, %p158
      %p161 = scmp.ne.s32.totalorder %s144, %s160
      %p162 = scmp.eq.s32.totalorder %s18, 0
      %p163 = por %p161, %p162
      %p164 = scmp.le.s32.totalorder 1, %s12
      %p165 = scmp.lt.s32.totalorder %s12, 3
      %p166 = pnand %p164, %p165
      %p167 = pneg %p166
      // Predicated region
      $region9: #{forward.17} parent=5 // pred_check
        _
      $region10: #{forward.17} parent=5 // pred_check_branch
        %169 = sbr.rel (%p166) target = $region12
      $region11: #{forward.17} parent=5 // pred_region
        %s170 = ssub.s32 %s12, 1
        // Predicated region
        $region13: #{forward.17} parent=11 // pred_check
          %p171 = pneg %p76
        $region14: #{forward.17} parent=11 // pred_check_branch
          %173 = sbr.rel (%p171) target = $region16
        $region15: #{forward.17} parent=11 // pred_region
          %p174 = scmp.lt.s32.totalorder %s22, 0
          %s175 = scalar_select %p174, %s22, 0
          %s176 = smul.addr %s175, 4
          %s177 = scalar_lea.vmem %s1, %s176
        $region16: #{forward.17} parent=11 // pred_fallthru
          _
        // Predicated region
        $region17: #{forward.17} parent=11 // pred_check
          %p178 = pneg %p102
        $region18: #{forward.17} parent=11 // pred_check_branch
          %180 = sbr.rel (%p178) target = $region20
        $region19: #{forward.17} parent=11 // pred_region
          %182 = vsyncadd [#allocation3], 0
          %s183 = scalar_lea.hbm %s2, %s22
          %s185 = sshll.u32 %s183, 4
          %s186 = int_to_ptr.hbm [resolvable:$true] %s185
          %s187 = sshll.u32 [#allocation2], 4
          %s188 = int_to_ptr.vmem [resolvable:$true] %s187
          %190 = dma.hbm_to_vmem [thread:$0]  %s186, 16, %s188, [#allocation3]
        $region20: #{forward.17} parent=11 // pred_fallthru
          _
        // Predicated region
        $region21: #{forward.17} parent=11 // pred_check
          %p191 = pneg %p128
        $region22: #{forward.17} parent=11 // pred_check_branch
          %193 = sbr.rel (%p191) target = $region24
        $region23: #{forward.17} parent=11 // pred_region
          %195 = vsyncadd [#allocation5], 0
          %s196 = scalar_lea.hbm %s3, %s22
          %s198 = sshll.u32 %s196, 4
          %s199 = int_to_ptr.hbm [resolvable:$true] %s198
          %s200 = sshll.u32 [#allocation4], 4
          %s201 = int_to_ptr.vmem [resolvable:$true] %s200
          %203 = dma.hbm_to_vmem [thread:$0]  %s199, 16, %s201, [#allocation5]
        $region24: #{forward.17} parent=11 // pred_fallthru
          _
      $region12: #{forward.17} parent=5 // pred_fallthru
        _
      %p204 = scmp.lt.s32.totalorder %s12, 2
      // Predicated region
      $region25: #{forward.17} parent=5 // pred_check
        %p205 = pneg %p204
      $region26: #{forward.17} parent=5 // pred_check_branch
        %207 = sbr.rel (%p205) target = $region28
      $region27: #{forward.17} parent=5 // pred_region
        // Predicated region
        $region29: #{forward.17} parent=27 // pred_check
          %p208 = pneg %p44
        $region30: #{forward.17} parent=27 // pred_check_branch
          %210 = sbr.rel (%p208) target = $region32
        $region31: #{forward.17} parent=27 // pred_region
          %s211 = smul.u32 8, %s19
          %p212 = scmp.lt.s32.totalorder %s211, 15
          %s213 = scalar_select %p212, %s211, 15
          %s214 = smul.addr %s213, 4
          %s215 = scalar_lea.vmem %s0, %s214
          %s216 = smul.u32 8, %s19
        $region32: #{forward.17} parent=27 // pred_fallthru
          _
      $region28: #{forward.17} parent=5 // pred_fallthru
        _
      %p217 = scmp.le.s32.totalorder 1, %s12
      %p218 = scmp.lt.s32.totalorder %s12, 3
      %p219 = pnand %p217, %p218
      %p220 = pneg %p219
      // Predicated region
      $region33: #{forward.17} parent=5 // pred_check
        _
      $region34: #{forward.17} parent=5 // pred_check_branch
        %222 = sbr.rel (%p219) target = $region36
      $region35: #{forward.17} parent=5 // pred_region
        %s223 = ssub.s32 %s12, 1
        // Predicated region
        $region37: #{forward.17} parent=35 // pred_check
          %p224 = pneg %p102
        $region38: #{forward.17} parent=35 // pred_check_branch
          %226 = sbr.rel (%p224) target = $region40
        $region39: #{forward.17} parent=35 // pred_region
          %228 = dma.done [#allocation3], 16
        $region40: #{forward.17} parent=35 // pred_fallthru
          _
        // Predicated region
        $region41: #{forward.17} parent=35 // pred_check
          %p229 = pneg %p128
        $region42: #{forward.17} parent=35 // pred_check_branch
          %231 = sbr.rel (%p229) target = $region44
        $region43: #{forward.17} parent=35 // pred_region
          %233 = dma.done [#allocation5], 16
        $region44: #{forward.17} parent=35 // pred_fallthru
          _
        %s234 = smul.u32 8, %s21
        %p235 = scmp.lt.s32.totalorder %s234, 15
        %s236 = scalar_select %p235, %s234, 15
        %s237 = smul.addr %s236, 4
        %s238 = scalar_lea.vmem %s0, %s237
        %p239 = pneg %p50
        %p240 = pneg %p47
        %p241 = scmp.lt.s32.totalorder %s22, 0
        %s242 = scalar_select %p241, %s22, 0
        %s243 = smul.addr %s242, 4
        %s244 = scalar_lea.vmem %s1, %s243
        %p245 = pneg %p76
        %p246 = pneg %p73
        %p247 = pneg %p102
        %p248 = pneg %p99
        %p249 = pneg %p128
        %p250 = pneg %p125
        %p251 = pneg %p156
        %p252 = pneg %p153
        %s253 = smul.u32 8, %s21
        %p254 = scmp.lt.s32.totalorder %s253, 15
        %s255 = scalar_select %p254, %s253, 15
        %p256 = scmp.lt.s32.totalorder %s22, 0
        %s257 = scalar_select %p256, %s22, 0
        %s258 = sadd.s32 %s257, %s255
        %s259 = smul.addr %s258, 4
        %s260 = scalar_lea.vmem %s4, %s259
        %s261 = smul.u32 8, %s21
        %p262 = scmp.lt.s32.totalorder %s261, 15
        %s263 = scalar_select %p262, %s261, 15
        %s264 = smul.addr %s263, 4
        %s265 = scalar_lea.vmem %s0, %s264
        %s266 = smul.u32 8, %s21
        %p267 = scmp.lt.s32.totalorder %s22, 0
        %s268 = scalar_select %p267, %s22, 0
        %s269 = smul.addr %s268, 4
        %s270 = scalar_lea.vmem %s1, %s269
        %s271 = smul.u32 8, %s21
        %p272 = scmp.lt.s32.totalorder %s271, 15
        %s273 = scalar_select %p272, %s271, 15
        %p274 = scmp.lt.s32.totalorder %s22, 0
        %s275 = scalar_select %p274, %s22, 0
        %s276 = sadd.s32 %s275, %s273
        %s277 = smul.addr %s276, 4
        %s278 = scalar_lea.vmem %s4, %s277
        %s279 = smul.u32 8, %s21
        %v280 = vld [vmem:[%s265] sm:$0xf]
        %v281 = vld [vmem:[%s265 + $0x4] sm:$0xf]
        %v282 = vld [vmem:[%s265 + $0x8] sm:$0xf]
        %v283 = vld [vmem:[%s265 + $0xc] sm:$0xf]
        %v284 = vld [vmem:[%s265 + $0x10] sm:$0xf]
        %v285 = vld [vmem:[%s265 + $0x14] sm:$0xf]
        %v286 = vld [vmem:[%s265 + $0x18] sm:$0xf]
        %v287 = vld [vmem:[%s265 + $0x1c] sm:$0xf]
        %v288 = vld [vmem:[%s270] sm:$0xf]
        %v289 = vld [vmem:[%s270 + $0x4] sm:$0xf]
        %v290 = vld [vmem:[%s270 + $0x8] sm:$0xf]
        %v291 = vld [vmem:[%s270 + $0xc] sm:$0xf]
        %v292 = vld [vmem:[%s270 + $0x10] sm:$0xf]
        %v293 = vld [vmem:[%s270 + $0x14] sm:$0xf]
        %v294 = vld [vmem:[%s270 + $0x18] sm:$0xf]
        %v295 = vld [vmem:[%s270 + $0x1c] sm:$0xf]
        %v296 = vld [vmem:[%s270 + $0x20] sm:$0xf]
        %v297 = vld [vmem:[%s270 + $0x24] sm:$0xf]
        %v298 = vld [vmem:[%s270 + $0x28] sm:$0xf]
        %v299 = vld [vmem:[%s270 + $0x2c] sm:$0xf]
        %v300 = vld [vmem:[%s270 + $0x30] sm:$0xf]
        %v301 = vld [vmem:[%s270 + $0x34] sm:$0xf]
        %v302 = vld [vmem:[%s270 + $0x38] sm:$0xf]
        %v303 = vld [vmem:[%s270 + $0x3c] sm:$0xf]
        %v312 = vunpack.c.l.b16 %v280
        %v313 = vunpack.c.l.b16 %v281
        %v314 = vunpack.c.l.b16 %v282
        %v315 = vunpack.c.l.b16 %v283
        %v316 = vunpack.c.l.b16 %v284
        %v317 = vunpack.c.l.b16 %v285
        %v318 = vunpack.c.l.b16 %v286
        %v319 = vunpack.c.l.b16 %v287
        %v320 = vpack.c.b16 %v313, %v312
        %v321 = vpack.c.b16 %v315, %v314
        %v322 = vpack.c.b16 %v317, %v316
        %v323 = vpack.c.b16 %v319, %v318
        %v344 = vunpack.c.l.b16 %v288
        %v345 = vunpack.c.l.b16 %v289
        %v346 = vunpack.c.l.b16 %v290
        %v347 = vunpack.c.l.b16 %v291
        %v348 = vunpack.c.l.b16 %v292
        %v349 = vunpack.c.l.b16 %v293
        %v350 = vunpack.c.l.b16 %v294
        %v351 = vunpack.c.l.b16 %v295
        %v352 = vunpack.c.l.b16 %v296
        %v353 = vunpack.c.l.b16 %v297
        %v354 = vunpack.c.l.b16 %v298
        %v355 = vunpack.c.l.b16 %v299
        %v356 = vunpack.c.l.b16 %v300
        %v357 = vunpack.c.l.b16 %v301
        %v358 = vunpack.c.l.b16 %v302
        %v359 = vunpack.c.l.b16 %v303
        %v360 = vpack.c.b16 %v345, %v344
        %v361 = vpack.c.b16 %v347, %v346
        %v362 = vpack.c.b16 %v349, %v348
        %v363 = vpack.c.b16 %v351, %v350
        %v364 = vpack.c.b16 %v353, %v352
        %v365 = vpack.c.b16 %v355, %v354
        %v366 = vpack.c.b16 %v357, %v356
        %v367 = vpack.c.b16 %v359, %v358
        %376 = vmatpush.bf16.msra.mxu0 %v367
        %377 = vmatpush.bf16.msra.mxu0 %v366
        %378 = vmatpush.bf16.msra.mxu0 %v365
        %379 = vmatpush.bf16.msra.mxu0 %v364
        %380 = vmatpush.bf16.msra.mxu0 %v363
        %381 = vmatpush.bf16.msra.mxu0 %v362
        %382 = vmatpush.bf16.msra.mxu0 %v361
        %383 = vmatpush.bf16.msra.mxu0 %v360
        %384 = vmatmul.bf16.gmra.mxu0 %v320
        %v385 = vpop.f32.mrf.mxu0
        %v386 = vadd.f32 0.0, %v385
        %v387 = vpop.f32.mrf.mxu0
        %v388 = vadd.f32 0.0, %v387
        %389 = vmatmul.bf16.gmra.mxu0 %v321
        %v390 = vpop.f32.mrf.mxu0
        %v391 = vadd.f32 0.0, %v390
        %v392 = vpop.f32.mrf.mxu0
        %v393 = vadd.f32 0.0, %v392
        %394 = vmatmul.bf16.gmra.mxu0 %v322
        %v395 = vpop.f32.mrf.mxu0
        %v396 = vadd.f32 0.0, %v395
        %v397 = vpop.f32.mrf.mxu0
        %v398 = vadd.f32 0.0, %v397
        %399 = vmatmul.bf16.gmra.mxu0 %v323
        %v400 = vpop.f32.mrf.mxu0
        %v401 = vadd.f32 0.0, %v400
        %v402 = vpop.f32.mrf.mxu0
        %v403 = vadd.f32 0.0, %v402
        %404 = vdwg.mxu0
        %v405 = vld [vmem:[#allocation2] sm:$0x1]
        %v407 = vperm.slane %v405, 0
        %v409 = vmul.f32 %v386, %v407
        %v410 = vmul.f32 %v388, %v407
        %v411 = vmul.f32 %v391, %v407
        %v412 = vmul.f32 %v393, %v407
        %v413 = vmul.f32 %v396, %v407
        %v414 = vmul.f32 %v398, %v407
        %v415 = vmul.f32 %v401, %v407
        %v416 = vmul.f32 %v403, %v407
        %v417 = vld [vmem:[#allocation4] sm:$0x1]
        %v419 = vperm.slane %v417, 0
        %v421 = vadd.f32 %v409, %v419
        %v422 = vadd.f32 %v410, %v419
        %v423 = vadd.f32 %v411, %v419
        %v424 = vadd.f32 %v412, %v419
        %v425 = vadd.f32 %v413, %v419
        %v426 = vadd.f32 %v414, %v419
        %v427 = vadd.f32 %v415, %v419
        %v428 = vadd.f32 %v416, %v419
        %v429 = vpack.c.bf16 %v421, %v421
        %v430 = vpack.c.bf16 %v422, %v422
        %v431 = vpack.c.bf16 %v423, %v423
        %v432 = vpack.c.bf16 %v424, %v424
        %v433 = vpack.c.bf16 %v425, %v425
        %v434 = vpack.c.bf16 %v426, %v426
        %v435 = vpack.c.bf16 %v427, %v427
        %v436 = vpack.c.bf16 %v428, %v428
        %437 = vst [vmem:[%s278] sm:$0xf] %v429
        %438 = vst [vmem:[%s278 + $0x4] sm:$0xf] %v430
        %439 = vst [vmem:[%s278 + $0x8] sm:$0xf] %v431
        %440 = vst [vmem:[%s278 + $0xc] sm:$0xf] %v432
        %441 = vst [vmem:[%s278 + $0x10] sm:$0xf] %v433
        %442 = vst [vmem:[%s278 + $0x14] sm:$0xf] %v434
        %443 = vst [vmem:[%s278 + $0x18] sm:$0xf] %v435
        %444 = vst [vmem:[%s278 + $0x1c] sm:$0xf] %v436
        %s445 = smul.u32 8, %s21
        %p446 = scmp.lt.s32.totalorder %s445, 15
        %s447 = scalar_select %p446, %s445, 15
        %p448 = scmp.lt.s32.totalorder %s22, 0
        %s449 = scalar_select %p448, %s22, 0
        %s450 = sadd.s32 %s449, %s447
        %s451 = smul.addr %s450, 4
        %s452 = scalar_lea.vmem %s4, %s451
        // Predicated region
        $region45: #{forward.17} parent=35 // pred_check
          %p453 = pneg %p153
        $region46: #{forward.17} parent=35 // pred_check_branch
          %455 = sbr.rel (%p453) target = $region48
        $region47: #{forward.17} parent=35 // pred_region
          %s456 = smul.u32 8, %s21
        $region48: #{forward.17} parent=35 // pred_fallthru
          _
      $region36: #{forward.17} parent=5 // pred_fallthru
        _
      %p457 = scmp.le.s32.totalorder 2, %s12
      // Predicated region
      $region49: #{forward.17} parent=5 // pred_check
        %p458 = pneg %p457
      $region50: #{forward.17} parent=5 // pred_check_branch
        %460 = sbr.rel (%p458) target = $region52
      $region51: #{forward.17} parent=5 // pred_region
        %s461 = ssub.s32 %s12, 2
        // Predicated region
        $region53: #{forward.17} parent=51 // pred_check
          %p462 = pneg %p159
        $region54: #{forward.17} parent=51 // pred_check_branch
          %464 = sbr.rel (%p462) target = $region56
        $region55: #{forward.17} parent=51 // pred_region
          %s465 = smul.u32 8, %s23
          %p466 = scmp.lt.s32.totalorder %s465, 15
          %s467 = scalar_select %p466, %s465, 15
          %p468 = scmp.lt.s32.totalorder %s24, 0
          %s469 = scalar_select %p468, %s24, 0
          %s470 = sadd.s32 %s469, %s467
          %s471 = smul.addr %s470, 4
          %s472 = scalar_lea.vmem %s4, %s471
        $region56: #{forward.17} parent=51 // pred_fallthru
          _
      $region52: #{forward.17} parent=5 // pred_fallthru
        _
    $region6: #{forward.17} parent=1 // loop_footer
      %s16 = sadd.s32 1, %s12
    $region7: #{forward.17} parent=1 // loop_footer_branch
      %11 = sbr.rel target = $region3
    $region8: #{forward.17} parent=1 // loop_exit
      _
    %473 = vsyncpa [#allocation3], 1
    %s474 = scalar_lea.sflag [#allocation3], 1
    %475 = vsyncpa %s474, 1
    %476 = vsyncpa [#allocation5], 1

// kernel: forward.19
$region0: #{forward.19}
  #allocation0 [shape = 'u32[]', space=smem, size = 0x4, offset = 0x4, fixed_abs, tag = 'smem constant byte address 0x4 - core index']
  #allocation1 [shape = 'u32[72,128]{1,0:T(1,128)}', space=vmem, size = 0x9000, scoped, tag = 'internal scratch']
  %s0 = inlined_call_operand.vmem [shape: bf16[128,1152], index: 0, kind: input, shape index: {}]
  %s1 = inlined_call_operand.vmem [shape: bf16[1152,128], index: 1, kind: input, shape index: {}]
  %s2 = inlined_call_operand.vmem [shape: f32[1,128], index: 2, kind: input, shape index: {}]
  %s3 = inlined_call_operand.vmem [shape: f32[1,128], index: 3, kind: input, shape index: {}]
  %s4 = inlined_call_operand.vmem [shape: bf16[128,128], index: 4, kind: input, shape index: {}]
  %s5 = inlined_call_operand.vmem [shape: bf16[128,128], index: 5, kind: output, shape index: {}]
  %s6 = sld [smem:[#allocation0]]
  $region53: #{forward.19} parent=0
    _
  %s8 = ssub.s32 1, %s6
  %s9 = scalar_select 0, %s8, %s6
  loop: start=0, step=1, limit=4
  $region2: #{forward.19} parent=0 // loop_pre_header
    _
  $region3: #{forward.19} parent=0 // loop_header
    %s11 = sphi 0, %s15
    %p12 = scmp.ge.s32.totalorder %s11, 4
    %s18 = sphi 0, %s30
    %s19 = sphi 0, %s26
    %s20 = sphi 0, %s18
    %s21 = sphi 0, %s19
    %s22 = sphi 0, %s20
    %s23 = sphi 0, %s21
    %s33 = sphi 0, %s35
    %s36 = sphi 0, %s33
    %s37 = sphi 0, %s36
    %s53 = sphi 0, %s37
    %s59 = sphi 0, %s61
    %s62 = sphi 0, %s59
    %s63 = sphi 0, %s62
    %s79 = sphi 0, %s63
    %s85 = sphi 0, %s87
    %s88 = sphi 0, %s85
    %s89 = sphi 0, %s88
    %s105 = sphi 0, %s89
    %s111 = sphi 0, %s113
    %s114 = sphi 0, %s111
    %s115 = sphi 0, %s114
    %s131 = sphi 0, %s115
    %s139 = sphi 0, %s141
    %s142 = sphi 0, %s139
    %s143 = sphi 0, %s142
    %s159 = sphi 0, %s143
    %s167 = sphi 0, %s169
    %s170 = sphi 0, %s167
    %s171 = sphi 0, %s170
    %s187 = sphi 0, %s171
  $region4: #{forward.19} parent=0 // loop_header_branch
    %14 = sbr.rel (%p12) target = $region8
  $region5: #{forward.19} parent=0 // loop_body
    %s16 = ssub.s32 %s11, 1
    %s17 = ssub.s32 %s11, 2
    %s24 = sadd.s32 1, %s19
    %p25 = scmp.ge.s32.totalorder %s24, 1
    %s26 = scalar_select %p25, 0, %s24
    %s27 = sadd.s32 1, %s18
    %s28 = scalar_select %p25, %s27, %s18
    %p29 = scmp.ge.s32.totalorder %s28, 2
    %s30 = scalar_select %p29, 0, %s28
    %s31 = ssub.s32 %s18, %s30
    %p32 = scmp.eq.s32.totalorder %s31, 0
    %s34 = sadd.s32 %s33, 1
    %s35 = scalar_select %p32, %s33, %s34
    %p38 = pneg %p32
    %p39 = scmp.eq.s32.totalorder %s11, 1
    %p40 = por %p38, %p39
    %p41 = scmp.ne.s32.totalorder %s33, %s36
    %p42 = scmp.eq.s32.totalorder %s11, 0
    %p43 = por %p41, %p42
    %p44 = scmp.ne.s32.totalorder %s33, %s36
    %p45 = scmp.eq.s32.totalorder %s16, 1
    %p46 = por %p44, %p45
    %p47 = scmp.ne.s32.totalorder %s36, %s37
    %p48 = scmp.eq.s32.totalorder %s16, 0
    %p49 = por %p47, %p48
    %p50 = scmp.ne.s32.totalorder %s36, %s37
    %p51 = scmp.eq.s32.totalorder %s17, 1
    %p52 = por %p50, %p51
    %p54 = scmp.ne.s32.totalorder %s37, %s53
    %p55 = scmp.eq.s32.totalorder %s17, 0
    %p56 = por %p54, %p55
    %s57 = ssub.s32 %s19, %s26
    %p58 = scmp.eq.s32.totalorder %s57, 0
    %s60 = sadd.s32 %s59, 1
    %s61 = scalar_select %p58, %s59, %s60
    %p64 = pneg %p58
    %p65 = scmp.eq.s32.totalorder %s11, 1
    %p66 = por %p64, %p65
    %p67 = scmp.ne.s32.totalorder %s59, %s62
    %p68 = scmp.eq.s32.totalorder %s11, 0
    %p69 = por %p67, %p68
    %p70 = scmp.ne.s32.totalorder %s59, %s62
    %p71 = scmp.eq.s32.totalorder %s16, 1
    %p72 = por %p70, %p71
    %p73 = scmp.ne.s32.totalorder %s62, %s63
    %p74 = scmp.eq.s32.totalorder %s16, 0
    %p75 = por %p73, %p74
    %p76 = scmp.ne.s32.totalorder %s62, %s63
    %p77 = scmp.eq.s32.totalorder %s17, 1
    %p78 = por %p76, %p77
    %p80 = scmp.ne.s32.totalorder %s63, %s79
    %p81 = scmp.eq.s32.totalorder %s17, 0
    %p82 = por %p80, %p81
    %s83 = ssub.s32 %s19, %s26
    %p84 = scmp.eq.s32.totalorder %s83, 0
    %s86 = sadd.s32 %s85, 1
    %s87 = scalar_select %p84, %s85, %s86
    %p90 = pneg %p84
    %p91 = scmp.eq.s32.totalorder %s11, 1
    %p92 = por %p90, %p91
    %p93 = scmp.ne.s32.totalorder %s85, %s88
    %p94 = scmp.eq.s32.totalorder %s11, 0
    %p95 = por %p93, %p94
    %p96 = scmp.ne.s32.totalorder %s85, %s88
    %p97 = scmp.eq.s32.totalorder %s16, 1
    %p98 = por %p96, %p97
    %p99 = scmp.ne.s32.totalorder %s88, %s89
    %p100 = scmp.eq.s32.totalorder %s16, 0
    %p101 = por %p99, %p100
    %p102 = scmp.ne.s32.totalorder %s88, %s89
    %p103 = scmp.eq.s32.totalorder %s17, 1
    %p104 = por %p102, %p103
    %p106 = scmp.ne.s32.totalorder %s89, %s105
    %p107 = scmp.eq.s32.totalorder %s17, 0
    %p108 = por %p106, %p107
    %s109 = ssub.s32 %s19, %s26
    %p110 = scmp.eq.s32.totalorder %s109, 0
    %s112 = sadd.s32 %s111, 1
    %s113 = scalar_select %p110, %s111, %s112
    %p116 = pneg %p110
    %p117 = scmp.eq.s32.totalorder %s11, 1
    %p118 = por %p116, %p117
    %p119 = scmp.ne.s32.totalorder %s111, %s114
    %p120 = scmp.eq.s32.totalorder %s11, 0
    %p121 = por %p119, %p120
    %p122 = scmp.ne.s32.totalorder %s111, %s114
    %p123 = scmp.eq.s32.totalorder %s16, 1
    %p124 = por %p122, %p123
    %p125 = scmp.ne.s32.totalorder %s114, %s115
    %p126 = scmp.eq.s32.totalorder %s16, 0
    %p127 = por %p125, %p126
    %p128 = scmp.ne.s32.totalorder %s114, %s115
    %p129 = scmp.eq.s32.totalorder %s17, 1
    %p130 = por %p128, %p129
    %p132 = scmp.ne.s32.totalorder %s115, %s131
    %p133 = scmp.eq.s32.totalorder %s17, 0
    %p134 = por %p132, %p133
    %s135 = ssub.s32 %s18, %s30
    %s136 = ssub.s32 %s19, %s26
    %s137 = sor.u32 %s135, %s136
    %p138 = scmp.eq.s32.totalorder %s137, 0
    %s140 = sadd.s32 %s139, 1
    %s141 = scalar_select %p138, %s139, %s140
    %p144 = pneg %p138
    %p145 = scmp.eq.s32.totalorder %s11, 1
    %p146 = por %p144, %p145
    %p147 = scmp.ne.s32.totalorder %s139, %s142
    %p148 = scmp.eq.s32.totalorder %s11, 0
    %p149 = por %p147, %p148
    %p150 = scmp.ne.s32.totalorder %s139, %s142
    %p151 = scmp.eq.s32.totalorder %s16, 1
    %p152 = por %p150, %p151
    %p153 = scmp.ne.s32.totalorder %s142, %s143
    %p154 = scmp.eq.s32.totalorder %s16, 0
    %p155 = por %p153, %p154
    %p156 = scmp.ne.s32.totalorder %s142, %s143
    %p157 = scmp.eq.s32.totalorder %s17, 1
    %p158 = por %p156, %p157
    %p160 = scmp.ne.s32.totalorder %s143, %s159
    %p161 = scmp.eq.s32.totalorder %s17, 0
    %p162 = por %p160, %p161
    %s163 = ssub.s32 %s18, %s30
    %s164 = ssub.s32 %s19, %s26
    %s165 = sor.u32 %s163, %s164
    %p166 = scmp.eq.s32.totalorder %s165, 0
    %s168 = sadd.s32 %s167, 1
    %s169 = scalar_select %p166, %s167, %s168
    %p172 = pneg %p166
    %p173 = scmp.eq.s32.totalorder %s11, 1
    %p174 = por %p172, %p173
    %p175 = scmp.ne.s32.totalorder %s167, %s170
    %p176 = scmp.eq.s32.totalorder %s11, 0
    %p177 = por %p175, %p176
    %p178 = scmp.ne.s32.totalorder %s167, %s170
    %p179 = scmp.eq.s32.totalorder %s16, 1
    %p180 = por %p178, %p179
    %p181 = scmp.ne.s32.totalorder %s170, %s171
    %p182 = scmp.eq.s32.totalorder %s16, 0
    %p183 = por %p181, %p182
    %p184 = scmp.ne.s32.totalorder %s170, %s171
    %p185 = scmp.eq.s32.totalorder %s17, 1
    %p186 = por %p184, %p185
    %p188 = scmp.ne.s32.totalorder %s171, %s187
    %p189 = scmp.eq.s32.totalorder %s17, 0
    %p190 = por %p188, %p189
    %p191 = scmp.le.s32.totalorder 1, %s11
    %p192 = scmp.lt.s32.totalorder %s11, 3
    %p193 = pnand %p191, %p192
    %p194 = pneg %p193
    // Predicated region
    $region9: #{forward.19} parent=5 // pred_check
      _
    $region10: #{forward.19} parent=5 // pred_check_branch
      %196 = sbr.rel (%p193) target = $region12
    $region11: #{forward.19} parent=5 // pred_region
      %s197 = ssub.s32 %s11, 1
      // Predicated region
      $region13: #{forward.19} parent=11 // pred_check
        %p198 = pneg %p75
      $region14: #{forward.19} parent=11 // pred_check_branch
        %200 = sbr.rel (%p198) target = $region16
      $region15: #{forward.19} parent=11 // pred_region
        %p201 = scmp.lt.s32.totalorder %s21, 0
        %s202 = scalar_select %p201, %s21, 0
        %s203 = smul.addr %s202, 4
        %s204 = scalar_lea.vmem %s1, %s203
      $region16: #{forward.19} parent=11 // pred_fallthru
        _
      // Predicated region
      $region17: #{forward.19} parent=11 // pred_check
        %p205 = pneg %p101
      $region18: #{forward.19} parent=11 // pred_check_branch
        %207 = sbr.rel (%p205) target = $region20
      $region19: #{forward.19} parent=11 // pred_region
        %p208 = scmp.lt.s32.totalorder %s21, 0
        %s209 = scalar_select %p208, %s21, 0
        %s210 = scalar_lea.vmem %s2, %s209
      $region20: #{forward.19} parent=11 // pred_fallthru
        _
      // Predicated region
      $region21: #{forward.19} parent=11 // pred_check
        %p211 = pneg %p127
      $region22: #{forward.19} parent=11 // pred_check_branch
        %213 = sbr.rel (%p211) target = $region24
      $region23: #{forward.19} parent=11 // pred_region
        %p214 = scmp.lt.s32.totalorder %s21, 0
        %s215 = scalar_select %p214, %s21, 0
        %s216 = scalar_lea.vmem %s3, %s215
      $region24: #{forward.19} parent=11 // pred_fallthru
        _
    $region12: #{forward.19} parent=5 // pred_fallthru
      _
    %p217 = scmp.lt.s32.totalorder %s11, 2
    // Predicated region
    $region25: #{forward.19} parent=5 // pred_check
      %p218 = pneg %p217
    $region26: #{forward.19} parent=5 // pred_check_branch
      %220 = sbr.rel (%p218) target = $region28
    $region27: #{forward.19} parent=5 // pred_region
      // Predicated region
      $region29: #{forward.19} parent=27 // pred_check
        %p221 = pneg %p43
      $region30: #{forward.19} parent=27 // pred_check_branch
        %223 = sbr.rel (%p221) target = $region32
      $region31: #{forward.19} parent=27 // pred_region
        %s224 = smul.u32 8, %s18
        %p225 = scmp.lt.s32.totalorder %s224, 15
        %s226 = scalar_select %p225, %s224, 15
        %s227 = smul.addr %s226, 9
        %s228 = smul.addr %s227, 4
        %s229 = scalar_lea.vmem %s0, %s228
        %s230 = smul.u32 8, %s18
      $region32: #{forward.19} parent=27 // pred_fallthru
        _
      // Predicated region
      $region33: #{forward.19} parent=27 // pred_check
        %p231 = pneg %p149
      $region34: #{forward.19} parent=27 // pred_check_branch
        %233 = sbr.rel (%p231) target = $region36
      $region35: #{forward.19} parent=27 // pred_region
        %s234 = smul.u32 8, %s18
        %p235 = scmp.lt.s32.totalorder %s234, 15
        %s236 = scalar_select %p235, %s234, 15
        %p237 = scmp.lt.s32.totalorder %s19, 0
        %s238 = scalar_select %p237, %s19, 0
        %s239 = sadd.s32 %s238, %s236
        %s240 = smul.addr %s239, 4
        %s241 = scalar_lea.vmem %s4, %s240
        %s242 = smul.u32 8, %s18
      $region36: #{forward.19} parent=27 // pred_fallthru
        _
    $region28: #{forward.19} parent=5 // pred_fallthru
      _
    %p243 = scmp.le.s32.totalorder 1, %s11
    %p244 = scmp.lt.s32.totalorder %s11, 3
    %p245 = pnand %p243, %p244
    %p246 = pneg %p245
    // Predicated region
    $region37: #{forward.19} parent=5 // pred_check
      _
    $region38: #{forward.19} parent=5 // pred_check_branch
      %248 = sbr.rel (%p245) target = $region40
    $region39: #{forward.19} parent=5 // pred_region
      %s249 = ssub.s32 %s11, 1
      %s250 = smul.u32 8, %s20
      %p251 = scmp.lt.s32.totalorder %s250, 15
      %s252 = scalar_select %p251, %s250, 15
      %s253 = smul.addr %s252, 9
      %s254 = smul.addr %s253, 4
      %s255 = scalar_lea.vmem %s0, %s254
      %p256 = pneg %p49
      %p257 = pneg %p46
      %p258 = scmp.lt.s32.totalorder %s21, 0
      %s259 = scalar_select %p258, %s21, 0
      %s260 = smul.addr %s259, 4
      %s261 = scalar_lea.vmem %s1, %s260
      %p262 = pneg %p75
      %p263 = pneg %p72
      %p264 = scmp.lt.s32.totalorder %s21, 0
      %s265 = scalar_select %p264, %s21, 0
      %s266 = scalar_lea.vmem %s2, %s265
      %p267 = pneg %p101
      %p268 = pneg %p98
      %p269 = scmp.lt.s32.totalorder %s21, 0
      %s270 = scalar_select %p269, %s21, 0
      %s271 = scalar_lea.vmem %s3, %s270
      %p272 = pneg %p127
      %p273 = pneg %p124
      %s274 = smul.u32 8, %s20
      %p275 = scmp.lt.s32.totalorder %s274, 15
      %s276 = scalar_select %p275, %s274, 15
      %p277 = scmp.lt.s32.totalorder %s21, 0
      %s278 = scalar_select %p277, %s21, 0
      %s279 = sadd.s32 %s278, %s276
      %s280 = smul.addr %s279, 4
      %s281 = scalar_lea.vmem %s4, %s280
      %p282 = pneg %p155
      %p283 = pneg %p152
      %p284 = pneg %p183
      %p285 = pneg %p180
      %s286 = smul.u32 8, %s20
      %p287 = scmp.lt.s32.totalorder %s286, 15
      %s288 = scalar_select %p287, %s286, 15
      %p289 = scmp.lt.s32.totalorder %s21, 0
      %s290 = scalar_select %p289, %s21, 0
      %s291 = sadd.s32 %s290, %s288
      %s292 = smul.addr %s291, 4
      %s293 = scalar_lea.vmem %s5, %s292
      %s294 = smul.u32 8, %s20
      %p295 = scmp.lt.s32.totalorder %s294, 15
      %s296 = scalar_select %p295, %s294, 15
      %s297 = smul.addr %s296, 9
      %s298 = smul.addr %s297, 4
      %s299 = scalar_lea.vmem %s0, %s298
      %s300 = smul.u32 8, %s20
      %p301 = scmp.lt.s32.totalorder %s21, 0
      %s302 = scalar_select %p301, %s21, 0
      %s303 = smul.addr %s302, 4
      %s304 = scalar_lea.vmem %s1, %s303
      %p305 = scmp.lt.s32.totalorder %s21, 0
      %s306 = scalar_select %p305, %s21, 0
      %s307 = scalar_lea.vmem %s2, %s306
      %p308 = scmp.lt.s32.totalorder %s21, 0
      %s309 = scalar_select %p308, %s21, 0
      %s310 = scalar_lea.vmem %s3, %s309
      %s311 = smul.u32 8, %s20
      %p312 = scmp.lt.s32.totalorder %s311, 15
      %s313 = scalar_select %p312, %s311, 15
      %p314 = scmp.lt.s32.totalorder %s21, 0
      %s315 = scalar_select %p314, %s21, 0
      %s316 = sadd.s32 %s315, %s313
      %s317 = smul.addr %s316, 4
      %s318 = scalar_lea.vmem %s4, %s317
      %s319 = smul.u32 8, %s20
      %s320 = smul.u32 8, %s20
      %p321 = scmp.lt.s32.totalorder %s320, 15
      %s322 = scalar_select %p321, %s320, 15
      %p323 = scmp.lt.s32.totalorder %s21, 0
      %s324 = scalar_select %p323, %s21, 0
      %s325 = sadd.s32 %s324, %s322
      %s326 = smul.addr %s325, 4
      %s327 = scalar_lea.vmem %s5, %s326
      %s328 = smul.u32 8, %s20
      %v329 = vld [vmem:[%s299] sm:$0xff]
      %v330 = vld [vmem:[%s299 + $0x8] sm:$0xff]
      %v331 = vld [vmem:[%s299 + $0x10] sm:$0xff]
      %v332 = vld [vmem:[%s299 + $0x18] sm:$0xff]
      %v333 = vld [vmem:[%s299 + $0x20] sm:$0xf]
      %v334 = vld [vmem:[%s299 + $0x24] sm:$0xff]
      %v335 = vld [vmem:[%s299 + $0x2c] sm:$0xff]
      %v336 = vld [vmem:[%s299 + $0x34] sm:$0xff]
      %v337 = vld [vmem:[%s299 + $0x3c] sm:$0xff]
      %v338 = vld [vmem:[%s299 + $0x44] sm:$0xf]
      %v339 = vld [vmem:[%s299 + $0x48] sm:$0xff]
      %v340 = vld [vmem:[%s299 + $0x50] sm:$0xff]
      %v341 = vld [vmem:[%s299 + $0x58] sm:$0xff]
      %v342 = vld [vmem:[%s299 + $0x60] sm:$0xff]
      %v343 = vld [vmem:[%s299 + $0x68] sm:$0xf]
      %v344 = vld [vmem:[%s299 + $0x6c] sm:$0xff]
      %v345 = vld [vmem:[%s299 + $0x74] sm:$0xff]
      %v346 = vld [vmem:[%s299 + $0x7c] sm:$0xff]
      %v347 = vld [vmem:[%s299 + $0x84] sm:$0xff]
      %v348 = vld [vmem:[%s299 + $0x8c] sm:$0xf]
      %v349 = vld [vmem:[%s299 + $0x90] sm:$0xff]
      %v350 = vld [vmem:[%s299 + $0x98] sm:$0xff]
      %v351 = vld [vmem:[%s299 + $0xa0] sm:$0xff]
      %v352 = vld [vmem:[%s299 + $0xa8] sm:$0xff]
      %v353 = vld [vmem:[%s299 + $0xb0] sm:$0xf]
      %v354 = vld [vmem:[%s299 + $0xb4] sm:$0xff]
      %v355 = vld [vmem:[%s299 + $0xbc] sm:$0xff]
      %v356 = vld [vmem:[%s299 + $0xc4] sm:$0xff]
      %v357 = vld [vmem:[%s299 + $0xcc] sm:$0xff]
      %v358 = vld [vmem:[%s299 + $0xd4] sm:$0xf]
      %v359 = vld [vmem:[%s299 + $0xd8] sm:$0xff]
      %v360 = vld [vmem:[%s299 + $0xe0] sm:$0xff]
      %v361 = vld [vmem:[%s299 + $0xe8] sm:$0xff]
      %v362 = vld [vmem:[%s299 + $0xf0] sm:$0xff]
      %v363 = vld [vmem:[%s299 + $0xf8] sm:$0xf]
      %v364 = vld [vmem:[%s299 + $0xfc] sm:$0xff]
      %v365 = vld [vmem:[%s299 + $0x104] sm:$0xff]
      %v366 = vld [vmem:[%s299 + $0x10c] sm:$0xff]
      %v367 = vld [vmem:[%s299 + $0x114] sm:$0xff]
      %v368 = vld [vmem:[%s299 + $0x11c] sm:$0xf]
      %v369 = vld [vmem:[%s304] sm:$0xf]
      %v370 = vld [vmem:[%s304 + $0x4] sm:$0xf]
      %v371 = vld [vmem:[%s304 + $0x8] sm:$0xf]
      %v372 = vld [vmem:[%s304 + $0xc] sm:$0xf]
      %v373 = vld [vmem:[%s304 + $0x10] sm:$0xf]
      %v374 = vld [vmem:[%s304 + $0x14] sm:$0xf]
      %v375 = vld [vmem:[%s304 + $0x18] sm:$0xf]
      %v376 = vld [vmem:[%s304 + $0x1c] sm:$0xf]
      %v377 = vld [vmem:[%s304 + $0x20] sm:$0xf]
      %v378 = vld [vmem:[%s304 + $0x24] sm:$0xf]
      %v379 = vld [vmem:[%s304 + $0x28] sm:$0xf]
      %v380 = vld [vmem:[%s304 + $0x2c] sm:$0xf]
      %v381 = vld [vmem:[%s304 + $0x30] sm:$0xf]
      %v382 = vld [vmem:[%s304 + $0x34] sm:$0xf]
      %v383 = vld [vmem:[%s304 + $0x38] sm:$0xf]
      %v384 = vld [vmem:[%s304 + $0x3c] sm:$0xf]
      %v385 = vld [vmem:[%s304 + $0x40] sm:$0xf]
      %v386 = vld [vmem:[%s304 + $0x44] sm:$0xf]
      %v387 = vld [vmem:[%s304 + $0x48] sm:$0xf]
      %v388 = vld [vmem:[%s304 + $0x4c] sm:$0xf]
      %v389 = vld [vmem:[%s304 + $0x50] sm:$0xf]
      %v390 = vld [vmem:[%s304 + $0x54] sm:$0xf]
      %v391 = vld [vmem:[%s304 + $0x58] sm:$0xf]
      %v392 = vld [vmem:[%s304 + $0x5c] sm:$0xf]
      %v393 = vld [vmem:[%s304 + $0x60] sm:$0xf]
      %v394 = vld [vmem:[%s304 + $0x64] sm:$0xf]
      %v395 = vld [vmem:[%s304 + $0x68] sm:$0xf]
      %v396 = vld [vmem:[%s304 + $0x6c] sm:$0xf]
      %v397 = vld [vmem:[%s304 + $0x70] sm:$0xf]
      %v398 = vld [vmem:[%s304 + $0x74] sm:$0xf]
      %v399 = vld [vmem:[%s304 + $0x78] sm:$0xf]
      %v400 = vld [vmem:[%s304 + $0x7c] sm:$0xf]
      %v401 = vld [vmem:[%s304 + $0x80] sm:$0xf]
      %v402 = vld [vmem:[%s304 + $0x84] sm:$0xf]
      %v403 = vld [vmem:[%s304 + $0x88] sm:$0xf]
      %v404 = vld [vmem:[%s304 + $0x8c] sm:$0xf]
      %v405 = vld [vmem:[%s304 + $0x90] sm:$0xf]
      %v406 = vld [vmem:[%s304 + $0x94] sm:$0xf]
      %v407 = vld [vmem:[%s304 + $0x98] sm:$0xf]
      %v408 = vld [vmem:[%s304 + $0x9c] sm:$0xf]
      %v409 = vld [vmem:[%s304 + $0xa0] sm:$0xf]
      %v410 = vld [vmem:[%s304 + $0xa4] sm:$0xf]
      %v411 = vld [vmem:[%s304 + $0xa8] sm:$0xf]
      %v412 = vld [vmem:[%s304 + $0xac] sm:$0xf]
      %v413 = vld [vmem:[%s304 + $0xb0] sm:$0xf]
      %v414 = vld [vmem:[%s304 + $0xb4] sm:$0xf]
      %v415 = vld [vmem:[%s304 + $0xb8] sm:$0xf]
      %v416 = vld [vmem:[%s304 + $0xbc] sm:$0xf]
      %v417 = vld [vmem:[%s304 + $0xc0] sm:$0xf]
      %v418 = vld [vmem:[%s304 + $0xc4] sm:$0xf]
      %v419 = vld [vmem:[%s304 + $0xc8] sm:$0xf]
      %v420 = vld [vmem:[%s304 + $0xcc] sm:$0xf]
      %v421 = vld [vmem:[%s304 + $0xd0] sm:$0xf]
      %v422 = vld [vmem:[%s304 + $0xd4] sm:$0xf]
      %v423 = vld [vmem:[%s304 + $0xd8] sm:$0xf]
      %v424 = vld [vmem:[%s304 + $0xdc] sm:$0xf]
      %v425 = vld [vmem:[%s304 + $0xe0] sm:$0xf]
      %v426 = vld [vmem:[%s304 + $0xe4] sm:$0xf]
      %v427 = vld [vmem:[%s304 + $0xe8] sm:$0xf]
      %v428 = vld [vmem:[%s304 + $0xec] sm:$0xf]
      %v429 = vld [vmem:[%s304 + $0xf0] sm:$0xf]
      %v430 = vld [vmem:[%s304 + $0xf4] sm:$0xf]
      %v431 = vld [vmem:[%s304 + $0xf8] sm:$0xf]
      %v432 = vld [vmem:[%s304 + $0xfc] sm:$0xf]
      %v433 = vld [vmem:[%s304 + $0x100] sm:$0xf]
      %v434 = vld [vmem:[%s304 + $0x104] sm:$0xf]
      %v435 = vld [vmem:[%s304 + $0x108] sm:$0xf]
      %v436 = vld [vmem:[%s304 + $0x10c] sm:$0xf]
      %v437 = vld [vmem:[%s304 + $0x110] sm:$0xf]
      %v438 = vld [vmem:[%s304 + $0x114] sm:$0xf]
      %v439 = vld [vmem:[%s304 + $0x118] sm:$0xf]
      %v440 = vld [vmem:[%s304 + $0x11c] sm:$0xf]
      %v441 = vld [vmem:[%s304 + $0x120] sm:$0xf]
      %v442 = vld [vmem:[%s304 + $0x124] sm:$0xf]
      %v443 = vld [vmem:[%s304 + $0x128] sm:$0xf]
      %v444 = vld [vmem:[%s304 + $0x12c] sm:$0xf]
      %v445 = vld [vmem:[%s304 + $0x130] sm:$0xf]
      %v446 = vld [vmem:[%s304 + $0x134] sm:$0xf]
      %v447 = vld [vmem:[%s304 + $0x138] sm:$0xf]
      %v448 = vld [vmem:[%s304 + $0x13c] sm:$0xf]
      %v449 = vld [vmem:[%s304 + $0x140] sm:$0xf]
      %v450 = vld [vmem:[%s304 + $0x144] sm:$0xf]
      %v451 = vld [vmem:[%s304 + $0x148] sm:$0xf]
      %v452 = vld [vmem:[%s304 + $0x14c] sm:$0xf]
      %v453 = vld [vmem:[%s304 + $0x150] sm:$0xf]
      %v454 = vld [vmem:[%s304 + $0x154] sm:$0xf]
      %v455 = vld [vmem:[%s304 + $0x158] sm:$0xf]
      %v456 = vld [vmem:[%s304 + $0x15c] sm:$0xf]
      %v457 = vld [vmem:[%s304 + $0x160] sm:$0xf]
      %v458 = vld [vmem:[%s304 + $0x164] sm:$0xf]
      %v459 = vld [vmem:[%s304 + $0x168] sm:$0xf]
      %v460 = vld [vmem:[%s304 + $0x16c] sm:$0xf]
      %v461 = vld [vmem:[%s304 + $0x170] sm:$0xf]
      %v462 = vld [vmem:[%s304 + $0x174] sm:$0xf]
      %v463 = vld [vmem:[%s304 + $0x178] sm:$0xf]
      %v464 = vld [vmem:[%s304 + $0x17c] sm:$0xf]
      %v465 = vld [vmem:[%s304 + $0x180] sm:$0xf]
      %v466 = vld [vmem:[%s304 + $0x184] sm:$0xf]
      %v467 = vld [vmem:[%s304 + $0x188] sm:$0xf]
      %v468 = vld [vmem:[%s304 + $0x18c] sm:$0xf]
      %v469 = vld [vmem:[%s304 + $0x190] sm:$0xf]
      %v470 = vld [vmem:[%s304 + $0x194] sm:$0xf]
      %v471 = vld [vmem:[%s304 + $0x198] sm:$0xf]
      %v472 = vld [vmem:[%s304 + $0x19c] sm:$0xf]
      %v473 = vld [vmem:[%s304 + $0x1a0] sm:$0xf]
      %v474 = vld [vmem:[%s304 + $0x1a4] sm:$0xf]
      %v475 = vld [vmem:[%s304 + $0x1a8] sm:$0xf]
      %v476 = vld [vmem:[%s304 + $0x1ac] sm:$0xf]
      %v477 = vld [vmem:[%s304 + $0x1b0] sm:$0xf]
      %v478 = vld [vmem:[%s304 + $0x1b4] sm:$0xf]
      %v479 = vld [vmem:[%s304 + $0x1b8] sm:$0xf]
      %v480 = vld [vmem:[%s304 + $0x1bc] sm:$0xf]
      %v481 = vld [vmem:[%s304 + $0x1c0] sm:$0xf]
      %v482 = vld [vmem:[%s304 + $0x1c4] sm:$0xf]
      %v483 = vld [vmem:[%s304 + $0x1c8] sm:$0xf]
      %v484 = vld [vmem:[%s304 + $0x1cc] sm:$0xf]
      %v485 = vld [vmem:[%s304 + $0x1d0] sm:$0xf]
      %v486 = vld [vmem:[%s304 + $0x1d4] sm:$0xf]
      %v487 = vld [vmem:[%s304 + $0x1d8] sm:$0xf]
      %v488 = vld [vmem:[%s304 + $0x1dc] sm:$0xf]
      %v489 = vld [vmem:[%s304 + $0x1e0] sm:$0xf]
      %v490 = vld [vmem:[%s304 + $0x1e4] sm:$0xf]
      %v491 = vld [vmem:[%s304 + $0x1e8] sm:$0xf]
      %v492 = vld [vmem:[%s304 + $0x1ec] sm:$0xf]
      %v493 = vld [vmem:[%s304 + $0x1f0] sm:$0xf]
      %v494 = vld [vmem:[%s304 + $0x1f4] sm:$0xf]
      %v495 = vld [vmem:[%s304 + $0x1f8] sm:$0xf]
      %v496 = vld [vmem:[%s304 + $0x1fc] sm:$0xf]
      %v497 = vld [vmem:[%s304 + $0x200] sm:$0xf]
      %v498 = vld [vmem:[%s304 + $0x204] sm:$0xf]
      %v499 = vld [vmem:[%s304 + $0x208] sm:$0xf]
      %v500 = vld [vmem:[%s304 + $0x20c] sm:$0xf]
      %v501 = vld [vmem:[%s304 + $0x210] sm:$0xf]
      %v502 = vld [vmem:[%s304 + $0x214] sm:$0xf]
      %v503 = vld [vmem:[%s304 + $0x218] sm:$0xf]
      %v504 = vld [vmem:[%s304 + $0x21c] sm:$0xf]
      %v505 = vld [vmem:[%s304 + $0x220] sm:$0xf]
      %v506 = vld [vmem:[%s304 + $0x224] sm:$0xf]
      %v507 = vld [vmem:[%s304 + $0x228] sm:$0xf]
      %v508 = vld [vmem:[%s304 + $0x22c] sm:$0xf]
      %v509 = vld [vmem:[%s304 + $0x230] sm:$0xf]
      %v510 = vld [vmem:[%s304 + $0x234] sm:$0xf]
      %v511 = vld [vmem:[%s304 + $0x238] sm:$0xf]
      %v512 = vld [vmem:[%s304 + $0x23c] sm:$0xf]
      %v553 = vunpack.c.l.b16 %v329
      %v554 = vunpack.c.h.b16 %v329
      %v555 = vunpack.c.l.b16 %v330
      %v556 = vunpack.c.h.b16 %v330
      %v557 = vunpack.c.l.b16 %v331
      %v558 = vunpack.c.h.b16 %v331
      %v559 = vunpack.c.l.b16 %v332
      %v560 = vunpack.c.h.b16 %v332
      %v561 = vunpack.c.l.b16 %v333
      %v562 = vunpack.c.l.b16 %v334
      %v563 = vunpack.c.h.b16 %v334
      %v564 = vunpack.c.l.b16 %v335
      %v565 = vunpack.c.h.b16 %v335
      %v566 = vunpack.c.l.b16 %v336
      %v567 = vunpack.c.h.b16 %v336
      %v568 = vunpack.c.l.b16 %v337
      %v569 = vunpack.c.h.b16 %v337
      %v570 = vunpack.c.l.b16 %v338
      %v571 = vunpack.c.l.b16 %v339
      %v572 = vunpack.c.h.b16 %v339
      %v573 = vunpack.c.l.b16 %v340
      %v574 = vunpack.c.h.b16 %v340
      %v575 = vunpack.c.l.b16 %v341
      %v576 = vunpack.c.h.b16 %v341
      %v577 = vunpack.c.l.b16 %v342
      %v578 = vunpack.c.h.b16 %v342
      %v579 = vunpack.c.l.b16 %v343
      %v580 = vunpack.c.l.b16 %v344
      %v581 = vunpack.c.h.b16 %v344
      %v582 = vunpack.c.l.b16 %v345
      %v583 = vunpack.c.h.b16 %v345
      %v584 = vunpack.c.l.b16 %v346
      %v585 = vunpack.c.h.b16 %v346
      %v586 = vunpack.c.l.b16 %v347
      %v587 = vunpack.c.h.b16 %v347
      %v588 = vunpack.c.l.b16 %v348
      %v589 = vunpack.c.l.b16 %v349
      %v590 = vunpack.c.h.b16 %v349
      %v591 = vunpack.c.l.b16 %v350
      %v592 = vunpack.c.h.b16 %v350
      %v593 = vunpack.c.l.b16 %v351
      %v594 = vunpack.c.h.b16 %v351
      %v595 = vunpack.c.l.b16 %v352
      %v596 = vunpack.c.h.b16 %v352
      %v597 = vunpack.c.l.b16 %v353
      %v598 = vunpack.c.l.b16 %v354
      %v599 = vunpack.c.h.b16 %v354
      %v600 = vunpack.c.l.b16 %v355
      %v601 = vunpack.c.h.b16 %v355
      %v602 = vunpack.c.l.b16 %v356
      %v603 = vunpack.c.h.b16 %v356
      %v604 = vunpack.c.l.b16 %v357
      %v605 = vunpack.c.h.b16 %v357
      %v606 = vunpack.c.l.b16 %v358
      %v607 = vunpack.c.l.b16 %v359
      %v608 = vunpack.c.h.b16 %v359
      %v609 = vunpack.c.l.b16 %v360
      %v610 = vunpack.c.h.b16 %v360
      %v611 = vunpack.c.l.b16 %v361
      %v612 = vunpack.c.h.b16 %v361
      %v613 = vunpack.c.l.b16 %v362
      %v614 = vunpack.c.h.b16 %v362
      %v615 = vunpack.c.l.b16 %v363
      %v616 = vunpack.c.l.b16 %v364
      %v617 = vunpack.c.h.b16 %v364
      %v618 = vunpack.c.l.b16 %v365
      %v619 = vunpack.c.h.b16 %v365
      %v620 = vunpack.c.l.b16 %v366
      %v621 = vunpack.c.h.b16 %v366
      %v622 = vunpack.c.l.b16 %v367
      %v623 = vunpack.c.h.b16 %v367
      %v624 = vunpack.c.l.b16 %v368
      %v625 = vpack.c.b16 %v562, %v553
      %v626 = vpack.c.b16 %v563, %v554
      %v627 = vpack.c.b16 %v564, %v555
      %v628 = vpack.c.b16 %v565, %v556
      %v629 = vpack.c.b16 %v566, %v557
      %v630 = vpack.c.b16 %v567, %v558
      %v631 = vpack.c.b16 %v568, %v559
      %v632 = vpack.c.b16 %v569, %v560
      %v633 = vpack.c.b16 %v570, %v561
      %v634 = vpack.c.b16 %v580, %v571
      %v635 = vpack.c.b16 %v581, %v572
      %v636 = vpack.c.b16 %v582, %v573
      %v637 = vpack.c.b16 %v583, %v574
      %v638 = vpack.c.b16 %v584, %v575
      %v639 = vpack.c.b16 %v585, %v576
      %v640 = vpack.c.b16 %v586, %v577
      %v641 = vpack.c.b16 %v587, %v578
      %v642 = vpack.c.b16 %v588, %v579
      %v643 = vpack.c.b16 %v598, %v589
      %v644 = vpack.c.b16 %v599, %v590
      %v645 = vpack.c.b16 %v600, %v591
      %v646 = vpack.c.b16 %v601, %v592
      %v647 = vpack.c.b16 %v602, %v593
      %v648 = vpack.c.b16 %v603, %v594
      %v649 = vpack.c.b16 %v604, %v595
      %v650 = vpack.c.b16 %v605, %v596
      %v651 = vpack.c.b16 %v606, %v597
      %v652 = vpack.c.b16 %v616, %v607
      %v653 = vpack.c.b16 %v617, %v608
      %v654 = vpack.c.b16 %v618, %v609
      %v655 = vpack.c.b16 %v619, %v610
      %v656 = vpack.c.b16 %v620, %v611
      %v657 = vpack.c.b16 %v621, %v612
      %v658 = vpack.c.b16 %v622, %v613
      %v659 = vpack.c.b16 %v623, %v614
      %v660 = vpack.c.b16 %v624, %v615
      %v841 = vunpack.c.l.b16 %v369
      %v842 = vunpack.c.l.b16 %v370
      %v843 = vunpack.c.l.b16 %v371
      %v844 = vunpack.c.l.b16 %v372
      %v845 = vunpack.c.l.b16 %v373
      %v846 = vunpack.c.l.b16 %v374
      %v847 = vunpack.c.l.b16 %v375
      %v848 = vunpack.c.l.b16 %v376
      %v849 = vunpack.c.l.b16 %v377
      %v850 = vunpack.c.l.b16 %v378
      %v851 = vunpack.c.l.b16 %v379
      %v852 = vunpack.c.l.b16 %v380
      %v853 = vunpack.c.l.b16 %v381
      %v854 = vunpack.c.l.b16 %v382
      %v855 = vunpack.c.l.b16 %v383
      %v856 = vunpack.c.l.b16 %v384
      %v857 = vunpack.c.l.b16 %v385
      %v858 = vunpack.c.l.b16 %v386
      %v859 = vunpack.c.l.b16 %v387
      %v860 = vunpack.c.l.b16 %v388
      %v861 = vunpack.c.l.b16 %v389
      %v862 = vunpack.c.l.b16 %v390
      %v863 = vunpack.c.l.b16 %v391
      %v864 = vunpack.c.l.b16 %v392
      %v865 = vunpack.c.l.b16 %v393
      %v866 = vunpack.c.l.b16 %v394
      %v867 = vunpack.c.l.b16 %v395
      %v868 = vunpack.c.l.b16 %v396
      %v869 = vunpack.c.l.b16 %v397
      %v870 = vunpack.c.l.b16 %v398
      %v871 = vunpack.c.l.b16 %v399
      %v872 = vunpack.c.l.b16 %v400
      %v873 = vunpack.c.l.b16 %v401
      %v874 = vunpack.c.l.b16 %v402
      %v875 = vunpack.c.l.b16 %v403
      %v876 = vunpack.c.l.b16 %v404
      %v877 = vunpack.c.l.b16 %v405
      %v878 = vunpack.c.l.b16 %v406
      %v879 = vunpack.c.l.b16 %v407
      %v880 = vunpack.c.l.b16 %v408
      %v881 = vunpack.c.l.b16 %v409
      %v882 = vunpack.c.l.b16 %v410
      %v883 = vunpack.c.l.b16 %v411
      %v884 = vunpack.c.l.b16 %v412
      %v885 = vunpack.c.l.b16 %v413
      %v886 = vunpack.c.l.b16 %v414
      %v887 = vunpack.c.l.b16 %v415
      %v888 = vunpack.c.l.b16 %v416
      %v889 = vunpack.c.l.b16 %v417
      %v890 = vunpack.c.l.b16 %v418
      %v891 = vunpack.c.l.b16 %v419
      %v892 = vunpack.c.l.b16 %v420
      %v893 = vunpack.c.l.b16 %v421
      %v894 = vunpack.c.l.b16 %v422
      %v895 = vunpack.c.l.b16 %v423
      %v896 = vunpack.c.l.b16 %v424
      %v897 = vunpack.c.l.b16 %v425
      %v898 = vunpack.c.l.b16 %v426
      %v899 = vunpack.c.l.b16 %v427
      %v900 = vunpack.c.l.b16 %v428
      %v901 = vunpack.c.l.b16 %v429
      %v902 = vunpack.c.l.b16 %v430
      %v903 = vunpack.c.l.b16 %v431
      %v904 = vunpack.c.l.b16 %v432
      %v905 = vunpack.c.l.b16 %v433
      %v906 = vunpack.c.l.b16 %v434
      %v907 = vunpack.c.l.b16 %v435
      %v908 = vunpack.c.l.b16 %v436
      %v909 = vunpack.c.l.b16 %v437
      %v910 = vunpack.c.l.b16 %v438
      %v911 = vunpack.c.l.b16 %v439
      %v912 = vunpack.c.l.b16 %v440
      %v913 = vunpack.c.l.b16 %v441
      %v914 = vunpack.c.l.b16 %v442
      %v915 = vunpack.c.l.b16 %v443
      %v916 = vunpack.c.l.b16 %v444
      %v917 = vunpack.c.l.b16 %v445
      %v918 = vunpack.c.l.b16 %v446
      %v919 = vunpack.c.l.b16 %v447
      %v920 = vunpack.c.l.b16 %v448
      %v921 = vunpack.c.l.b16 %v449
      %v922 = vunpack.c.l.b16 %v450
      %v923 = vunpack.c.l.b16 %v451
      %v924 = vunpack.c.l.b16 %v452
      %v925 = vunpack.c.l.b16 %v453
      %v926 = vunpack.c.l.b16 %v454
      %v927 = vunpack.c.l.b16 %v455
      %v928 = vunpack.c.l.b16 %v456
      %v929 = vunpack.c.l.b16 %v457
      %v930 = vunpack.c.l.b16 %v458
      %v931 = vunpack.c.l.b16 %v459
      %v932 = vunpack.c.l.b16 %v460
      %v933 = vunpack.c.l.b16 %v461
      %v934 = vunpack.c.l.b16 %v462
      %v935 = vunpack.c.l.b16 %v463
      %v936 = vunpack.c.l.b16 %v464
      %v937 = vunpack.c.l.b16 %v465
      %v938 = vunpack.c.l.b16 %v466
      %v939 = vunpack.c.l.b16 %v467
      %v940 = vunpack.c.l.b16 %v468
      %v941 = vunpack.c.l.b16 %v469
      %v942 = vunpack.c.l.b16 %v470
      %v943 = vunpack.c.l.b16 %v471
      %v944 = vunpack.c.l.b16 %v472
      %v945 = vunpack.c.l.b16 %v473
      %v946 = vunpack.c.l.b16 %v474
      %v947 = vunpack.c.l.b16 %v475
      %v948 = vunpack.c.l.b16 %v476
      %v949 = vunpack.c.l.b16 %v477
      %v950 = vunpack.c.l.b16 %v478
      %v951 = vunpack.c.l.b16 %v479
      %v952 = vunpack.c.l.b16 %v480
      %v953 = vunpack.c.l.b16 %v481
      %v954 = vunpack.c.l.b16 %v482
      %v955 = vunpack.c.l.b16 %v483
      %v956 = vunpack.c.l.b16 %v484
      %v957 = vunpack.c.l.b16 %v485
      %v958 = vunpack.c.l.b16 %v486
      %v959 = vunpack.c.l.b16 %v487
      %v960 = vunpack.c.l.b16 %v488
      %v961 = vunpack.c.l.b16 %v489
      %v962 = vunpack.c.l.b16 %v490
      %v963 = vunpack.c.l.b16 %v491
      %v964 = vunpack.c.l.b16 %v492
      %v965 = vunpack.c.l.b16 %v493
      %v966 = vunpack.c.l.b16 %v494
      %v967 = vunpack.c.l.b16 %v495
      %v968 = vunpack.c.l.b16 %v496
      %v969 = vunpack.c.l.b16 %v497
      %v970 = vunpack.c.l.b16 %v498
      %v971 = vunpack.c.l.b16 %v499
      %v972 = vunpack.c.l.b16 %v500
      %v973 = vunpack.c.l.b16 %v501
      %v974 = vunpack.c.l.b16 %v502
      %v975 = vunpack.c.l.b16 %v503
      %v976 = vunpack.c.l.b16 %v504
      %v977 = vunpack.c.l.b16 %v505
      %v978 = vunpack.c.l.b16 %v506
      %v979 = vunpack.c.l.b16 %v507
      %v980 = vunpack.c.l.b16 %v508
      %v981 = vunpack.c.l.b16 %v509
      %v982 = vunpack.c.l.b16 %v510
      %v983 = vunpack.c.l.b16 %v511
      %v984 = vunpack.c.l.b16 %v512
      %v985 = vpack.c.b16 %v842, %v841
      %v986 = vpack.c.b16 %v844, %v843
      %v987 = vpack.c.b16 %v846, %v845
      %v988 = vpack.c.b16 %v848, %v847
      %v989 = vpack.c.b16 %v850, %v849
      %v990 = vpack.c.b16 %v852, %v851
      %v991 = vpack.c.b16 %v854, %v853
      %v992 = vpack.c.b16 %v856, %v855
      %v993 = vpack.c.b16 %v858, %v857
      %v994 = vpack.c.b16 %v860, %v859
      %v995 = vpack.c.b16 %v862, %v861
      %v996 = vpack.c.b16 %v864, %v863
      %v997 = vpack.c.b16 %v866, %v865
      %v998 = vpack.c.b16 %v868, %v867
      %v999 = vpack.c.b16 %v870, %v869
      %v1000 = vpack.c.b16 %v872, %v871
      %v1001 = vpack.c.b16 %v874, %v873
      %v1002 = vpack.c.b16 %v876, %v875
      %v1003 = vpack.c.b16 %v878, %v877
      %v1004 = vpack.c.b16 %v880, %v879
      %v1005 = vpack.c.b16 %v882, %v881
      %v1006 = vpack.c.b16 %v884, %v883
      %v1007 = vpack.c.b16 %v886, %v885
      %v1008 = vpack.c.b16 %v888, %v887
      %v1009 = vpack.c.b16 %v890, %v889
      %v1010 = vpack.c.b16 %v892, %v891
      %v1011 = vpack.c.b16 %v894, %v893
      %v1012 = vpack.c.b16 %v896, %v895
      %v1013 = vpack.c.b16 %v898, %v897
      %v1014 = vpack.c.b16 %v900, %v899
      %v1015 = vpack.c.b16 %v902, %v901
      %v1016 = vpack.c.b16 %v904, %v903
      %v1017 = vpack.c.b16 %v906, %v905
      %v1018 = vpack.c.b16 %v908, %v907
      %v1019 = vpack.c.b16 %v910, %v909
      %v1020 = vpack.c.b16 %v912, %v911
      %v1021 = vpack.c.b16 %v914, %v913
      %v1022 = vpack.c.b16 %v916, %v915
      %v1023 = vpack.c.b16 %v918, %v917
      %v1024 = vpack.c.b16 %v920, %v919
      %v1025 = vpack.c.b16 %v922, %v921
      %v1026 = vpack.c.b16 %v924, %v923
      %v1027 = vpack.c.b16 %v926, %v925
      %v1028 = vpack.c.b16 %v928, %v927
      %v1029 = vpack.c.b16 %v930, %v929
      %v1030 = vpack.c.b16 %v932, %v931
      %v1031 = vpack.c.b16 %v934, %v933
      %v1032 = vpack.c.b16 %v936, %v935
      %v1033 = vpack.c.b16 %v938, %v937
      %v1034 = vpack.c.b16 %v940, %v939
      %v1035 = vpack.c.b16 %v942, %v941
      %v1036 = vpack.c.b16 %v944, %v943
      %v1037 = vpack.c.b16 %v946, %v945
      %v1038 = vpack.c.b16 %v948, %v947
      %v1039 = vpack.c.b16 %v950, %v949
      %v1040 = vpack.c.b16 %v952, %v951
      %v1041 = vpack.c.b16 %v954, %v953
      %v1042 = vpack.c.b16 %v956, %v955
      %v1043 = vpack.c.b16 %v958, %v957
      %v1044 = vpack.c.b16 %v960, %v959
      %v1045 = vpack.c.b16 %v962, %v961
      %v1046 = vpack.c.b16 %v964, %v963
      %v1047 = vpack.c.b16 %v966, %v965
      %v1048 = vpack.c.b16 %v968, %v967
      %v1049 = vpack.c.b16 %v970, %v969
      %v1050 = vpack.c.b16 %v972, %v971
      %v1051 = vpack.c.b16 %v974, %v973
      %v1052 = vpack.c.b16 %v976, %v975
      %v1053 = vpack.c.b16 %v978, %v977
      %v1054 = vpack.c.b16 %v980, %v979
      %v1055 = vpack.c.b16 %v982, %v981
      %v1056 = vpack.c.b16 %v984, %v983
      %1129 = vmatpush.bf16.msra.mxu0 %v992
      %1130 = vmatpush.bf16.msra.mxu0 %v991
      %1131 = vmatpush.bf16.msra.mxu0 %v990
      %1132 = vmatpush.bf16.msra.mxu0 %v989
      %1133 = vmatpush.bf16.msra.mxu0 %v988
      %1134 = vmatpush.bf16.msra.mxu0 %v987
      %1135 = vmatpush.bf16.msra.mxu0 %v986
      %1136 = vmatpush.bf16.msra.mxu0 %v985
      %1137 = vmatmul.bf16.gmra.mxu0 %v625
      %v1138 = vpop.f32.mrf.mxu0
      %v1139 = vadd.f32 0.0, %v1138
      %v1140 = vpop.f32.mrf.mxu0
      %v1141 = vadd.f32 0.0, %v1140
      %1142 = vmatmul.bf16.gmra.mxu0 %v634
      %v1143 = vpop.f32.mrf.mxu0
      %v1144 = vadd.f32 0.0, %v1143
      %v1145 = vpop.f32.mrf.mxu0
      %v1146 = vadd.f32 0.0, %v1145
      %1147 = vmatmul.bf16.gmra.mxu0 %v643
      %v1148 = vpop.f32.mrf.mxu0
      %v1149 = vadd.f32 0.0, %v1148
      %v1150 = vpop.f32.mrf.mxu0
      %v1151 = vadd.f32 0.0, %v1150
      %1152 = vmatmul.bf16.gmra.mxu0 %v652
      %v1153 = vpop.f32.mrf.mxu0
      %v1154 = vadd.f32 0.0, %v1153
      %v1155 = vpop.f32.mrf.mxu0
      %v1156 = vadd.f32 0.0, %v1155
      %1157 = vdwg.mxu0
      %1158 = vmatpush.bf16.msra.mxu0 %v1000
      %1159 = vmatpush.bf16.msra.mxu0 %v999
      %1160 = vmatpush.bf16.msra.mxu0 %v998
      %1161 = vmatpush.bf16.msra.mxu0 %v997
      %1162 = vmatpush.bf16.msra.mxu0 %v996
      %1163 = vmatpush.bf16.msra.mxu0 %v995
      %1164 = vmatpush.bf16.msra.mxu0 %v994
      %1165 = vmatpush.bf16.msra.mxu0 %v993
      %1166 = vmatmul.bf16.gmra.mxu0 %v626
      %v1167 = vpop.f32.mrf.mxu0
      %v1168 = vadd.f32 %v1139, %v1167
      %v1169 = vpop.f32.mrf.mxu0
      %v1170 = vadd.f32 %v1141, %v1169
      %1171 = vmatmul.bf16.gmra.mxu0 %v635
      %v1172 = vpop.f32.mrf.mxu0
      %v1173 = vadd.f32 %v1144, %v1172
      %v1174 = vpop.f32.mrf.mxu0
      %v1175 = vadd.f32 %v1146, %v1174
      %1176 = vmatmul.bf16.gmra.mxu0 %v644
      %v1177 = vpop.f32.mrf.mxu0
      %v1178 = vadd.f32 %v1149, %v1177
      %v1179 = vpop.f32.mrf.mxu0
      %v1180 = vadd.f32 %v1151, %v1179
      %1181 = vmatmul.bf16.gmra.mxu0 %v653
      %v1182 = vpop.f32.mrf.mxu0
      %v1183 = vadd.f32 %v1154, %v1182
      %v1184 = vpop.f32.mrf.mxu0
      %v1185 = vadd.f32 %v1156, %v1184
      %1186 = vdwg.mxu0
      %1187 = vmatpush.bf16.msra.mxu0 %v1008
      %1188 = vmatpush.bf16.msra.mxu0 %v1007
      %1189 = vmatpush.bf16.msra.mxu0 %v1006
      %1190 = vmatpush.bf16.msra.mxu0 %v1005
      %1191 = vmatpush.bf16.msra.mxu0 %v1004
      %1192 = vmatpush.bf16.msra.mxu0 %v1003
      %1193 = vmatpush.bf16.msra.mxu0 %v1002
      %1194 = vmatpush.bf16.msra.mxu0 %v1001
      %1195 = vmatmul.bf16.gmra.mxu0 %v627
      %v1196 = vpop.f32.mrf.mxu0
      %v1197 = vadd.f32 %v1168, %v1196
      %v1198 = vpop.f32.mrf.mxu0
      %v1199 = vadd.f32 %v1170, %v1198
      %1200 = vmatmul.bf16.gmra.mxu0 %v636
      %v1201 = vpop.f32.mrf.mxu0
      %v1202 = vadd.f32 %v1173, %v1201
      %v1203 = vpop.f32.mrf.mxu0
      %v1204 = vadd.f32 %v1175, %v1203
      %1205 = vmatmul.bf16.gmra.mxu0 %v645
      %v1206 = vpop.f32.mrf.mxu0
      %v1207 = vadd.f32 %v1178, %v1206
      %v1208 = vpop.f32.mrf.mxu0
      %v1209 = vadd.f32 %v1180, %v1208
      %1210 = vmatmul.bf16.gmra.mxu0 %v654
      %v1211 = vpop.f32.mrf.mxu0
      %v1212 = vadd.f32 %v1183, %v1211
      %v1213 = vpop.f32.mrf.mxu0
      %v1214 = vadd.f32 %v1185, %v1213
      %1215 = vdwg.mxu0
      %1216 = vmatpush.bf16.msra.mxu0 %v1016
      %1217 = vmatpush.bf16.msra.mxu0 %v1015
      %1218 = vmatpush.bf16.msra.mxu0 %v1014
      %1219 = vmatpush.bf16.msra.mxu0 %v1013
      %1220 = vmatpush.bf16.msra.mxu0 %v1012
      %1221 = vmatpush.bf16.msra.mxu0 %v1011
      %1222 = vmatpush.bf16.msra.mxu0 %v1010
      %1223 = vmatpush.bf16.msra.mxu0 %v1009
      %1224 = vmatmul.bf16.gmra.mxu0 %v628
      %v1225 = vpop.f32.mrf.mxu0
      %v1226 = vadd.f32 %v1197, %v1225
      %v1227 = vpop.f32.mrf.mxu0
      %v1228 = vadd.f32 %v1199, %v1227
      %1229 = vmatmul.bf16.gmra.mxu0 %v637
      %v1230 = vpop.f32.mrf.mxu0
      %v1231 = vadd.f32 %v1202, %v1230
      %v1232 = vpop.f32.mrf.mxu0
      %v1233 = vadd.f32 %v1204, %v1232
      %1234 = vmatmul.bf16.gmra.mxu0 %v646
      %v1235 = vpop.f32.mrf.mxu0
      %v1236 = vadd.f32 %v1207, %v1235
      %v1237 = vpop.f32.mrf.mxu0
      %v1238 = vadd.f32 %v1209, %v1237
      %1239 = vmatmul.bf16.gmra.mxu0 %v655
      %v1240 = vpop.f32.mrf.mxu0
      %v1241 = vadd.f32 %v1212, %v1240
      %v1242 = vpop.f32.mrf.mxu0
      %v1243 = vadd.f32 %v1214, %v1242
      %1244 = vdwg.mxu0
      %1245 = vmatpush.bf16.msra.mxu0 %v1024
      %1246 = vmatpush.bf16.msra.mxu0 %v1023
      %1247 = vmatpush.bf16.msra.mxu0 %v1022
      %1248 = vmatpush.bf16.msra.mxu0 %v1021
      %1249 = vmatpush.bf16.msra.mxu0 %v1020
      %1250 = vmatpush.bf16.msra.mxu0 %v1019
      %1251 = vmatpush.bf16.msra.mxu0 %v1018
      %1252 = vmatpush.bf16.msra.mxu0 %v1017
      %1253 = vmatmul.bf16.gmra.mxu0 %v629
      %v1254 = vpop.f32.mrf.mxu0
      %v1255 = vadd.f32 %v1226, %v1254
      %v1256 = vpop.f32.mrf.mxu0
      %v1257 = vadd.f32 %v1228, %v1256
      %1258 = vmatmul.bf16.gmra.mxu0 %v638
      %v1259 = vpop.f32.mrf.mxu0
      %v1260 = vadd.f32 %v1231, %v1259
      %v1261 = vpop.f32.mrf.mxu0
      %v1262 = vadd.f32 %v1233, %v1261
      %1263 = vmatmul.bf16.gmra.mxu0 %v647
      %v1264 = vpop.f32.mrf.mxu0
      %v1265 = vadd.f32 %v1236, %v1264
      %v1266 = vpop.f32.mrf.mxu0
      %v1267 = vadd.f32 %v1238, %v1266
      %1268 = vmatmul.bf16.gmra.mxu0 %v656
      %v1269 = vpop.f32.mrf.mxu0
      %v1270 = vadd.f32 %v1241, %v1269
      %v1271 = vpop.f32.mrf.mxu0
      %v1272 = vadd.f32 %v1243, %v1271
      %1273 = vdwg.mxu0
      %1274 = vmatpush.bf16.msra.mxu0 %v1032
      %1275 = vmatpush.bf16.msra.mxu0 %v1031
      %1276 = vmatpush.bf16.msra.mxu0 %v1030
      %1277 = vmatpush.bf16.msra.mxu0 %v1029
      %1278 = vmatpush.bf16.msra.mxu0 %v1028
      %1279 = vmatpush.bf16.msra.mxu0 %v1027
      %1280 = vmatpush.bf16.msra.mxu0 %v1026
      %1281 = vmatpush.bf16.msra.mxu0 %v1025
      %1282 = vmatmul.bf16.gmra.mxu0 %v630
      %v1283 = vpop.f32.mrf.mxu0
      %v1284 = vadd.f32 %v1255, %v1283
      %v1285 = vpop.f32.mrf.mxu0
      %v1286 = vadd.f32 %v1257, %v1285
      %1287 = vmatmul.bf16.gmra.mxu0 %v639
      %v1288 = vpop.f32.mrf.mxu0
      %v1289 = vadd.f32 %v1260, %v1288
      %v1290 = vpop.f32.mrf.mxu0
      %v1291 = vadd.f32 %v1262, %v1290
      %1292 = vmatmul.bf16.gmra.mxu0 %v648
      %v1293 = vpop.f32.mrf.mxu0
      %v1294 = vadd.f32 %v1265, %v1293
      %v1295 = vpop.f32.mrf.mxu0
      %v1296 = vadd.f32 %v1267, %v1295
      %1297 = vmatmul.bf16.gmra.mxu0 %v657
      %v1298 = vpop.f32.mrf.mxu0
      %v1299 = vadd.f32 %v1270, %v1298
      %v1300 = vpop.f32.mrf.mxu0
      %v1301 = vadd.f32 %v1272, %v1300
      %1302 = vdwg.mxu0
      %1303 = vmatpush.bf16.msra.mxu0 %v1040
      %1304 = vmatpush.bf16.msra.mxu0 %v1039
      %1305 = vmatpush.bf16.msra.mxu0 %v1038
      %1306 = vmatpush.bf16.msra.mxu0 %v1037
      %1307 = vmatpush.bf16.msra.mxu0 %v1036
      %1308 = vmatpush.bf16.msra.mxu0 %v1035
      %1309 = vmatpush.bf16.msra.mxu0 %v1034
      %1310 = vmatpush.bf16.msra.mxu0 %v1033
      %1311 = vmatmul.bf16.gmra.mxu0 %v631
      %v1312 = vpop.f32.mrf.mxu0
      %v1313 = vadd.f32 %v1284, %v1312
      %v1314 = vpop.f32.mrf.mxu0
      %v1315 = vadd.f32 %v1286, %v1314
      %1316 = vmatmul.bf16.gmra.mxu0 %v640
      %v1317 = vpop.f32.mrf.mxu0
      %v1318 = vadd.f32 %v1289, %v1317
      %v1319 = vpop.f32.mrf.mxu0
      %v1320 = vadd.f32 %v1291, %v1319
      %1321 = vmatmul.bf16.gmra.mxu0 %v649
      %v1322 = vpop.f32.mrf.mxu0
      %v1323 = vadd.f32 %v1294, %v1322
      %v1324 = vpop.f32.mrf.mxu0
      %v1325 = vadd.f32 %v1296, %v1324
      %1326 = vmatmul.bf16.gmra.mxu0 %v658
      %v1327 = vpop.f32.mrf.mxu0
      %v1328 = vadd.f32 %v1299, %v1327
      %v1329 = vpop.f32.mrf.mxu0
      %v1330 = vadd.f32 %v1301, %v1329
      %1331 = vdwg.mxu0
      %1332 = vmatpush.bf16.msra.mxu0 %v1048
      %1333 = vmatpush.bf16.msra.mxu0 %v1047
      %1334 = vmatpush.bf16.msra.mxu0 %v1046
      %1335 = vmatpush.bf16.msra.mxu0 %v1045
      %1336 = vmatpush.bf16.msra.mxu0 %v1044
      %1337 = vmatpush.bf16.msra.mxu0 %v1043
      %1338 = vmatpush.bf16.msra.mxu0 %v1042
      %1339 = vmatpush.bf16.msra.mxu0 %v1041
      %1340 = vmatmul.bf16.gmra.mxu0 %v632
      %v1341 = vpop.f32.mrf.mxu0
      %v1342 = vadd.f32 %v1313, %v1341
      %v1343 = vpop.f32.mrf.mxu0
      %v1344 = vadd.f32 %v1315, %v1343
      %1345 = vmatmul.bf16.gmra.mxu0 %v641
      %v1346 = vpop.f32.mrf.mxu0
      %v1347 = vadd.f32 %v1318, %v1346
      %v1348 = vpop.f32.mrf.mxu0
      %v1349 = vadd.f32 %v1320, %v1348
      %1350 = vmatmul.bf16.gmra.mxu0 %v650
      %v1351 = vpop.f32.mrf.mxu0
      %v1352 = vadd.f32 %v1323, %v1351
      %v1353 = vpop.f32.mrf.mxu0
      %v1354 = vadd.f32 %v1325, %v1353
      %1355 = vmatmul.bf16.gmra.mxu0 %v659
      %v1356 = vpop.f32.mrf.mxu0
      %v1357 = vadd.f32 %v1328, %v1356
      %v1358 = vpop.f32.mrf.mxu0
      %v1359 = vadd.f32 %v1330, %v1358
      %1360 = vdwg.mxu0
      %1361 = vmatpush.bf16.msra.mxu0 %v1056
      %1362 = vmatpush.bf16.msra.mxu0 %v1055
      %1363 = vmatpush.bf16.msra.mxu0 %v1054
      %1364 = vmatpush.bf16.msra.mxu0 %v1053
      %1365 = vmatpush.bf16.msra.mxu0 %v1052
      %1366 = vmatpush.bf16.msra.mxu0 %v1051
      %1367 = vmatpush.bf16.msra.mxu0 %v1050
      %1368 = vmatpush.bf16.msra.mxu0 %v1049
      %1369 = vmatmul.bf16.gmra.mxu0 %v633
      %v1370 = vpop.f32.mrf.mxu0
      %v1371 = vadd.f32 %v1342, %v1370
      %v1372 = vpop.f32.mrf.mxu0
      %v1373 = vadd.f32 %v1344, %v1372
      %1374 = vmatmul.bf16.gmra.mxu0 %v642
      %v1375 = vpop.f32.mrf.mxu0
      %v1376 = vadd.f32 %v1347, %v1375
      %v1377 = vpop.f32.mrf.mxu0
      %v1378 = vadd.f32 %v1349, %v1377
      %1379 = vmatmul.bf16.gmra.mxu0 %v651
      %v1380 = vpop.f32.mrf.mxu0
      %v1381 = vadd.f32 %v1352, %v1380
      %v1382 = vpop.f32.mrf.mxu0
      %v1383 = vadd.f32 %v1354, %v1382
      %1384 = vmatmul.bf16.gmra.mxu0 %v660
      %v1385 = vpop.f32.mrf.mxu0
      %v1386 = vadd.f32 %v1357, %v1385
      %v1387 = vpop.f32.mrf.mxu0
      %v1388 = vadd.f32 %v1359, %v1387
      %1389 = vdwg.mxu0
      %v1390 = vld [vmem:[%s307] sm:$0x1]
      %v1392 = vperm.slane %v1390, 0
      %v1394 = vmul.f32 %v1371, %v1392
      %v1395 = vmul.f32 %v1373, %v1392
      %v1396 = vmul.f32 %v1376, %v1392
      %v1397 = vmul.f32 %v1378, %v1392
      %v1398 = vmul.f32 %v1381, %v1392
      %v1399 = vmul.f32 %v1383, %v1392
      %v1400 = vmul.f32 %v1386, %v1392
      %v1401 = vmul.f32 %v1388, %v1392
      %v1402 = vld [vmem:[%s310] sm:$0x1]
      %v1404 = vperm.slane %v1402, 0
      %v1406 = vadd.f32 %v1394, %v1404
      %v1407 = vadd.f32 %v1395, %v1404
      %v1408 = vadd.f32 %v1396, %v1404
      %v1409 = vadd.f32 %v1397, %v1404
      %v1410 = vadd.f32 %v1398, %v1404
      %v1411 = vadd.f32 %v1399, %v1404
      %v1412 = vadd.f32 %v1400, %v1404
      %v1413 = vadd.f32 %v1401, %v1404
      %v1414 = vld [vmem:[%s318] sm:$0xf]
      %v1415 = vld [vmem:[%s318 + $0x4] sm:$0xf]
      %v1416 = vld [vmem:[%s318 + $0x8] sm:$0xf]
      %v1417 = vld [vmem:[%s318 + $0xc] sm:$0xf]
      %v1418 = vld [vmem:[%s318 + $0x10] sm:$0xf]
      %v1419 = vld [vmem:[%s318 + $0x14] sm:$0xf]
      %v1420 = vld [vmem:[%s318 + $0x18] sm:$0xf]
      %v1421 = vld [vmem:[%s318 + $0x1c] sm:$0xf]
      %v1422 = vunpack.c.l.bf16 %v1414
      %v1423 = vunpack.c.l.bf16 %v1415
      %v1424 = vunpack.c.l.bf16 %v1416
      %v1425 = vunpack.c.l.bf16 %v1417
      %v1426 = vunpack.c.l.bf16 %v1418
      %v1427 = vunpack.c.l.bf16 %v1419
      %v1428 = vunpack.c.l.bf16 %v1420
      %v1429 = vunpack.c.l.bf16 %v1421
      %v1430 = vadd.f32 %v1406, %v1422
      %v1431 = vadd.f32 %v1407, %v1423
      %v1432 = vadd.f32 %v1408, %v1424
      %v1433 = vadd.f32 %v1409, %v1425
      %v1434 = vadd.f32 %v1410, %v1426
      %v1435 = vadd.f32 %v1411, %v1427
      %v1436 = vadd.f32 %v1412, %v1428
      %v1437 = vadd.f32 %v1413, %v1429
      %v1438 = vmax.f32 %v1430, 0.0
      %v1439 = vmax.f32 %v1431, 0.0
      %v1440 = vmax.f32 %v1432, 0.0
      %v1441 = vmax.f32 %v1433, 0.0
      %v1442 = vmax.f32 %v1434, 0.0
      %v1443 = vmax.f32 %v1435, 0.0
      %v1444 = vmax.f32 %v1436, 0.0
      %v1445 = vmax.f32 %v1437, 0.0
      %v1446 = vpack.c.bf16 %v1438, %v1438
      %v1447 = vpack.c.bf16 %v1439, %v1439
      %v1448 = vpack.c.bf16 %v1440, %v1440
      %v1449 = vpack.c.bf16 %v1441, %v1441
      %v1450 = vpack.c.bf16 %v1442, %v1442
      %v1451 = vpack.c.bf16 %v1443, %v1443
      %v1452 = vpack.c.bf16 %v1444, %v1444
      %v1453 = vpack.c.bf16 %v1445, %v1445
      %1454 = vst [vmem:[%s327] sm:$0xf] %v1446
      %1455 = vst [vmem:[%s327 + $0x4] sm:$0xf] %v1447
      %1456 = vst [vmem:[%s327 + $0x8] sm:$0xf] %v1448
      %1457 = vst [vmem:[%s327 + $0xc] sm:$0xf] %v1449
      %1458 = vst [vmem:[%s327 + $0x10] sm:$0xf] %v1450
      %1459 = vst [vmem:[%s327 + $0x14] sm:$0xf] %v1451
      %1460 = vst [vmem:[%s327 + $0x18] sm:$0xf] %v1452
      %1461 = vst [vmem:[%s327 + $0x1c] sm:$0xf] %v1453
      %s1462 = smul.u32 8, %s20
      %p1463 = scmp.lt.s32.totalorder %s1462, 15
      %s1464 = scalar_select %p1463, %s1462, 15
      %p1465 = scmp.lt.s32.totalorder %s21, 0
      %s1466 = scalar_select %p1465, %s21, 0
      %s1467 = sadd.s32 %s1466, %s1464
      %s1468 = smul.addr %s1467, 4
      %s1469 = scalar_lea.vmem %s5, %s1468
      // Predicated region
      $region41: #{forward.19} parent=39 // pred_check
        %p1470 = pneg %p180
      $region42: #{forward.19} parent=39 // pred_check_branch
        %1472 = sbr.rel (%p1470) target = $region44
      $region43: #{forward.19} parent=39 // pred_region
        %s1473 = smul.u32 8, %s20
      $region44: #{forward.19} parent=39 // pred_fallthru
        _
    $region40: #{forward.19} parent=5 // pred_fallthru
      _
    %p1474 = scmp.le.s32.totalorder 2, %s11
    // Predicated region
    $region45: #{forward.19} parent=5 // pred_check
      %p1475 = pneg %p1474
    $region46: #{forward.19} parent=5 // pred_check_branch
      %1477 = sbr.rel (%p1475) target = $region48
    $region47: #{forward.19} parent=5 // pred_region
      %s1478 = ssub.s32 %s11, 2
      // Predicated region
      $region49: #{forward.19} parent=47 // pred_check
        %p1479 = pneg %p186
      $region50: #{forward.19} parent=47 // pred_check_branch
        %1481 = sbr.rel (%p1479) target = $region52
      $region51: #{forward.19} parent=47 // pred_region
        %s1482 = smul.u32 8, %s22
        %p1483 = scmp.lt.s32.totalorder %s1482, 15
        %s1484 = scalar_select %p1483, %s1482, 15
        %p1485 = scmp.lt.s32.totalorder %s23, 0
        %s1486 = scalar_select %p1485, %s23, 0
        %s1487 = sadd.s32 %s1486, %s1484
        %s1488 = smul.addr %s1487, 4
        %s1489 = scalar_lea.vmem %s5, %s1488
      $region52: #{forward.19} parent=47 // pred_fallthru
        _
    $region48: #{forward.19} parent=5 // pred_fallthru
      _
  $region6: #{forward.19} parent=0 // loop_footer
    %s15 = sadd.s32 1, %s11
  $region7: #{forward.19} parent=0 // loop_footer_branch
    %10 = sbr.rel target = $region3
  $region8: #{forward.19} parent=0 // loop_exit
    _

// kernel: forward.20
$region0: #{forward.20}
  #allocation0 [shape = 'u32[]', space=smem, size = 0x4, offset = 0x4, fixed_abs, tag = 'smem constant byte address 0x4 - core index']
  #allocation1 [shape = 'u32[72,128]{1,0:T(1,128)}', space=vmem, size = 0x9000, scoped, tag = 'internal scratch']
  %s0 = inlined_call_operand.vmem [shape: bf16[128,1152], index: 0, kind: input, shape index: {}]
  %s1 = inlined_call_operand.vmem [shape: bf16[1152,128], index: 1, kind: input, shape index: {}]
  %s2 = inlined_call_operand.hbm [shape: f32[1,128], index: 2, kind: input, shape index: {}]
  %s3 = inlined_call_operand.hbm [shape: f32[1,128], index: 3, kind: input, shape index: {}]
  %s4 = inlined_call_operand.vmem [shape: bf16[128,128], index: 4, kind: output, shape index: {}]
  %s5 = sld [smem:[#allocation0]]
  $region57: #{forward.20} parent=0
    _
  %s7 = ssub.s32 1, %s5
  %s8 = scalar_select 0, %s7, %s5
  $region1: #{forward.20} parent=0
    #allocation2 [shape = 'u8[512]{0}', space=vmem, size = 0x400, scoped, tag = 'input window, operand 2, single buffered']
    #allocation3 [shape = 's32[2]{0}', space=sflag, size = 0x8, scoped, tag = 'scoped memory for forward.20']
    #allocation4 [shape = 'u8[512]{0}', space=vmem, size = 0x400, scoped, tag = 'input window, operand 3, single buffered']
    #allocation5 [shape = 's32[1]{0}', space=sflag, size = 0x4, scoped, tag = 'scoped memory for forward.20']
    %9 = vsyncpa [#allocation3], 0
    %10 = vsyncpa [#allocation5], 0
    loop: start=0, step=1, limit=4
    $region2: #{forward.20} parent=1 // loop_pre_header
      _
    $region3: #{forward.20} parent=1 // loop_header
      %s12 = sphi 0, %s16
      %p13 = scmp.ge.s32.totalorder %s12, 4
      %s19 = sphi 0, %s31
      %s20 = sphi 0, %s27
      %s21 = sphi 0, %s19
      %s22 = sphi 0, %s20
      %s23 = sphi 0, %s21
      %s24 = sphi 0, %s22
      %s34 = sphi 0, %s36
      %s37 = sphi 0, %s34
      %s38 = sphi 0, %s37
      %s54 = sphi 0, %s38
      %s60 = sphi 0, %s62
      %s63 = sphi 0, %s60
      %s64 = sphi 0, %s63
      %s80 = sphi 0, %s64
      %s86 = sphi 0, %s88
      %s89 = sphi 0, %s86
      %s90 = sphi 0, %s89
      %s106 = sphi 0, %s90
      %s112 = sphi 0, %s114
      %s115 = sphi 0, %s112
      %s116 = sphi 0, %s115
      %s132 = sphi 0, %s116
      %s140 = sphi 0, %s142
      %s143 = sphi 0, %s140
      %s144 = sphi 0, %s143
      %s160 = sphi 0, %s144
    $region4: #{forward.20} parent=1 // loop_header_branch
      %15 = sbr.rel (%p13) target = $region8
    $region5: #{forward.20} parent=1 // loop_body
      %s17 = ssub.s32 %s12, 1
      %s18 = ssub.s32 %s12, 2
      %s25 = sadd.s32 1, %s20
      %p26 = scmp.ge.s32.totalorder %s25, 1
      %s27 = scalar_select %p26, 0, %s25
      %s28 = sadd.s32 1, %s19
      %s29 = scalar_select %p26, %s28, %s19
      %p30 = scmp.ge.s32.totalorder %s29, 2
      %s31 = scalar_select %p30, 0, %s29
      %s32 = ssub.s32 %s19, %s31
      %p33 = scmp.eq.s32.totalorder %s32, 0
      %s35 = sadd.s32 %s34, 1
      %s36 = scalar_select %p33, %s34, %s35
      %p39 = pneg %p33
      %p40 = scmp.eq.s32.totalorder %s12, 1
      %p41 = por %p39, %p40
      %p42 = scmp.ne.s32.totalorder %s34, %s37
      %p43 = scmp.eq.s32.totalorder %s12, 0
      %p44 = por %p42, %p43
      %p45 = scmp.ne.s32.totalorder %s34, %s37
      %p46 = scmp.eq.s32.totalorder %s17, 1
      %p47 = por %p45, %p46
      %p48 = scmp.ne.s32.totalorder %s37, %s38
      %p49 = scmp.eq.s32.totalorder %s17, 0
      %p50 = por %p48, %p49
      %p51 = scmp.ne.s32.totalorder %s37, %s38
      %p52 = scmp.eq.s32.totalorder %s18, 1
      %p53 = por %p51, %p52
      %p55 = scmp.ne.s32.totalorder %s38, %s54
      %p56 = scmp.eq.s32.totalorder %s18, 0
      %p57 = por %p55, %p56
      %s58 = ssub.s32 %s20, %s27
      %p59 = scmp.eq.s32.totalorder %s58, 0
      %s61 = sadd.s32 %s60, 1
      %s62 = scalar_select %p59, %s60, %s61
      %p65 = pneg %p59
      %p66 = scmp.eq.s32.totalorder %s12, 1
      %p67 = por %p65, %p66
      %p68 = scmp.ne.s32.totalorder %s60, %s63
      %p69 = scmp.eq.s32.totalorder %s12, 0
      %p70 = por %p68, %p69
      %p71 = scmp.ne.s32.totalorder %s60, %s63
      %p72 = scmp.eq.s32.totalorder %s17, 1
      %p73 = por %p71, %p72
      %p74 = scmp.ne.s32.totalorder %s63, %s64
      %p75 = scmp.eq.s32.totalorder %s17, 0
      %p76 = por %p74, %p75
      %p77 = scmp.ne.s32.totalorder %s63, %s64
      %p78 = scmp.eq.s32.totalorder %s18, 1
      %p79 = por %p77, %p78
      %p81 = scmp.ne.s32.totalorder %s64, %s80
      %p82 = scmp.eq.s32.totalorder %s18, 0
      %p83 = por %p81, %p82
      %s84 = ssub.s32 %s20, %s27
      %p85 = scmp.eq.s32.totalorder %s84, 0
      %s87 = sadd.s32 %s86, 1
      %s88 = scalar_select %p85, %s86, %s87
      %p91 = pneg %p85
      %p92 = scmp.eq.s32.totalorder %s12, 1
      %p93 = por %p91, %p92
      %p94 = scmp.ne.s32.totalorder %s86, %s89
      %p95 = scmp.eq.s32.totalorder %s12, 0
      %p96 = por %p94, %p95
      %p97 = scmp.ne.s32.totalorder %s86, %s89
      %p98 = scmp.eq.s32.totalorder %s17, 1
      %p99 = por %p97, %p98
      %p100 = scmp.ne.s32.totalorder %s89, %s90
      %p101 = scmp.eq.s32.totalorder %s17, 0
      %p102 = por %p100, %p101
      %p103 = scmp.ne.s32.totalorder %s89, %s90
      %p104 = scmp.eq.s32.totalorder %s18, 1
      %p105 = por %p103, %p104
      %p107 = scmp.ne.s32.totalorder %s90, %s106
      %p108 = scmp.eq.s32.totalorder %s18, 0
      %p109 = por %p107, %p108
      %s110 = ssub.s32 %s20, %s27
      %p111 = scmp.eq.s32.totalorder %s110, 0
      %s113 = sadd.s32 %s112, 1
      %s114 = scalar_select %p111, %s112, %s113
      %p117 = pneg %p111
      %p118 = scmp.eq.s32.totalorder %s12, 1
      %p119 = por %p117, %p118
      %p120 = scmp.ne.s32.totalorder %s112, %s115
      %p121 = scmp.eq.s32.totalorder %s12, 0
      %p122 = por %p120, %p121
      %p123 = scmp.ne.s32.totalorder %s112, %s115
      %p124 = scmp.eq.s32.totalorder %s17, 1
      %p125 = por %p123, %p124
      %p126 = scmp.ne.s32.totalorder %s115, %s116
      %p127 = scmp.eq.s32.totalorder %s17, 0
      %p128 = por %p126, %p127
      %p129 = scmp.ne.s32.totalorder %s115, %s116
      %p130 = scmp.eq.s32.totalorder %s18, 1
      %p131 = por %p129, %p130
      %p133 = scmp.ne.s32.totalorder %s116, %s132
      %p134 = scmp.eq.s32.totalorder %s18, 0
      %p135 = por %p133, %p134
      %s136 = ssub.s32 %s19, %s31
      %s137 = ssub.s32 %s20, %s27
      %s138 = sor.u32 %s136, %s137
      %p139 = scmp.eq.s32.totalorder %s138, 0
      %s141 = sadd.s32 %s140, 1
      %s142 = scalar_select %p139, %s140, %s141
      %p145 = pneg %p139
      %p146 = scmp.eq.s32.totalorder %s12, 1
      %p147 = por %p145, %p146
      %p148 = scmp.ne.s32.totalorder %s140, %s143
      %p149 = scmp.eq.s32.totalorder %s12, 0
      %p150 = por %p148, %p149
      %p151 = scmp.ne.s32.totalorder %s140, %s143
      %p152 = scmp.eq.s32.totalorder %s17, 1
      %p153 = por %p151, %p152
      %p154 = scmp.ne.s32.totalorder %s143, %s144
      %p155 = scmp.eq.s32.totalorder %s17, 0
      %p156 = por %p154, %p155
      %p157 = scmp.ne.s32.totalorder %s143, %s144
      %p158 = scmp.eq.s32.totalorder %s18, 1
      %p159 = por %p157, %p158
      %p161 = scmp.ne.s32.totalorder %s144, %s160
      %p162 = scmp.eq.s32.totalorder %s18, 0
      %p163 = por %p161, %p162
      %p164 = scmp.le.s32.totalorder 1, %s12
      %p165 = scmp.lt.s32.totalorder %s12, 3
      %p166 = pnand %p164, %p165
      %p167 = pneg %p166
      // Predicated region
      $region9: #{forward.20} parent=5 // pred_check
        _
      $region10: #{forward.20} parent=5 // pred_check_branch
        %169 = sbr.rel (%p166) target = $region12
      $region11: #{forward.20} parent=5 // pred_region
        %s170 = ssub.s32 %s12, 1
        // Predicated region
        $region13: #{forward.20} parent=11 // pred_check
          %p171 = pneg %p76
        $region14: #{forward.20} parent=11 // pred_check_branch
          %173 = sbr.rel (%p171) target = $region16
        $region15: #{forward.20} parent=11 // pred_region
          %p174 = scmp.lt.s32.totalorder %s22, 0
          %s175 = scalar_select %p174, %s22, 0
          %s176 = smul.addr %s175, 4
          %s177 = scalar_lea.vmem %s1, %s176
        $region16: #{forward.20} parent=11 // pred_fallthru
          _
        // Predicated region
        $region17: #{forward.20} parent=11 // pred_check
          %p178 = pneg %p102
        $region18: #{forward.20} parent=11 // pred_check_branch
          %180 = sbr.rel (%p178) target = $region20
        $region19: #{forward.20} parent=11 // pred_region
          %182 = vsyncadd [#allocation3], 0
          %s183 = scalar_lea.hbm %s2, %s22
          %s185 = sshll.u32 %s183, 4
          %s186 = int_to_ptr.hbm [resolvable:$true] %s185
          %s187 = sshll.u32 [#allocation2], 4
          %s188 = int_to_ptr.vmem [resolvable:$true] %s187
          %190 = dma.hbm_to_vmem [thread:$0]  %s186, 16, %s188, [#allocation3]
        $region20: #{forward.20} parent=11 // pred_fallthru
          _
        // Predicated region
        $region21: #{forward.20} parent=11 // pred_check
          %p191 = pneg %p128
        $region22: #{forward.20} parent=11 // pred_check_branch
          %193 = sbr.rel (%p191) target = $region24
        $region23: #{forward.20} parent=11 // pred_region
          %195 = vsyncadd [#allocation5], 0
          %s196 = scalar_lea.hbm %s3, %s22
          %s198 = sshll.u32 %s196, 4
          %s199 = int_to_ptr.hbm [resolvable:$true] %s198
          %s200 = sshll.u32 [#allocation4], 4
          %s201 = int_to_ptr.vmem [resolvable:$true] %s200
          %203 = dma.hbm_to_vmem [thread:$0]  %s199, 16, %s201, [#allocation5]
        $region24: #{forward.20} parent=11 // pred_fallthru
          _
      $region12: #{forward.20} parent=5 // pred_fallthru
        _
      %p204 = scmp.lt.s32.totalorder %s12, 2
      // Predicated region
      $region25: #{forward.20} parent=5 // pred_check
        %p205 = pneg %p204
      $region26: #{forward.20} parent=5 // pred_check_branch
        %207 = sbr.rel (%p205) target = $region28
      $region27: #{forward.20} parent=5 // pred_region
        // Predicated region
        $region29: #{forward.20} parent=27 // pred_check
          %p208 = pneg %p44
        $region30: #{forward.20} parent=27 // pred_check_branch
          %210 = sbr.rel (%p208) target = $region32
        $region31: #{forward.20} parent=27 // pred_region
          %s211 = smul.u32 8, %s19
          %p212 = scmp.lt.s32.totalorder %s211, 15
          %s213 = scalar_select %p212, %s211, 15
          %s214 = smul.addr %s213, 9
          %s215 = smul.addr %s214, 4
          %s216 = scalar_lea.vmem %s0, %s215
          %s217 = smul.u32 8, %s19
        $region32: #{forward.20} parent=27 // pred_fallthru
          _
      $region28: #{forward.20} parent=5 // pred_fallthru
        _
      %p218 = scmp.le.s32.totalorder 1, %s12
      %p219 = scmp.lt.s32.totalorder %s12, 3
      %p220 = pnand %p218, %p219
      %p221 = pneg %p220
      // Predicated region
      $region33: #{forward.20} parent=5 // pred_check
        _
      $region34: #{forward.20} parent=5 // pred_check_branch
        %223 = sbr.rel (%p220) target = $region36
      $region35: #{forward.20} parent=5 // pred_region
        %s224 = ssub.s32 %s12, 1
        // Predicated region
        $region37: #{forward.20} parent=35 // pred_check
          %p225 = pneg %p102
        $region38: #{forward.20} parent=35 // pred_check_branch
          %227 = sbr.rel (%p225) target = $region40
        $region39: #{forward.20} parent=35 // pred_region
          %229 = dma.done [#allocation3], 16
        $region40: #{forward.20} parent=35 // pred_fallthru
          _
        // Predicated region
        $region41: #{forward.20} parent=35 // pred_check
          %p230 = pneg %p128
        $region42: #{forward.20} parent=35 // pred_check_branch
          %232 = sbr.rel (%p230) target = $region44
        $region43: #{forward.20} parent=35 // pred_region
          %234 = dma.done [#allocation5], 16
        $region44: #{forward.20} parent=35 // pred_fallthru
          _
        %s235 = smul.u32 8, %s21
        %p236 = scmp.lt.s32.totalorder %s235, 15
        %s237 = scalar_select %p236, %s235, 15
        %s238 = smul.addr %s237, 9
        %s239 = smul.addr %s238, 4
        %s240 = scalar_lea.vmem %s0, %s239
        %p241 = pneg %p50
        %p242 = pneg %p47
        %p243 = scmp.lt.s32.totalorder %s22, 0
        %s244 = scalar_select %p243, %s22, 0
        %s245 = smul.addr %s244, 4
        %s246 = scalar_lea.vmem %s1, %s245
        %p247 = pneg %p76
        %p248 = pneg %p73
        %p249 = pneg %p102
        %p250 = pneg %p99
        %p251 = pneg %p128
        %p252 = pneg %p125
        %p253 = pneg %p156
        %p254 = pneg %p153
        %s255 = smul.u32 8, %s21
        %p256 = scmp.lt.s32.totalorder %s255, 15
        %s257 = scalar_select %p256, %s255, 15
        %p258 = scmp.lt.s32.totalorder %s22, 0
        %s259 = scalar_select %p258, %s22, 0
        %s260 = sadd.s32 %s259, %s257
        %s261 = smul.addr %s260, 4
        %s262 = scalar_lea.vmem %s4, %s261
        %s263 = smul.u32 8, %s21
        %p264 = scmp.lt.s32.totalorder %s263, 15
        %s265 = scalar_select %p264, %s263, 15
        %s266 = smul.addr %s265, 9
        %s267 = smul.addr %s266, 4
        %s268 = scalar_lea.vmem %s0, %s267
        %s269 = smul.u32 8, %s21
        %p270 = scmp.lt.s32.totalorder %s22, 0
        %s271 = scalar_select %p270, %s22, 0
        %s272 = smul.addr %s271, 4
        %s273 = scalar_lea.vmem %s1, %s272
        %s274 = smul.u32 8, %s21
        %p275 = scmp.lt.s32.totalorder %s274, 15
        %s276 = scalar_select %p275, %s274, 15
        %p277 = scmp.lt.s32.totalorder %s22, 0
        %s278 = scalar_select %p277, %s22, 0
        %s279 = sadd.s32 %s278, %s276
        %s280 = smul.addr %s279, 4
        %s281 = scalar_lea.vmem %s4, %s280
        %s282 = smul.u32 8, %s21
        %v283 = vld [vmem:[%s268] sm:$0xff]
        %v284 = vld [vmem:[%s268 + $0x8] sm:$0xff]
        %v285 = vld [vmem:[%s268 + $0x10] sm:$0xff]
        %v286 = vld [vmem:[%s268 + $0x18] sm:$0xff]
        %v287 = vld [vmem:[%s268 + $0x20] sm:$0xf]
        %v288 = vld [vmem:[%s268 + $0x24] sm:$0xff]
        %v289 = vld [vmem:[%s268 + $0x2c] sm:$0xff]
        %v290 = vld [vmem:[%s268 + $0x34] sm:$0xff]
        %v291 = vld [vmem:[%s268 + $0x3c] sm:$0xff]
        %v292 = vld [vmem:[%s268 + $0x44] sm:$0xf]
        %v293 = vld [vmem:[%s268 + $0x48] sm:$0xff]
        %v294 = vld [vmem:[%s268 + $0x50] sm:$0xff]
        %v295 = vld [vmem:[%s268 + $0x58] sm:$0xff]
        %v296 = vld [vmem:[%s268 + $0x60] sm:$0xff]
        %v297 = vld [vmem:[%s268 + $0x68] sm:$0xf]
        %v298 = vld [vmem:[%s268 + $0x6c] sm:$0xff]
        %v299 = vld [vmem:[%s268 + $0x74] sm:$0xff]
        %v300 = vld [vmem:[%s268 + $0x7c] sm:$0xff]
        %v301 = vld [vmem:[%s268 + $0x84] sm:$0xff]
        %v302 = vld [vmem:[%s268 + $0x8c] sm:$0xf]
        %v303 = vld [vmem:[%s268 + $0x90] sm:$0xff]
        %v304 = vld [vmem:[%s268 + $0x98] sm:$0xff]
        %v305 = vld [vmem:[%s268 + $0xa0] sm:$0xff]
        %v306 = vld [vmem:[%s268 + $0xa8] sm:$0xff]
        %v307 = vld [vmem:[%s268 + $0xb0] sm:$0xf]
        %v308 = vld [vmem:[%s268 + $0xb4] sm:$0xff]
        %v309 = vld [vmem:[%s268 + $0xbc] sm:$0xff]
        %v310 = vld [vmem:[%s268 + $0xc4] sm:$0xff]
        %v311 = vld [vmem:[%s268 + $0xcc] sm:$0xff]
        %v312 = vld [vmem:[%s268 + $0xd4] sm:$0xf]
        %v313 = vld [vmem:[%s268 + $0xd8] sm:$0xff]
        %v314 = vld [vmem:[%s268 + $0xe0] sm:$0xff]
        %v315 = vld [vmem:[%s268 + $0xe8] sm:$0xff]
        %v316 = vld [vmem:[%s268 + $0xf0] sm:$0xff]
        %v317 = vld [vmem:[%s268 + $0xf8] sm:$0xf]
        %v318 = vld [vmem:[%s268 + $0xfc] sm:$0xff]
        %v319 = vld [vmem:[%s268 + $0x104] sm:$0xff]
        %v320 = vld [vmem:[%s268 + $0x10c] sm:$0xff]
        %v321 = vld [vmem:[%s268 + $0x114] sm:$0xff]
        %v322 = vld [vmem:[%s268 + $0x11c] sm:$0xf]
        %v323 = vld [vmem:[%s273] sm:$0xf]
        %v324 = vld [vmem:[%s273 + $0x4] sm:$0xf]
        %v325 = vld [vmem:[%s273 + $0x8] sm:$0xf]
        %v326 = vld [vmem:[%s273 + $0xc] sm:$0xf]
        %v327 = vld [vmem:[%s273 + $0x10] sm:$0xf]
        %v328 = vld [vmem:[%s273 + $0x14] sm:$0xf]
        %v329 = vld [vmem:[%s273 + $0x18] sm:$0xf]
        %v330 = vld [vmem:[%s273 + $0x1c] sm:$0xf]
        %v331 = vld [vmem:[%s273 + $0x20] sm:$0xf]
        %v332 = vld [vmem:[%s273 + $0x24] sm:$0xf]
        %v333 = vld [vmem:[%s273 + $0x28] sm:$0xf]
        %v334 = vld [vmem:[%s273 + $0x2c] sm:$0xf]
        %v335 = vld [vmem:[%s273 + $0x30] sm:$0xf]
        %v336 = vld [vmem:[%s273 + $0x34] sm:$0xf]
        %v337 = vld [vmem:[%s273 + $0x38] sm:$0xf]
        %v338 = vld [vmem:[%s273 + $0x3c] sm:$0xf]
        %v339 = vld [vmem:[%s273 + $0x40] sm:$0xf]
        %v340 = vld [vmem:[%s273 + $0x44] sm:$0xf]
        %v341 = vld [vmem:[%s273 + $0x48] sm:$0xf]
        %v342 = vld [vmem:[%s273 + $0x4c] sm:$0xf]
        %v343 = vld [vmem:[%s273 + $0x50] sm:$0xf]
        %v344 = vld [vmem:[%s273 + $0x54] sm:$0xf]
        %v345 = vld [vmem:[%s273 + $0x58] sm:$0xf]
        %v346 = vld [vmem:[%s273 + $0x5c] sm:$0xf]
        %v347 = vld [vmem:[%s273 + $0x60] sm:$0xf]
        %v348 = vld [vmem:[%s273 + $0x64] sm:$0xf]
        %v349 = vld [vmem:[%s273 + $0x68] sm:$0xf]
        %v350 = vld [vmem:[%s273 + $0x6c] sm:$0xf]
        %v351 = vld [vmem:[%s273 + $0x70] sm:$0xf]
        %v352 = vld [vmem:[%s273 + $0x74] sm:$0xf]
        %v353 = vld [vmem:[%s273 + $0x78] sm:$0xf]
        %v354 = vld [vmem:[%s273 + $0x7c] sm:$0xf]
        %v355 = vld [vmem:[%s273 + $0x80] sm:$0xf]
        %v356 = vld [vmem:[%s273 + $0x84] sm:$0xf]
        %v357 = vld [vmem:[%s273 + $0x88] sm:$0xf]
        %v358 = vld [vmem:[%s273 + $0x8c] sm:$0xf]
        %v359 = vld [vmem:[%s273 + $0x90] sm:$0xf]
        %v360 = vld [vmem:[%s273 + $0x94] sm:$0xf]
        %v361 = vld [vmem:[%s273 + $0x98] sm:$0xf]
        %v362 = vld [vmem:[%s273 + $0x9c] sm:$0xf]
        %v363 = vld [vmem:[%s273 + $0xa0] sm:$0xf]
        %v364 = vld [vmem:[%s273 + $0xa4] sm:$0xf]
        %v365 = vld [vmem:[%s273 + $0xa8] sm:$0xf]
        %v366 = vld [vmem:[%s273 + $0xac] sm:$0xf]
        %v367 = vld [vmem:[%s273 + $0xb0] sm:$0xf]
        %v368 = vld [vmem:[%s273 + $0xb4] sm:$0xf]
        %v369 = vld [vmem:[%s273 + $0xb8] sm:$0xf]
        %v370 = vld [vmem:[%s273 + $0xbc] sm:$0xf]
        %v371 = vld [vmem:[%s273 + $0xc0] sm:$0xf]
        %v372 = vld [vmem:[%s273 + $0xc4] sm:$0xf]
        %v373 = vld [vmem:[%s273 + $0xc8] sm:$0xf]
        %v374 = vld [vmem:[%s273 + $0xcc] sm:$0xf]
        %v375 = vld [vmem:[%s273 + $0xd0] sm:$0xf]
        %v376 = vld [vmem:[%s273 + $0xd4] sm:$0xf]
        %v377 = vld [vmem:[%s273 + $0xd8] sm:$0xf]
        %v378 = vld [vmem:[%s273 + $0xdc] sm:$0xf]
        %v379 = vld [vmem:[%s273 + $0xe0] sm:$0xf]
        %v380 = vld [vmem:[%s273 + $0xe4] sm:$0xf]
        %v381 = vld [vmem:[%s273 + $0xe8] sm:$0xf]
        %v382 = vld [vmem:[%s273 + $0xec] sm:$0xf]
        %v383 = vld [vmem:[%s273 + $0xf0] sm:$0xf]
        %v384 = vld [vmem:[%s273 + $0xf4] sm:$0xf]
        %v385 = vld [vmem:[%s273 + $0xf8] sm:$0xf]
        %v386 = vld [vmem:[%s273 + $0xfc] sm:$0xf]
        %v387 = vld [vmem:[%s273 + $0x100] sm:$0xf]
        %v388 = vld [vmem:[%s273 + $0x104] sm:$0xf]
        %v389 = vld [vmem:[%s273 + $0x108] sm:$0xf]
        %v390 = vld [vmem:[%s273 + $0x10c] sm:$0xf]
        %v391 = vld [vmem:[%s273 + $0x110] sm:$0xf]
        %v392 = vld [vmem:[%s273 + $0x114] sm:$0xf]
        %v393 = vld [vmem:[%s273 + $0x118] sm:$0xf]
        %v394 = vld [vmem:[%s273 + $0x11c] sm:$0xf]
        %v395 = vld [vmem:[%s273 + $0x120] sm:$0xf]
        %v396 = vld [vmem:[%s273 + $0x124] sm:$0xf]
        %v397 = vld [vmem:[%s273 + $0x128] sm:$0xf]
        %v398 = vld [vmem:[%s273 + $0x12c] sm:$0xf]
        %v399 = vld [vmem:[%s273 + $0x130] sm:$0xf]
        %v400 = vld [vmem:[%s273 + $0x134] sm:$0xf]
        %v401 = vld [vmem:[%s273 + $0x138] sm:$0xf]
        %v402 = vld [vmem:[%s273 + $0x13c] sm:$0xf]
        %v403 = vld [vmem:[%s273 + $0x140] sm:$0xf]
        %v404 = vld [vmem:[%s273 + $0x144] sm:$0xf]
        %v405 = vld [vmem:[%s273 + $0x148] sm:$0xf]
        %v406 = vld [vmem:[%s273 + $0x14c] sm:$0xf]
        %v407 = vld [vmem:[%s273 + $0x150] sm:$0xf]
        %v408 = vld [vmem:[%s273 + $0x154] sm:$0xf]
        %v409 = vld [vmem:[%s273 + $0x158] sm:$0xf]
        %v410 = vld [vmem:[%s273 + $0x15c] sm:$0xf]
        %v411 = vld [vmem:[%s273 + $0x160] sm:$0xf]
        %v412 = vld [vmem:[%s273 + $0x164] sm:$0xf]
        %v413 = vld [vmem:[%s273 + $0x168] sm:$0xf]
        %v414 = vld [vmem:[%s273 + $0x16c] sm:$0xf]
        %v415 = vld [vmem:[%s273 + $0x170] sm:$0xf]
        %v416 = vld [vmem:[%s273 + $0x174] sm:$0xf]
        %v417 = vld [vmem:[%s273 + $0x178] sm:$0xf]
        %v418 = vld [vmem:[%s273 + $0x17c] sm:$0xf]
        %v419 = vld [vmem:[%s273 + $0x180] sm:$0xf]
        %v420 = vld [vmem:[%s273 + $0x184] sm:$0xf]
        %v421 = vld [vmem:[%s273 + $0x188] sm:$0xf]
        %v422 = vld [vmem:[%s273 + $0x18c] sm:$0xf]
        %v423 = vld [vmem:[%s273 + $0x190] sm:$0xf]
        %v424 = vld [vmem:[%s273 + $0x194] sm:$0xf]
        %v425 = vld [vmem:[%s273 + $0x198] sm:$0xf]
        %v426 = vld [vmem:[%s273 + $0x19c] sm:$0xf]
        %v427 = vld [vmem:[%s273 + $0x1a0] sm:$0xf]
        %v428 = vld [vmem:[%s273 + $0x1a4] sm:$0xf]
        %v429 = vld [vmem:[%s273 + $0x1a8] sm:$0xf]
        %v430 = vld [vmem:[%s273 + $0x1ac] sm:$0xf]
        %v431 = vld [vmem:[%s273 + $0x1b0] sm:$0xf]
        %v432 = vld [vmem:[%s273 + $0x1b4] sm:$0xf]
        %v433 = vld [vmem:[%s273 + $0x1b8] sm:$0xf]
        %v434 = vld [vmem:[%s273 + $0x1bc] sm:$0xf]
        %v435 = vld [vmem:[%s273 + $0x1c0] sm:$0xf]
        %v436 = vld [vmem:[%s273 + $0x1c4] sm:$0xf]
        %v437 = vld [vmem:[%s273 + $0x1c8] sm:$0xf]
        %v438 = vld [vmem:[%s273 + $0x1cc] sm:$0xf]
        %v439 = vld [vmem:[%s273 + $0x1d0] sm:$0xf]
        %v440 = vld [vmem:[%s273 + $0x1d4] sm:$0xf]
        %v441 = vld [vmem:[%s273 + $0x1d8] sm:$0xf]
        %v442 = vld [vmem:[%s273 + $0x1dc] sm:$0xf]
        %v443 = vld [vmem:[%s273 + $0x1e0] sm:$0xf]
        %v444 = vld [vmem:[%s273 + $0x1e4] sm:$0xf]
        %v445 = vld [vmem:[%s273 + $0x1e8] sm:$0xf]
        %v446 = vld [vmem:[%s273 + $0x1ec] sm:$0xf]
        %v447 = vld [vmem:[%s273 + $0x1f0] sm:$0xf]
        %v448 = vld [vmem:[%s273 + $0x1f4] sm:$0xf]
        %v449 = vld [vmem:[%s273 + $0x1f8] sm:$0xf]
        %v450 = vld [vmem:[%s273 + $0x1fc] sm:$0xf]
        %v451 = vld [vmem:[%s273 + $0x200] sm:$0xf]
        %v452 = vld [vmem:[%s273 + $0x204] sm:$0xf]
        %v453 = vld [vmem:[%s273 + $0x208] sm:$0xf]
        %v454 = vld [vmem:[%s273 + $0x20c] sm:$0xf]
        %v455 = vld [vmem:[%s273 + $0x210] sm:$0xf]
        %v456 = vld [vmem:[%s273 + $0x214] sm:$0xf]
        %v457 = vld [vmem:[%s273 + $0x218] sm:$0xf]
        %v458 = vld [vmem:[%s273 + $0x21c] sm:$0xf]
        %v459 = vld [vmem:[%s273 + $0x220] sm:$0xf]
        %v460 = vld [vmem:[%s273 + $0x224] sm:$0xf]
        %v461 = vld [vmem:[%s273 + $0x228] sm:$0xf]
        %v462 = vld [vmem:[%s273 + $0x22c] sm:$0xf]
        %v463 = vld [vmem:[%s273 + $0x230] sm:$0xf]
        %v464 = vld [vmem:[%s273 + $0x234] sm:$0xf]
        %v465 = vld [vmem:[%s273 + $0x238] sm:$0xf]
        %v466 = vld [vmem:[%s273 + $0x23c] sm:$0xf]
        %v507 = vunpack.c.l.b16 %v283
        %v508 = vunpack.c.h.b16 %v283
        %v509 = vunpack.c.l.b16 %v284
        %v510 = vunpack.c.h.b16 %v284
        %v511 = vunpack.c.l.b16 %v285
        %v512 = vunpack.c.h.b16 %v285
        %v513 = vunpack.c.l.b16 %v286
        %v514 = vunpack.c.h.b16 %v286
        %v515 = vunpack.c.l.b16 %v287
        %v516 = vunpack.c.l.b16 %v288
        %v517 = vunpack.c.h.b16 %v288
        %v518 = vunpack.c.l.b16 %v289
        %v519 = vunpack.c.h.b16 %v289
        %v520 = vunpack.c.l.b16 %v290
        %v521 = vunpack.c.h.b16 %v290
        %v522 = vunpack.c.l.b16 %v291
        %v523 = vunpack.c.h.b16 %v291
        %v524 = vunpack.c.l.b16 %v292
        %v525 = vunpack.c.l.b16 %v293
        %v526 = vunpack.c.h.b16 %v293
        %v527 = vunpack.c.l.b16 %v294
        %v528 = vunpack.c.h.b16 %v294
        %v529 = vunpack.c.l.b16 %v295
        %v530 = vunpack.c.h.b16 %v295
        %v531 = vunpack.c.l.b16 %v296
        %v532 = vunpack.c.h.b16 %v296
        %v533 = vunpack.c.l.b16 %v297
        %v534 = vunpack.c.l.b16 %v298
        %v535 = vunpack.c.h.b16 %v298
        %v536 = vunpack.c.l.b16 %v299
        %v537 = vunpack.c.h.b16 %v299
        %v538 = vunpack.c.l.b16 %v300
        %v539 = vunpack.c.h.b16 %v300
        %v540 = vunpack.c.l.b16 %v301
        %v541 = vunpack.c.h.b16 %v301
        %v542 = vunpack.c.l.b16 %v302
        %v543 = vunpack.c.l.b16 %v303
        %v544 = vunpack.c.h.b16 %v303
        %v545 = vunpack.c.l.b16 %v304
        %v546 = vunpack.c.h.b16 %v304
        %v547 = vunpack.c.l.b16 %v305
        %v548 = vunpack.c.h.b16 %v305
        %v549 = vunpack.c.l.b16 %v306
        %v550 = vunpack.c.h.b16 %v306
        %v551 = vunpack.c.l.b16 %v307
        %v552 = vunpack.c.l.b16 %v308
        %v553 = vunpack.c.h.b16 %v308
        %v554 = vunpack.c.l.b16 %v309
        %v555 = vunpack.c.h.b16 %v309
        %v556 = vunpack.c.l.b16 %v310
        %v557 = vunpack.c.h.b16 %v310
        %v558 = vunpack.c.l.b16 %v311
        %v559 = vunpack.c.h.b16 %v311
        %v560 = vunpack.c.l.b16 %v312
        %v561 = vunpack.c.l.b16 %v313
        %v562 = vunpack.c.h.b16 %v313
        %v563 = vunpack.c.l.b16 %v314
        %v564 = vunpack.c.h.b16 %v314
        %v565 = vunpack.c.l.b16 %v315
        %v566 = vunpack.c.h.b16 %v315
        %v567 = vunpack.c.l.b16 %v316
        %v568 = vunpack.c.h.b16 %v316
        %v569 = vunpack.c.l.b16 %v317
        %v570 = vunpack.c.l.b16 %v318
        %v571 = vunpack.c.h.b16 %v318
        %v572 = vunpack.c.l.b16 %v319
        %v573 = vunpack.c.h.b16 %v319
        %v574 = vunpack.c.l.b16 %v320
        %v575 = vunpack.c.h.b16 %v320
        %v576 = vunpack.c.l.b16 %v321
        %v577 = vunpack.c.h.b16 %v321
        %v578 = vunpack.c.l.b16 %v322
        %v579 = vpack.c.b16 %v516, %v507
        %v580 = vpack.c.b16 %v517, %v508
        %v581 = vpack.c.b16 %v518, %v509
        %v582 = vpack.c.b16 %v519, %v510
        %v583 = vpack.c.b16 %v520, %v511
        %v584 = vpack.c.b16 %v521, %v512
        %v585 = vpack.c.b16 %v522, %v513
        %v586 = vpack.c.b16 %v523, %v514
        %v587 = vpack.c.b16 %v524, %v515
        %v588 = vpack.c.b16 %v534, %v525
        %v589 = vpack.c.b16 %v535, %v526
        %v590 = vpack.c.b16 %v536, %v527
        %v591 = vpack.c.b16 %v537, %v528
        %v592 = vpack.c.b16 %v538, %v529
        %v593 = vpack.c.b16 %v539, %v530
        %v594 = vpack.c.b16 %v540, %v531
        %v595 = vpack.c.b16 %v541, %v532
        %v596 = vpack.c.b16 %v542, %v533
        %v597 = vpack.c.b16 %v552, %v543
        %v598 = vpack.c.b16 %v553, %v544
        %v599 = vpack.c.b16 %v554, %v545
        %v600 = vpack.c.b16 %v555, %v546
        %v601 = vpack.c.b16 %v556, %v547
        %v602 = vpack.c.b16 %v557, %v548
        %v603 = vpack.c.b16 %v558, %v549
        %v604 = vpack.c.b16 %v559, %v550
        %v605 = vpack.c.b16 %v560, %v551
        %v606 = vpack.c.b16 %v570, %v561
        %v607 = vpack.c.b16 %v571, %v562
        %v608 = vpack.c.b16 %v572, %v563
        %v609 = vpack.c.b16 %v573, %v564
        %v610 = vpack.c.b16 %v574, %v565
        %v611 = vpack.c.b16 %v575, %v566
        %v612 = vpack.c.b16 %v576, %v567
        %v613 = vpack.c.b16 %v577, %v568
        %v614 = vpack.c.b16 %v578, %v569
        %v795 = vunpack.c.l.b16 %v323
        %v796 = vunpack.c.l.b16 %v324
        %v797 = vunpack.c.l.b16 %v325
        %v798 = vunpack.c.l.b16 %v326
        %v799 = vunpack.c.l.b16 %v327
        %v800 = vunpack.c.l.b16 %v328
        %v801 = vunpack.c.l.b16 %v329
        %v802 = vunpack.c.l.b16 %v330
        %v803 = vunpack.c.l.b16 %v331
        %v804 = vunpack.c.l.b16 %v332
        %v805 = vunpack.c.l.b16 %v333
        %v806 = vunpack.c.l.b16 %v334
        %v807 = vunpack.c.l.b16 %v335
        %v808 = vunpack.c.l.b16 %v336
        %v809 = vunpack.c.l.b16 %v337
        %v810 = vunpack.c.l.b16 %v338
        %v811 = vunpack.c.l.b16 %v339
        %v812 = vunpack.c.l.b16 %v340
        %v813 = vunpack.c.l.b16 %v341
        %v814 = vunpack.c.l.b16 %v342
        %v815 = vunpack.c.l.b16 %v343
        %v816 = vunpack.c.l.b16 %v344
        %v817 = vunpack.c.l.b16 %v345
        %v818 = vunpack.c.l.b16 %v346
        %v819 = vunpack.c.l.b16 %v347
        %v820 = vunpack.c.l.b16 %v348
        %v821 = vunpack.c.l.b16 %v349
        %v822 = vunpack.c.l.b16 %v350
        %v823 = vunpack.c.l.b16 %v351
        %v824 = vunpack.c.l.b16 %v352
        %v825 = vunpack.c.l.b16 %v353
        %v826 = vunpack.c.l.b16 %v354
        %v827 = vunpack.c.l.b16 %v355
        %v828 = vunpack.c.l.b16 %v356
        %v829 = vunpack.c.l.b16 %v357
        %v830 = vunpack.c.l.b16 %v358
        %v831 = vunpack.c.l.b16 %v359
        %v832 = vunpack.c.l.b16 %v360
        %v833 = vunpack.c.l.b16 %v361
        %v834 = vunpack.c.l.b16 %v362
        %v835 = vunpack.c.l.b16 %v363
        %v836 = vunpack.c.l.b16 %v364
        %v837 = vunpack.c.l.b16 %v365
        %v838 = vunpack.c.l.b16 %v366
        %v839 = vunpack.c.l.b16 %v367
        %v840 = vunpack.c.l.b16 %v368
        %v841 = vunpack.c.l.b16 %v369
        %v842 = vunpack.c.l.b16 %v370
        %v843 = vunpack.c.l.b16 %v371
        %v844 = vunpack.c.l.b16 %v372
        %v845 = vunpack.c.l.b16 %v373
        %v846 = vunpack.c.l.b16 %v374
        %v847 = vunpack.c.l.b16 %v375
        %v848 = vunpack.c.l.b16 %v376
        %v849 = vunpack.c.l.b16 %v377
        %v850 = vunpack.c.l.b16 %v378
        %v851 = vunpack.c.l.b16 %v379
        %v852 = vunpack.c.l.b16 %v380
        %v853 = vunpack.c.l.b16 %v381
        %v854 = vunpack.c.l.b16 %v382
        %v855 = vunpack.c.l.b16 %v383
        %v856 = vunpack.c.l.b16 %v384
        %v857 = vunpack.c.l.b16 %v385
        %v858 = vunpack.c.l.b16 %v386
        %v859 = vunpack.c.l.b16 %v387
        %v860 = vunpack.c.l.b16 %v388
        %v861 = vunpack.c.l.b16 %v389
        %v862 = vunpack.c.l.b16 %v390
        %v863 = vunpack.c.l.b16 %v391
        %v864 = vunpack.c.l.b16 %v392
        %v865 = vunpack.c.l.b16 %v393
        %v866 = vunpack.c.l.b16 %v394
        %v867 = vunpack.c.l.b16 %v395
        %v868 = vunpack.c.l.b16 %v396
        %v869 = vunpack.c.l.b16 %v397
        %v870 = vunpack.c.l.b16 %v398
        %v871 = vunpack.c.l.b16 %v399
        %v872 = vunpack.c.l.b16 %v400
        %v873 = vunpack.c.l.b16 %v401
        %v874 = vunpack.c.l.b16 %v402
        %v875 = vunpack.c.l.b16 %v403
        %v876 = vunpack.c.l.b16 %v404
        %v877 = vunpack.c.l.b16 %v405
        %v878 = vunpack.c.l.b16 %v406
        %v879 = vunpack.c.l.b16 %v407
        %v880 = vunpack.c.l.b16 %v408
        %v881 = vunpack.c.l.b16 %v409
        %v882 = vunpack.c.l.b16 %v410
        %v883 = vunpack.c.l.b16 %v411
        %v884 = vunpack.c.l.b16 %v412
        %v885 = vunpack.c.l.b16 %v413
        %v886 = vunpack.c.l.b16 %v414
        %v887 = vunpack.c.l.b16 %v415
        %v888 = vunpack.c.l.b16 %v416
        %v889 = vunpack.c.l.b16 %v417
        %v890 = vunpack.c.l.b16 %v418
        %v891 = vunpack.c.l.b16 %v419
        %v892 = vunpack.c.l.b16 %v420
        %v893 = vunpack.c.l.b16 %v421
        %v894 = vunpack.c.l.b16 %v422
        %v895 = vunpack.c.l.b16 %v423
        %v896 = vunpack.c.l.b16 %v424
        %v897 = vunpack.c.l.b16 %v425
        %v898 = vunpack.c.l.b16 %v426
        %v899 = vunpack.c.l.b16 %v427
        %v900 = vunpack.c.l.b16 %v428
        %v901 = vunpack.c.l.b16 %v429
        %v902 = vunpack.c.l.b16 %v430
        %v903 = vunpack.c.l.b16 %v431
        %v904 = vunpack.c.l.b16 %v432
        %v905 = vunpack.c.l.b16 %v433
        %v906 = vunpack.c.l.b16 %v434
        %v907 = vunpack.c.l.b16 %v435
        %v908 = vunpack.c.l.b16 %v436
        %v909 = vunpack.c.l.b16 %v437
        %v910 = vunpack.c.l.b16 %v438
        %v911 = vunpack.c.l.b16 %v439
        %v912 = vunpack.c.l.b16 %v440
        %v913 = vunpack.c.l.b16 %v441
        %v914 = vunpack.c.l.b16 %v442
        %v915 = vunpack.c.l.b16 %v443
        %v916 = vunpack.c.l.b16 %v444
        %v917 = vunpack.c.l.b16 %v445
        %v918 = vunpack.c.l.b16 %v446
        %v919 = vunpack.c.l.b16 %v447
        %v920 = vunpack.c.l.b16 %v448
        %v921 = vunpack.c.l.b16 %v449
        %v922 = vunpack.c.l.b16 %v450
        %v923 = vunpack.c.l.b16 %v451
        %v924 = vunpack.c.l.b16 %v452
        %v925 = vunpack.c.l.b16 %v453
        %v926 = vunpack.c.l.b16 %v454
        %v927 = vunpack.c.l.b16 %v455
        %v928 = vunpack.c.l.b16 %v456
        %v929 = vunpack.c.l.b16 %v457
        %v930 = vunpack.c.l.b16 %v458
        %v931 = vunpack.c.l.b16 %v459
        %v932 = vunpack.c.l.b16 %v460
        %v933 = vunpack.c.l.b16 %v461
        %v934 = vunpack.c.l.b16 %v462
        %v935 = vunpack.c.l.b16 %v463
        %v936 = vunpack.c.l.b16 %v464
        %v937 = vunpack.c.l.b16 %v465
        %v938 = vunpack.c.l.b16 %v466
        %v939 = vpack.c.b16 %v796, %v795
        %v940 = vpack.c.b16 %v798, %v797
        %v941 = vpack.c.b16 %v800, %v799
        %v942 = vpack.c.b16 %v802, %v801
        %v943 = vpack.c.b16 %v804, %v803
        %v944 = vpack.c.b16 %v806, %v805
        %v945 = vpack.c.b16 %v808, %v807
        %v946 = vpack.c.b16 %v810, %v809
        %v947 = vpack.c.b16 %v812, %v811
        %v948 = vpack.c.b16 %v814, %v813
        %v949 = vpack.c.b16 %v816, %v815
        %v950 = vpack.c.b16 %v818, %v817
        %v951 = vpack.c.b16 %v820, %v819
        %v952 = vpack.c.b16 %v822, %v821
        %v953 = vpack.c.b16 %v824, %v823
        %v954 = vpack.c.b16 %v826, %v825
        %v955 = vpack.c.b16 %v828, %v827
        %v956 = vpack.c.b16 %v830, %v829
        %v957 = vpack.c.b16 %v832, %v831
        %v958 = vpack.c.b16 %v834, %v833
        %v959 = vpack.c.b16 %v836, %v835
        %v960 = vpack.c.b16 %v838, %v837
        %v961 = vpack.c.b16 %v840, %v839
        %v962 = vpack.c.b16 %v842, %v841
        %v963 = vpack.c.b16 %v844, %v843
        %v964 = vpack.c.b16 %v846, %v845
        %v965 = vpack.c.b16 %v848, %v847
        %v966 = vpack.c.b16 %v850, %v849
        %v967 = vpack.c.b16 %v852, %v851
        %v968 = vpack.c.b16 %v854, %v853
        %v969 = vpack.c.b16 %v856, %v855
        %v970 = vpack.c.b16 %v858, %v857
        %v971 = vpack.c.b16 %v860, %v859
        %v972 = vpack.c.b16 %v862, %v861
        %v973 = vpack.c.b16 %v864, %v863
        %v974 = vpack.c.b16 %v866, %v865
        %v975 = vpack.c.b16 %v868, %v867
        %v976 = vpack.c.b16 %v870, %v869
        %v977 = vpack.c.b16 %v872, %v871
        %v978 = vpack.c.b16 %v874, %v873
        %v979 = vpack.c.b16 %v876, %v875
        %v980 = vpack.c.b16 %v878, %v877
        %v981 = vpack.c.b16 %v880, %v879
        %v982 = vpack.c.b16 %v882, %v881
        %v983 = vpack.c.b16 %v884, %v883
        %v984 = vpack.c.b16 %v886, %v885
        %v985 = vpack.c.b16 %v888, %v887
        %v986 = vpack.c.b16 %v890, %v889
        %v987 = vpack.c.b16 %v892, %v891
        %v988 = vpack.c.b16 %v894, %v893
        %v989 = vpack.c.b16 %v896, %v895
        %v990 = vpack.c.b16 %v898, %v897
        %v991 = vpack.c.b16 %v900, %v899
        %v992 = vpack.c.b16 %v902, %v901
        %v993 = vpack.c.b16 %v904, %v903
        %v994 = vpack.c.b16 %v906, %v905
        %v995 = vpack.c.b16 %v908, %v907
        %v996 = vpack.c.b16 %v910, %v909
        %v997 = vpack.c.b16 %v912, %v911
        %v998 = vpack.c.b16 %v914, %v913
        %v999 = vpack.c.b16 %v916, %v915
        %v1000 = vpack.c.b16 %v918, %v917
        %v1001 = vpack.c.b16 %v920, %v919
        %v1002 = vpack.c.b16 %v922, %v921
        %v1003 = vpack.c.b16 %v924, %v923
        %v1004 = vpack.c.b16 %v926, %v925
        %v1005 = vpack.c.b16 %v928, %v927
        %v1006 = vpack.c.b16 %v930, %v929
        %v1007 = vpack.c.b16 %v932, %v931
        %v1008 = vpack.c.b16 %v934, %v933
        %v1009 = vpack.c.b16 %v936, %v935
        %v1010 = vpack.c.b16 %v938, %v937
        %1083 = vmatpush.bf16.msra.mxu0 %v946
        %1084 = vmatpush.bf16.msra.mxu0 %v945
        %1085 = vmatpush.bf16.msra.mxu0 %v944
        %1086 = vmatpush.bf16.msra.mxu0 %v943
        %1087 = vmatpush.bf16.msra.mxu0 %v942
        %1088 = vmatpush.bf16.msra.mxu0 %v941
        %1089 = vmatpush.bf16.msra.mxu0 %v940
        %1090 = vmatpush.bf16.msra.mxu0 %v939
        %1091 = vmatmul.bf16.gmra.mxu0 %v579
        %v1092 = vpop.f32.mrf.mxu0
        %v1093 = vadd.f32 0.0, %v1092
        %v1094 = vpop.f32.mrf.mxu0
        %v1095 = vadd.f32 0.0, %v1094
        %1096 = vmatmul.bf16.gmra.mxu0 %v588
        %v1097 = vpop.f32.mrf.mxu0
        %v1098 = vadd.f32 0.0, %v1097
        %v1099 = vpop.f32.mrf.mxu0
        %v1100 = vadd.f32 0.0, %v1099
        %1101 = vmatmul.bf16.gmra.mxu0 %v597
        %v1102 = vpop.f32.mrf.mxu0
        %v1103 = vadd.f32 0.0, %v1102
        %v1104 = vpop.f32.mrf.mxu0
        %v1105 = vadd.f32 0.0, %v1104
        %1106 = vmatmul.bf16.gmra.mxu0 %v606
        %v1107 = vpop.f32.mrf.mxu0
        %v1108 = vadd.f32 0.0, %v1107
        %v1109 = vpop.f32.mrf.mxu0
        %v1110 = vadd.f32 0.0, %v1109
        %1111 = vdwg.mxu0
        %1112 = vmatpush.bf16.msra.mxu0 %v954
        %1113 = vmatpush.bf16.msra.mxu0 %v953
        %1114 = vmatpush.bf16.msra.mxu0 %v952
        %1115 = vmatpush.bf16.msra.mxu0 %v951
        %1116 = vmatpush.bf16.msra.mxu0 %v950
        %1117 = vmatpush.bf16.msra.mxu0 %v949
        %1118 = vmatpush.bf16.msra.mxu0 %v948
        %1119 = vmatpush.bf16.msra.mxu0 %v947
        %1120 = vmatmul.bf16.gmra.mxu0 %v580
        %v1121 = vpop.f32.mrf.mxu0
        %v1122 = vadd.f32 %v1093, %v1121
        %v1123 = vpop.f32.mrf.mxu0
        %v1124 = vadd.f32 %v1095, %v1123
        %1125 = vmatmul.bf16.gmra.mxu0 %v589
        %v1126 = vpop.f32.mrf.mxu0
        %v1127 = vadd.f32 %v1098, %v1126
        %v1128 = vpop.f32.mrf.mxu0
        %v1129 = vadd.f32 %v1100, %v1128
        %1130 = vmatmul.bf16.gmra.mxu0 %v598
        %v1131 = vpop.f32.mrf.mxu0
        %v1132 = vadd.f32 %v1103, %v1131
        %v1133 = vpop.f32.mrf.mxu0
        %v1134 = vadd.f32 %v1105, %v1133
        %1135 = vmatmul.bf16.gmra.mxu0 %v607
        %v1136 = vpop.f32.mrf.mxu0
        %v1137 = vadd.f32 %v1108, %v1136
        %v1138 = vpop.f32.mrf.mxu0
        %v1139 = vadd.f32 %v1110, %v1138
        %1140 = vdwg.mxu0
        %1141 = vmatpush.bf16.msra.mxu0 %v962
        %1142 = vmatpush.bf16.msra.mxu0 %v961
        %1143 = vmatpush.bf16.msra.mxu0 %v960
        %1144 = vmatpush.bf16.msra.mxu0 %v959
        %1145 = vmatpush.bf16.msra.mxu0 %v958
        %1146 = vmatpush.bf16.msra.mxu0 %v957
        %1147 = vmatpush.bf16.msra.mxu0 %v956
        %1148 = vmatpush.bf16.msra.mxu0 %v955
        %1149 = vmatmul.bf16.gmra.mxu0 %v581
        %v1150 = vpop.f32.mrf.mxu0
        %v1151 = vadd.f32 %v1122, %v1150
        %v1152 = vpop.f32.mrf.mxu0
        %v1153 = vadd.f32 %v1124, %v1152
        %1154 = vmatmul.bf16.gmra.mxu0 %v590
        %v1155 = vpop.f32.mrf.mxu0
        %v1156 = vadd.f32 %v1127, %v1155
        %v1157 = vpop.f32.mrf.mxu0
        %v1158 = vadd.f32 %v1129, %v1157
        %1159 = vmatmul.bf16.gmra.mxu0 %v599
        %v1160 = vpop.f32.mrf.mxu0
        %v1161 = vadd.f32 %v1132, %v1160
        %v1162 = vpop.f32.mrf.mxu0
        %v1163 = vadd.f32 %v1134, %v1162
        %1164 = vmatmul.bf16.gmra.mxu0 %v608
        %v1165 = vpop.f32.mrf.mxu0
        %v1166 = vadd.f32 %v1137, %v1165
        %v1167 = vpop.f32.mrf.mxu0
        %v1168 = vadd.f32 %v1139, %v1167
        %1169 = vdwg.mxu0
        %1170 = vmatpush.bf16.msra.mxu0 %v970
        %1171 = vmatpush.bf16.msra.mxu0 %v969
        %1172 = vmatpush.bf16.msra.mxu0 %v968
        %1173 = vmatpush.bf16.msra.mxu0 %v967
        %1174 = vmatpush.bf16.msra.mxu0 %v966
        %1175 = vmatpush.bf16.msra.mxu0 %v965
        %1176 = vmatpush.bf16.msra.mxu0 %v964
        %1177 = vmatpush.bf16.msra.mxu0 %v963
        %1178 = vmatmul.bf16.gmra.mxu0 %v582
        %v1179 = vpop.f32.mrf.mxu0
        %v1180 = vadd.f32 %v1151, %v1179
        %v1181 = vpop.f32.mrf.mxu0
        %v1182 = vadd.f32 %v1153, %v1181
        %1183 = vmatmul.bf16.gmra.mxu0 %v591
        %v1184 = vpop.f32.mrf.mxu0
        %v1185 = vadd.f32 %v1156, %v1184
        %v1186 = vpop.f32.mrf.mxu0
        %v1187 = vadd.f32 %v1158, %v1186
        %1188 = vmatmul.bf16.gmra.mxu0 %v600
        %v1189 = vpop.f32.mrf.mxu0
        %v1190 = vadd.f32 %v1161, %v1189
        %v1191 = vpop.f32.mrf.mxu0
        %v1192 = vadd.f32 %v1163, %v1191
        %1193 = vmatmul.bf16.gmra.mxu0 %v609
        %v1194 = vpop.f32.mrf.mxu0
        %v1195 = vadd.f32 %v1166, %v1194
        %v1196 = vpop.f32.mrf.mxu0
        %v1197 = vadd.f32 %v1168, %v1196
        %1198 = vdwg.mxu0
        %1199 = vmatpush.bf16.msra.mxu0 %v978
        %1200 = vmatpush.bf16.msra.mxu0 %v977
        %1201 = vmatpush.bf16.msra.mxu0 %v976
        %1202 = vmatpush.bf16.msra.mxu0 %v975
        %1203 = vmatpush.bf16.msra.mxu0 %v974
        %1204 = vmatpush.bf16.msra.mxu0 %v973
        %1205 = vmatpush.bf16.msra.mxu0 %v972
        %1206 = vmatpush.bf16.msra.mxu0 %v971
        %1207 = vmatmul.bf16.gmra.mxu0 %v583
        %v1208 = vpop.f32.mrf.mxu0
        %v1209 = vadd.f32 %v1180, %v1208
        %v1210 = vpop.f32.mrf.mxu0
        %v1211 = vadd.f32 %v1182, %v1210
        %1212 = vmatmul.bf16.gmra.mxu0 %v592
        %v1213 = vpop.f32.mrf.mxu0
        %v1214 = vadd.f32 %v1185, %v1213
        %v1215 = vpop.f32.mrf.mxu0
        %v1216 = vadd.f32 %v1187, %v1215
        %1217 = vmatmul.bf16.gmra.mxu0 %v601
        %v1218 = vpop.f32.mrf.mxu0
        %v1219 = vadd.f32 %v1190, %v1218
        %v1220 = vpop.f32.mrf.mxu0
        %v1221 = vadd.f32 %v1192, %v1220
        %1222 = vmatmul.bf16.gmra.mxu0 %v610
        %v1223 = vpop.f32.mrf.mxu0
        %v1224 = vadd.f32 %v1195, %v1223
        %v1225 = vpop.f32.mrf.mxu0
        %v1226 = vadd.f32 %v1197, %v1225
        %1227 = vdwg.mxu0
        %1228 = vmatpush.bf16.msra.mxu0 %v986
        %1229 = vmatpush.bf16.msra.mxu0 %v985
        %1230 = vmatpush.bf16.msra.mxu0 %v984
        %1231 = vmatpush.bf16.msra.mxu0 %v983
        %1232 = vmatpush.bf16.msra.mxu0 %v982
        %1233 = vmatpush.bf16.msra.mxu0 %v981
        %1234 = vmatpush.bf16.msra.mxu0 %v980
        %1235 = vmatpush.bf16.msra.mxu0 %v979
        %1236 = vmatmul.bf16.gmra.mxu0 %v584
        %v1237 = vpop.f32.mrf.mxu0
        %v1238 = vadd.f32 %v1209, %v1237
        %v1239 = vpop.f32.mrf.mxu0
        %v1240 = vadd.f32 %v1211, %v1239
        %1241 = vmatmul.bf16.gmra.mxu0 %v593
        %v1242 = vpop.f32.mrf.mxu0
        %v1243 = vadd.f32 %v1214, %v1242
        %v1244 = vpop.f32.mrf.mxu0
        %v1245 = vadd.f32 %v1216, %v1244
        %1246 = vmatmul.bf16.gmra.mxu0 %v602
        %v1247 = vpop.f32.mrf.mxu0
        %v1248 = vadd.f32 %v1219, %v1247
        %v1249 = vpop.f32.mrf.mxu0
        %v1250 = vadd.f32 %v1221, %v1249
        %1251 = vmatmul.bf16.gmra.mxu0 %v611
        %v1252 = vpop.f32.mrf.mxu0
        %v1253 = vadd.f32 %v1224, %v1252
        %v1254 = vpop.f32.mrf.mxu0
        %v1255 = vadd.f32 %v1226, %v1254
        %1256 = vdwg.mxu0
        %1257 = vmatpush.bf16.msra.mxu0 %v994
        %1258 = vmatpush.bf16.msra.mxu0 %v993
        %1259 = vmatpush.bf16.msra.mxu0 %v992
        %1260 = vmatpush.bf16.msra.mxu0 %v991
        %1261 = vmatpush.bf16.msra.mxu0 %v990
        %1262 = vmatpush.bf16.msra.mxu0 %v989
        %1263 = vmatpush.bf16.msra.mxu0 %v988
        %1264 = vmatpush.bf16.msra.mxu0 %v987
        %1265 = vmatmul.bf16.gmra.mxu0 %v585
        %v1266 = vpop.f32.mrf.mxu0
        %v1267 = vadd.f32 %v1238, %v1266
        %v1268 = vpop.f32.mrf.mxu0
        %v1269 = vadd.f32 %v1240, %v1268
        %1270 = vmatmul.bf16.gmra.mxu0 %v594
        %v1271 = vpop.f32.mrf.mxu0
        %v1272 = vadd.f32 %v1243, %v1271
        %v1273 = vpop.f32.mrf.mxu0
        %v1274 = vadd.f32 %v1245, %v1273
        %1275 = vmatmul.bf16.gmra.mxu0 %v603
        %v1276 = vpop.f32.mrf.mxu0
        %v1277 = vadd.f32 %v1248, %v1276
        %v1278 = vpop.f32.mrf.mxu0
        %v1279 = vadd.f32 %v1250, %v1278
        %1280 = vmatmul.bf16.gmra.mxu0 %v612
        %v1281 = vpop.f32.mrf.mxu0
        %v1282 = vadd.f32 %v1253, %v1281
        %v1283 = vpop.f32.mrf.mxu0
        %v1284 = vadd.f32 %v1255, %v1283
        %1285 = vdwg.mxu0
        %1286 = vmatpush.bf16.msra.mxu0 %v1002
        %1287 = vmatpush.bf16.msra.mxu0 %v1001
        %1288 = vmatpush.bf16.msra.mxu0 %v1000
        %1289 = vmatpush.bf16.msra.mxu0 %v999
        %1290 = vmatpush.bf16.msra.mxu0 %v998
        %1291 = vmatpush.bf16.msra.mxu0 %v997
        %1292 = vmatpush.bf16.msra.mxu0 %v996
        %1293 = vmatpush.bf16.msra.mxu0 %v995
        %1294 = vmatmul.bf16.gmra.mxu0 %v586
        %v1295 = vpop.f32.mrf.mxu0
        %v1296 = vadd.f32 %v1267, %v1295
        %v1297 = vpop.f32.mrf.mxu0
        %v1298 = vadd.f32 %v1269, %v1297
        %1299 = vmatmul.bf16.gmra.mxu0 %v595
        %v1300 = vpop.f32.mrf.mxu0
        %v1301 = vadd.f32 %v1272, %v1300
        %v1302 = vpop.f32.mrf.mxu0
        %v1303 = vadd.f32 %v1274, %v1302
        %1304 = vmatmul.bf16.gmra.mxu0 %v604
        %v1305 = vpop.f32.mrf.mxu0
        %v1306 = vadd.f32 %v1277, %v1305
        %v1307 = vpop.f32.mrf.mxu0
        %v1308 = vadd.f32 %v1279, %v1307
        %1309 = vmatmul.bf16.gmra.mxu0 %v613
        %v1310 = vpop.f32.mrf.mxu0
        %v1311 = vadd.f32 %v1282, %v1310
        %v1312 = vpop.f32.mrf.mxu0
        %v1313 = vadd.f32 %v1284, %v1312
        %1314 = vdwg.mxu0
        %1315 = vmatpush.bf16.msra.mxu0 %v1010
        %1316 = vmatpush.bf16.msra.mxu0 %v1009
        %1317 = vmatpush.bf16.msra.mxu0 %v1008
        %1318 = vmatpush.bf16.msra.mxu0 %v1007
        %1319 = vmatpush.bf16.msra.mxu0 %v1006
        %1320 = vmatpush.bf16.msra.mxu0 %v1005
        %1321 = vmatpush.bf16.msra.mxu0 %v1004
        %1322 = vmatpush.bf16.msra.mxu0 %v1003
        %1323 = vmatmul.bf16.gmra.mxu0 %v587
        %v1324 = vpop.f32.mrf.mxu0
        %v1325 = vadd.f32 %v1296, %v1324
        %v1326 = vpop.f32.mrf.mxu0
        %v1327 = vadd.f32 %v1298, %v1326
        %1328 = vmatmul.bf16.gmra.mxu0 %v596
        %v1329 = vpop.f32.mrf.mxu0
        %v1330 = vadd.f32 %v1301, %v1329
        %v1331 = vpop.f32.mrf.mxu0
        %v1332 = vadd.f32 %v1303, %v1331
        %1333 = vmatmul.bf16.gmra.mxu0 %v605
        %v1334 = vpop.f32.mrf.mxu0
        %v1335 = vadd.f32 %v1306, %v1334
        %v1336 = vpop.f32.mrf.mxu0
        %v1337 = vadd.f32 %v1308, %v1336
        %1338 = vmatmul.bf16.gmra.mxu0 %v614
        %v1339 = vpop.f32.mrf.mxu0
        %v1340 = vadd.f32 %v1311, %v1339
        %v1341 = vpop.f32.mrf.mxu0
        %v1342 = vadd.f32 %v1313, %v1341
        %1343 = vdwg.mxu0
        %v1344 = vld [vmem:[#allocation2] sm:$0x1]
        %v1346 = vperm.slane %v1344, 0
        %v1348 = vmul.f32 %v1325, %v1346
        %v1349 = vmul.f32 %v1327, %v1346
        %v1350 = vmul.f32 %v1330, %v1346
        %v1351 = vmul.f32 %v1332, %v1346
        %v1352 = vmul.f32 %v1335, %v1346
        %v1353 = vmul.f32 %v1337, %v1346
        %v1354 = vmul.f32 %v1340, %v1346
        %v1355 = vmul.f32 %v1342, %v1346
        %v1356 = vld [vmem:[#allocation4] sm:$0x1]
        %v1358 = vperm.slane %v1356, 0
        %v1360 = vadd.f32 %v1348, %v1358
        %v1361 = vadd.f32 %v1349, %v1358
        %v1362 = vadd.f32 %v1350, %v1358
        %v1363 = vadd.f32 %v1351, %v1358
        %v1364 = vadd.f32 %v1352, %v1358
        %v1365 = vadd.f32 %v1353, %v1358
        %v1366 = vadd.f32 %v1354, %v1358
        %v1367 = vadd.f32 %v1355, %v1358
        %v1368 = vmax.f32 %v1360, 0.0
        %v1369 = vmax.f32 %v1361, 0.0
        %v1370 = vmax.f32 %v1362, 0.0
        %v1371 = vmax.f32 %v1363, 0.0
        %v1372 = vmax.f32 %v1364, 0.0
        %v1373 = vmax.f32 %v1365, 0.0
        %v1374 = vmax.f32 %v1366, 0.0
        %v1375 = vmax.f32 %v1367, 0.0
        %v1376 = vpack.c.bf16 %v1368, %v1368
        %v1377 = vpack.c.bf16 %v1369, %v1369
        %v1378 = vpack.c.bf16 %v1370, %v1370
        %v1379 = vpack.c.bf16 %v1371, %v1371
        %v1380 = vpack.c.bf16 %v1372, %v1372
        %v1381 = vpack.c.bf16 %v1373, %v1373
        %v1382 = vpack.c.bf16 %v1374, %v1374
        %v1383 = vpack.c.bf16 %v1375, %v1375
        %1384 = vst [vmem:[%s281] sm:$0xf] %v1376
        %1385 = vst [vmem:[%s281 + $0x4] sm:$0xf] %v1377
        %1386 = vst [vmem:[%s281 + $0x8] sm:$0xf] %v1378
        %1387 = vst [vmem:[%s281 + $0xc] sm:$0xf] %v1379
        %1388 = vst [vmem:[%s281 + $0x10] sm:$0xf] %v1380
        %1389 = vst [vmem:[%s281 + $0x14] sm:$0xf] %v1381
        %1390 = vst [vmem:[%s281 + $0x18] sm:$0xf] %v1382
        %1391 = vst [vmem:[%s281 + $0x1c] sm:$0xf] %v1383
        %s1392 = smul.u32 8, %s21
        %p1393 = scmp.lt.s32.totalorder %s1392, 15
        %s1394 = scalar_select %p1393, %s1392, 15
        %p1395 = scmp.lt.s32.totalorder %s22, 0
        %s1396 = scalar_select %p1395, %s22, 0
        %s1397 = sadd.s32 %s1396, %s1394
        %s1398 = smul.addr %s1397, 4
        %s1399 = scalar_lea.vmem %s4, %s1398
        // Predicated region
        $region45: #{forward.20} parent=35 // pred_check
          %p1400 = pneg %p153
        $region46: #{forward.20} parent=35 // pred_check_branch
          %1402 = sbr.rel (%p1400) target = $region48
        $region47: #{forward.20} parent=35 // pred_region
          %s1403 = smul.u32 8, %s21
        $region48: #{forward.20} parent=35 // pred_fallthru
          _
      $region36: #{forward.20} parent=5 // pred_fallthru
        _
      %p1404 = scmp.le.s32.totalorder 2, %s12
      // Predicated region
      $region49: #{forward.20} parent=5 // pred_check
        %p1405 = pneg %p1404
      $region50: #{forward.20} parent=5 // pred_check_branch
        %1407 = sbr.rel (%p1405) target = $region52
      $region51: #{forward.20} parent=5 // pred_region
        %s1408 = ssub.s32 %s12, 2
        // Predicated region
        $region53: #{forward.20} parent=51 // pred_check
          %p1409 = pneg %p159
        $region54: #{forward.20} parent=51 // pred_check_branch
          %1411 = sbr.rel (%p1409) target = $region56
        $region55: #{forward.20} parent=51 // pred_region
          %s1412 = smul.u32 8, %s23
          %p1413 = scmp.lt.s32.totalorder %s1412, 15
          %s1414 = scalar_select %p1413, %s1412, 15
          %p1415 = scmp.lt.s32.totalorder %s24, 0
          %s1416 = scalar_select %p1415, %s24, 0
          %s1417 = sadd.s32 %s1416, %s1414
          %s1418 = smul.addr %s1417, 4
          %s1419 = scalar_lea.vmem %s4, %s1418
        $region56: #{forward.20} parent=51 // pred_fallthru
          _
      $region52: #{forward.20} parent=5 // pred_fallthru
        _
    $region6: #{forward.20} parent=1 // loop_footer
      %s16 = sadd.s32 1, %s12
    $region7: #{forward.20} parent=1 // loop_footer_branch
      %11 = sbr.rel target = $region3
    $region8: #{forward.20} parent=1 // loop_exit
      _
    %1420 = vsyncpa [#allocation3], 1
    %s1421 = scalar_lea.sflag [#allocation3], 1
    %1422 = vsyncpa %s1421, 1
    %1423 = vsyncpa [#allocation5], 1

</llo_original>
